<compile_context>
chip_gen: v7x
topology: tpu7x:2x2x1
jax: 0.10.0
libtpu: 0.0.40
codegen_flags: <defaults>
</compile_context>

<pallas_src>
import jax
import jax.numpy as jnp
from jax.experimental import pallas as pl
from jax.experimental.pallas import tpu as pltpu

_EPS = 1e-5


# ----------------------------------------------------------------------------
# Fused kernel: conv3x3 -> SwitchNorm -> ReLU -> conv3x3 -> SwitchNorm -> +x
# ----------------------------------------------------------------------------
def _residual_block_kernel(x_ref, w1_ref, b1_ref, g1_ref, be1_ref,
                           w2_ref, b2_ref, g2_ref, be2_ref, sw_ref,
                           o_ref, pad_ref, y_ref):
    n, h, w, c = x_ref.shape
    hw = h * w
    m = n * hw

    # Zero only the two halo rows of the tap scratch (interior rows are fully
    # overwritten by each conv's staging pass, so this happens once per call).
    pad_ref[:, 0:1, :, :] = jnp.zeros((n, 1, w, 3 * c), pad_ref.dtype)
    pad_ref[:, h + 1:h + 2, :, :] = jnp.zeros((n, 1, w, 3 * c), pad_ref.dtype)

    # Edge-column masks for the width-rolled taps (the wrapped x==0 / x==w-1 columns
    # must become zero padding). Tiny (1,1,w,c) masks, built once, reused by both convs.
    col = jax.lax.broadcasted_iota(jnp.int32, (1, 1, w, c), 2)
    not_first = (col != 0).astype(jnp.float32)
    not_last = (col != (w - 1)).astype(jnp.float32)

    def stage_taps(act4):
        """Stage [x-1 | x | x+1] width-shifted bf16 copies of act4 into pad_ref's interior.

        The width shift is an XLU sublane roll (+ edge masking), so every tap read in
        conv3x3 below is a sublane/lane-aligned slice -> no relayout copies."""
        left = pltpu.roll(act4, shift=1, axis=2) * not_first       # act[:, y, x-1]
        right = pltpu.roll(act4, shift=w - 1, axis=2) * not_last   # act[:, y, x+1]
        pad_ref[:, 1:h + 1, :, 0 * c:1 * c] = left.astype(pad_ref.dtype)
        pad_ref[:, 1:h + 1, :, 1 * c:2 * c] = act4.astype(pad_ref.dtype)
        pad_ref[:, 1:h + 1, :, 2 * c:3 * c] = right.astype(pad_ref.dtype)

    def conv3x3(wk_ref, b_ref):
        """3x3 / stride 1 / pad 1 conv from the staged taps.

        One K = 3*C matmul per kernel row (3 MXU dots + 2 VPU adds instead of 9 + 8);
        the h-offset slices are on a free (non sublane/lane) dim."""
        acc = jnp.dot(pad_ref[:, 0:h, :, :].reshape(m, 3 * c), wk_ref[0],
                      preferred_element_type=jnp.float32)
        acc = acc + jnp.dot(pad_ref[:, 1:h + 1, :, :].reshape(m, 3 * c), wk_ref[1],
                            preferred_element_type=jnp.float32)
        acc = acc + jnp.dot(pad_ref[:, 2:h + 2, :, :].reshape(m, 3 * c), wk_ref[2],
                            preferred_element_type=jnp.float32)
        return (acc + b_ref[...]).reshape(n, hw, c)

    def switch_norm(g_ref, be_ref, row):
        """SwitchNorm2d (training-mode stats, using_bn=True) applied to y_ref."""
        mw0, mw1, mw2 = sw_ref[row, 0], sw_ref[row, 1], sw_ref[row, 2]
        vw0, vw1, vw2 = sw_ref[row + 1, 0], sw_ref[row + 1, 1], sw_ref[row + 1, 2]
        y3 = y_ref[...]                                              # (n, hw, c) f32
        mean_in = jnp.mean(y3, axis=1, keepdims=True)                # (n,1,c)
        mean_sq = jnp.mean(y3 * y3, axis=1, keepdims=True)
        var_in = (mean_sq - mean_in * mean_in) * (hw / (hw - 1.0))   # unbiased (torch.var)
        mean_ln = jnp.mean(mean_in, axis=2, keepdims=True)           # (n,1,1)
        temp = var_in + mean_in * mean_in
        var_ln = jnp.mean(temp, axis=2, keepdims=True) - mean_ln * mean_ln
        mean_bn = jnp.mean(mean_in, axis=0, keepdims=True)           # (1,1,c)
        var_bn = jnp.mean(temp, axis=0, keepdims=True) - mean_bn * mean_bn
        mean = mw0 * mean_in + mw1 * mean_ln + mw2 * mean_bn
        var = vw0 * var_in + vw1 * var_ln + vw2 * var_bn
        # Guard E[x^2]-E[x]^2 cancellation before rsqrt; fold gamma/beta into scale/shift.
        scale = jax.lax.rsqrt(jnp.maximum(var, 0.0) + _EPS) * g_ref[...].reshape(1, 1, c)
        shift = be_ref[...].reshape(1, 1, c) - mean * scale
        return y_ref[...] * scale + shift                            # (n, hw, c)

    # conv1 -> SwitchNorm1 -> ReLU (y_ref gives explicit phase boundaries -> low vreg pressure)
    stage_taps(x_ref[...])
    y_ref[...] = conv3x3(w1_ref, b1_ref)
    y_ref[...] = jnp.maximum(switch_norm(g1_ref, be1_ref, 0), 0.0)
    # conv2 -> SwitchNorm2 -> residual add
    stage_taps(y_ref[...].reshape(n, h, w, c))
    y_ref[...] = conv3x3(w2_ref, b2_ref)
    z = switch_norm(g2_ref, be2_ref, 2)
    o_ref[...] = (x_ref[...].reshape(n, hw, c) + z).reshape(n, h, w, c)


# ----------------------------------------------------------------------------
# Wrapper (parameter prep + single pallas_call; NHWC end-to-end, no transposes)
# ----------------------------------------------------------------------------
def _prep_conv_weight(w_oihw):
    """PyTorch (Cout, Cin, 3, 3) -> (3, 3*Cin, Cout): one (3*Cin, Cout) block per kernel
    row, with rows ordered [kw=0 | kw=1 | kw=2] x Cin to match the tap lane layout."""
    c_out, c_in = w_oihw.shape[0], w_oihw.shape[1]
    wt = jnp.transpose(w_oihw, (2, 3, 1, 0))             # (kh, kw, cin, cout)
    return wt.reshape(3, 3 * c_in, c_out).astype(jnp.bfloat16)


def residual_block_forward(params, x_nhwc):
    """ResidualBlock forward on an NHWC activation (C on the 128-lane axis)."""
    n, h, w, c = x_nhwc.shape
    row = lambda v: v.reshape(1, c).astype(jnp.float32)
    w1 = _prep_conv_weight(params["w1"])
    w2 = _prep_conv_weight(params["w2"])
    sw = jnp.stack([jax.nn.softmax(params["sn1_mean_w"]),
                    jax.nn.softmax(params["sn1_var_w"]),
                    jax.nn.softmax(params["sn2_mean_w"]),
                    jax.nn.softmax(params["sn2_var_w"])]).astype(jnp.float32)

    act_spec = pl.BlockSpec((n, h, w, c), lambda i: (0, 0, 0, 0))
    wgt_spec = pl.BlockSpec((3, 3 * c, c), lambda i: (0, 0, 0))
    vec_spec = pl.BlockSpec((1, c), lambda i: (0, 0))
    smem_spec = pl.BlockSpec(memory_space=pltpu.MemorySpace.SMEM)

    flops = 2 * (2 * n * h * w * (9 * c) * c)                  # two 3x3 convs
    bytes_accessed = 4 * 2 * n * h * w * c + 2 * 2 * 9 * c * c + 4 * 8 * c

    out_nhwc = pl.pallas_call(
        _residual_block_kernel,
        out_shape=jax.ShapeDtypeStruct((n, h, w, c), jnp.float32),
        grid=(1,),   # fully VMEM-resident at this size; tile batch/rows for larger shapes
        in_specs=[act_spec, wgt_spec, vec_spec, vec_spec, vec_spec,
                  wgt_spec, vec_spec, vec_spec, vec_spec, smem_spec],
        out_specs=act_spec,
        scratch_shapes=[
            pltpu.VMEM((n, h + 2, w, 3 * c), jnp.bfloat16),    # padded/shifted tap scratch
            pltpu.VMEM((n, h * w, c), jnp.float32),            # inter-stage activation
        ],
        compiler_params=pltpu.CompilerParams(
            dimension_semantics=("arbitrary",),
            vmem_limit_bytes=32 * 1024 * 1024),
        cost_estimate=pl.CostEstimate(flops=flops, transcendentals=2 * n * c,
                                      bytes_accessed=bytes_accessed),
    )(x_nhwc, w1, row(params["b1"]), row(params["sn1_w"]), row(params["sn1_b"]),
      w2, row(params["b2"]), row(params["sn2_w"]), row(params["sn2_b"]), sw)

    return out_nhwc


# ----------------------------------------------------------------------------
# Pure-JAX reference (f32, NHWC) for correctness checking
# ----------------------------------------------------------------------------
def _conv3x3_ref(x, w_oihw, b):
    y = jax.lax.conv_general_dilated(
        x, w_oihw, window_strides=(1, 1), padding=((1, 1), (1, 1)),
        dimension_numbers=("NHWC", "OIHW", "NHWC"))
    return y + b.reshape(1, 1, 1, -1)


def _switchnorm2d_ref(x, gamma, beta, mean_w, var_w, eps=_EPS):
    n, h, w, c = x.shape
    xr = x.reshape(n, h * w, c)
    mean_in = jnp.mean(xr, axis=1, keepdims=True)
    var_in = jnp.var(xr, axis=1, keepdims=True, ddof=1)
    mean_ln = jnp.mean(mean_in, axis=2, keepdims=True)
    temp = var_in + mean_in ** 2
    var_ln = jnp.mean(temp, axis=2, keepdims=True) - mean_ln ** 2
    mean_bn = jnp.mean(mean_in, axis=0, keepdims=True)
    var_bn = jnp.mean(temp, axis=0, keepdims=True) - mean_bn ** 2
    mw = jax.nn.softmax(mean_w)
    vw = jax.nn.softmax(var_w)
    mean = mw[0] * mean_in + mw[1] * mean_ln + mw[2] * mean_bn
    var = vw[0] * var_in + vw[1] * var_ln + vw[2] * var_bn
    xr = (xr - mean) / jnp.sqrt(var + eps)
    return xr.reshape(n, h, w, c) * gamma.reshape(1, 1, 1, c) + beta.reshape(1, 1, 1, c)


def residual_block_ref(params, x):
    y = _conv3x3_ref(x, params["w1"], params["b1"])
    y = _switchnorm2d_ref(y, params["sn1_w"], params["sn1_b"],
                          params["sn1_mean_w"], params["sn1_var_w"])
    y = jnp.maximum(y, 0.0)
    y = _conv3x3_ref(y, params["w2"], params["b2"])
    y = _switchnorm2d_ref(y, params["sn2_w"], params["sn2_b"],
                          params["sn2_mean_w"], params["sn2_var_w"])
    return x + y


# ----------------------------------------------------------------------------
# Parameters + main
# ----------------------------------------------------------------------------
def init_params(key, c):
    ks = jax.random.split(key, 12)
    bound = (9 * c) ** -0.5
    u = lambda k, s: jax.random.uniform(k, s, jnp.float32, -bound, bound)
    nrm = lambda k, s, scale: scale * jax.random.normal(k, s, jnp.float32)
    return {
        "w1": u(ks[0], (c, c, 3, 3)), "b1": u(ks[1], (c,)),
        "w2": u(ks[2], (c, c, 3, 3)), "b2": u(ks[3], (c,)),
        "sn1_w": 1.0 + nrm(ks[4], (c,), 0.1), "sn1_b": nrm(ks[5], (c,), 0.1),
        "sn1_mean_w": nrm(ks[6], (3,), 1.0), "sn1_var_w": nrm(ks[7], (3,), 1.0),
        "sn2_w": 1.0 + nrm(ks[8], (c,), 0.1), "sn2_b": nrm(ks[9], (c,), 0.1),
        "sn2_mean_w": nrm(ks[10], (3,), 1.0), "sn2_var_w": nrm(ks[11], (3,), 1.0),
    }


if __name__ == "__main__":
    key = jax.random.PRNGKey(0)
    pkey, xkey = jax.random.split(key)
    N, C, H, W = 2, 128, 16, 16      # in_features=128: channel dim exactly fills the 128-lane axis
    params = init_params(pkey, C)
    x = jax.random.normal(xkey, (N, H, W, C), dtype=jnp.float32)   # NHWC end-to-end

    fwd = jax.jit(residual_block_forward)
    out = jax.block_until_ready(fwd(params, x))

    ref = residual_block_ref(params, x)
    assert out.shape == (N, H, W, C), out.shape
    assert bool(jnp.all(jnp.isfinite(out)))
    max_err = float(jnp.max(jnp.abs(out - ref)))
    assert max_err < 1e-1, f"max |pallas - ref| = {max_err}"   # bf16 MXU operands, f32 accum/norm
    print("KERNEL_OK")
</pallas_src>

<mosaic_0001>
module attributes {stable_mosaic.version = 11 : i64} {
  func.func @_residual_block_kernel(%arg0: i32, %arg1: memref<2x16x16x128xf32, #tpu.memory_space<vmem>>, %arg2: memref<3x384x128xbf16, #tpu.memory_space<vmem>>, %arg3: memref<1x128xf32, #tpu.memory_space<vmem>>, %arg4: memref<1x128xf32, #tpu.memory_space<vmem>>, %arg5: memref<1x128xf32, #tpu.memory_space<vmem>>, %arg6: memref<3x384x128xbf16, #tpu.memory_space<vmem>>, %arg7: memref<1x128xf32, #tpu.memory_space<vmem>>, %arg8: memref<1x128xf32, #tpu.memory_space<vmem>>, %arg9: memref<1x128xf32, #tpu.memory_space<vmem>>, %arg10: memref<4x3xf32, #tpu.memory_space<smem>>, %arg11: memref<2x16x16x128xf32, #tpu.memory_space<vmem>>, %arg12: memref<2x18x16x384xbf16, #tpu.memory_space<vmem>>, %arg13: memref<2x256x128xf32, #tpu.memory_space<vmem>>) attributes {dimension_semantics = [#tpu.dimension_semantics<arbitrary>], iteration_bounds = array<i64: 1>, scalar_prefetch = 0 : i64, scratch_operands = 2 : i64, tpu.core_type = #tpu.core_type<tc>, window_params = [{pipeline_mode = #tpu.pipeline_mode<synchronous>, transform_indices = @transform_0, window_bounds = array<i64: 2, 16, 16, 128>}, {pipeline_mode = #tpu.pipeline_mode<synchronous>, transform_indices = @transform_1, window_bounds = array<i64: 3, 384, 128>}, {pipeline_mode = #tpu.pipeline_mode<synchronous>, transform_indices = @transform_2, window_bounds = array<i64: 1, 128>}, {pipeline_mode = #tpu.pipeline_mode<synchronous>, transform_indices = @transform_3, window_bounds = array<i64: 1, 128>}, {pipeline_mode = #tpu.pipeline_mode<synchronous>, transform_indices = @transform_4, window_bounds = array<i64: 1, 128>}, {pipeline_mode = #tpu.pipeline_mode<synchronous>, transform_indices = @transform_5, window_bounds = array<i64: 3, 384, 128>}, {pipeline_mode = #tpu.pipeline_mode<synchronous>, transform_indices = @transform_6, window_bounds = array<i64: 1, 128>}, {pipeline_mode = #tpu.pipeline_mode<synchronous>, transform_indices = @transform_7, window_bounds = array<i64: 1, 128>}, {pipeline_mode = #tpu.pipeline_mode<synchronous>, transform_indices = @transform_8, window_bounds = array<i64: 1, 128>}, {transform_indices = @transform_9, window_bounds = array<i64: 4, 3>}, {pipeline_mode = #tpu.pipeline_mode<synchronous>, transform_indices = @transform_10, window_bounds = array<i64: 2, 16, 16, 128>}]} {
    %cst = arith.constant 0.000000e+00 : bf16
    %0 = vector.broadcast %cst : bf16 to vector<2x1x16x384xbf16>
    %c0 = arith.constant 0 : index
    %c0_0 = arith.constant 0 : index
    %c0_1 = arith.constant 0 : index
    %c0_2 = arith.constant 0 : index
    %1 = vector.load %arg12[%c0, %c0_0, %c0_1, %c0_2] : memref<2x18x16x384xbf16, #tpu.memory_space<vmem>>, vector<2x1x16x384xbf16>
    tpu.vector_store %arg12[%c0, %c0_0, %c0_1, %c0_2], %0 {strides = array<i32>} : memref<2x18x16x384xbf16, #tpu.memory_space<vmem>>, vector<2x1x16x384xbf16>,
    %cst_3 = arith.constant 0.000000e+00 : bf16
    %2 = vector.broadcast %cst_3 : bf16 to vector<2x1x16x384xbf16>
    %c0_4 = arith.constant 0 : index
    %c17 = arith.constant 17 : index
    %c0_5 = arith.constant 0 : index
    %c0_6 = arith.constant 0 : index
    %3 = vector.load %arg12[%c0_4, %c17, %c0_5, %c0_6] : memref<2x18x16x384xbf16, #tpu.memory_space<vmem>>, vector<2x1x16x384xbf16>
    tpu.vector_store %arg12[%c0_4, %c17, %c0_5, %c0_6], %2 {strides = array<i32>} : memref<2x18x16x384xbf16, #tpu.memory_space<vmem>>, vector<2x1x16x384xbf16>,
    %4 = tpu.iota {dimensions = array<i32: 2>} : vector<1x1x16x128xi32>
    %c0_i32 = arith.constant 0 : i32
    %5 = vector.broadcast %c0_i32 : i32 to vector<1x1x16x128xi32>
    %6 = arith.cmpi ne, %4, %5 : vector<1x1x16x128xi32>
    %7 = arith.extui %6 : vector<1x1x16x128xi1> to vector<1x1x16x128xi32>
    %8 = arith.sitofp %7 : vector<1x1x16x128xi32> to vector<1x1x16x128xf32>
    %c15_i32 = arith.constant 15 : i32
    %9 = vector.broadcast %c15_i32 : i32 to vector<1x1x16x128xi32>
    %10 = arith.cmpi ne, %4, %9 : vector<1x1x16x128xi32>
    %11 = arith.extui %10 : vector<1x1x16x128xi1> to vector<1x1x16x128xi32>
    %12 = arith.sitofp %11 : vector<1x1x16x128xi32> to vector<1x1x16x128xf32>
    %c0_7 = arith.constant 0 : index
    %c0_8 = arith.constant 0 : index
    %c0_9 = arith.constant 0 : index
    %c0_10 = arith.constant 0 : index
    %13 = vector.load %arg1[%c0_7, %c0_8, %c0_9, %c0_10] : memref<2x16x16x128xf32, #tpu.memory_space<vmem>>, vector<2x16x16x128xf32>
    %c1_i32 = arith.constant 1 : i32
    %14 = tpu.dynamic_rotate %13 by %c1_i32 dim 2 : vector<2x16x16x128xf32>, i32 -> vector<2x16x16x128xf32>
    %15 = vector.broadcast %8 : vector<1x1x16x128xf32> to vector<2x16x16x128xf32>
    %16 = arith.mulf %14, %15 : vector<2x16x16x128xf32>
    %c15_i32_11 = arith.constant 15 : i32
    %17 = tpu.dynamic_rotate %13 by %c15_i32_11 dim 2 : vector<2x16x16x128xf32>, i32 -> vector<2x16x16x128xf32>
    %18 = vector.broadcast %12 : vector<1x1x16x128xf32> to vector<2x16x16x128xf32>
    %19 = arith.mulf %17, %18 : vector<2x16x16x128xf32>
    %20 = arith.truncf %16 : vector<2x16x16x128xf32> to vector<2x16x16x128xbf16>
    %c0_12 = arith.constant 0 : index
    %c1 = arith.constant 1 : index
    %c0_13 = arith.constant 0 : index
    %c0_14 = arith.constant 0 : index
    %21 = vector.load %arg12[%c0_12, %c1, %c0_13, %c0_14] : memref<2x18x16x384xbf16, #tpu.memory_space<vmem>>, vector<2x16x16x128xbf16>
    tpu.vector_store %arg12[%c0_12, %c1, %c0_13, %c0_14], %20 {strides = array<i32>} : memref<2x18x16x384xbf16, #tpu.memory_space<vmem>>, vector<2x16x16x128xbf16>,
    %22 = arith.truncf %13 : vector<2x16x16x128xf32> to vector<2x16x16x128xbf16>
    %c0_15 = arith.constant 0 : index
    %c1_16 = arith.constant 1 : index
    %c0_17 = arith.constant 0 : index
    %c128 = arith.constant 128 : index
    %23 = vector.load %arg12[%c0_15, %c1_16, %c0_17, %c128] : memref<2x18x16x384xbf16, #tpu.memory_space<vmem>>, vector<2x16x16x128xbf16>
    tpu.vector_store %arg12[%c0_15, %c1_16, %c0_17, %c128], %22 {strides = array<i32>} : memref<2x18x16x384xbf16, #tpu.memory_space<vmem>>, vector<2x16x16x128xbf16>,
    %24 = arith.truncf %19 : vector<2x16x16x128xf32> to vector<2x16x16x128xbf16>
    %c0_18 = arith.constant 0 : index
    %c1_19 = arith.constant 1 : index
    %c0_20 = arith.constant 0 : index
    %c256 = arith.constant 256 : index
    %25 = vector.load %arg12[%c0_18, %c1_19, %c0_20, %c256] : memref<2x18x16x384xbf16, #tpu.memory_space<vmem>>, vector<2x16x16x128xbf16>
    tpu.vector_store %arg12[%c0_18, %c1_19, %c0_20, %c256], %24 {strides = array<i32>} : memref<2x18x16x384xbf16, #tpu.memory_space<vmem>>, vector<2x16x16x128xbf16>,
    %c0_21 = arith.constant 0 : index
    %c0_22 = arith.constant 0 : index
    %c0_23 = arith.constant 0 : index
    %c0_24 = arith.constant 0 : index
    %26 = vector.load %arg12[%c0_21, %c0_22, %c0_23, %c0_24] : memref<2x18x16x384xbf16, #tpu.memory_space<vmem>>, vector<2x16x16x384xbf16>
    %27 = vector.shape_cast %26 : vector<2x16x16x384xbf16> to vector<512x384xbf16>
    %c0_25 = arith.constant 0 : index
    %c0_26 = arith.constant 0 : index
    %c0_27 = arith.constant 0 : index
    %28 = vector.load %arg2[%c0_25, %c0_26, %c0_27] : memref<3x384x128xbf16, #tpu.memory_space<vmem>>, vector<1x384x128xbf16>
    %29 = vector.shape_cast %28 : vector<1x384x128xbf16> to vector<384x128xbf16>
    %cst_28 = arith.constant dense<0.000000e+00> : vector<512x128xf32>
    %30 = tpu.matmul %27, %29, %cst_28 {dimension_numbers = #tpu.dot_dimension_numbers<[1], [0], [0], [1], [0, 0, 1, 1], [], []>} : vector<512x384xbf16>, vector<384x128xbf16>, vector<512x128xf32> -> vector<512x128xf32>
    %c0_29 = arith.constant 0 : index
    %c1_30 = arith.constant 1 : index
    %c0_31 = arith.constant 0 : index
    %c0_32 = arith.constant 0 : index
    %31 = vector.load %arg12[%c0_29, %c1_30, %c0_31, %c0_32] : memref<2x18x16x384xbf16, #tpu.memory_space<vmem>>, vector<2x16x16x384xbf16>
    %32 = vector.shape_cast %31 : vector<2x16x16x384xbf16> to vector<512x384xbf16>
    %c1_33 = arith.constant 1 : index
    %c0_34 = arith.constant 0 : index
    %c0_35 = arith.constant 0 : index
    %33 = vector.load %arg2[%c1_33, %c0_34, %c0_35] : memref<3x384x128xbf16, #tpu.memory_space<vmem>>, vector<1x384x128xbf16>
    %34 = vector.shape_cast %33 : vector<1x384x128xbf16> to vector<384x128xbf16>
    %cst_36 = arith.constant dense<0.000000e+00> : vector<512x128xf32>
    %35 = tpu.matmul %32, %34, %cst_36 {dimension_numbers = #tpu.dot_dimension_numbers<[1], [0], [0], [1], [0, 0, 1, 1], [], []>} : vector<512x384xbf16>, vector<384x128xbf16>, vector<512x128xf32> -> vector<512x128xf32>
    %36 = arith.addf %30, %35 : vector<512x128xf32>
    %c0_37 = arith.constant 0 : index
    %c2 = arith.constant 2 : index
    %c0_38 = arith.constant 0 : index
    %c0_39 = arith.constant 0 : index
    %37 = vector.load %arg12[%c0_37, %c2, %c0_38, %c0_39] : memref<2x18x16x384xbf16, #tpu.memory_space<vmem>>, vector<2x16x16x384xbf16>
    %38 = vector.shape_cast %37 : vector<2x16x16x384xbf16> to vector<512x384xbf16>
    %c2_40 = arith.constant 2 : index
    %c0_41 = arith.constant 0 : index
    %c0_42 = arith.constant 0 : index
    %39 = vector.load %arg2[%c2_40, %c0_41, %c0_42] : memref<3x384x128xbf16, #tpu.memory_space<vmem>>, vector<1x384x128xbf16>
    %40 = vector.shape_cast %39 : vector<1x384x128xbf16> to vector<384x128xbf16>
    %cst_43 = arith.constant dense<0.000000e+00> : vector<512x128xf32>
    %41 = tpu.matmul %38, %40, %cst_43 {dimension_numbers = #tpu.dot_dimension_numbers<[1], [0], [0], [1], [0, 0, 1, 1], [], []>} : vector<512x384xbf16>, vector<384x128xbf16>, vector<512x128xf32> -> vector<512x128xf32>
    %42 = arith.addf %36, %41 : vector<512x128xf32>
    %c0_44 = arith.constant 0 : index
    %c0_45 = arith.constant 0 : index
    %43 = vector.load %arg3[%c0_44, %c0_45] : memref<1x128xf32, #tpu.memory_space<vmem>>, vector<1x128xf32>
    %44 = vector.broadcast %43 : vector<1x128xf32> to vector<512x128xf32>
    %45 = arith.addf %42, %44 : vector<512x128xf32>
    %46 = vector.shape_cast %45 : vector<512x128xf32> to vector<2x256x128xf32>
    %c0_46 = arith.constant 0 : index
    %c0_47 = arith.constant 0 : index
    %c0_48 = arith.constant 0 : index
    %47 = vector.load %arg13[%c0_46, %c0_47, %c0_48] : memref<2x256x128xf32, #tpu.memory_space<vmem>>, vector<2x256x128xf32>
    tpu.vector_store %arg13[%c0_46, %c0_47, %c0_48], %46 {strides = array<i32>} : memref<2x256x128xf32, #tpu.memory_space<vmem>>, vector<2x256x128xf32>,
    %c0_49 = arith.constant 0 : index
    %c0_50 = arith.constant 0 : index
    %48 = memref.load %arg10[%c0_49, %c0_50] : memref<4x3xf32, #tpu.memory_space<smem>>
    %c0_51 = arith.constant 0 : index
    %c1_52 = arith.constant 1 : index
    %49 = memref.load %arg10[%c0_51, %c1_52] : memref<4x3xf32, #tpu.memory_space<smem>>
    %c0_53 = arith.constant 0 : index
    %c2_54 = arith.constant 2 : index
    %50 = memref.load %arg10[%c0_53, %c2_54] : memref<4x3xf32, #tpu.memory_space<smem>>
    %c1_55 = arith.constant 1 : index
    %c0_56 = arith.constant 0 : index
    %51 = memref.load %arg10[%c1_55, %c0_56] : memref<4x3xf32, #tpu.memory_space<smem>>
    %c1_57 = arith.constant 1 : index
    %c1_58 = arith.constant 1 : index
    %52 = memref.load %arg10[%c1_57, %c1_58] : memref<4x3xf32, #tpu.memory_space<smem>>
    %c1_59 = arith.constant 1 : index
    %c2_60 = arith.constant 2 : index
    %53 = memref.load %arg10[%c1_59, %c2_60] : memref<4x3xf32, #tpu.memory_space<smem>>
    %c0_61 = arith.constant 0 : index
    %c0_62 = arith.constant 0 : index
    %c0_63 = arith.constant 0 : index
    %54 = vector.load %arg13[%c0_61, %c0_62, %c0_63] : memref<2x256x128xf32, #tpu.memory_space<vmem>>, vector<2x256x128xf32>
    %cst_64 = arith.constant dense<0.000000e+00> : vector<2x128xf32>
    %55 = vector.multi_reduction <add>, %54, %cst_64 [1] : vector<2x256x128xf32> to vector<2x128xf32>
    %56 = vector.shape_cast %55 : vector<2x128xf32> to vector<2x1x128xf32>
    %cst_65 = arith.constant 2.560000e+02 : f32
    %57 = vector.broadcast %cst_65 : f32 to vector<2x1x128xf32>
    %58 = arith.divf %56, %57 : vector<2x1x128xf32>
    %59 = arith.mulf %54, %54 : vector<2x256x128xf32>
    %cst_66 = arith.constant dense<0.000000e+00> : vector<2x128xf32>
    %60 = vector.multi_reduction <add>, %59, %cst_66 [1] : vector<2x256x128xf32> to vector<2x128xf32>
    %61 = vector.shape_cast %60 : vector<2x128xf32> to vector<2x1x128xf32>
    %cst_67 = arith.constant 2.560000e+02 : f32
    %62 = vector.broadcast %cst_67 : f32 to vector<2x1x128xf32>
    %63 = arith.divf %61, %62 : vector<2x1x128xf32>
    %64 = arith.mulf %58, %58 : vector<2x1x128xf32>
    %65 = arith.subf %63, %64 : vector<2x1x128xf32>
    %cst_68 = arith.constant 1.00392163 : f32
    %66 = vector.broadcast %cst_68 : f32 to vector<2x1x128xf32>
    %67 = arith.mulf %65, %66 : vector<2x1x128xf32>
    %cst_69 = arith.constant dense<0.000000e+00> : vector<2x1xf32>
    %68 = vector.multi_reduction <add>, %58, %cst_69 [2] : vector<2x1x128xf32> to vector<2x1xf32>
    %69 = vector.shape_cast %68 : vector<2x1xf32> to vector<2x1x1xf32>
    %cst_70 = arith.constant 1.280000e+02 : f32
    %70 = vector.broadcast %cst_70 : f32 to vector<2x1x1xf32>
    %71 = arith.divf %69, %70 : vector<2x1x1xf32>
    %72 = arith.mulf %58, %58 : vector<2x1x128xf32>
    %73 = arith.addf %67, %72 : vector<2x1x128xf32>
    %cst_71 = arith.constant dense<0.000000e+00> : vector<2x1xf32>
    %74 = vector.multi_reduction <add>, %73, %cst_71 [2] : vector<2x1x128xf32> to vector<2x1xf32>
    %75 = vector.shape_cast %74 : vector<2x1xf32> to vector<2x1x1xf32>
    %cst_72 = arith.constant 1.280000e+02 : f32
    %76 = vector.broadcast %cst_72 : f32 to vector<2x1x1xf32>
    %77 = arith.divf %75, %76 : vector<2x1x1xf32>
    %78 = arith.mulf %71, %71 : vector<2x1x1xf32>
    %79 = arith.subf %77, %78 : vector<2x1x1xf32>
    %cst_73 = arith.constant dense<0.000000e+00> : vector<1x128xf32>
    %80 = vector.multi_reduction <add>, %58, %cst_73 [0] : vector<2x1x128xf32> to vector<1x128xf32>
    %81 = vector.shape_cast %80 : vector<1x128xf32> to vector<1x1x128xf32>
    %cst_74 = arith.constant 2.000000e+00 : f32
    %82 = vector.broadcast %cst_74 : f32 to vector<1x1x128xf32>
    %83 = arith.divf %81, %82 : vector<1x1x128xf32>
    %cst_75 = arith.constant dense<0.000000e+00> : vector<1x128xf32>
    %84 = vector.multi_reduction <add>, %73, %cst_75 [0] : vector<2x1x128xf32> to vector<1x128xf32>
    %85 = vector.shape_cast %84 : vector<1x128xf32> to vector<1x1x128xf32>
    %cst_76 = arith.constant 2.000000e+00 : f32
    %86 = vector.broadcast %cst_76 : f32 to vector<1x1x128xf32>
    %87 = arith.divf %85, %86 : vector<1x1x128xf32>
    %88 = arith.mulf %83, %83 : vector<1x1x128xf32>
    %89 = arith.subf %87, %88 : vector<1x1x128xf32>
    %90 = vector.broadcast %48 : f32 to vector<2x1x128xf32>
    %91 = arith.mulf %90, %58 : vector<2x1x128xf32>
    %92 = vector.broadcast %49 : f32 to vector<2x1x1xf32>
    %93 = arith.mulf %92, %71 : vector<2x1x1xf32>
    %94 = vector.broadcast %93 : vector<2x1x1xf32> to vector<2x1x128xf32>
    %95 = arith.addf %91, %94 : vector<2x1x128xf32>
    %96 = vector.broadcast %50 : f32 to vector<1x1x128xf32>
    %97 = arith.mulf %96, %83 : vector<1x1x128xf32>
    %98 = vector.broadcast %97 : vector<1x1x128xf32> to vector<2x1x128xf32>
    %99 = arith.addf %95, %98 : vector<2x1x128xf32>
    %100 = vector.broadcast %51 : f32 to vector<2x1x128xf32>
    %101 = arith.mulf %100, %67 : vector<2x1x128xf32>
    %102 = vector.broadcast %52 : f32 to vector<2x1x1xf32>
    %103 = arith.mulf %102, %79 : vector<2x1x1xf32>
    %104 = vector.broadcast %103 : vector<2x1x1xf32> to vector<2x1x128xf32>
    %105 = arith.addf %101, %104 : vector<2x1x128xf32>
    %106 = vector.broadcast %53 : f32 to vector<1x1x128xf32>
    %107 = arith.mulf %106, %89 : vector<1x1x128xf32>
    %108 = vector.broadcast %107 : vector<1x1x128xf32> to vector<2x1x128xf32>
    %109 = arith.addf %105, %108 : vector<2x1x128xf32>
    %cst_77 = arith.constant 0.000000e+00 : f32
    %110 = vector.broadcast %cst_77 : f32 to vector<2x1x128xf32>
    %111 = arith.maximumf %109, %110 : vector<2x1x128xf32>
    %cst_78 = arith.constant 9.99999974E-6 : f32
    %112 = vector.broadcast %cst_78 : f32 to vector<2x1x128xf32>
    %113 = arith.addf %111, %112 : vector<2x1x128xf32>
    %114 = math.rsqrt %113 : vector<2x1x128xf32>
    %c0_79 = arith.constant 0 : index
    %c0_80 = arith.constant 0 : index
    %115 = vector.load %arg4[%c0_79, %c0_80] : memref<1x128xf32, #tpu.memory_space<vmem>>, vector<1x128xf32>
    %116 = vector.shape_cast %115 : vector<1x128xf32> to vector<1x1x128xf32>
    %117 = vector.broadcast %116 : vector<1x1x128xf32> to vector<2x1x128xf32>
    %118 = arith.mulf %114, %117 : vector<2x1x128xf32>
    %c0_81 = arith.constant 0 : index
    %c0_82 = arith.constant 0 : index
    %119 = vector.load %arg5[%c0_81, %c0_82] : memref<1x128xf32, #tpu.memory_space<vmem>>, vector<1x128xf32>
    %120 = vector.shape_cast %119 : vector<1x128xf32> to vector<1x1x128xf32>
    %121 = arith.mulf %99, %118 : vector<2x1x128xf32>
    %122 = vector.broadcast %120 : vector<1x1x128xf32> to vector<2x1x128xf32>
    %123 = arith.subf %122, %121 : vector<2x1x128xf32>
    %c0_83 = arith.constant 0 : index
    %c0_84 = arith.constant 0 : index
    %c0_85 = arith.constant 0 : index
    %124 = vector.load %arg13[%c0_83, %c0_84, %c0_85] : memref<2x256x128xf32, #tpu.memory_space<vmem>>, vector<2x256x128xf32>
    %125 = vector.broadcast %118 : vector<2x1x128xf32> to vector<2x256x128xf32>
    %126 = arith.mulf %124, %125 : vector<2x256x128xf32>
    %127 = vector.broadcast %123 : vector<2x1x128xf32> to vector<2x256x128xf32>
    %128 = arith.addf %126, %127 : vector<2x256x128xf32>
    %cst_86 = arith.constant 0.000000e+00 : f32
    %129 = vector.broadcast %cst_86 : f32 to vector<2x256x128xf32>
    %130 = arith.maximumf %128, %129 : vector<2x256x128xf32>
    %c0_87 = arith.constant 0 : index
    %c0_88 = arith.constant 0 : index
    %c0_89 = arith.constant 0 : index
    %131 = vector.load %arg13[%c0_87, %c0_88, %c0_89] : memref<2x256x128xf32, #tpu.memory_space<vmem>>, vector<2x256x128xf32>
    tpu.vector_store %arg13[%c0_87, %c0_88, %c0_89], %130 {strides = array<i32>} : memref<2x256x128xf32, #tpu.memory_space<vmem>>, vector<2x256x128xf32>,
    %c0_90 = arith.constant 0 : index
    %c0_91 = arith.constant 0 : index
    %c0_92 = arith.constant 0 : index
    %132 = vector.load %arg13[%c0_90, %c0_91, %c0_92] : memref<2x256x128xf32, #tpu.memory_space<vmem>>, vector<2x256x128xf32>
    %133 = vector.shape_cast %132 : vector<2x256x128xf32> to vector<2x16x16x128xf32>
    %c1_i32_93 = arith.constant 1 : i32
    %134 = tpu.dynamic_rotate %133 by %c1_i32_93 dim 2 : vector<2x16x16x128xf32>, i32 -> vector<2x16x16x128xf32>
    %135 = vector.broadcast %8 : vector<1x1x16x128xf32> to vector<2x16x16x128xf32>
    %136 = arith.mulf %134, %135 : vector<2x16x16x128xf32>
    %c15_i32_94 = arith.constant 15 : i32
    %137 = tpu.dynamic_rotate %133 by %c15_i32_94 dim 2 : vector<2x16x16x128xf32>, i32 -> vector<2x16x16x128xf32>
    %138 = vector.broadcast %12 : vector<1x1x16x128xf32> to vector<2x16x16x128xf32>
    %139 = arith.mulf %137, %138 : vector<2x16x16x128xf32>
    %140 = arith.truncf %136 : vector<2x16x16x128xf32> to vector<2x16x16x128xbf16>
    %c0_95 = arith.constant 0 : index
    %c1_96 = arith.constant 1 : index
    %c0_97 = arith.constant 0 : index
    %c0_98 = arith.constant 0 : index
    %141 = vector.load %arg12[%c0_95, %c1_96, %c0_97, %c0_98] : memref<2x18x16x384xbf16, #tpu.memory_space<vmem>>, vector<2x16x16x128xbf16>
    tpu.vector_store %arg12[%c0_95, %c1_96, %c0_97, %c0_98], %140 {strides = array<i32>} : memref<2x18x16x384xbf16, #tpu.memory_space<vmem>>, vector<2x16x16x128xbf16>,
    %142 = arith.truncf %133 : vector<2x16x16x128xf32> to vector<2x16x16x128xbf16>
    %c0_99 = arith.constant 0 : index
    %c1_100 = arith.constant 1 : index
    %c0_101 = arith.constant 0 : index
    %c128_102 = arith.constant 128 : index
    %143 = vector.load %arg12[%c0_99, %c1_100, %c0_101, %c128_102] : memref<2x18x16x384xbf16, #tpu.memory_space<vmem>>, vector<2x16x16x128xbf16>
    tpu.vector_store %arg12[%c0_99, %c1_100, %c0_101, %c128_102], %142 {strides = array<i32>} : memref<2x18x16x384xbf16, #tpu.memory_space<vmem>>, vector<2x16x16x128xbf16>,
    %144 = arith.truncf %139 : vector<2x16x16x128xf32> to vector<2x16x16x128xbf16>
    %c0_103 = arith.constant 0 : index
    %c1_104 = arith.constant 1 : index
    %c0_105 = arith.constant 0 : index
    %c256_106 = arith.constant 256 : index
    %145 = vector.load %arg12[%c0_103, %c1_104, %c0_105, %c256_106] : memref<2x18x16x384xbf16, #tpu.memory_space<vmem>>, vector<2x16x16x128xbf16>
    tpu.vector_store %arg12[%c0_103, %c1_104, %c0_105, %c256_106], %144 {strides = array<i32>} : memref<2x18x16x384xbf16, #tpu.memory_space<vmem>>, vector<2x16x16x128xbf16>,
    %c0_107 = arith.constant 0 : index
    %c0_108 = arith.constant 0 : index
    %c0_109 = arith.constant 0 : index
    %c0_110 = arith.constant 0 : index
    %146 = vector.load %arg12[%c0_107, %c0_108, %c0_109, %c0_110] : memref<2x18x16x384xbf16, #tpu.memory_space<vmem>>, vector<2x16x16x384xbf16>
    %147 = vector.shape_cast %146 : vector<2x16x16x384xbf16> to vector<512x384xbf16>
    %c0_111 = arith.constant 0 : index
    %c0_112 = arith.constant 0 : index
    %c0_113 = arith.constant 0 : index
    %148 = vector.load %arg6[%c0_111, %c0_112, %c0_113] : memref<3x384x128xbf16, #tpu.memory_space<vmem>>, vector<1x384x128xbf16>
    %149 = vector.shape_cast %148 : vector<1x384x128xbf16> to vector<384x128xbf16>
    %cst_114 = arith.constant dense<0.000000e+00> : vector<512x128xf32>
    %150 = tpu.matmul %147, %149, %cst_114 {dimension_numbers = #tpu.dot_dimension_numbers<[1], [0], [0], [1], [0, 0, 1, 1], [], []>} : vector<512x384xbf16>, vector<384x128xbf16>, vector<512x128xf32> -> vector<512x128xf32>
    %c0_115 = arith.constant 0 : index
    %c1_116 = arith.constant 1 : index
    %c0_117 = arith.constant 0 : index
    %c0_118 = arith.constant 0 : index
    %151 = vector.load %arg12[%c0_115, %c1_116, %c0_117, %c0_118] : memref<2x18x16x384xbf16, #tpu.memory_space<vmem>>, vector<2x16x16x384xbf16>
    %152 = vector.shape_cast %151 : vector<2x16x16x384xbf16> to vector<512x384xbf16>
    %c1_119 = arith.constant 1 : index
    %c0_120 = arith.constant 0 : index
    %c0_121 = arith.constant 0 : index
    %153 = vector.load %arg6[%c1_119, %c0_120, %c0_121] : memref<3x384x128xbf16, #tpu.memory_space<vmem>>, vector<1x384x128xbf16>
    %154 = vector.shape_cast %153 : vector<1x384x128xbf16> to vector<384x128xbf16>
    %cst_122 = arith.constant dense<0.000000e+00> : vector<512x128xf32>
    %155 = tpu.matmul %152, %154, %cst_122 {dimension_numbers = #tpu.dot_dimension_numbers<[1], [0], [0], [1], [0, 0, 1, 1], [], []>} : vector<512x384xbf16>, vector<384x128xbf16>, vector<512x128xf32> -> vector<512x128xf32>
    %156 = arith.addf %150, %155 : vector<512x128xf32>
    %c0_123 = arith.constant 0 : index
    %c2_124 = arith.constant 2 : index
    %c0_125 = arith.constant 0 : index
    %c0_126 = arith.constant 0 : index
    %157 = vector.load %arg12[%c0_123, %c2_124, %c0_125, %c0_126] : memref<2x18x16x384xbf16, #tpu.memory_space<vmem>>, vector<2x16x16x384xbf16>
    %158 = vector.shape_cast %157 : vector<2x16x16x384xbf16> to vector<512x384xbf16>
    %c2_127 = arith.constant 2 : index
    %c0_128 = arith.constant 0 : index
    %c0_129 = arith.constant 0 : index
    %159 = vector.load %arg6[%c2_127, %c0_128, %c0_129] : memref<3x384x128xbf16, #tpu.memory_space<vmem>>, vector<1x384x128xbf16>
    %160 = vector.shape_cast %159 : vector<1x384x128xbf16> to vector<384x128xbf16>
    %cst_130 = arith.constant dense<0.000000e+00> : vector<512x128xf32>
    %161 = tpu.matmul %158, %160, %cst_130 {dimension_numbers = #tpu.dot_dimension_numbers<[1], [0], [0], [1], [0, 0, 1, 1], [], []>} : vector<512x384xbf16>, vector<384x128xbf16>, vector<512x128xf32> -> vector<512x128xf32>
    %162 = arith.addf %156, %161 : vector<512x128xf32>
    %c0_131 = arith.constant 0 : index
    %c0_132 = arith.constant 0 : index
    %163 = vector.load %arg7[%c0_131, %c0_132] : memref<1x128xf32, #tpu.memory_space<vmem>>, vector<1x128xf32>
    %164 = vector.broadcast %163 : vector<1x128xf32> to vector<512x128xf32>
    %165 = arith.addf %162, %164 : vector<512x128xf32>
    %166 = vector.shape_cast %165 : vector<512x128xf32> to vector<2x256x128xf32>
    %c0_133 = arith.constant 0 : index
    %c0_134 = arith.constant 0 : index
    %c0_135 = arith.constant 0 : index
    %167 = vector.load %arg13[%c0_133, %c0_134, %c0_135] : memref<2x256x128xf32, #tpu.memory_space<vmem>>, vector<2x256x128xf32>
    tpu.vector_store %arg13[%c0_133, %c0_134, %c0_135], %166 {strides = array<i32>} : memref<2x256x128xf32, #tpu.memory_space<vmem>>, vector<2x256x128xf32>,
    %c2_136 = arith.constant 2 : index
    %c0_137 = arith.constant 0 : index
    %168 = memref.load %arg10[%c2_136, %c0_137] : memref<4x3xf32, #tpu.memory_space<smem>>
    %c2_138 = arith.constant 2 : index
    %c1_139 = arith.constant 1 : index
    %169 = memref.load %arg10[%c2_138, %c1_139] : memref<4x3xf32, #tpu.memory_space<smem>>
    %c2_140 = arith.constant 2 : index
    %c2_141 = arith.constant 2 : index
    %170 = memref.load %arg10[%c2_140, %c2_141] : memref<4x3xf32, #tpu.memory_space<smem>>
    %c3 = arith.constant 3 : index
    %c0_142 = arith.constant 0 : index
    %171 = memref.load %arg10[%c3, %c0_142] : memref<4x3xf32, #tpu.memory_space<smem>>
    %c3_143 = arith.constant 3 : index
    %c1_144 = arith.constant 1 : index
    %172 = memref.load %arg10[%c3_143, %c1_144] : memref<4x3xf32, #tpu.memory_space<smem>>
    %c3_145 = arith.constant 3 : index
    %c2_146 = arith.constant 2 : index
    %173 = memref.load %arg10[%c3_145, %c2_146] : memref<4x3xf32, #tpu.memory_space<smem>>
    %c0_147 = arith.constant 0 : index
    %c0_148 = arith.constant 0 : index
    %c0_149 = arith.constant 0 : index
    %174 = vector.load %arg13[%c0_147, %c0_148, %c0_149] : memref<2x256x128xf32, #tpu.memory_space<vmem>>, vector<2x256x128xf32>
    %cst_150 = arith.constant dense<0.000000e+00> : vector<2x128xf32>
    %175 = vector.multi_reduction <add>, %174, %cst_150 [1] : vector<2x256x128xf32> to vector<2x128xf32>
    %176 = vector.shape_cast %175 : vector<2x128xf32> to vector<2x1x128xf32>
    %cst_151 = arith.constant 2.560000e+02 : f32
    %177 = vector.broadcast %cst_151 : f32 to vector<2x1x128xf32>
    %178 = arith.divf %176, %177 : vector<2x1x128xf32>
    %179 = arith.mulf %174, %174 : vector<2x256x128xf32>
    %cst_152 = arith.constant dense<0.000000e+00> : vector<2x128xf32>
    %180 = vector.multi_reduction <add>, %179, %cst_152 [1] : vector<2x256x128xf32> to vector<2x128xf32>
    %181 = vector.shape_cast %180 : vector<2x128xf32> to vector<2x1x128xf32>
    %cst_153 = arith.constant 2.560000e+02 : f32
    %182 = vector.broadcast %cst_153 : f32 to vector<2x1x128xf32>
    %183 = arith.divf %181, %182 : vector<2x1x128xf32>
    %184 = arith.mulf %178, %178 : vector<2x1x128xf32>
    %185 = arith.subf %183, %184 : vector<2x1x128xf32>
    %cst_154 = arith.constant 1.00392163 : f32
    %186 = vector.broadcast %cst_154 : f32 to vector<2x1x128xf32>
    %187 = arith.mulf %185, %186 : vector<2x1x128xf32>
    %cst_155 = arith.constant dense<0.000000e+00> : vector<2x1xf32>
    %188 = vector.multi_reduction <add>, %178, %cst_155 [2] : vector<2x1x128xf32> to vector<2x1xf32>
    %189 = vector.shape_cast %188 : vector<2x1xf32> to vector<2x1x1xf32>
    %cst_156 = arith.constant 1.280000e+02 : f32
    %190 = vector.broadcast %cst_156 : f32 to vector<2x1x1xf32>
    %191 = arith.divf %189, %190 : vector<2x1x1xf32>
    %192 = arith.mulf %178, %178 : vector<2x1x128xf32>
    %193 = arith.addf %187, %192 : vector<2x1x128xf32>
    %cst_157 = arith.constant dense<0.000000e+00> : vector<2x1xf32>
    %194 = vector.multi_reduction <add>, %193, %cst_157 [2] : vector<2x1x128xf32> to vector<2x1xf32>
    %195 = vector.shape_cast %194 : vector<2x1xf32> to vector<2x1x1xf32>
    %cst_158 = arith.constant 1.280000e+02 : f32
    %196 = vector.broadcast %cst_158 : f32 to vector<2x1x1xf32>
    %197 = arith.divf %195, %196 : vector<2x1x1xf32>
    %198 = arith.mulf %191, %191 : vector<2x1x1xf32>
    %199 = arith.subf %197, %198 : vector<2x1x1xf32>
    %cst_159 = arith.constant dense<0.000000e+00> : vector<1x128xf32>
    %200 = vector.multi_reduction <add>, %178, %cst_159 [0] : vector<2x1x128xf32> to vector<1x128xf32>
    %201 = vector.shape_cast %200 : vector<1x128xf32> to vector<1x1x128xf32>
    %cst_160 = arith.constant 2.000000e+00 : f32
    %202 = vector.broadcast %cst_160 : f32 to vector<1x1x128xf32>
    %203 = arith.divf %201, %202 : vector<1x1x128xf32>
    %cst_161 = arith.constant dense<0.000000e+00> : vector<1x128xf32>
    %204 = vector.multi_reduction <add>, %193, %cst_161 [0] : vector<2x1x128xf32> to vector<1x128xf32>
    %205 = vector.shape_cast %204 : vector<1x128xf32> to vector<1x1x128xf32>
    %cst_162 = arith.constant 2.000000e+00 : f32
    %206 = vector.broadcast %cst_162 : f32 to vector<1x1x128xf32>
    %207 = arith.divf %205, %206 : vector<1x1x128xf32>
    %208 = arith.mulf %203, %203 : vector<1x1x128xf32>
    %209 = arith.subf %207, %208 : vector<1x1x128xf32>
    %210 = vector.broadcast %168 : f32 to vector<2x1x128xf32>
    %211 = arith.mulf %210, %178 : vector<2x1x128xf32>
    %212 = vector.broadcast %169 : f32 to vector<2x1x1xf32>
    %213 = arith.mulf %212, %191 : vector<2x1x1xf32>
    %214 = vector.broadcast %213 : vector<2x1x1xf32> to vector<2x1x128xf32>
    %215 = arith.addf %211, %214 : vector<2x1x128xf32>
    %216 = vector.broadcast %170 : f32 to vector<1x1x128xf32>
    %217 = arith.mulf %216, %203 : vector<1x1x128xf32>
    %218 = vector.broadcast %217 : vector<1x1x128xf32> to vector<2x1x128xf32>
    %219 = arith.addf %215, %218 : vector<2x1x128xf32>
    %220 = vector.broadcast %171 : f32 to vector<2x1x128xf32>
    %221 = arith.mulf %220, %187 : vector<2x1x128xf32>
    %222 = vector.broadcast %172 : f32 to vector<2x1x1xf32>
    %223 = arith.mulf %222, %199 : vector<2x1x1xf32>
    %224 = vector.broadcast %223 : vector<2x1x1xf32> to vector<2x1x128xf32>
    %225 = arith.addf %221, %224 : vector<2x1x128xf32>
    %226 = vector.broadcast %173 : f32 to vector<1x1x128xf32>
    %227 = arith.mulf %226, %209 : vector<1x1x128xf32>
    %228 = vector.broadcast %227 : vector<1x1x128xf32> to vector<2x1x128xf32>
    %229 = arith.addf %225, %228 : vector<2x1x128xf32>
    %cst_163 = arith.constant 0.000000e+00 : f32
    %230 = vector.broadcast %cst_163 : f32 to vector<2x1x128xf32>
    %231 = arith.maximumf %229, %230 : vector<2x1x128xf32>
    %cst_164 = arith.constant 9.99999974E-6 : f32
    %232 = vector.broadcast %cst_164 : f32 to vector<2x1x128xf32>
    %233 = arith.addf %231, %232 : vector<2x1x128xf32>
    %234 = math.rsqrt %233 : vector<2x1x128xf32>
    %c0_165 = arith.constant 0 : index
    %c0_166 = arith.constant 0 : index
    %235 = vector.load %arg8[%c0_165, %c0_166] : memref<1x128xf32, #tpu.memory_space<vmem>>, vector<1x128xf32>
    %236 = vector.shape_cast %235 : vector<1x128xf32> to vector<1x1x128xf32>
    %237 = vector.broadcast %236 : vector<1x1x128xf32> to vector<2x1x128xf32>
    %238 = arith.mulf %234, %237 : vector<2x1x128xf32>
    %c0_167 = arith.constant 0 : index
    %c0_168 = arith.constant 0 : index
    %239 = vector.load %arg9[%c0_167, %c0_168] : memref<1x128xf32, #tpu.memory_space<vmem>>, vector<1x128xf32>
    %240 = vector.shape_cast %239 : vector<1x128xf32> to vector<1x1x128xf32>
    %241 = arith.mulf %219, %238 : vector<2x1x128xf32>
    %242 = vector.broadcast %240 : vector<1x1x128xf32> to vector<2x1x128xf32>
    %243 = arith.subf %242, %241 : vector<2x1x128xf32>
    %c0_169 = arith.constant 0 : index
    %c0_170 = arith.constant 0 : index
    %c0_171 = arith.constant 0 : index
    %244 = vector.load %arg13[%c0_169, %c0_170, %c0_171] : memref<2x256x128xf32, #tpu.memory_space<vmem>>, vector<2x256x128xf32>
    %245 = vector.broadcast %238 : vector<2x1x128xf32> to vector<2x256x128xf32>
    %246 = arith.mulf %244, %245 : vector<2x256x128xf32>
    %247 = vector.broadcast %243 : vector<2x1x128xf32> to vector<2x256x128xf32>
    %248 = arith.addf %246, %247 : vector<2x256x128xf32>
    %c0_172 = arith.constant 0 : index
    %c0_173 = arith.constant 0 : index
    %c0_174 = arith.constant 0 : index
    %c0_175 = arith.constant 0 : index
    %249 = vector.load %arg1[%c0_172, %c0_173, %c0_174, %c0_175] : memref<2x16x16x128xf32, #tpu.memory_space<vmem>>, vector<2x16x16x128xf32>
    %250 = vector.shape_cast %249 : vector<2x16x16x128xf32> to vector<2x256x128xf32>
    %251 = arith.addf %250, %248 : vector<2x256x128xf32>
    %252 = vector.shape_cast %251 : vector<2x256x128xf32> to vector<2x16x16x128xf32>
    %c0_176 = arith.constant 0 : index
    %c0_177 = arith.constant 0 : index
    %c0_178 = arith.constant 0 : index
    %c0_179 = arith.constant 0 : index
    %253 = vector.load %arg11[%c0_176, %c0_177, %c0_178, %c0_179] : memref<2x16x16x128xf32, #tpu.memory_space<vmem>>, vector<2x16x16x128xf32>
    tpu.vector_store %arg11[%c0_176, %c0_177, %c0_178, %c0_179], %252 {strides = array<i32>} : memref<2x16x16x128xf32, #tpu.memory_space<vmem>>, vector<2x16x16x128xf32>,
    return
  }
  func.func @transform_0(%arg0: i32) -> (i32, i32, i32, i32) {
    %c0_i32 = arith.constant 0 : i32
    %c0_i32_0 = arith.constant 0 : i32
    %c0_i32_1 = arith.constant 0 : i32
    %c0_i32_2 = arith.constant 0 : i32
    %c0_i32_3 = arith.constant 0 : i32
    return %c0_i32, %c0_i32_0, %c0_i32_1, %c0_i32_2 : i32, i32, i32, i32
  }
  func.func @transform_1(%arg0: i32) -> (i32, i32, i32) {
    %c0_i32 = arith.constant 0 : i32
    %c0_i32_0 = arith.constant 0 : i32
    %c0_i32_1 = arith.constant 0 : i32
    %c0_i32_2 = arith.constant 0 : i32
    return %c0_i32, %c0_i32_0, %c0_i32_1 : i32, i32, i32
  }
  func.func @transform_2(%arg0: i32) -> (i32, i32) {
    %c0_i32 = arith.constant 0 : i32
    %c0_i32_0 = arith.constant 0 : i32
    %c0_i32_1 = arith.constant 0 : i32
    return %c0_i32, %c0_i32_0 : i32, i32
  }
  func.func @transform_3(%arg0: i32) -> (i32, i32) {
    %c0_i32 = arith.constant 0 : i32
    %c0_i32_0 = arith.constant 0 : i32
    %c0_i32_1 = arith.constant 0 : i32
    return %c0_i32, %c0_i32_0 : i32, i32
  }
  func.func @transform_4(%arg0: i32) -> (i32, i32) {
    %c0_i32 = arith.constant 0 : i32
    %c0_i32_0 = arith.constant 0 : i32
    %c0_i32_1 = arith.constant 0 : i32
    return %c0_i32, %c0_i32_0 : i32, i32
  }
  func.func @transform_5(%arg0: i32) -> (i32, i32, i32) {
    %c0_i32 = arith.constant 0 : i32
    %c0_i32_0 = arith.constant 0 : i32
    %c0_i32_1 = arith.constant 0 : i32
    %c0_i32_2 = arith.constant 0 : i32
    return %c0_i32, %c0_i32_0, %c0_i32_1 : i32, i32, i32
  }
  func.func @transform_6(%arg0: i32) -> (i32, i32) {
    %c0_i32 = arith.constant 0 : i32
    %c0_i32_0 = arith.constant 0 : i32
    %c0_i32_1 = arith.constant 0 : i32
    return %c0_i32, %c0_i32_0 : i32, i32
  }
  func.func @transform_7(%arg0: i32) -> (i32, i32) {
    %c0_i32 = arith.constant 0 : i32
    %c0_i32_0 = arith.constant 0 : i32
    %c0_i32_1 = arith.constant 0 : i32
    return %c0_i32, %c0_i32_0 : i32, i32
  }
  func.func @transform_8(%arg0: i32) -> (i32, i32) {
    %c0_i32 = arith.constant 0 : i32
    %c0_i32_0 = arith.constant 0 : i32
    %c0_i32_1 = arith.constant 0 : i32
    return %c0_i32, %c0_i32_0 : i32, i32
  }
  func.func @transform_9(%arg0: i32) -> (i32, i32) {
    %c0_i32 = arith.constant 0 : i32
    %c0_i32_0 = arith.constant 0 : i32
    %c0_i32_1 = arith.constant 0 : i32
    return %c0_i32, %c0_i32_0 : i32, i32
  }
  func.func @transform_10(%arg0: i32) -> (i32, i32, i32, i32) {
    %c0_i32 = arith.constant 0 : i32
    %c0_i32_0 = arith.constant 0 : i32
    %c0_i32_1 = arith.constant 0 : i32
    %c0_i32_2 = arith.constant 0 : i32
    %c0_i32_3 = arith.constant 0 : i32
    return %c0_i32, %c0_i32_0, %c0_i32_1, %c0_i32_2 : i32, i32, i32, i32
  }
}

</mosaic_0001>

<llo_original>
// kernel: residual_block_forward.1
$region0: #{residual_block_forward.1}
  #allocation0 [shape = 'u32[]', space=smem, size = 0x4, offset = 0x4, fixed_abs, tag = 'smem constant byte address 0x4 - core index']
  #allocation1 [shape = 'u32[144,128]{1,0:T(1,128)}', space=vmem, size = 0x12000, scoped, tag = 'internal scratch']
  #allocation2 [shape = 'bf16[2,18,16,384]{3,2,1,0:T(16,128)(2,1)}', space=vmem, size = 0x6c000, scoped, tag = 'scratch operand']
  #allocation3 [shape = 'f32[2,256,128]{2,1,0:T(8,128)}', space=vmem, size = 0x40000, scoped, tag = 'scratch operand']
  %s0 = inlined_call_operand.vmem [shape: f32[2,16,16,128], index: 0, kind: input, shape index: {}]
  %s1 = inlined_call_operand.vmem [shape: bf16[3,384,128], index: 1, kind: input, shape index: {}]
  %s2 = inlined_call_operand.vmem [shape: f32[1,128], index: 2, kind: input, shape index: {}]
  %s3 = inlined_call_operand.vmem [shape: f32[1,128], index: 3, kind: input, shape index: {}]
  %s4 = inlined_call_operand.vmem [shape: f32[1,128], index: 4, kind: input, shape index: {}]
  %s5 = inlined_call_operand.vmem [shape: bf16[3,384,128], index: 5, kind: input, shape index: {}]
  %s6 = inlined_call_operand.vmem [shape: f32[1,128], index: 6, kind: input, shape index: {}]
  %s7 = inlined_call_operand.vmem [shape: f32[1,128], index: 7, kind: input, shape index: {}]
  %s8 = inlined_call_operand.vmem [shape: f32[1,128], index: 8, kind: input, shape index: {}]
  %s9 = inlined_call_operand.vmem [shape: f32[4,3], index: 9, kind: input, shape index: {}]
  %s10 = inlined_call_operand.hbm [shape: f32[2,16,16,128], index: 10, kind: output, shape index: {}]
  %s11 = sld [smem:[#allocation0]]
  $region54: #{residual_block_forward.1} parent=0
    _
  %s13 = ssub.s32 1, %s11
  %s14 = scalar_select 0, %s13, %s11
  $region1: #{residual_block_forward.1} parent=0
    #allocation4 [shape = 'u8[2048]{0}', space=smem, size = 0x800, scoped, tag = 'input window, operand 9, single buffered']
    #allocation5 [shape = 's32[1]{0}', space=sflag, size = 0x4, scoped, tag = 'scoped memory for residual_block_forward.1']
    #allocation6 [shape = 's32[1]{0}', space=sflag, size = 0x4, scoped, tag = 'scoped memory for residual_block_forward.1']
    #allocation7 [shape = 'u8[262144]{0}', space=vmem, size = 0x40000, scoped, tag = 'output window, operand 0, single buffered']
    %15 = vsyncpa [#allocation6], 0
    %16 = vsyncpa [#allocation5], 0
    // Predicated region
    $region2: #{residual_block_forward.1} parent=1 // pred_check
      _
    $region3: #{residual_block_forward.1} parent=1 // pred_check_branch
      %18 = sbr.rel (0) target = $region5
    $region4: #{residual_block_forward.1} parent=1 // pred_region
      _
    $region5: #{residual_block_forward.1} parent=1 // pred_fallthru
      _
    // Predicated region
    $region6: #{residual_block_forward.1} parent=1 // pred_check
      _
    $region7: #{residual_block_forward.1} parent=1 // pred_check_branch
      %20 = sbr.rel (0) target = $region9
    $region8: #{residual_block_forward.1} parent=1 // pred_region
      _
    $region9: #{residual_block_forward.1} parent=1 // pred_fallthru
      _
    // Predicated region
    $region10: #{residual_block_forward.1} parent=1 // pred_check
      _
    $region11: #{residual_block_forward.1} parent=1 // pred_check_branch
      %22 = sbr.rel (0) target = $region13
    $region12: #{residual_block_forward.1} parent=1 // pred_region
      _
    $region13: #{residual_block_forward.1} parent=1 // pred_fallthru
      _
    // Predicated region
    $region14: #{residual_block_forward.1} parent=1 // pred_check
      _
    $region15: #{residual_block_forward.1} parent=1 // pred_check_branch
      %24 = sbr.rel (0) target = $region17
    $region16: #{residual_block_forward.1} parent=1 // pred_region
      _
    $region17: #{residual_block_forward.1} parent=1 // pred_fallthru
      _
    // Predicated region
    $region18: #{residual_block_forward.1} parent=1 // pred_check
      _
    $region19: #{residual_block_forward.1} parent=1 // pred_check_branch
      %26 = sbr.rel (0) target = $region21
    $region20: #{residual_block_forward.1} parent=1 // pred_region
      _
    $region21: #{residual_block_forward.1} parent=1 // pred_fallthru
      _
    // Predicated region
    $region22: #{residual_block_forward.1} parent=1 // pred_check
      _
    $region23: #{residual_block_forward.1} parent=1 // pred_check_branch
      %28 = sbr.rel (0) target = $region25
    $region24: #{residual_block_forward.1} parent=1 // pred_region
      _
    $region25: #{residual_block_forward.1} parent=1 // pred_fallthru
      _
    // Predicated region
    $region26: #{residual_block_forward.1} parent=1 // pred_check
      _
    $region27: #{residual_block_forward.1} parent=1 // pred_check_branch
      %30 = sbr.rel (0) target = $region29
    $region28: #{residual_block_forward.1} parent=1 // pred_region
      _
    $region29: #{residual_block_forward.1} parent=1 // pred_fallthru
      _
    // Predicated region
    $region30: #{residual_block_forward.1} parent=1 // pred_check
      _
    $region31: #{residual_block_forward.1} parent=1 // pred_check_branch
      %32 = sbr.rel (0) target = $region33
    $region32: #{residual_block_forward.1} parent=1 // pred_region
      _
    $region33: #{residual_block_forward.1} parent=1 // pred_fallthru
      _
    // Predicated region
    $region34: #{residual_block_forward.1} parent=1 // pred_check
      _
    $region35: #{residual_block_forward.1} parent=1 // pred_check_branch
      %34 = sbr.rel (0) target = $region37
    $region36: #{residual_block_forward.1} parent=1 // pred_region
      _
    $region37: #{residual_block_forward.1} parent=1 // pred_fallthru
      _
    // Predicated region
    $region38: #{residual_block_forward.1} parent=1 // pred_check
      _
    $region39: #{residual_block_forward.1} parent=1 // pred_check_branch
      %36 = sbr.rel (0) target = $region41
    $region40: #{residual_block_forward.1} parent=1 // pred_region
      %s38 = ssub.s32 64, 64
      %39 = vsyncadd [#allocation6], %s38
      %s41 = sshll.u32 %s9, 4
      %s42 = int_to_ptr.vmem [resolvable:$true] %s41
      %44 = dma.vmem_to_smem %s42, 64, [#allocation4], [#allocation6]
    $region41: #{residual_block_forward.1} parent=1 // pred_fallthru
      _
    // Predicated region
    $region42: #{residual_block_forward.1} parent=1 // pred_check
      _
    $region43: #{residual_block_forward.1} parent=1 // pred_check_branch
      %46 = sbr.rel (0) target = $region45
    $region44: #{residual_block_forward.1} parent=1 // pred_region
      %47 = dma.done [#allocation6], 64
    $region45: #{residual_block_forward.1} parent=1 // pred_fallthru
      _
    %48 = sfence
    %50 = vst [vmem:[#allocation2] sm:$0xff] 0
    %51 = vst [vmem:[#allocation2 + $0x8] sm:$0xff] 0
    %52 = vst [vmem:[#allocation2 + $0x10] sm:$0xff] 0
    %53 = vst [vmem:[#allocation2 + $0x1b0] sm:$0xff] 0
    %54 = vst [vmem:[#allocation2 + $0x1b8] sm:$0xff] 0
    %55 = vst [vmem:[#allocation2 + $0x1c0] sm:$0xff] 0
    %s56 = scalar_lea.vmem [#allocation2], 408
    %57 = vst [vmem:[%s56] sm:$0xff] 0
    %58 = vst [vmem:[%s56 + $0x8] sm:$0xff] 0
    %59 = vst [vmem:[%s56 + $0x10] sm:$0xff] 0
    %60 = vst [vmem:[%s56 + $0x1b0] sm:$0xff] 0
    %61 = vst [vmem:[%s56 + $0x1b8] sm:$0xff] 0
    %62 = vst [vmem:[%s56 + $0x1c0] sm:$0xff] 0
    %v63 = vlaneseq
    %v64 = vshrl.u32 %v63, 7
    %v65 = vadd.s32 %v64, 8
    %vm66 = vcmp.ne.s32.totalorder %v64, 0
    %vm67 = vcmp.ne.s32.totalorder %v65, 0
    %v68 = vsel %vm66, 1, 0
    %v69 = vsel %vm67, 1, 0
    %v70 = vcvt.s32.f32 %v68
    %v71 = vcvt.s32.f32 %v69
    %vm72 = vcmp.ne.s32.totalorder %v64, 15
    %vm73 = vcmp.ne.s32.totalorder %v65, 15
    %v74 = vsel %vm72, 1, 0
    %v75 = vsel %vm73, 1, 0
    %v76 = vcvt.s32.f32 %v74
    %v77 = vcvt.s32.f32 %v75
    %v78 = vld [vmem:[%s0] sm:$0xff]
    %v79 = vld [vmem:[%s0 + $0x8] sm:$0xff]
    %v80 = vld [vmem:[%s0 + $0x10] sm:$0xff]
    %v81 = vld [vmem:[%s0 + $0x18] sm:$0xff]
    %v82 = vld [vmem:[%s0 + $0x20] sm:$0xff]
    %v83 = vld [vmem:[%s0 + $0x28] sm:$0xff]
    %v84 = vld [vmem:[%s0 + $0x30] sm:$0xff]
    %v85 = vld [vmem:[%s0 + $0x38] sm:$0xff]
    %v86 = vld [vmem:[%s0 + $0x40] sm:$0xff]
    %v87 = vld [vmem:[%s0 + $0x48] sm:$0xff]
    %v88 = vld [vmem:[%s0 + $0x50] sm:$0xff]
    %v89 = vld [vmem:[%s0 + $0x58] sm:$0xff]
    %v90 = vld [vmem:[%s0 + $0x60] sm:$0xff]
    %v91 = vld [vmem:[%s0 + $0x68] sm:$0xff]
    %v92 = vld [vmem:[%s0 + $0x70] sm:$0xff]
    %v93 = vld [vmem:[%s0 + $0x78] sm:$0xff]
    %v94 = vld [vmem:[%s0 + $0x80] sm:$0xff]
    %v95 = vld [vmem:[%s0 + $0x88] sm:$0xff]
    %v96 = vld [vmem:[%s0 + $0x90] sm:$0xff]
    %v97 = vld [vmem:[%s0 + $0x98] sm:$0xff]
    %v98 = vld [vmem:[%s0 + $0xa0] sm:$0xff]
    %v99 = vld [vmem:[%s0 + $0xa8] sm:$0xff]
    %v100 = vld [vmem:[%s0 + $0xb0] sm:$0xff]
    %v101 = vld [vmem:[%s0 + $0xb8] sm:$0xff]
    %v102 = vld [vmem:[%s0 + $0xc0] sm:$0xff]
    %v103 = vld [vmem:[%s0 + $0xc8] sm:$0xff]
    %v104 = vld [vmem:[%s0 + $0xd0] sm:$0xff]
    %v105 = vld [vmem:[%s0 + $0xd8] sm:$0xff]
    %v106 = vld [vmem:[%s0 + $0xe0] sm:$0xff]
    %v107 = vld [vmem:[%s0 + $0xe8] sm:$0xff]
    %v108 = vld [vmem:[%s0 + $0xf0] sm:$0xff]
    %v109 = vld [vmem:[%s0 + $0xf8] sm:$0xff]
    %v110 = vld [vmem:[%s0 + $0x100] sm:$0xff]
    %v111 = vld [vmem:[%s0 + $0x108] sm:$0xff]
    %v112 = vld [vmem:[%s0 + $0x110] sm:$0xff]
    %v113 = vld [vmem:[%s0 + $0x118] sm:$0xff]
    %v114 = vld [vmem:[%s0 + $0x120] sm:$0xff]
    %v115 = vld [vmem:[%s0 + $0x128] sm:$0xff]
    %v116 = vld [vmem:[%s0 + $0x130] sm:$0xff]
    %v117 = vld [vmem:[%s0 + $0x138] sm:$0xff]
    %v118 = vld [vmem:[%s0 + $0x140] sm:$0xff]
    %v119 = vld [vmem:[%s0 + $0x148] sm:$0xff]
    %v120 = vld [vmem:[%s0 + $0x150] sm:$0xff]
    %v121 = vld [vmem:[%s0 + $0x158] sm:$0xff]
    %v122 = vld [vmem:[%s0 + $0x160] sm:$0xff]
    %v123 = vld [vmem:[%s0 + $0x168] sm:$0xff]
    %v124 = vld [vmem:[%s0 + $0x170] sm:$0xff]
    %v125 = vld [vmem:[%s0 + $0x178] sm:$0xff]
    %v126 = vld [vmem:[%s0 + $0x180] sm:$0xff]
    %v127 = vld [vmem:[%s0 + $0x188] sm:$0xff]
    %v128 = vld [vmem:[%s0 + $0x190] sm:$0xff]
    %v129 = vld [vmem:[%s0 + $0x198] sm:$0xff]
    %v130 = vld [vmem:[%s0 + $0x1a0] sm:$0xff]
    %v131 = vld [vmem:[%s0 + $0x1a8] sm:$0xff]
    %v132 = vld [vmem:[%s0 + $0x1b0] sm:$0xff]
    %v133 = vld [vmem:[%s0 + $0x1b8] sm:$0xff]
    %v134 = vld [vmem:[%s0 + $0x1c0] sm:$0xff]
    %v135 = vld [vmem:[%s0 + $0x1c8] sm:$0xff]
    %v136 = vld [vmem:[%s0 + $0x1d0] sm:$0xff]
    %v137 = vld [vmem:[%s0 + $0x1d8] sm:$0xff]
    %v138 = vld [vmem:[%s0 + $0x1e0] sm:$0xff]
    %v139 = vld [vmem:[%s0 + $0x1e8] sm:$0xff]
    %v140 = vld [vmem:[%s0 + $0x1f0] sm:$0xff]
    %v141 = vld [vmem:[%s0 + $0x1f8] sm:$0xff]
    %v142 = vrot.slane %v78, 7
    %v143 = vrot.slane %v80, 7
    %v144 = vrot.slane %v82, 7
    %v145 = vrot.slane %v84, 7
    %v146 = vrot.slane %v86, 7
    %v147 = vrot.slane %v88, 7
    %v148 = vrot.slane %v90, 7
    %v149 = vrot.slane %v92, 7
    %v150 = vrot.slane %v94, 7
    %v151 = vrot.slane %v96, 7
    %v152 = vrot.slane %v98, 7
    %v153 = vrot.slane %v100, 7
    %v154 = vrot.slane %v102, 7
    %v155 = vrot.slane %v104, 7
    %v156 = vrot.slane %v106, 7
    %v157 = vrot.slane %v108, 7
    %v158 = vrot.slane %v110, 7
    %v159 = vrot.slane %v112, 7
    %v160 = vrot.slane %v114, 7
    %v161 = vrot.slane %v116, 7
    %v162 = vrot.slane %v118, 7
    %v163 = vrot.slane %v120, 7
    %v164 = vrot.slane %v122, 7
    %v165 = vrot.slane %v124, 7
    %v166 = vrot.slane %v126, 7
    %v167 = vrot.slane %v128, 7
    %v168 = vrot.slane %v130, 7
    %v169 = vrot.slane %v132, 7
    %v170 = vrot.slane %v134, 7
    %v171 = vrot.slane %v136, 7
    %v172 = vrot.slane %v138, 7
    %v173 = vrot.slane %v140, 7
    %v174 = vrot.slane %v79, 7
    %v175 = vrot.slane %v81, 7
    %v176 = vrot.slane %v83, 7
    %v177 = vrot.slane %v85, 7
    %v178 = vrot.slane %v87, 7
    %v179 = vrot.slane %v89, 7
    %v180 = vrot.slane %v91, 7
    %v181 = vrot.slane %v93, 7
    %v182 = vrot.slane %v95, 7
    %v183 = vrot.slane %v97, 7
    %v184 = vrot.slane %v99, 7
    %v185 = vrot.slane %v101, 7
    %v186 = vrot.slane %v103, 7
    %v187 = vrot.slane %v105, 7
    %v188 = vrot.slane %v107, 7
    %v189 = vrot.slane %v109, 7
    %v190 = vrot.slane %v111, 7
    %v191 = vrot.slane %v113, 7
    %v192 = vrot.slane %v115, 7
    %v193 = vrot.slane %v117, 7
    %v194 = vrot.slane %v119, 7
    %v195 = vrot.slane %v121, 7
    %v196 = vrot.slane %v123, 7
    %v197 = vrot.slane %v125, 7
    %v198 = vrot.slane %v127, 7
    %v199 = vrot.slane %v129, 7
    %v200 = vrot.slane %v131, 7
    %v201 = vrot.slane %v133, 7
    %v202 = vrot.slane %v135, 7
    %v203 = vrot.slane %v137, 7
    %v204 = vrot.slane %v139, 7
    %v205 = vrot.slane %v141, 7
    %vm206 = vcmp.lt.s32.totalorder %v64, 1
    %v207 = vsel %vm206, %v142, %v174
    %v208 = vsel %vm206, %v143, %v175
    %v209 = vsel %vm206, %v144, %v176
    %v210 = vsel %vm206, %v145, %v177
    %v211 = vsel %vm206, %v146, %v178
    %v212 = vsel %vm206, %v147, %v179
    %v213 = vsel %vm206, %v148, %v180
    %v214 = vsel %vm206, %v149, %v181
    %v215 = vsel %vm206, %v150, %v182
    %v216 = vsel %vm206, %v151, %v183
    %v217 = vsel %vm206, %v152, %v184
    %v218 = vsel %vm206, %v153, %v185
    %v219 = vsel %vm206, %v154, %v186
    %v220 = vsel %vm206, %v155, %v187
    %v221 = vsel %vm206, %v156, %v188
    %v222 = vsel %vm206, %v157, %v189
    %v223 = vsel %vm206, %v158, %v190
    %v224 = vsel %vm206, %v159, %v191
    %v225 = vsel %vm206, %v160, %v192
    %v226 = vsel %vm206, %v161, %v193
    %v227 = vsel %vm206, %v162, %v194
    %v228 = vsel %vm206, %v163, %v195
    %v229 = vsel %vm206, %v164, %v196
    %v230 = vsel %vm206, %v165, %v197
    %v231 = vsel %vm206, %v166, %v198
    %v232 = vsel %vm206, %v167, %v199
    %v233 = vsel %vm206, %v168, %v200
    %v234 = vsel %vm206, %v169, %v201
    %v235 = vsel %vm206, %v170, %v202
    %v236 = vsel %vm206, %v171, %v203
    %v237 = vsel %vm206, %v172, %v204
    %v238 = vsel %vm206, %v173, %v205
    %v239 = vsel %vm206, %v174, %v142
    %v240 = vsel %vm206, %v175, %v143
    %v241 = vsel %vm206, %v176, %v144
    %v242 = vsel %vm206, %v177, %v145
    %v243 = vsel %vm206, %v178, %v146
    %v244 = vsel %vm206, %v179, %v147
    %v245 = vsel %vm206, %v180, %v148
    %v246 = vsel %vm206, %v181, %v149
    %v247 = vsel %vm206, %v182, %v150
    %v248 = vsel %vm206, %v183, %v151
    %v249 = vsel %vm206, %v184, %v152
    %v250 = vsel %vm206, %v185, %v153
    %v251 = vsel %vm206, %v186, %v154
    %v252 = vsel %vm206, %v187, %v155
    %v253 = vsel %vm206, %v188, %v156
    %v254 = vsel %vm206, %v189, %v157
    %v255 = vsel %vm206, %v190, %v158
    %v256 = vsel %vm206, %v191, %v159
    %v257 = vsel %vm206, %v192, %v160
    %v258 = vsel %vm206, %v193, %v161
    %v259 = vsel %vm206, %v194, %v162
    %v260 = vsel %vm206, %v195, %v163
    %v261 = vsel %vm206, %v196, %v164
    %v262 = vsel %vm206, %v197, %v165
    %v263 = vsel %vm206, %v198, %v166
    %v264 = vsel %vm206, %v199, %v167
    %v265 = vsel %vm206, %v200, %v168
    %v266 = vsel %vm206, %v201, %v169
    %v267 = vsel %vm206, %v202, %v170
    %v268 = vsel %vm206, %v203, %v171
    %v269 = vsel %vm206, %v204, %v172
    %v270 = vsel %vm206, %v205, %v173
    %v271 = vmul.f32 %v239, %v70
    %v272 = vmul.f32 %v207, %v71
    %v273 = vmul.f32 %v240, %v70
    %v274 = vmul.f32 %v208, %v71
    %v275 = vmul.f32 %v241, %v70
    %v276 = vmul.f32 %v209, %v71
    %v277 = vmul.f32 %v242, %v70
    %v278 = vmul.f32 %v210, %v71
    %v279 = vmul.f32 %v243, %v70
    %v280 = vmul.f32 %v211, %v71
    %v281 = vmul.f32 %v244, %v70
    %v282 = vmul.f32 %v212, %v71
    %v283 = vmul.f32 %v245, %v70
    %v284 = vmul.f32 %v213, %v71
    %v285 = vmul.f32 %v246, %v70
    %v286 = vmul.f32 %v214, %v71
    %v287 = vmul.f32 %v247, %v70
    %v288 = vmul.f32 %v215, %v71
    %v289 = vmul.f32 %v248, %v70
    %v290 = vmul.f32 %v216, %v71
    %v291 = vmul.f32 %v249, %v70
    %v292 = vmul.f32 %v217, %v71
    %v293 = vmul.f32 %v250, %v70
    %v294 = vmul.f32 %v218, %v71
    %v295 = vmul.f32 %v251, %v70
    %v296 = vmul.f32 %v219, %v71
    %v297 = vmul.f32 %v252, %v70
    %v298 = vmul.f32 %v220, %v71
    %v299 = vmul.f32 %v253, %v70
    %v300 = vmul.f32 %v221, %v71
    %v301 = vmul.f32 %v254, %v70
    %v302 = vmul.f32 %v222, %v71
    %v303 = vmul.f32 %v255, %v70
    %v304 = vmul.f32 %v223, %v71
    %v305 = vmul.f32 %v256, %v70
    %v306 = vmul.f32 %v224, %v71
    %v307 = vmul.f32 %v257, %v70
    %v308 = vmul.f32 %v225, %v71
    %v309 = vmul.f32 %v258, %v70
    %v310 = vmul.f32 %v226, %v71
    %v311 = vmul.f32 %v259, %v70
    %v312 = vmul.f32 %v227, %v71
    %v313 = vmul.f32 %v260, %v70
    %v314 = vmul.f32 %v228, %v71
    %v315 = vmul.f32 %v261, %v70
    %v316 = vmul.f32 %v229, %v71
    %v317 = vmul.f32 %v262, %v70
    %v318 = vmul.f32 %v230, %v71
    %v319 = vmul.f32 %v263, %v70
    %v320 = vmul.f32 %v231, %v71
    %v321 = vmul.f32 %v264, %v70
    %v322 = vmul.f32 %v232, %v71
    %v323 = vmul.f32 %v265, %v70
    %v324 = vmul.f32 %v233, %v71
    %v325 = vmul.f32 %v266, %v70
    %v326 = vmul.f32 %v234, %v71
    %v327 = vmul.f32 %v267, %v70
    %v328 = vmul.f32 %v235, %v71
    %v329 = vmul.f32 %v268, %v70
    %v330 = vmul.f32 %v236, %v71
    %v331 = vmul.f32 %v269, %v70
    %v332 = vmul.f32 %v237, %v71
    %v333 = vmul.f32 %v270, %v70
    %v334 = vmul.f32 %v238, %v71
    %v335 = vrot.slane %v78, 1
    %v336 = vrot.slane %v80, 1
    %v337 = vrot.slane %v82, 1
    %v338 = vrot.slane %v84, 1
    %v339 = vrot.slane %v86, 1
    %v340 = vrot.slane %v88, 1
    %v341 = vrot.slane %v90, 1
    %v342 = vrot.slane %v92, 1
    %v343 = vrot.slane %v94, 1
    %v344 = vrot.slane %v96, 1
    %v345 = vrot.slane %v98, 1
    %v346 = vrot.slane %v100, 1
    %v347 = vrot.slane %v102, 1
    %v348 = vrot.slane %v104, 1
    %v349 = vrot.slane %v106, 1
    %v350 = vrot.slane %v108, 1
    %v351 = vrot.slane %v110, 1
    %v352 = vrot.slane %v112, 1
    %v353 = vrot.slane %v114, 1
    %v354 = vrot.slane %v116, 1
    %v355 = vrot.slane %v118, 1
    %v356 = vrot.slane %v120, 1
    %v357 = vrot.slane %v122, 1
    %v358 = vrot.slane %v124, 1
    %v359 = vrot.slane %v126, 1
    %v360 = vrot.slane %v128, 1
    %v361 = vrot.slane %v130, 1
    %v362 = vrot.slane %v132, 1
    %v363 = vrot.slane %v134, 1
    %v364 = vrot.slane %v136, 1
    %v365 = vrot.slane %v138, 1
    %v366 = vrot.slane %v140, 1
    %v367 = vrot.slane %v79, 1
    %v368 = vrot.slane %v81, 1
    %v369 = vrot.slane %v83, 1
    %v370 = vrot.slane %v85, 1
    %v371 = vrot.slane %v87, 1
    %v372 = vrot.slane %v89, 1
    %v373 = vrot.slane %v91, 1
    %v374 = vrot.slane %v93, 1
    %v375 = vrot.slane %v95, 1
    %v376 = vrot.slane %v97, 1
    %v377 = vrot.slane %v99, 1
    %v378 = vrot.slane %v101, 1
    %v379 = vrot.slane %v103, 1
    %v380 = vrot.slane %v105, 1
    %v381 = vrot.slane %v107, 1
    %v382 = vrot.slane %v109, 1
    %v383 = vrot.slane %v111, 1
    %v384 = vrot.slane %v113, 1
    %v385 = vrot.slane %v115, 1
    %v386 = vrot.slane %v117, 1
    %v387 = vrot.slane %v119, 1
    %v388 = vrot.slane %v121, 1
    %v389 = vrot.slane %v123, 1
    %v390 = vrot.slane %v125, 1
    %v391 = vrot.slane %v127, 1
    %v392 = vrot.slane %v129, 1
    %v393 = vrot.slane %v131, 1
    %v394 = vrot.slane %v133, 1
    %v395 = vrot.slane %v135, 1
    %v396 = vrot.slane %v137, 1
    %v397 = vrot.slane %v139, 1
    %v398 = vrot.slane %v141, 1
    %vm399 = vcmp.lt.s32.totalorder %v64, 7
    %v400 = vsel %vm399, %v335, %v367
    %v401 = vsel %vm399, %v336, %v368
    %v402 = vsel %vm399, %v337, %v369
    %v403 = vsel %vm399, %v338, %v370
    %v404 = vsel %vm399, %v339, %v371
    %v405 = vsel %vm399, %v340, %v372
    %v406 = vsel %vm399, %v341, %v373
    %v407 = vsel %vm399, %v342, %v374
    %v408 = vsel %vm399, %v343, %v375
    %v409 = vsel %vm399, %v344, %v376
    %v410 = vsel %vm399, %v345, %v377
    %v411 = vsel %vm399, %v346, %v378
    %v412 = vsel %vm399, %v347, %v379
    %v413 = vsel %vm399, %v348, %v380
    %v414 = vsel %vm399, %v349, %v381
    %v415 = vsel %vm399, %v350, %v382
    %v416 = vsel %vm399, %v351, %v383
    %v417 = vsel %vm399, %v352, %v384
    %v418 = vsel %vm399, %v353, %v385
    %v419 = vsel %vm399, %v354, %v386
    %v420 = vsel %vm399, %v355, %v387
    %v421 = vsel %vm399, %v356, %v388
    %v422 = vsel %vm399, %v357, %v389
    %v423 = vsel %vm399, %v358, %v390
    %v424 = vsel %vm399, %v359, %v391
    %v425 = vsel %vm399, %v360, %v392
    %v426 = vsel %vm399, %v361, %v393
    %v427 = vsel %vm399, %v362, %v394
    %v428 = vsel %vm399, %v363, %v395
    %v429 = vsel %vm399, %v364, %v396
    %v430 = vsel %vm399, %v365, %v397
    %v431 = vsel %vm399, %v366, %v398
    %v432 = vsel %vm399, %v367, %v335
    %v433 = vsel %vm399, %v368, %v336
    %v434 = vsel %vm399, %v369, %v337
    %v435 = vsel %vm399, %v370, %v338
    %v436 = vsel %vm399, %v371, %v339
    %v437 = vsel %vm399, %v372, %v340
    %v438 = vsel %vm399, %v373, %v341
    %v439 = vsel %vm399, %v374, %v342
    %v440 = vsel %vm399, %v375, %v343
    %v441 = vsel %vm399, %v376, %v344
    %v442 = vsel %vm399, %v377, %v345
    %v443 = vsel %vm399, %v378, %v346
    %v444 = vsel %vm399, %v379, %v347
    %v445 = vsel %vm399, %v380, %v348
    %v446 = vsel %vm399, %v381, %v349
    %v447 = vsel %vm399, %v382, %v350
    %v448 = vsel %vm399, %v383, %v351
    %v449 = vsel %vm399, %v384, %v352
    %v450 = vsel %vm399, %v385, %v353
    %v451 = vsel %vm399, %v386, %v354
    %v452 = vsel %vm399, %v387, %v355
    %v453 = vsel %vm399, %v388, %v356
    %v454 = vsel %vm399, %v389, %v357
    %v455 = vsel %vm399, %v390, %v358
    %v456 = vsel %vm399, %v391, %v359
    %v457 = vsel %vm399, %v392, %v360
    %v458 = vsel %vm399, %v393, %v361
    %v459 = vsel %vm399, %v394, %v362
    %v460 = vsel %vm399, %v395, %v363
    %v461 = vsel %vm399, %v396, %v364
    %v462 = vsel %vm399, %v397, %v365
    %v463 = vsel %vm399, %v398, %v366
    %v464 = vmul.f32 %v400, %v76
    %v465 = vmul.f32 %v432, %v77
    %v466 = vmul.f32 %v401, %v76
    %v467 = vmul.f32 %v433, %v77
    %v468 = vmul.f32 %v402, %v76
    %v469 = vmul.f32 %v434, %v77
    %v470 = vmul.f32 %v403, %v76
    %v471 = vmul.f32 %v435, %v77
    %v472 = vmul.f32 %v404, %v76
    %v473 = vmul.f32 %v436, %v77
    %v474 = vmul.f32 %v405, %v76
    %v475 = vmul.f32 %v437, %v77
    %v476 = vmul.f32 %v406, %v76
    %v477 = vmul.f32 %v438, %v77
    %v478 = vmul.f32 %v407, %v76
    %v479 = vmul.f32 %v439, %v77
    %v480 = vmul.f32 %v408, %v76
    %v481 = vmul.f32 %v440, %v77
    %v482 = vmul.f32 %v409, %v76
    %v483 = vmul.f32 %v441, %v77
    %v484 = vmul.f32 %v410, %v76
    %v485 = vmul.f32 %v442, %v77
    %v486 = vmul.f32 %v411, %v76
    %v487 = vmul.f32 %v443, %v77
    %v488 = vmul.f32 %v412, %v76
    %v489 = vmul.f32 %v444, %v77
    %v490 = vmul.f32 %v413, %v76
    %v491 = vmul.f32 %v445, %v77
    %v492 = vmul.f32 %v414, %v76
    %v493 = vmul.f32 %v446, %v77
    %v494 = vmul.f32 %v415, %v76
    %v495 = vmul.f32 %v447, %v77
    %v496 = vmul.f32 %v416, %v76
    %v497 = vmul.f32 %v448, %v77
    %v498 = vmul.f32 %v417, %v76
    %v499 = vmul.f32 %v449, %v77
    %v500 = vmul.f32 %v418, %v76
    %v501 = vmul.f32 %v450, %v77
    %v502 = vmul.f32 %v419, %v76
    %v503 = vmul.f32 %v451, %v77
    %v504 = vmul.f32 %v420, %v76
    %v505 = vmul.f32 %v452, %v77
    %v506 = vmul.f32 %v421, %v76
    %v507 = vmul.f32 %v453, %v77
    %v508 = vmul.f32 %v422, %v76
    %v509 = vmul.f32 %v454, %v77
    %v510 = vmul.f32 %v423, %v76
    %v511 = vmul.f32 %v455, %v77
    %v512 = vmul.f32 %v424, %v76
    %v513 = vmul.f32 %v456, %v77
    %v514 = vmul.f32 %v425, %v76
    %v515 = vmul.f32 %v457, %v77
    %v516 = vmul.f32 %v426, %v76
    %v517 = vmul.f32 %v458, %v77
    %v518 = vmul.f32 %v427, %v76
    %v519 = vmul.f32 %v459, %v77
    %v520 = vmul.f32 %v428, %v76
    %v521 = vmul.f32 %v460, %v77
    %v522 = vmul.f32 %v429, %v76
    %v523 = vmul.f32 %v461, %v77
    %v524 = vmul.f32 %v430, %v76
    %v525 = vmul.f32 %v462, %v77
    %v526 = vmul.f32 %v431, %v76
    %v527 = vmul.f32 %v463, %v77
    %v528 = vpack.c.bf16 %v272, %v271
    %v529 = vpack.c.bf16 %v274, %v273
    %v530 = vpack.c.bf16 %v276, %v275
    %v531 = vpack.c.bf16 %v278, %v277
    %v532 = vpack.c.bf16 %v280, %v279
    %v533 = vpack.c.bf16 %v282, %v281
    %v534 = vpack.c.bf16 %v284, %v283
    %v535 = vpack.c.bf16 %v286, %v285
    %v536 = vpack.c.bf16 %v288, %v287
    %v537 = vpack.c.bf16 %v290, %v289
    %v538 = vpack.c.bf16 %v292, %v291
    %v539 = vpack.c.bf16 %v294, %v293
    %v540 = vpack.c.bf16 %v296, %v295
    %v541 = vpack.c.bf16 %v298, %v297
    %v542 = vpack.c.bf16 %v300, %v299
    %v543 = vpack.c.bf16 %v302, %v301
    %v544 = vpack.c.bf16 %v304, %v303
    %v545 = vpack.c.bf16 %v306, %v305
    %v546 = vpack.c.bf16 %v308, %v307
    %v547 = vpack.c.bf16 %v310, %v309
    %v548 = vpack.c.bf16 %v312, %v311
    %v549 = vpack.c.bf16 %v314, %v313
    %v550 = vpack.c.bf16 %v316, %v315
    %v551 = vpack.c.bf16 %v318, %v317
    %v552 = vpack.c.bf16 %v320, %v319
    %v553 = vpack.c.bf16 %v322, %v321
    %v554 = vpack.c.bf16 %v324, %v323
    %v555 = vpack.c.bf16 %v326, %v325
    %v556 = vpack.c.bf16 %v328, %v327
    %v557 = vpack.c.bf16 %v330, %v329
    %v558 = vpack.c.bf16 %v332, %v331
    %v559 = vpack.c.bf16 %v334, %v333
    %s560 = scalar_lea.vmem [#allocation2], 24
    %561 = vst [vmem:[%s560] sm:$0xff] %v528
    %562 = vst [vmem:[%s560 + $0x18] sm:$0xff] %v529
    %563 = vst [vmem:[%s560 + $0x30] sm:$0xff] %v530
    %564 = vst [vmem:[%s560 + $0x48] sm:$0xff] %v531
    %565 = vst [vmem:[%s560 + $0x60] sm:$0xff] %v532
    %566 = vst [vmem:[%s560 + $0x78] sm:$0xff] %v533
    %567 = vst [vmem:[%s560 + $0x90] sm:$0xff] %v534
    %568 = vst [vmem:[%s560 + $0xa8] sm:$0xff] %v535
    %569 = vst [vmem:[%s560 + $0xc0] sm:$0xff] %v536
    %570 = vst [vmem:[%s560 + $0xd8] sm:$0xff] %v537
    %571 = vst [vmem:[%s560 + $0xf0] sm:$0xff] %v538
    %572 = vst [vmem:[%s560 + $0x108] sm:$0xff] %v539
    %573 = vst [vmem:[%s560 + $0x120] sm:$0xff] %v540
    %574 = vst [vmem:[%s560 + $0x138] sm:$0xff] %v541
    %575 = vst [vmem:[%s560 + $0x150] sm:$0xff] %v542
    %576 = vst [vmem:[%s560 + $0x168] sm:$0xff] %v543
    %577 = vst [vmem:[%s560 + $0x1b0] sm:$0xff] %v544
    %578 = vst [vmem:[%s560 + $0x1c8] sm:$0xff] %v545
    %579 = vst [vmem:[%s560 + $0x1e0] sm:$0xff] %v546
    %580 = vst [vmem:[%s560 + $0x1f8] sm:$0xff] %v547
    %581 = vst [vmem:[%s560 + $0x210] sm:$0xff] %v548
    %582 = vst [vmem:[%s560 + $0x228] sm:$0xff] %v549
    %583 = vst [vmem:[%s560 + $0x240] sm:$0xff] %v550
    %584 = vst [vmem:[%s560 + $0x258] sm:$0xff] %v551
    %585 = vst [vmem:[%s560 + $0x270] sm:$0xff] %v552
    %586 = vst [vmem:[%s560 + $0x288] sm:$0xff] %v553
    %587 = vst [vmem:[%s560 + $0x2a0] sm:$0xff] %v554
    %588 = vst [vmem:[%s560 + $0x2b8] sm:$0xff] %v555
    %589 = vst [vmem:[%s560 + $0x2d0] sm:$0xff] %v556
    %590 = vst [vmem:[%s560 + $0x2e8] sm:$0xff] %v557
    %591 = vst [vmem:[%s560 + $0x300] sm:$0xff] %v558
    %592 = vst [vmem:[%s560 + $0x318] sm:$0xff] %v559
    %v593 = vpack.c.bf16 %v79, %v78
    %v594 = vpack.c.bf16 %v81, %v80
    %v595 = vpack.c.bf16 %v83, %v82
    %v596 = vpack.c.bf16 %v85, %v84
    %v597 = vpack.c.bf16 %v87, %v86
    %v598 = vpack.c.bf16 %v89, %v88
    %v599 = vpack.c.bf16 %v91, %v90
    %v600 = vpack.c.bf16 %v93, %v92
    %v601 = vpack.c.bf16 %v95, %v94
    %v602 = vpack.c.bf16 %v97, %v96
    %v603 = vpack.c.bf16 %v99, %v98
    %v604 = vpack.c.bf16 %v101, %v100
    %v605 = vpack.c.bf16 %v103, %v102
    %v606 = vpack.c.bf16 %v105, %v104
    %v607 = vpack.c.bf16 %v107, %v106
    %v608 = vpack.c.bf16 %v109, %v108
    %v609 = vpack.c.bf16 %v111, %v110
    %v610 = vpack.c.bf16 %v113, %v112
    %v611 = vpack.c.bf16 %v115, %v114
    %v612 = vpack.c.bf16 %v117, %v116
    %v613 = vpack.c.bf16 %v119, %v118
    %v614 = vpack.c.bf16 %v121, %v120
    %v615 = vpack.c.bf16 %v123, %v122
    %v616 = vpack.c.bf16 %v125, %v124
    %v617 = vpack.c.bf16 %v127, %v126
    %v618 = vpack.c.bf16 %v129, %v128
    %v619 = vpack.c.bf16 %v131, %v130
    %v620 = vpack.c.bf16 %v133, %v132
    %v621 = vpack.c.bf16 %v135, %v134
    %v622 = vpack.c.bf16 %v137, %v136
    %v623 = vpack.c.bf16 %v139, %v138
    %v624 = vpack.c.bf16 %v141, %v140
    %625 = vst [vmem:[%s560 + $0x8] sm:$0xff] %v593
    %626 = vst [vmem:[%s560 + $0x20] sm:$0xff] %v594
    %627 = vst [vmem:[%s560 + $0x38] sm:$0xff] %v595
    %628 = vst [vmem:[%s560 + $0x50] sm:$0xff] %v596
    %629 = vst [vmem:[%s560 + $0x68] sm:$0xff] %v597
    %630 = vst [vmem:[%s560 + $0x80] sm:$0xff] %v598
    %631 = vst [vmem:[%s560 + $0x98] sm:$0xff] %v599
    %632 = vst [vmem:[%s560 + $0xb0] sm:$0xff] %v600
    %633 = vst [vmem:[%s560 + $0xc8] sm:$0xff] %v601
    %634 = vst [vmem:[%s560 + $0xe0] sm:$0xff] %v602
    %635 = vst [vmem:[%s560 + $0xf8] sm:$0xff] %v603
    %636 = vst [vmem:[%s560 + $0x110] sm:$0xff] %v604
    %637 = vst [vmem:[%s560 + $0x128] sm:$0xff] %v605
    %638 = vst [vmem:[%s560 + $0x140] sm:$0xff] %v606
    %639 = vst [vmem:[%s560 + $0x158] sm:$0xff] %v607
    %640 = vst [vmem:[%s560 + $0x170] sm:$0xff] %v608
    %641 = vst [vmem:[%s560 + $0x1b8] sm:$0xff] %v609
    %642 = vst [vmem:[%s560 + $0x1d0] sm:$0xff] %v610
    %643 = vst [vmem:[%s560 + $0x1e8] sm:$0xff] %v611
    %644 = vst [vmem:[%s560 + $0x200] sm:$0xff] %v612
    %645 = vst [vmem:[%s560 + $0x218] sm:$0xff] %v613
    %646 = vst [vmem:[%s560 + $0x230] sm:$0xff] %v614
    %647 = vst [vmem:[%s560 + $0x248] sm:$0xff] %v615
    %648 = vst [vmem:[%s560 + $0x260] sm:$0xff] %v616
    %649 = vst [vmem:[%s560 + $0x278] sm:$0xff] %v617
    %650 = vst [vmem:[%s560 + $0x290] sm:$0xff] %v618
    %651 = vst [vmem:[%s560 + $0x2a8] sm:$0xff] %v619
    %652 = vst [vmem:[%s560 + $0x2c0] sm:$0xff] %v620
    %653 = vst [vmem:[%s560 + $0x2d8] sm:$0xff] %v621
    %654 = vst [vmem:[%s560 + $0x2f0] sm:$0xff] %v622
    %655 = vst [vmem:[%s560 + $0x308] sm:$0xff] %v623
    %656 = vst [vmem:[%s560 + $0x320] sm:$0xff] %v624
    %v657 = vpack.c.bf16 %v465, %v464
    %v658 = vpack.c.bf16 %v467, %v466
    %v659 = vpack.c.bf16 %v469, %v468
    %v660 = vpack.c.bf16 %v471, %v470
    %v661 = vpack.c.bf16 %v473, %v472
    %v662 = vpack.c.bf16 %v475, %v474
    %v663 = vpack.c.bf16 %v477, %v476
    %v664 = vpack.c.bf16 %v479, %v478
    %v665 = vpack.c.bf16 %v481, %v480
    %v666 = vpack.c.bf16 %v483, %v482
    %v667 = vpack.c.bf16 %v485, %v484
    %v668 = vpack.c.bf16 %v487, %v486
    %v669 = vpack.c.bf16 %v489, %v488
    %v670 = vpack.c.bf16 %v491, %v490
    %v671 = vpack.c.bf16 %v493, %v492
    %v672 = vpack.c.bf16 %v495, %v494
    %v673 = vpack.c.bf16 %v497, %v496
    %v674 = vpack.c.bf16 %v499, %v498
    %v675 = vpack.c.bf16 %v501, %v500
    %v676 = vpack.c.bf16 %v503, %v502
    %v677 = vpack.c.bf16 %v505, %v504
    %v678 = vpack.c.bf16 %v507, %v506
    %v679 = vpack.c.bf16 %v509, %v508
    %v680 = vpack.c.bf16 %v511, %v510
    %v681 = vpack.c.bf16 %v513, %v512
    %v682 = vpack.c.bf16 %v515, %v514
    %v683 = vpack.c.bf16 %v517, %v516
    %v684 = vpack.c.bf16 %v519, %v518
    %v685 = vpack.c.bf16 %v521, %v520
    %v686 = vpack.c.bf16 %v523, %v522
    %v687 = vpack.c.bf16 %v525, %v524
    %v688 = vpack.c.bf16 %v527, %v526
    %689 = vst [vmem:[%s560 + $0x10] sm:$0xff] %v657
    %690 = vst [vmem:[%s560 + $0x28] sm:$0xff] %v658
    %691 = vst [vmem:[%s560 + $0x40] sm:$0xff] %v659
    %692 = vst [vmem:[%s560 + $0x58] sm:$0xff] %v660
    %693 = vst [vmem:[%s560 + $0x70] sm:$0xff] %v661
    %694 = vst [vmem:[%s560 + $0x88] sm:$0xff] %v662
    %695 = vst [vmem:[%s560 + $0xa0] sm:$0xff] %v663
    %696 = vst [vmem:[%s560 + $0xb8] sm:$0xff] %v664
    %697 = vst [vmem:[%s560 + $0xd0] sm:$0xff] %v665
    %698 = vst [vmem:[%s560 + $0xe8] sm:$0xff] %v666
    %699 = vst [vmem:[%s560 + $0x100] sm:$0xff] %v667
    %700 = vst [vmem:[%s560 + $0x118] sm:$0xff] %v668
    %701 = vst [vmem:[%s560 + $0x130] sm:$0xff] %v669
    %702 = vst [vmem:[%s560 + $0x148] sm:$0xff] %v670
    %703 = vst [vmem:[%s560 + $0x160] sm:$0xff] %v671
    %704 = vst [vmem:[%s560 + $0x178] sm:$0xff] %v672
    %705 = vst [vmem:[%s560 + $0x1c0] sm:$0xff] %v673
    %706 = vst [vmem:[%s560 + $0x1d8] sm:$0xff] %v674
    %707 = vst [vmem:[%s560 + $0x1f0] sm:$0xff] %v675
    %708 = vst [vmem:[%s560 + $0x208] sm:$0xff] %v676
    %709 = vst [vmem:[%s560 + $0x220] sm:$0xff] %v677
    %710 = vst [vmem:[%s560 + $0x238] sm:$0xff] %v678
    %711 = vst [vmem:[%s560 + $0x250] sm:$0xff] %v679
    %712 = vst [vmem:[%s560 + $0x268] sm:$0xff] %v680
    %713 = vst [vmem:[%s560 + $0x280] sm:$0xff] %v681
    %714 = vst [vmem:[%s560 + $0x298] sm:$0xff] %v682
    %715 = vst [vmem:[%s560 + $0x2b0] sm:$0xff] %v683
    %716 = vst [vmem:[%s560 + $0x2c8] sm:$0xff] %v684
    %717 = vst [vmem:[%s560 + $0x2e0] sm:$0xff] %v685
    %718 = vst [vmem:[%s560 + $0x2f8] sm:$0xff] %v686
    %719 = vst [vmem:[%s560 + $0x310] sm:$0xff] %v687
    %720 = vst [vmem:[%s560 + $0x328] sm:$0xff] %v688
    %v721 = vld [vmem:[#allocation2] sm:$0xff]
    %v722 = vld [vmem:[#allocation2 + $0x8] sm:$0xff]
    %v723 = vld [vmem:[#allocation2 + $0x10] sm:$0xff]
    %v724 = vld [vmem:[#allocation2 + $0x18] sm:$0xff]
    %v725 = vld [vmem:[#allocation2 + $0x20] sm:$0xff]
    %v726 = vld [vmem:[#allocation2 + $0x28] sm:$0xff]
    %v727 = vld [vmem:[#allocation2 + $0x30] sm:$0xff]
    %v728 = vld [vmem:[#allocation2 + $0x38] sm:$0xff]
    %v729 = vld [vmem:[#allocation2 + $0x40] sm:$0xff]
    %v730 = vld [vmem:[#allocation2 + $0x48] sm:$0xff]
    %v731 = vld [vmem:[#allocation2 + $0x50] sm:$0xff]
    %v732 = vld [vmem:[#allocation2 + $0x58] sm:$0xff]
    %v733 = vld [vmem:[#allocation2 + $0x60] sm:$0xff]
    %v734 = vld [vmem:[#allocation2 + $0x68] sm:$0xff]
    %v735 = vld [vmem:[#allocation2 + $0x70] sm:$0xff]
    %v736 = vld [vmem:[#allocation2 + $0x78] sm:$0xff]
    %v737 = vld [vmem:[#allocation2 + $0x80] sm:$0xff]
    %v738 = vld [vmem:[#allocation2 + $0x88] sm:$0xff]
    %v739 = vld [vmem:[#allocation2 + $0x90] sm:$0xff]
    %v740 = vld [vmem:[#allocation2 + $0x98] sm:$0xff]
    %v741 = vld [vmem:[#allocation2 + $0xa0] sm:$0xff]
    %v742 = vld [vmem:[#allocation2 + $0xa8] sm:$0xff]
    %v743 = vld [vmem:[#allocation2 + $0xb0] sm:$0xff]
    %v744 = vld [vmem:[#allocation2 + $0xb8] sm:$0xff]
    %v745 = vld [vmem:[#allocation2 + $0xc0] sm:$0xff]
    %v746 = vld [vmem:[#allocation2 + $0xc8] sm:$0xff]
    %v747 = vld [vmem:[#allocation2 + $0xd0] sm:$0xff]
    %v748 = vld [vmem:[#allocation2 + $0xd8] sm:$0xff]
    %v749 = vld [vmem:[#allocation2 + $0xe0] sm:$0xff]
    %v750 = vld [vmem:[#allocation2 + $0xe8] sm:$0xff]
    %v751 = vld [vmem:[#allocation2 + $0xf0] sm:$0xff]
    %v752 = vld [vmem:[#allocation2 + $0xf8] sm:$0xff]
    %v753 = vld [vmem:[#allocation2 + $0x100] sm:$0xff]
    %v754 = vld [vmem:[#allocation2 + $0x108] sm:$0xff]
    %v755 = vld [vmem:[#allocation2 + $0x110] sm:$0xff]
    %v756 = vld [vmem:[#allocation2 + $0x118] sm:$0xff]
    %v757 = vld [vmem:[#allocation2 + $0x120] sm:$0xff]
    %v758 = vld [vmem:[#allocation2 + $0x128] sm:$0xff]
    %v759 = vld [vmem:[#allocation2 + $0x130] sm:$0xff]
    %v760 = vld [vmem:[#allocation2 + $0x138] sm:$0xff]
    %v761 = vld [vmem:[#allocation2 + $0x140] sm:$0xff]
    %v762 = vld [vmem:[#allocation2 + $0x148] sm:$0xff]
    %v763 = vld [vmem:[#allocation2 + $0x150] sm:$0xff]
    %v764 = vld [vmem:[#allocation2 + $0x158] sm:$0xff]
    %v765 = vld [vmem:[#allocation2 + $0x160] sm:$0xff]
    %v766 = vld [vmem:[#allocation2 + $0x168] sm:$0xff]
    %v767 = vld [vmem:[#allocation2 + $0x170] sm:$0xff]
    %v768 = vld [vmem:[#allocation2 + $0x178] sm:$0xff]
    %v769 = vld [vmem:[#allocation2 + $0x1b0] sm:$0xff]
    %v770 = vld [vmem:[#allocation2 + $0x1b8] sm:$0xff]
    %v771 = vld [vmem:[#allocation2 + $0x1c0] sm:$0xff]
    %v772 = vld [vmem:[#allocation2 + $0x1c8] sm:$0xff]
    %v773 = vld [vmem:[#allocation2 + $0x1d0] sm:$0xff]
    %v774 = vld [vmem:[#allocation2 + $0x1d8] sm:$0xff]
    %v775 = vld [vmem:[#allocation2 + $0x1e0] sm:$0xff]
    %v776 = vld [vmem:[#allocation2 + $0x1e8] sm:$0xff]
    %v777 = vld [vmem:[#allocation2 + $0x1f0] sm:$0xff]
    %v778 = vld [vmem:[#allocation2 + $0x1f8] sm:$0xff]
    %v779 = vld [vmem:[#allocation2 + $0x200] sm:$0xff]
    %v780 = vld [vmem:[#allocation2 + $0x208] sm:$0xff]
    %v781 = vld [vmem:[#allocation2 + $0x210] sm:$0xff]
    %v782 = vld [vmem:[#allocation2 + $0x218] sm:$0xff]
    %v783 = vld [vmem:[#allocation2 + $0x220] sm:$0xff]
    %v784 = vld [vmem:[#allocation2 + $0x228] sm:$0xff]
    %v785 = vld [vmem:[#allocation2 + $0x230] sm:$0xff]
    %v786 = vld [vmem:[#allocation2 + $0x238] sm:$0xff]
    %v787 = vld [vmem:[#allocation2 + $0x240] sm:$0xff]
    %v788 = vld [vmem:[#allocation2 + $0x248] sm:$0xff]
    %v789 = vld [vmem:[#allocation2 + $0x250] sm:$0xff]
    %v790 = vld [vmem:[#allocation2 + $0x258] sm:$0xff]
    %v791 = vld [vmem:[#allocation2 + $0x260] sm:$0xff]
    %v792 = vld [vmem:[#allocation2 + $0x268] sm:$0xff]
    %v793 = vld [vmem:[#allocation2 + $0x270] sm:$0xff]
    %v794 = vld [vmem:[#allocation2 + $0x278] sm:$0xff]
    %v795 = vld [vmem:[#allocation2 + $0x280] sm:$0xff]
    %v796 = vld [vmem:[#allocation2 + $0x288] sm:$0xff]
    %v797 = vld [vmem:[#allocation2 + $0x290] sm:$0xff]
    %v798 = vld [vmem:[#allocation2 + $0x298] sm:$0xff]
    %v799 = vld [vmem:[#allocation2 + $0x2a0] sm:$0xff]
    %v800 = vld [vmem:[#allocation2 + $0x2a8] sm:$0xff]
    %v801 = vld [vmem:[#allocation2 + $0x2b0] sm:$0xff]
    %v802 = vld [vmem:[#allocation2 + $0x2b8] sm:$0xff]
    %v803 = vld [vmem:[#allocation2 + $0x2c0] sm:$0xff]
    %v804 = vld [vmem:[#allocation2 + $0x2c8] sm:$0xff]
    %v805 = vld [vmem:[#allocation2 + $0x2d0] sm:$0xff]
    %v806 = vld [vmem:[#allocation2 + $0x2d8] sm:$0xff]
    %v807 = vld [vmem:[#allocation2 + $0x2e0] sm:$0xff]
    %v808 = vld [vmem:[#allocation2 + $0x2e8] sm:$0xff]
    %v809 = vld [vmem:[#allocation2 + $0x2f0] sm:$0xff]
    %v810 = vld [vmem:[#allocation2 + $0x2f8] sm:$0xff]
    %v811 = vld [vmem:[#allocation2 + $0x300] sm:$0xff]
    %v812 = vld [vmem:[#allocation2 + $0x308] sm:$0xff]
    %v813 = vld [vmem:[#allocation2 + $0x310] sm:$0xff]
    %v814 = vld [vmem:[#allocation2 + $0x318] sm:$0xff]
    %v815 = vld [vmem:[#allocation2 + $0x320] sm:$0xff]
    %v816 = vld [vmem:[#allocation2 + $0x328] sm:$0xff]
    %v817 = vld [vmem:[%s1] sm:$0xf]
    %v818 = vld [vmem:[%s1 + $0x4] sm:$0xf]
    %v819 = vld [vmem:[%s1 + $0x8] sm:$0xf]
    %v820 = vld [vmem:[%s1 + $0xc] sm:$0xf]
    %v821 = vld [vmem:[%s1 + $0x10] sm:$0xf]
    %v822 = vld [vmem:[%s1 + $0x14] sm:$0xf]
    %v823 = vld [vmem:[%s1 + $0x18] sm:$0xf]
    %v824 = vld [vmem:[%s1 + $0x1c] sm:$0xf]
    %v825 = vld [vmem:[%s1 + $0x20] sm:$0xf]
    %v826 = vld [vmem:[%s1 + $0x24] sm:$0xf]
    %v827 = vld [vmem:[%s1 + $0x28] sm:$0xf]
    %v828 = vld [vmem:[%s1 + $0x2c] sm:$0xf]
    %v829 = vld [vmem:[%s1 + $0x30] sm:$0xf]
    %v830 = vld [vmem:[%s1 + $0x34] sm:$0xf]
    %v831 = vld [vmem:[%s1 + $0x38] sm:$0xf]
    %v832 = vld [vmem:[%s1 + $0x3c] sm:$0xf]
    %v833 = vld [vmem:[%s1 + $0x40] sm:$0xf]
    %v834 = vld [vmem:[%s1 + $0x44] sm:$0xf]
    %v835 = vld [vmem:[%s1 + $0x48] sm:$0xf]
    %v836 = vld [vmem:[%s1 + $0x4c] sm:$0xf]
    %v837 = vld [vmem:[%s1 + $0x50] sm:$0xf]
    %v838 = vld [vmem:[%s1 + $0x54] sm:$0xf]
    %v839 = vld [vmem:[%s1 + $0x58] sm:$0xf]
    %v840 = vld [vmem:[%s1 + $0x5c] sm:$0xf]
    %v841 = vld [vmem:[%s1 + $0x60] sm:$0xf]
    %v842 = vld [vmem:[%s1 + $0x64] sm:$0xf]
    %v843 = vld [vmem:[%s1 + $0x68] sm:$0xf]
    %v844 = vld [vmem:[%s1 + $0x6c] sm:$0xf]
    %v845 = vld [vmem:[%s1 + $0x70] sm:$0xf]
    %v846 = vld [vmem:[%s1 + $0x74] sm:$0xf]
    %v847 = vld [vmem:[%s1 + $0x78] sm:$0xf]
    %v848 = vld [vmem:[%s1 + $0x7c] sm:$0xf]
    %v849 = vld [vmem:[%s1 + $0x80] sm:$0xf]
    %v850 = vld [vmem:[%s1 + $0x84] sm:$0xf]
    %v851 = vld [vmem:[%s1 + $0x88] sm:$0xf]
    %v852 = vld [vmem:[%s1 + $0x8c] sm:$0xf]
    %v853 = vld [vmem:[%s1 + $0x90] sm:$0xf]
    %v854 = vld [vmem:[%s1 + $0x94] sm:$0xf]
    %v855 = vld [vmem:[%s1 + $0x98] sm:$0xf]
    %v856 = vld [vmem:[%s1 + $0x9c] sm:$0xf]
    %v857 = vld [vmem:[%s1 + $0xa0] sm:$0xf]
    %v858 = vld [vmem:[%s1 + $0xa4] sm:$0xf]
    %v859 = vld [vmem:[%s1 + $0xa8] sm:$0xf]
    %v860 = vld [vmem:[%s1 + $0xac] sm:$0xf]
    %v861 = vld [vmem:[%s1 + $0xb0] sm:$0xf]
    %v862 = vld [vmem:[%s1 + $0xb4] sm:$0xf]
    %v863 = vld [vmem:[%s1 + $0xb8] sm:$0xf]
    %v864 = vld [vmem:[%s1 + $0xbc] sm:$0xf]
    %v865 = vld [vmem:[%s560] sm:$0xff]
    %v866 = vld [vmem:[%s560 + $0x8] sm:$0xff]
    %v867 = vld [vmem:[%s560 + $0x10] sm:$0xff]
    %v868 = vld [vmem:[%s560 + $0x18] sm:$0xff]
    %v869 = vld [vmem:[%s560 + $0x20] sm:$0xff]
    %v870 = vld [vmem:[%s560 + $0x28] sm:$0xff]
    %v871 = vld [vmem:[%s560 + $0x30] sm:$0xff]
    %v872 = vld [vmem:[%s560 + $0x38] sm:$0xff]
    %v873 = vld [vmem:[%s560 + $0x40] sm:$0xff]
    %v874 = vld [vmem:[%s560 + $0x48] sm:$0xff]
    %v875 = vld [vmem:[%s560 + $0x50] sm:$0xff]
    %v876 = vld [vmem:[%s560 + $0x58] sm:$0xff]
    %v877 = vld [vmem:[%s560 + $0x60] sm:$0xff]
    %v878 = vld [vmem:[%s560 + $0x68] sm:$0xff]
    %v879 = vld [vmem:[%s560 + $0x70] sm:$0xff]
    %v880 = vld [vmem:[%s560 + $0x78] sm:$0xff]
    %v881 = vld [vmem:[%s560 + $0x80] sm:$0xff]
    %v882 = vld [vmem:[%s560 + $0x88] sm:$0xff]
    %v883 = vld [vmem:[%s560 + $0x90] sm:$0xff]
    %v884 = vld [vmem:[%s560 + $0x98] sm:$0xff]
    %v885 = vld [vmem:[%s560 + $0xa0] sm:$0xff]
    %v886 = vld [vmem:[%s560 + $0xa8] sm:$0xff]
    %v887 = vld [vmem:[%s560 + $0xb0] sm:$0xff]
    %v888 = vld [vmem:[%s560 + $0xb8] sm:$0xff]
    %v889 = vld [vmem:[%s560 + $0xc0] sm:$0xff]
    %v890 = vld [vmem:[%s560 + $0xc8] sm:$0xff]
    %v891 = vld [vmem:[%s560 + $0xd0] sm:$0xff]
    %v892 = vld [vmem:[%s560 + $0xd8] sm:$0xff]
    %v893 = vld [vmem:[%s560 + $0xe0] sm:$0xff]
    %v894 = vld [vmem:[%s560 + $0xe8] sm:$0xff]
    %v895 = vld [vmem:[%s560 + $0xf0] sm:$0xff]
    %v896 = vld [vmem:[%s560 + $0xf8] sm:$0xff]
    %v897 = vld [vmem:[%s560 + $0x100] sm:$0xff]
    %v898 = vld [vmem:[%s560 + $0x108] sm:$0xff]
    %v899 = vld [vmem:[%s560 + $0x110] sm:$0xff]
    %v900 = vld [vmem:[%s560 + $0x118] sm:$0xff]
    %v901 = vld [vmem:[%s560 + $0x120] sm:$0xff]
    %v902 = vld [vmem:[%s560 + $0x128] sm:$0xff]
    %v903 = vld [vmem:[%s560 + $0x130] sm:$0xff]
    %v904 = vld [vmem:[%s560 + $0x138] sm:$0xff]
    %v905 = vld [vmem:[%s560 + $0x140] sm:$0xff]
    %v906 = vld [vmem:[%s560 + $0x148] sm:$0xff]
    %v907 = vld [vmem:[%s560 + $0x150] sm:$0xff]
    %v908 = vld [vmem:[%s560 + $0x158] sm:$0xff]
    %v909 = vld [vmem:[%s560 + $0x160] sm:$0xff]
    %v910 = vld [vmem:[%s560 + $0x168] sm:$0xff]
    %v911 = vld [vmem:[%s560 + $0x170] sm:$0xff]
    %v912 = vld [vmem:[%s560 + $0x178] sm:$0xff]
    %v913 = vld [vmem:[%s560 + $0x1b0] sm:$0xff]
    %v914 = vld [vmem:[%s560 + $0x1b8] sm:$0xff]
    %v915 = vld [vmem:[%s560 + $0x1c0] sm:$0xff]
    %v916 = vld [vmem:[%s560 + $0x1c8] sm:$0xff]
    %v917 = vld [vmem:[%s560 + $0x1d0] sm:$0xff]
    %v918 = vld [vmem:[%s560 + $0x1d8] sm:$0xff]
    %v919 = vld [vmem:[%s560 + $0x1e0] sm:$0xff]
    %v920 = vld [vmem:[%s560 + $0x1e8] sm:$0xff]
    %v921 = vld [vmem:[%s560 + $0x1f0] sm:$0xff]
    %v922 = vld [vmem:[%s560 + $0x1f8] sm:$0xff]
    %v923 = vld [vmem:[%s560 + $0x200] sm:$0xff]
    %v924 = vld [vmem:[%s560 + $0x208] sm:$0xff]
    %v925 = vld [vmem:[%s560 + $0x210] sm:$0xff]
    %v926 = vld [vmem:[%s560 + $0x218] sm:$0xff]
    %v927 = vld [vmem:[%s560 + $0x220] sm:$0xff]
    %v928 = vld [vmem:[%s560 + $0x228] sm:$0xff]
    %v929 = vld [vmem:[%s560 + $0x230] sm:$0xff]
    %v930 = vld [vmem:[%s560 + $0x238] sm:$0xff]
    %v931 = vld [vmem:[%s560 + $0x240] sm:$0xff]
    %v932 = vld [vmem:[%s560 + $0x248] sm:$0xff]
    %v933 = vld [vmem:[%s560 + $0x250] sm:$0xff]
    %v934 = vld [vmem:[%s560 + $0x258] sm:$0xff]
    %v935 = vld [vmem:[%s560 + $0x260] sm:$0xff]
    %v936 = vld [vmem:[%s560 + $0x268] sm:$0xff]
    %v937 = vld [vmem:[%s560 + $0x270] sm:$0xff]
    %v938 = vld [vmem:[%s560 + $0x278] sm:$0xff]
    %v939 = vld [vmem:[%s560 + $0x280] sm:$0xff]
    %v940 = vld [vmem:[%s560 + $0x288] sm:$0xff]
    %v941 = vld [vmem:[%s560 + $0x290] sm:$0xff]
    %v942 = vld [vmem:[%s560 + $0x298] sm:$0xff]
    %v943 = vld [vmem:[%s560 + $0x2a0] sm:$0xff]
    %v944 = vld [vmem:[%s560 + $0x2a8] sm:$0xff]
    %v945 = vld [vmem:[%s560 + $0x2b0] sm:$0xff]
    %v946 = vld [vmem:[%s560 + $0x2b8] sm:$0xff]
    %v947 = vld [vmem:[%s560 + $0x2c0] sm:$0xff]
    %v948 = vld [vmem:[%s560 + $0x2c8] sm:$0xff]
    %v949 = vld [vmem:[%s560 + $0x2d0] sm:$0xff]
    %v950 = vld [vmem:[%s560 + $0x2d8] sm:$0xff]
    %v951 = vld [vmem:[%s560 + $0x2e0] sm:$0xff]
    %v952 = vld [vmem:[%s560 + $0x2e8] sm:$0xff]
    %v953 = vld [vmem:[%s560 + $0x2f0] sm:$0xff]
    %v954 = vld [vmem:[%s560 + $0x2f8] sm:$0xff]
    %v955 = vld [vmem:[%s560 + $0x300] sm:$0xff]
    %v956 = vld [vmem:[%s560 + $0x308] sm:$0xff]
    %v957 = vld [vmem:[%s560 + $0x310] sm:$0xff]
    %v958 = vld [vmem:[%s560 + $0x318] sm:$0xff]
    %v959 = vld [vmem:[%s560 + $0x320] sm:$0xff]
    %v960 = vld [vmem:[%s560 + $0x328] sm:$0xff]
    %s961 = scalar_lea.vmem %s1, 192
    %v962 = vld [vmem:[%s961] sm:$0xf]
    %v963 = vld [vmem:[%s961 + $0x4] sm:$0xf]
    %v964 = vld [vmem:[%s961 + $0x8] sm:$0xf]
    %v965 = vld [vmem:[%s961 + $0xc] sm:$0xf]
    %v966 = vld [vmem:[%s961 + $0x10] sm:$0xf]
    %v967 = vld [vmem:[%s961 + $0x14] sm:$0xf]
    %v968 = vld [vmem:[%s961 + $0x18] sm:$0xf]
    %v969 = vld [vmem:[%s961 + $0x1c] sm:$0xf]
    %v970 = vld [vmem:[%s961 + $0x20] sm:$0xf]
    %v971 = vld [vmem:[%s961 + $0x24] sm:$0xf]
    %v972 = vld [vmem:[%s961 + $0x28] sm:$0xf]
    %v973 = vld [vmem:[%s961 + $0x2c] sm:$0xf]
    %v974 = vld [vmem:[%s961 + $0x30] sm:$0xf]
    %v975 = vld [vmem:[%s961 + $0x34] sm:$0xf]
    %v976 = vld [vmem:[%s961 + $0x38] sm:$0xf]
    %v977 = vld [vmem:[%s961 + $0x3c] sm:$0xf]
    %v978 = vld [vmem:[%s961 + $0x40] sm:$0xf]
    %v979 = vld [vmem:[%s961 + $0x44] sm:$0xf]
    %v980 = vld [vmem:[%s961 + $0x48] sm:$0xf]
    %v981 = vld [vmem:[%s961 + $0x4c] sm:$0xf]
    %v982 = vld [vmem:[%s961 + $0x50] sm:$0xf]
    %v983 = vld [vmem:[%s961 + $0x54] sm:$0xf]
    %v984 = vld [vmem:[%s961 + $0x58] sm:$0xf]
    %v985 = vld [vmem:[%s961 + $0x5c] sm:$0xf]
    %v986 = vld [vmem:[%s961 + $0x60] sm:$0xf]
    %v987 = vld [vmem:[%s961 + $0x64] sm:$0xf]
    %v988 = vld [vmem:[%s961 + $0x68] sm:$0xf]
    %v989 = vld [vmem:[%s961 + $0x6c] sm:$0xf]
    %v990 = vld [vmem:[%s961 + $0x70] sm:$0xf]
    %v991 = vld [vmem:[%s961 + $0x74] sm:$0xf]
    %v992 = vld [vmem:[%s961 + $0x78] sm:$0xf]
    %v993 = vld [vmem:[%s961 + $0x7c] sm:$0xf]
    %v994 = vld [vmem:[%s961 + $0x80] sm:$0xf]
    %v995 = vld [vmem:[%s961 + $0x84] sm:$0xf]
    %v996 = vld [vmem:[%s961 + $0x88] sm:$0xf]
    %v997 = vld [vmem:[%s961 + $0x8c] sm:$0xf]
    %v998 = vld [vmem:[%s961 + $0x90] sm:$0xf]
    %v999 = vld [vmem:[%s961 + $0x94] sm:$0xf]
    %v1000 = vld [vmem:[%s961 + $0x98] sm:$0xf]
    %v1001 = vld [vmem:[%s961 + $0x9c] sm:$0xf]
    %v1002 = vld [vmem:[%s961 + $0xa0] sm:$0xf]
    %v1003 = vld [vmem:[%s961 + $0xa4] sm:$0xf]
    %v1004 = vld [vmem:[%s961 + $0xa8] sm:$0xf]
    %v1005 = vld [vmem:[%s961 + $0xac] sm:$0xf]
    %v1006 = vld [vmem:[%s961 + $0xb0] sm:$0xf]
    %v1007 = vld [vmem:[%s961 + $0xb4] sm:$0xf]
    %v1008 = vld [vmem:[%s961 + $0xb8] sm:$0xf]
    %v1009 = vld [vmem:[%s961 + $0xbc] sm:$0xf]
    %v1058 = vunpack.c.l.b16 %v962
    %v1059 = vunpack.c.l.b16 %v963
    %v1060 = vunpack.c.l.b16 %v964
    %v1061 = vunpack.c.l.b16 %v965
    %v1062 = vunpack.c.l.b16 %v966
    %v1063 = vunpack.c.l.b16 %v967
    %v1064 = vunpack.c.l.b16 %v968
    %v1065 = vunpack.c.l.b16 %v969
    %v1066 = vunpack.c.l.b16 %v970
    %v1067 = vunpack.c.l.b16 %v971
    %v1068 = vunpack.c.l.b16 %v972
    %v1069 = vunpack.c.l.b16 %v973
    %v1070 = vunpack.c.l.b16 %v974
    %v1071 = vunpack.c.l.b16 %v975
    %v1072 = vunpack.c.l.b16 %v976
    %v1073 = vunpack.c.l.b16 %v977
    %v1074 = vunpack.c.l.b16 %v978
    %v1075 = vunpack.c.l.b16 %v979
    %v1076 = vunpack.c.l.b16 %v980
    %v1077 = vunpack.c.l.b16 %v981
    %v1078 = vunpack.c.l.b16 %v982
    %v1079 = vunpack.c.l.b16 %v983
    %v1080 = vunpack.c.l.b16 %v984
    %v1081 = vunpack.c.l.b16 %v985
    %v1082 = vunpack.c.l.b16 %v986
    %v1083 = vunpack.c.l.b16 %v987
    %v1084 = vunpack.c.l.b16 %v988
    %v1085 = vunpack.c.l.b16 %v989
    %v1086 = vunpack.c.l.b16 %v990
    %v1087 = vunpack.c.l.b16 %v991
    %v1088 = vunpack.c.l.b16 %v992
    %v1089 = vunpack.c.l.b16 %v993
    %v1090 = vunpack.c.l.b16 %v994
    %v1091 = vunpack.c.l.b16 %v995
    %v1092 = vunpack.c.l.b16 %v996
    %v1093 = vunpack.c.l.b16 %v997
    %v1094 = vunpack.c.l.b16 %v998
    %v1095 = vunpack.c.l.b16 %v999
    %v1096 = vunpack.c.l.b16 %v1000
    %v1097 = vunpack.c.l.b16 %v1001
    %v1098 = vunpack.c.l.b16 %v1002
    %v1099 = vunpack.c.l.b16 %v1003
    %v1100 = vunpack.c.l.b16 %v1004
    %v1101 = vunpack.c.l.b16 %v1005
    %v1102 = vunpack.c.l.b16 %v1006
    %v1103 = vunpack.c.l.b16 %v1007
    %v1104 = vunpack.c.l.b16 %v1008
    %v1105 = vunpack.c.l.b16 %v1009
    %v1106 = vpack.c.b16 %v1059, %v1058
    %v1107 = vpack.c.b16 %v1061, %v1060
    %v1108 = vpack.c.b16 %v1063, %v1062
    %v1109 = vpack.c.b16 %v1065, %v1064
    %v1110 = vpack.c.b16 %v1067, %v1066
    %v1111 = vpack.c.b16 %v1069, %v1068
    %v1112 = vpack.c.b16 %v1071, %v1070
    %v1113 = vpack.c.b16 %v1073, %v1072
    %v1114 = vpack.c.b16 %v1075, %v1074
    %v1115 = vpack.c.b16 %v1077, %v1076
    %v1116 = vpack.c.b16 %v1079, %v1078
    %v1117 = vpack.c.b16 %v1081, %v1080
    %v1118 = vpack.c.b16 %v1083, %v1082
    %v1119 = vpack.c.b16 %v1085, %v1084
    %v1120 = vpack.c.b16 %v1087, %v1086
    %v1121 = vpack.c.b16 %v1089, %v1088
    %v1122 = vpack.c.b16 %v1091, %v1090
    %v1123 = vpack.c.b16 %v1093, %v1092
    %v1124 = vpack.c.b16 %v1095, %v1094
    %v1125 = vpack.c.b16 %v1097, %v1096
    %v1126 = vpack.c.b16 %v1099, %v1098
    %v1127 = vpack.c.b16 %v1101, %v1100
    %v1128 = vpack.c.b16 %v1103, %v1102
    %v1129 = vpack.c.b16 %v1105, %v1104
    %1154 = vmatprep.subr.bf16.mxu0 0
    %1155 = vmatpush1.bf16.msra.mxu0 %v1106
    %1156 = vmatprep.subr.bf16.mxu0 0
    %1157 = vmatpush1.bf16.msra.mxu0 %v1107
    %1158 = vmatprep.subr.bf16.mxu0 0
    %1159 = vmatpush1.bf16.msra.mxu0 %v1108
    %1160 = vmatprep.subr.bf16.mxu0 0
    %1161 = vmatpush1.bf16.msra.mxu0 %v1109
    %1162 = vmatprep.subr.bf16.mxu0 0
    %1163 = vmatpush1.bf16.msra.mxu0 %v1110
    %1164 = vmatprep.subr.bf16.mxu0 0
    %1165 = vmatpush1.bf16.msra.mxu0 %v1111
    %1166 = vmatprep.subr.bf16.mxu0 0
    %1167 = vmatpush1.bf16.msra.mxu0 %v1112
    %1168 = vmatprep.subr.bf16.mxu0 0
    %1169 = vmatpush1.bf16.msra.mxu0 %v1113
    %1170 = vmatprep.subr.bf16.mxu0 0
    %1171 = vmatpush1.bf16.msra.mxu0 %v1114
    %1172 = vmatprep.subr.bf16.mxu0 0
    %1173 = vmatpush1.bf16.msra.mxu0 %v1115
    %1174 = vmatprep.subr.bf16.mxu0 0
    %1175 = vmatpush1.bf16.msra.mxu0 %v1116
    %1176 = vmatprep.subr.bf16.mxu0 0
    %1177 = vmatpush1.bf16.msra.mxu0 %v1117
    %1178 = vmatprep.subr.bf16.mxu0 0
    %1179 = vmatpush1.bf16.msra.mxu0 %v1118
    %1180 = vmatprep.subr.bf16.mxu0 0
    %1181 = vmatpush1.bf16.msra.mxu0 %v1119
    %1182 = vmatprep.subr.bf16.mxu0 0
    %1183 = vmatpush1.bf16.msra.mxu0 %v1120
    %1184 = vmatprep.subr.bf16.mxu0 0
    %1185 = vmatpush1.bf16.msra.mxu0 %v1121
    %1186 = vmatprep.mubr.bf16.mxu0 %v866
    %1187 = vmatmul.mubr.bf16.gmra.mrb[0].mxu0 %v865
    %v1188 = vpop.f32.mrb[0].mxu0
    %v1189 = vadd.f32 0.0, %v1188
    %v1190 = vpop.f32.mrb[0].mxu0
    %v1191 = vpop.f32.mrb[0].mxu0
    %v1192 = vadd.f32 0.0, %v1191
    %v1193 = vpop.f32.mrb[0].mxu0
    %1194 = vmatprep.mubr.bf16.mxu0 %v869
    %1195 = vmatmul.mubr.bf16.gmra.mrb[0].mxu0 %v868
    %v1196 = vpop.f32.mrb[0].mxu0
    %v1197 = vadd.f32 0.0, %v1196
    %v1198 = vpop.f32.mrb[0].mxu0
    %v1199 = vpop.f32.mrb[0].mxu0
    %v1200 = vadd.f32 0.0, %v1199
    %v1201 = vpop.f32.mrb[0].mxu0
    %1202 = vmatprep.mubr.bf16.mxu0 %v872
    %1203 = vmatmul.mubr.bf16.gmra.mrb[0].mxu0 %v871
    %v1204 = vpop.f32.mrb[0].mxu0
    %v1205 = vadd.f32 0.0, %v1204
    %v1206 = vpop.f32.mrb[0].mxu0
    %v1207 = vpop.f32.mrb[0].mxu0
    %v1208 = vadd.f32 0.0, %v1207
    %v1209 = vpop.f32.mrb[0].mxu0
    %1210 = vmatprep.mubr.bf16.mxu0 %v875
    %1211 = vmatmul.mubr.bf16.gmra.mrb[0].mxu0 %v874
    %v1212 = vpop.f32.mrb[0].mxu0
    %v1213 = vadd.f32 0.0, %v1212
    %v1214 = vpop.f32.mrb[0].mxu0
    %v1215 = vpop.f32.mrb[0].mxu0
    %v1216 = vadd.f32 0.0, %v1215
    %v1217 = vpop.f32.mrb[0].mxu0
    %1218 = vmatprep.mubr.bf16.mxu0 %v878
    %1219 = vmatmul.mubr.bf16.gmra.mrb[0].mxu0 %v877
    %v1220 = vpop.f32.mrb[0].mxu0
    %v1221 = vadd.f32 0.0, %v1220
    %v1222 = vpop.f32.mrb[0].mxu0
    %v1223 = vpop.f32.mrb[0].mxu0
    %v1224 = vadd.f32 0.0, %v1223
    %v1225 = vpop.f32.mrb[0].mxu0
    %1226 = vmatprep.mubr.bf16.mxu0 %v881
    %1227 = vmatmul.mubr.bf16.gmra.mrb[0].mxu0 %v880
    %v1228 = vpop.f32.mrb[0].mxu0
    %v1229 = vadd.f32 0.0, %v1228
    %v1230 = vpop.f32.mrb[0].mxu0
    %v1231 = vpop.f32.mrb[0].mxu0
    %v1232 = vadd.f32 0.0, %v1231
    %v1233 = vpop.f32.mrb[0].mxu0
    %1234 = vmatprep.mubr.bf16.mxu0 %v884
    %1235 = vmatmul.mubr.bf16.gmra.mrb[0].mxu0 %v883
    %v1236 = vpop.f32.mrb[0].mxu0
    %v1237 = vadd.f32 0.0, %v1236
    %v1238 = vpop.f32.mrb[0].mxu0
    %v1239 = vpop.f32.mrb[0].mxu0
    %v1240 = vadd.f32 0.0, %v1239
    %v1241 = vpop.f32.mrb[0].mxu0
    %1242 = vmatprep.mubr.bf16.mxu0 %v887
    %1243 = vmatmul.mubr.bf16.gmra.mrb[0].mxu0 %v886
    %v1244 = vpop.f32.mrb[0].mxu0
    %v1245 = vadd.f32 0.0, %v1244
    %v1246 = vpop.f32.mrb[0].mxu0
    %v1247 = vpop.f32.mrb[0].mxu0
    %v1248 = vadd.f32 0.0, %v1247
    %v1249 = vpop.f32.mrb[0].mxu0
    %1250 = vmatprep.mubr.bf16.mxu0 %v890
    %1251 = vmatmul.mubr.bf16.gmra.mrb[0].mxu0 %v889
    %v1252 = vpop.f32.mrb[0].mxu0
    %v1253 = vadd.f32 0.0, %v1252
    %v1254 = vpop.f32.mrb[0].mxu0
    %v1255 = vpop.f32.mrb[0].mxu0
    %v1256 = vadd.f32 0.0, %v1255
    %v1257 = vpop.f32.mrb[0].mxu0
    %1258 = vmatprep.mubr.bf16.mxu0 %v893
    %1259 = vmatmul.mubr.bf16.gmra.mrb[0].mxu0 %v892
    %v1260 = vpop.f32.mrb[0].mxu0
    %v1261 = vadd.f32 0.0, %v1260
    %v1262 = vpop.f32.mrb[0].mxu0
    %v1263 = vpop.f32.mrb[0].mxu0
    %v1264 = vadd.f32 0.0, %v1263
    %v1265 = vpop.f32.mrb[0].mxu0
    %1266 = vmatprep.mubr.bf16.mxu0 %v896
    %1267 = vmatmul.mubr.bf16.gmra.mrb[0].mxu0 %v895
    %v1268 = vpop.f32.mrb[0].mxu0
    %v1269 = vadd.f32 0.0, %v1268
    %v1270 = vpop.f32.mrb[0].mxu0
    %v1271 = vpop.f32.mrb[0].mxu0
    %v1272 = vadd.f32 0.0, %v1271
    %v1273 = vpop.f32.mrb[0].mxu0
    %1274 = vmatprep.mubr.bf16.mxu0 %v899
    %1275 = vmatmul.mubr.bf16.gmra.mrb[0].mxu0 %v898
    %v1276 = vpop.f32.mrb[0].mxu0
    %v1277 = vadd.f32 0.0, %v1276
    %v1278 = vpop.f32.mrb[0].mxu0
    %v1279 = vpop.f32.mrb[0].mxu0
    %v1280 = vadd.f32 0.0, %v1279
    %v1281 = vpop.f32.mrb[0].mxu0
    %1282 = vmatprep.mubr.bf16.mxu0 %v902
    %1283 = vmatmul.mubr.bf16.gmra.mrb[0].mxu0 %v901
    %v1284 = vpop.f32.mrb[0].mxu0
    %v1285 = vadd.f32 0.0, %v1284
    %v1286 = vpop.f32.mrb[0].mxu0
    %v1287 = vpop.f32.mrb[0].mxu0
    %v1288 = vadd.f32 0.0, %v1287
    %v1289 = vpop.f32.mrb[0].mxu0
    %1290 = vmatprep.mubr.bf16.mxu0 %v905
    %1291 = vmatmul.mubr.bf16.gmra.mrb[0].mxu0 %v904
    %v1292 = vpop.f32.mrb[0].mxu0
    %v1293 = vadd.f32 0.0, %v1292
    %v1294 = vpop.f32.mrb[0].mxu0
    %v1295 = vpop.f32.mrb[0].mxu0
    %v1296 = vadd.f32 0.0, %v1295
    %v1297 = vpop.f32.mrb[0].mxu0
    %1298 = vmatprep.mubr.bf16.mxu0 %v908
    %1299 = vmatmul.mubr.bf16.gmra.mrb[0].mxu0 %v907
    %v1300 = vpop.f32.mrb[0].mxu0
    %v1301 = vadd.f32 0.0, %v1300
    %v1302 = vpop.f32.mrb[0].mxu0
    %v1303 = vpop.f32.mrb[0].mxu0
    %v1304 = vadd.f32 0.0, %v1303
    %v1305 = vpop.f32.mrb[0].mxu0
    %1306 = vmatprep.mubr.bf16.mxu0 %v911
    %1307 = vmatmul.mubr.bf16.gmra.mrb[0].mxu0 %v910
    %v1308 = vpop.f32.mrb[0].mxu0
    %v1309 = vadd.f32 0.0, %v1308
    %v1310 = vpop.f32.mrb[0].mxu0
    %v1311 = vpop.f32.mrb[0].mxu0
    %v1312 = vadd.f32 0.0, %v1311
    %v1313 = vpop.f32.mrb[0].mxu0
    %1314 = vmatprep.mubr.bf16.mxu0 %v914
    %1315 = vmatmul.mubr.bf16.gmra.mrb[0].mxu0 %v913
    %v1316 = vpop.f32.mrb[0].mxu0
    %v1317 = vadd.f32 0.0, %v1316
    %v1318 = vpop.f32.mrb[0].mxu0
    %v1319 = vpop.f32.mrb[0].mxu0
    %v1320 = vadd.f32 0.0, %v1319
    %v1321 = vpop.f32.mrb[0].mxu0
    %1322 = vmatprep.mubr.bf16.mxu0 %v917
    %1323 = vmatmul.mubr.bf16.gmra.mrb[0].mxu0 %v916
    %v1324 = vpop.f32.mrb[0].mxu0
    %v1325 = vadd.f32 0.0, %v1324
    %v1326 = vpop.f32.mrb[0].mxu0
    %v1327 = vpop.f32.mrb[0].mxu0
    %v1328 = vadd.f32 0.0, %v1327
    %v1329 = vpop.f32.mrb[0].mxu0
    %1330 = vmatprep.mubr.bf16.mxu0 %v920
    %1331 = vmatmul.mubr.bf16.gmra.mrb[0].mxu0 %v919
    %v1332 = vpop.f32.mrb[0].mxu0
    %v1333 = vadd.f32 0.0, %v1332
    %v1334 = vpop.f32.mrb[0].mxu0
    %v1335 = vpop.f32.mrb[0].mxu0
    %v1336 = vadd.f32 0.0, %v1335
    %v1337 = vpop.f32.mrb[0].mxu0
    %1338 = vmatprep.mubr.bf16.mxu0 %v923
    %1339 = vmatmul.mubr.bf16.gmra.mrb[0].mxu0 %v922
    %v1340 = vpop.f32.mrb[0].mxu0
    %v1341 = vadd.f32 0.0, %v1340
    %v1342 = vpop.f32.mrb[0].mxu0
    %v1343 = vpop.f32.mrb[0].mxu0
    %v1344 = vadd.f32 0.0, %v1343
    %v1345 = vpop.f32.mrb[0].mxu0
    %1346 = vmatprep.mubr.bf16.mxu0 %v926
    %1347 = vmatmul.mubr.bf16.gmra.mrb[0].mxu0 %v925
    %v1348 = vpop.f32.mrb[0].mxu0
    %v1349 = vadd.f32 0.0, %v1348
    %v1350 = vpop.f32.mrb[0].mxu0
    %v1351 = vpop.f32.mrb[0].mxu0
    %v1352 = vadd.f32 0.0, %v1351
    %v1353 = vpop.f32.mrb[0].mxu0
    %1354 = vmatprep.mubr.bf16.mxu0 %v929
    %1355 = vmatmul.mubr.bf16.gmra.mrb[0].mxu0 %v928
    %v1356 = vpop.f32.mrb[0].mxu0
    %v1357 = vadd.f32 0.0, %v1356
    %v1358 = vpop.f32.mrb[0].mxu0
    %v1359 = vpop.f32.mrb[0].mxu0
    %v1360 = vadd.f32 0.0, %v1359
    %v1361 = vpop.f32.mrb[0].mxu0
    %1362 = vmatprep.mubr.bf16.mxu0 %v932
    %1363 = vmatmul.mubr.bf16.gmra.mrb[0].mxu0 %v931
    %v1364 = vpop.f32.mrb[0].mxu0
    %v1365 = vadd.f32 0.0, %v1364
    %v1366 = vpop.f32.mrb[0].mxu0
    %v1367 = vpop.f32.mrb[0].mxu0
    %v1368 = vadd.f32 0.0, %v1367
    %v1369 = vpop.f32.mrb[0].mxu0
    %1370 = vmatprep.mubr.bf16.mxu0 %v935
    %1371 = vmatmul.mubr.bf16.gmra.mrb[0].mxu0 %v934
    %v1372 = vpop.f32.mrb[0].mxu0
    %v1373 = vadd.f32 0.0, %v1372
    %v1374 = vpop.f32.mrb[0].mxu0
    %v1375 = vpop.f32.mrb[0].mxu0
    %v1376 = vadd.f32 0.0, %v1375
    %v1377 = vpop.f32.mrb[0].mxu0
    %1378 = vmatprep.mubr.bf16.mxu0 %v938
    %1379 = vmatmul.mubr.bf16.gmra.mrb[0].mxu0 %v937
    %v1380 = vpop.f32.mrb[0].mxu0
    %v1381 = vadd.f32 0.0, %v1380
    %v1382 = vpop.f32.mrb[0].mxu0
    %v1383 = vpop.f32.mrb[0].mxu0
    %v1384 = vadd.f32 0.0, %v1383
    %v1385 = vpop.f32.mrb[0].mxu0
    %1386 = vmatprep.mubr.bf16.mxu0 %v941
    %1387 = vmatmul.mubr.bf16.gmra.mrb[0].mxu0 %v940
    %v1388 = vpop.f32.mrb[0].mxu0
    %v1389 = vadd.f32 0.0, %v1388
    %v1390 = vpop.f32.mrb[0].mxu0
    %v1391 = vpop.f32.mrb[0].mxu0
    %v1392 = vadd.f32 0.0, %v1391
    %v1393 = vpop.f32.mrb[0].mxu0
    %1394 = vmatprep.mubr.bf16.mxu0 %v944
    %1395 = vmatmul.mubr.bf16.gmra.mrb[0].mxu0 %v943
    %v1396 = vpop.f32.mrb[0].mxu0
    %v1397 = vadd.f32 0.0, %v1396
    %v1398 = vpop.f32.mrb[0].mxu0
    %v1399 = vpop.f32.mrb[0].mxu0
    %v1400 = vadd.f32 0.0, %v1399
    %v1401 = vpop.f32.mrb[0].mxu0
    %1402 = vmatprep.mubr.bf16.mxu0 %v947
    %1403 = vmatmul.mubr.bf16.gmra.mrb[0].mxu0 %v946
    %v1404 = vpop.f32.mrb[0].mxu0
    %v1405 = vadd.f32 0.0, %v1404
    %v1406 = vpop.f32.mrb[0].mxu0
    %v1407 = vpop.f32.mrb[0].mxu0
    %v1408 = vadd.f32 0.0, %v1407
    %v1409 = vpop.f32.mrb[0].mxu0
    %1410 = vmatprep.mubr.bf16.mxu0 %v950
    %1411 = vmatmul.mubr.bf16.gmra.mrb[0].mxu0 %v949
    %v1412 = vpop.f32.mrb[0].mxu0
    %v1413 = vadd.f32 0.0, %v1412
    %v1414 = vpop.f32.mrb[0].mxu0
    %v1415 = vpop.f32.mrb[0].mxu0
    %v1416 = vadd.f32 0.0, %v1415
    %v1417 = vpop.f32.mrb[0].mxu0
    %1418 = vmatprep.mubr.bf16.mxu0 %v953
    %1419 = vmatmul.mubr.bf16.gmra.mrb[0].mxu0 %v952
    %v1420 = vpop.f32.mrb[0].mxu0
    %v1421 = vadd.f32 0.0, %v1420
    %v1422 = vpop.f32.mrb[0].mxu0
    %v1423 = vpop.f32.mrb[0].mxu0
    %v1424 = vadd.f32 0.0, %v1423
    %v1425 = vpop.f32.mrb[0].mxu0
    %1426 = vmatprep.mubr.bf16.mxu0 %v956
    %1427 = vmatmul.mubr.bf16.gmra.mrb[0].mxu0 %v955
    %v1428 = vpop.f32.mrb[0].mxu0
    %v1429 = vadd.f32 0.0, %v1428
    %v1430 = vpop.f32.mrb[0].mxu0
    %v1431 = vpop.f32.mrb[0].mxu0
    %v1432 = vadd.f32 0.0, %v1431
    %v1433 = vpop.f32.mrb[0].mxu0
    %1434 = vmatprep.mubr.bf16.mxu0 %v959
    %1435 = vmatmul.mubr.bf16.gmra.mrb[0].mxu0 %v958
    %v1436 = vpop.f32.mrb[0].mxu0
    %v1437 = vadd.f32 0.0, %v1436
    %v1438 = vpop.f32.mrb[0].mxu0
    %v1439 = vpop.f32.mrb[0].mxu0
    %v1440 = vadd.f32 0.0, %v1439
    %v1441 = vpop.f32.mrb[0].mxu0
    %1442 = vdwg.mxu0
    %1443 = vmatprep.subr.bf16.mxu0 0
    %1444 = vmatpush1.bf16.msra.mxu0 %v1122
    %1445 = vmatprep.subr.bf16.mxu0 0
    %1446 = vmatpush1.bf16.msra.mxu0 %v1123
    %1447 = vmatprep.subr.bf16.mxu0 0
    %1448 = vmatpush1.bf16.msra.mxu0 %v1124
    %1449 = vmatprep.subr.bf16.mxu0 0
    %1450 = vmatpush1.bf16.msra.mxu0 %v1125
    %1451 = vmatprep.subr.bf16.mxu0 0
    %1452 = vmatpush1.bf16.msra.mxu0 %v1126
    %1453 = vmatprep.subr.bf16.mxu0 0
    %1454 = vmatpush1.bf16.msra.mxu0 %v1127
    %1455 = vmatprep.subr.bf16.mxu0 0
    %1456 = vmatpush1.bf16.msra.mxu0 %v1128
    %1457 = vmatprep.subr.bf16.mxu0 0
    %1458 = vmatpush1.bf16.msra.mxu0 %v1129
    %1459 = vmatprep.subr.bf16.mxu0 0
    %1460 = vmatpush1.bf16.msra.mxu0 0
    %1461 = vmatprep.subr.bf16.mxu0 0
    %1462 = vmatpush1.bf16.msra.mxu0 0
    %1463 = vmatprep.subr.bf16.mxu0 0
    %1464 = vmatpush1.bf16.msra.mxu0 0
    %1465 = vmatprep.subr.bf16.mxu0 0
    %1466 = vmatpush1.bf16.msra.mxu0 0
    %1467 = vmatprep.subr.bf16.mxu0 0
    %1468 = vmatpush1.bf16.msra.mxu0 0
    %1469 = vmatprep.subr.bf16.mxu0 0
    %1470 = vmatpush1.bf16.msra.mxu0 0
    %1471 = vmatprep.subr.bf16.mxu0 0
    %1472 = vmatpush1.bf16.msra.mxu0 0
    %1473 = vmatprep.subr.bf16.mxu0 0
    %1474 = vmatpush1.bf16.msra.mxu0 0
    %1475 = vmatprep.mubr.bf16.mxu0 0
    %1476 = vmatmul.mubr.bf16.gmra.mrb[0].mxu0 %v867
    %v1477 = vpop.f32.mrb[0].mxu0
    %v1478 = vadd.f32 %v1189, %v1477
    %v1479 = vpop.f32.mrb[0].mxu0
    %v1480 = vpop.f32.mrb[0].mxu0
    %v1481 = vadd.f32 %v1192, %v1480
    %v1482 = vpop.f32.mrb[0].mxu0
    %1483 = vmatprep.mubr.bf16.mxu0 0
    %1484 = vmatmul.mubr.bf16.gmra.mrb[0].mxu0 %v870
    %v1485 = vpop.f32.mrb[0].mxu0
    %v1486 = vadd.f32 %v1197, %v1485
    %v1487 = vpop.f32.mrb[0].mxu0
    %v1488 = vpop.f32.mrb[0].mxu0
    %v1489 = vadd.f32 %v1200, %v1488
    %v1490 = vpop.f32.mrb[0].mxu0
    %1491 = vmatprep.mubr.bf16.mxu0 0
    %1492 = vmatmul.mubr.bf16.gmra.mrb[0].mxu0 %v873
    %v1493 = vpop.f32.mrb[0].mxu0
    %v1494 = vadd.f32 %v1205, %v1493
    %v1495 = vpop.f32.mrb[0].mxu0
    %v1496 = vpop.f32.mrb[0].mxu0
    %v1497 = vadd.f32 %v1208, %v1496
    %v1498 = vpop.f32.mrb[0].mxu0
    %1499 = vmatprep.mubr.bf16.mxu0 0
    %1500 = vmatmul.mubr.bf16.gmra.mrb[0].mxu0 %v876
    %v1501 = vpop.f32.mrb[0].mxu0
    %v1502 = vadd.f32 %v1213, %v1501
    %v1503 = vpop.f32.mrb[0].mxu0
    %v1504 = vpop.f32.mrb[0].mxu0
    %v1505 = vadd.f32 %v1216, %v1504
    %v1506 = vpop.f32.mrb[0].mxu0
    %1507 = vmatprep.mubr.bf16.mxu0 0
    %1508 = vmatmul.mubr.bf16.gmra.mrb[0].mxu0 %v879
    %v1509 = vpop.f32.mrb[0].mxu0
    %v1510 = vadd.f32 %v1221, %v1509
    %v1511 = vpop.f32.mrb[0].mxu0
    %v1512 = vpop.f32.mrb[0].mxu0
    %v1513 = vadd.f32 %v1224, %v1512
    %v1514 = vpop.f32.mrb[0].mxu0
    %1515 = vmatprep.mubr.bf16.mxu0 0
    %1516 = vmatmul.mubr.bf16.gmra.mrb[0].mxu0 %v882
    %v1517 = vpop.f32.mrb[0].mxu0
    %v1518 = vadd.f32 %v1229, %v1517
    %v1519 = vpop.f32.mrb[0].mxu0
    %v1520 = vpop.f32.mrb[0].mxu0
    %v1521 = vadd.f32 %v1232, %v1520
    %v1522 = vpop.f32.mrb[0].mxu0
    %1523 = vmatprep.mubr.bf16.mxu0 0
    %1524 = vmatmul.mubr.bf16.gmra.mrb[0].mxu0 %v885
    %v1525 = vpop.f32.mrb[0].mxu0
    %v1526 = vadd.f32 %v1237, %v1525
    %v1527 = vpop.f32.mrb[0].mxu0
    %v1528 = vpop.f32.mrb[0].mxu0
    %v1529 = vadd.f32 %v1240, %v1528
    %v1530 = vpop.f32.mrb[0].mxu0
    %1531 = vmatprep.mubr.bf16.mxu0 0
    %1532 = vmatmul.mubr.bf16.gmra.mrb[0].mxu0 %v888
    %v1533 = vpop.f32.mrb[0].mxu0
    %v1534 = vadd.f32 %v1245, %v1533
    %v1535 = vpop.f32.mrb[0].mxu0
    %v1536 = vpop.f32.mrb[0].mxu0
    %v1537 = vadd.f32 %v1248, %v1536
    %v1538 = vpop.f32.mrb[0].mxu0
    %1539 = vmatprep.mubr.bf16.mxu0 0
    %1540 = vmatmul.mubr.bf16.gmra.mrb[0].mxu0 %v891
    %v1541 = vpop.f32.mrb[0].mxu0
    %v1542 = vadd.f32 %v1253, %v1541
    %v1543 = vpop.f32.mrb[0].mxu0
    %v1544 = vpop.f32.mrb[0].mxu0
    %v1545 = vadd.f32 %v1256, %v1544
    %v1546 = vpop.f32.mrb[0].mxu0
    %1547 = vmatprep.mubr.bf16.mxu0 0
    %1548 = vmatmul.mubr.bf16.gmra.mrb[0].mxu0 %v894
    %v1549 = vpop.f32.mrb[0].mxu0
    %v1550 = vadd.f32 %v1261, %v1549
    %v1551 = vpop.f32.mrb[0].mxu0
    %v1552 = vpop.f32.mrb[0].mxu0
    %v1553 = vadd.f32 %v1264, %v1552
    %v1554 = vpop.f32.mrb[0].mxu0
    %1555 = vmatprep.mubr.bf16.mxu0 0
    %1556 = vmatmul.mubr.bf16.gmra.mrb[0].mxu0 %v897
    %v1557 = vpop.f32.mrb[0].mxu0
    %v1558 = vadd.f32 %v1269, %v1557
    %v1559 = vpop.f32.mrb[0].mxu0
    %v1560 = vpop.f32.mrb[0].mxu0
    %v1561 = vadd.f32 %v1272, %v1560
    %v1562 = vpop.f32.mrb[0].mxu0
    %1563 = vmatprep.mubr.bf16.mxu0 0
    %1564 = vmatmul.mubr.bf16.gmra.mrb[0].mxu0 %v900
    %v1565 = vpop.f32.mrb[0].mxu0
    %v1566 = vadd.f32 %v1277, %v1565
    %v1567 = vpop.f32.mrb[0].mxu0
    %v1568 = vpop.f32.mrb[0].mxu0
    %v1569 = vadd.f32 %v1280, %v1568
    %v1570 = vpop.f32.mrb[0].mxu0
    %1571 = vmatprep.mubr.bf16.mxu0 0
    %1572 = vmatmul.mubr.bf16.gmra.mrb[0].mxu0 %v903
    %v1573 = vpop.f32.mrb[0].mxu0
    %v1574 = vadd.f32 %v1285, %v1573
    %v1575 = vpop.f32.mrb[0].mxu0
    %v1576 = vpop.f32.mrb[0].mxu0
    %v1577 = vadd.f32 %v1288, %v1576
    %v1578 = vpop.f32.mrb[0].mxu0
    %1579 = vmatprep.mubr.bf16.mxu0 0
    %1580 = vmatmul.mubr.bf16.gmra.mrb[0].mxu0 %v906
    %v1581 = vpop.f32.mrb[0].mxu0
    %v1582 = vadd.f32 %v1293, %v1581
    %v1583 = vpop.f32.mrb[0].mxu0
    %v1584 = vpop.f32.mrb[0].mxu0
    %v1585 = vadd.f32 %v1296, %v1584
    %v1586 = vpop.f32.mrb[0].mxu0
    %1587 = vmatprep.mubr.bf16.mxu0 0
    %1588 = vmatmul.mubr.bf16.gmra.mrb[0].mxu0 %v909
    %v1589 = vpop.f32.mrb[0].mxu0
    %v1590 = vadd.f32 %v1301, %v1589
    %v1591 = vpop.f32.mrb[0].mxu0
    %v1592 = vpop.f32.mrb[0].mxu0
    %v1593 = vadd.f32 %v1304, %v1592
    %v1594 = vpop.f32.mrb[0].mxu0
    %1595 = vmatprep.mubr.bf16.mxu0 0
    %1596 = vmatmul.mubr.bf16.gmra.mrb[0].mxu0 %v912
    %v1597 = vpop.f32.mrb[0].mxu0
    %v1598 = vadd.f32 %v1309, %v1597
    %v1599 = vpop.f32.mrb[0].mxu0
    %v1600 = vpop.f32.mrb[0].mxu0
    %v1601 = vadd.f32 %v1312, %v1600
    %v1602 = vpop.f32.mrb[0].mxu0
    %1603 = vmatprep.mubr.bf16.mxu0 0
    %1604 = vmatmul.mubr.bf16.gmra.mrb[0].mxu0 %v915
    %v1605 = vpop.f32.mrb[0].mxu0
    %v1606 = vadd.f32 %v1317, %v1605
    %v1607 = vpop.f32.mrb[0].mxu0
    %v1608 = vpop.f32.mrb[0].mxu0
    %v1609 = vadd.f32 %v1320, %v1608
    %v1610 = vpop.f32.mrb[0].mxu0
    %1611 = vmatprep.mubr.bf16.mxu0 0
    %1612 = vmatmul.mubr.bf16.gmra.mrb[0].mxu0 %v918
    %v1613 = vpop.f32.mrb[0].mxu0
    %v1614 = vadd.f32 %v1325, %v1613
    %v1615 = vpop.f32.mrb[0].mxu0
    %v1616 = vpop.f32.mrb[0].mxu0
    %v1617 = vadd.f32 %v1328, %v1616
    %v1618 = vpop.f32.mrb[0].mxu0
    %1619 = vmatprep.mubr.bf16.mxu0 0
    %1620 = vmatmul.mubr.bf16.gmra.mrb[0].mxu0 %v921
    %v1621 = vpop.f32.mrb[0].mxu0
    %v1622 = vadd.f32 %v1333, %v1621
    %v1623 = vpop.f32.mrb[0].mxu0
    %v1624 = vpop.f32.mrb[0].mxu0
    %v1625 = vadd.f32 %v1336, %v1624
    %v1626 = vpop.f32.mrb[0].mxu0
    %1627 = vmatprep.mubr.bf16.mxu0 0
    %1628 = vmatmul.mubr.bf16.gmra.mrb[0].mxu0 %v924
    %v1629 = vpop.f32.mrb[0].mxu0
    %v1630 = vadd.f32 %v1341, %v1629
    %v1631 = vpop.f32.mrb[0].mxu0
    %v1632 = vpop.f32.mrb[0].mxu0
    %v1633 = vadd.f32 %v1344, %v1632
    %v1634 = vpop.f32.mrb[0].mxu0
    %1635 = vmatprep.mubr.bf16.mxu0 0
    %1636 = vmatmul.mubr.bf16.gmra.mrb[0].mxu0 %v927
    %v1637 = vpop.f32.mrb[0].mxu0
    %v1638 = vadd.f32 %v1349, %v1637
    %v1639 = vpop.f32.mrb[0].mxu0
    %v1640 = vpop.f32.mrb[0].mxu0
    %v1641 = vadd.f32 %v1352, %v1640
    %v1642 = vpop.f32.mrb[0].mxu0
    %1643 = vmatprep.mubr.bf16.mxu0 0
    %1644 = vmatmul.mubr.bf16.gmra.mrb[0].mxu0 %v930
    %v1645 = vpop.f32.mrb[0].mxu0
    %v1646 = vadd.f32 %v1357, %v1645
    %v1647 = vpop.f32.mrb[0].mxu0
    %v1648 = vpop.f32.mrb[0].mxu0
    %v1649 = vadd.f32 %v1360, %v1648
    %v1650 = vpop.f32.mrb[0].mxu0
    %1651 = vmatprep.mubr.bf16.mxu0 0
    %1652 = vmatmul.mubr.bf16.gmra.mrb[0].mxu0 %v933
    %v1653 = vpop.f32.mrb[0].mxu0
    %v1654 = vadd.f32 %v1365, %v1653
    %v1655 = vpop.f32.mrb[0].mxu0
    %v1656 = vpop.f32.mrb[0].mxu0
    %v1657 = vadd.f32 %v1368, %v1656
    %v1658 = vpop.f32.mrb[0].mxu0
    %1659 = vmatprep.mubr.bf16.mxu0 0
    %1660 = vmatmul.mubr.bf16.gmra.mrb[0].mxu0 %v936
    %v1661 = vpop.f32.mrb[0].mxu0
    %v1662 = vadd.f32 %v1373, %v1661
    %v1663 = vpop.f32.mrb[0].mxu0
    %v1664 = vpop.f32.mrb[0].mxu0
    %v1665 = vadd.f32 %v1376, %v1664
    %v1666 = vpop.f32.mrb[0].mxu0
    %1667 = vmatprep.mubr.bf16.mxu0 0
    %1668 = vmatmul.mubr.bf16.gmra.mrb[0].mxu0 %v939
    %v1669 = vpop.f32.mrb[0].mxu0
    %v1670 = vadd.f32 %v1381, %v1669
    %v1671 = vpop.f32.mrb[0].mxu0
    %v1672 = vpop.f32.mrb[0].mxu0
    %v1673 = vadd.f32 %v1384, %v1672
    %v1674 = vpop.f32.mrb[0].mxu0
    %1675 = vmatprep.mubr.bf16.mxu0 0
    %1676 = vmatmul.mubr.bf16.gmra.mrb[0].mxu0 %v942
    %v1677 = vpop.f32.mrb[0].mxu0
    %v1678 = vadd.f32 %v1389, %v1677
    %v1679 = vpop.f32.mrb[0].mxu0
    %v1680 = vpop.f32.mrb[0].mxu0
    %v1681 = vadd.f32 %v1392, %v1680
    %v1682 = vpop.f32.mrb[0].mxu0
    %1683 = vmatprep.mubr.bf16.mxu0 0
    %1684 = vmatmul.mubr.bf16.gmra.mrb[0].mxu0 %v945
    %v1685 = vpop.f32.mrb[0].mxu0
    %v1686 = vadd.f32 %v1397, %v1685
    %v1687 = vpop.f32.mrb[0].mxu0
    %v1688 = vpop.f32.mrb[0].mxu0
    %v1689 = vadd.f32 %v1400, %v1688
    %v1690 = vpop.f32.mrb[0].mxu0
    %1691 = vmatprep.mubr.bf16.mxu0 0
    %1692 = vmatmul.mubr.bf16.gmra.mrb[0].mxu0 %v948
    %v1693 = vpop.f32.mrb[0].mxu0
    %v1694 = vadd.f32 %v1405, %v1693
    %v1695 = vpop.f32.mrb[0].mxu0
    %v1696 = vpop.f32.mrb[0].mxu0
    %v1697 = vadd.f32 %v1408, %v1696
    %v1698 = vpop.f32.mrb[0].mxu0
    %1699 = vmatprep.mubr.bf16.mxu0 0
    %1700 = vmatmul.mubr.bf16.gmra.mrb[0].mxu0 %v951
    %v1701 = vpop.f32.mrb[0].mxu0
    %v1702 = vadd.f32 %v1413, %v1701
    %v1703 = vpop.f32.mrb[0].mxu0
    %v1704 = vpop.f32.mrb[0].mxu0
    %v1705 = vadd.f32 %v1416, %v1704
    %v1706 = vpop.f32.mrb[0].mxu0
    %1707 = vmatprep.mubr.bf16.mxu0 0
    %1708 = vmatmul.mubr.bf16.gmra.mrb[0].mxu0 %v954
    %v1709 = vpop.f32.mrb[0].mxu0
    %v1710 = vadd.f32 %v1421, %v1709
    %v1711 = vpop.f32.mrb[0].mxu0
    %v1712 = vpop.f32.mrb[0].mxu0
    %v1713 = vadd.f32 %v1424, %v1712
    %v1714 = vpop.f32.mrb[0].mxu0
    %1715 = vmatprep.mubr.bf16.mxu0 0
    %1716 = vmatmul.mubr.bf16.gmra.mrb[0].mxu0 %v957
    %v1717 = vpop.f32.mrb[0].mxu0
    %v1718 = vadd.f32 %v1429, %v1717
    %v1719 = vpop.f32.mrb[0].mxu0
    %v1720 = vpop.f32.mrb[0].mxu0
    %v1721 = vadd.f32 %v1432, %v1720
    %v1722 = vpop.f32.mrb[0].mxu0
    %1723 = vmatprep.mubr.bf16.mxu0 0
    %1724 = vmatmul.mubr.bf16.gmra.mrb[0].mxu0 %v960
    %v1725 = vpop.f32.mrb[0].mxu0
    %v1726 = vadd.f32 %v1437, %v1725
    %v1727 = vpop.f32.mrb[0].mxu0
    %v1728 = vpop.f32.mrb[0].mxu0
    %v1729 = vadd.f32 %v1440, %v1728
    %v1730 = vpop.f32.mrb[0].mxu0
    %1731 = vdwg.mxu0
    %v1780 = vunpack.c.l.b16 %v817
    %v1781 = vunpack.c.l.b16 %v818
    %v1782 = vunpack.c.l.b16 %v819
    %v1783 = vunpack.c.l.b16 %v820
    %v1784 = vunpack.c.l.b16 %v821
    %v1785 = vunpack.c.l.b16 %v822
    %v1786 = vunpack.c.l.b16 %v823
    %v1787 = vunpack.c.l.b16 %v824
    %v1788 = vunpack.c.l.b16 %v825
    %v1789 = vunpack.c.l.b16 %v826
    %v1790 = vunpack.c.l.b16 %v827
    %v1791 = vunpack.c.l.b16 %v828
    %v1792 = vunpack.c.l.b16 %v829
    %v1793 = vunpack.c.l.b16 %v830
    %v1794 = vunpack.c.l.b16 %v831
    %v1795 = vunpack.c.l.b16 %v832
    %v1796 = vunpack.c.l.b16 %v833
    %v1797 = vunpack.c.l.b16 %v834
    %v1798 = vunpack.c.l.b16 %v835
    %v1799 = vunpack.c.l.b16 %v836
    %v1800 = vunpack.c.l.b16 %v837
    %v1801 = vunpack.c.l.b16 %v838
    %v1802 = vunpack.c.l.b16 %v839
    %v1803 = vunpack.c.l.b16 %v840
    %v1804 = vunpack.c.l.b16 %v841
    %v1805 = vunpack.c.l.b16 %v842
    %v1806 = vunpack.c.l.b16 %v843
    %v1807 = vunpack.c.l.b16 %v844
    %v1808 = vunpack.c.l.b16 %v845
    %v1809 = vunpack.c.l.b16 %v846
    %v1810 = vunpack.c.l.b16 %v847
    %v1811 = vunpack.c.l.b16 %v848
    %v1812 = vunpack.c.l.b16 %v849
    %v1813 = vunpack.c.l.b16 %v850
    %v1814 = vunpack.c.l.b16 %v851
    %v1815 = vunpack.c.l.b16 %v852
    %v1816 = vunpack.c.l.b16 %v853
    %v1817 = vunpack.c.l.b16 %v854
    %v1818 = vunpack.c.l.b16 %v855
    %v1819 = vunpack.c.l.b16 %v856
    %v1820 = vunpack.c.l.b16 %v857
    %v1821 = vunpack.c.l.b16 %v858
    %v1822 = vunpack.c.l.b16 %v859
    %v1823 = vunpack.c.l.b16 %v860
    %v1824 = vunpack.c.l.b16 %v861
    %v1825 = vunpack.c.l.b16 %v862
    %v1826 = vunpack.c.l.b16 %v863
    %v1827 = vunpack.c.l.b16 %v864
    %v1828 = vpack.c.b16 %v1781, %v1780
    %v1829 = vpack.c.b16 %v1783, %v1782
    %v1830 = vpack.c.b16 %v1785, %v1784
    %v1831 = vpack.c.b16 %v1787, %v1786
    %v1832 = vpack.c.b16 %v1789, %v1788
    %v1833 = vpack.c.b16 %v1791, %v1790
    %v1834 = vpack.c.b16 %v1793, %v1792
    %v1835 = vpack.c.b16 %v1795, %v1794
    %v1836 = vpack.c.b16 %v1797, %v1796
    %v1837 = vpack.c.b16 %v1799, %v1798
    %v1838 = vpack.c.b16 %v1801, %v1800
    %v1839 = vpack.c.b16 %v1803, %v1802
    %v1840 = vpack.c.b16 %v1805, %v1804
    %v1841 = vpack.c.b16 %v1807, %v1806
    %v1842 = vpack.c.b16 %v1809, %v1808
    %v1843 = vpack.c.b16 %v1811, %v1810
    %v1844 = vpack.c.b16 %v1813, %v1812
    %v1845 = vpack.c.b16 %v1815, %v1814
    %v1846 = vpack.c.b16 %v1817, %v1816
    %v1847 = vpack.c.b16 %v1819, %v1818
    %v1848 = vpack.c.b16 %v1821, %v1820
    %v1849 = vpack.c.b16 %v1823, %v1822
    %v1850 = vpack.c.b16 %v1825, %v1824
    %v1851 = vpack.c.b16 %v1827, %v1826
    %1876 = vmatprep.subr.bf16.mxu0 0
    %1877 = vmatpush1.bf16.msra.mxu0 %v1828
    %1878 = vmatprep.subr.bf16.mxu0 0
    %1879 = vmatpush1.bf16.msra.mxu0 %v1829
    %1880 = vmatprep.subr.bf16.mxu0 0
    %1881 = vmatpush1.bf16.msra.mxu0 %v1830
    %1882 = vmatprep.subr.bf16.mxu0 0
    %1883 = vmatpush1.bf16.msra.mxu0 %v1831
    %1884 = vmatprep.subr.bf16.mxu0 0
    %1885 = vmatpush1.bf16.msra.mxu0 %v1832
    %1886 = vmatprep.subr.bf16.mxu0 0
    %1887 = vmatpush1.bf16.msra.mxu0 %v1833
    %1888 = vmatprep.subr.bf16.mxu0 0
    %1889 = vmatpush1.bf16.msra.mxu0 %v1834
    %1890 = vmatprep.subr.bf16.mxu0 0
    %1891 = vmatpush1.bf16.msra.mxu0 %v1835
    %1892 = vmatprep.subr.bf16.mxu0 0
    %1893 = vmatpush1.bf16.msra.mxu0 %v1836
    %1894 = vmatprep.subr.bf16.mxu0 0
    %1895 = vmatpush1.bf16.msra.mxu0 %v1837
    %1896 = vmatprep.subr.bf16.mxu0 0
    %1897 = vmatpush1.bf16.msra.mxu0 %v1838
    %1898 = vmatprep.subr.bf16.mxu0 0
    %1899 = vmatpush1.bf16.msra.mxu0 %v1839
    %1900 = vmatprep.subr.bf16.mxu0 0
    %1901 = vmatpush1.bf16.msra.mxu0 %v1840
    %1902 = vmatprep.subr.bf16.mxu0 0
    %1903 = vmatpush1.bf16.msra.mxu0 %v1841
    %1904 = vmatprep.subr.bf16.mxu0 0
    %1905 = vmatpush1.bf16.msra.mxu0 %v1842
    %1906 = vmatprep.subr.bf16.mxu0 0
    %1907 = vmatpush1.bf16.msra.mxu0 %v1843
    %1908 = vmatprep.mubr.bf16.mxu0 %v722
    %1909 = vmatmul.mubr.bf16.gmra.mrb[0].mxu0 %v721
    %v1910 = vpop.f32.mrb[0].mxu0
    %v1911 = vadd.f32 %v1478, %v1910
    %v1912 = vpop.f32.mrb[0].mxu0
    %v1913 = vpop.f32.mrb[0].mxu0
    %v1914 = vadd.f32 %v1481, %v1913
    %v1915 = vpop.f32.mrb[0].mxu0
    %1916 = vmatprep.mubr.bf16.mxu0 %v725
    %1917 = vmatmul.mubr.bf16.gmra.mrb[0].mxu0 %v724
    %v1918 = vpop.f32.mrb[0].mxu0
    %v1919 = vadd.f32 %v1486, %v1918
    %v1920 = vpop.f32.mrb[0].mxu0
    %v1921 = vpop.f32.mrb[0].mxu0
    %v1922 = vadd.f32 %v1489, %v1921
    %v1923 = vpop.f32.mrb[0].mxu0
    %1924 = vmatprep.mubr.bf16.mxu0 %v728
    %1925 = vmatmul.mubr.bf16.gmra.mrb[0].mxu0 %v727
    %v1926 = vpop.f32.mrb[0].mxu0
    %v1927 = vadd.f32 %v1494, %v1926
    %v1928 = vpop.f32.mrb[0].mxu0
    %v1929 = vpop.f32.mrb[0].mxu0
    %v1930 = vadd.f32 %v1497, %v1929
    %v1931 = vpop.f32.mrb[0].mxu0
    %1932 = vmatprep.mubr.bf16.mxu0 %v731
    %1933 = vmatmul.mubr.bf16.gmra.mrb[0].mxu0 %v730
    %v1934 = vpop.f32.mrb[0].mxu0
    %v1935 = vadd.f32 %v1502, %v1934
    %v1936 = vpop.f32.mrb[0].mxu0
    %v1937 = vpop.f32.mrb[0].mxu0
    %v1938 = vadd.f32 %v1505, %v1937
    %v1939 = vpop.f32.mrb[0].mxu0
    %1940 = vmatprep.mubr.bf16.mxu0 %v734
    %1941 = vmatmul.mubr.bf16.gmra.mrb[0].mxu0 %v733
    %v1942 = vpop.f32.mrb[0].mxu0
    %v1943 = vadd.f32 %v1510, %v1942
    %v1944 = vpop.f32.mrb[0].mxu0
    %v1945 = vpop.f32.mrb[0].mxu0
    %v1946 = vadd.f32 %v1513, %v1945
    %v1947 = vpop.f32.mrb[0].mxu0
    %1948 = vmatprep.mubr.bf16.mxu0 %v737
    %1949 = vmatmul.mubr.bf16.gmra.mrb[0].mxu0 %v736
    %v1950 = vpop.f32.mrb[0].mxu0
    %v1951 = vadd.f32 %v1518, %v1950
    %v1952 = vpop.f32.mrb[0].mxu0
    %v1953 = vpop.f32.mrb[0].mxu0
    %v1954 = vadd.f32 %v1521, %v1953
    %v1955 = vpop.f32.mrb[0].mxu0
    %1956 = vmatprep.mubr.bf16.mxu0 %v740
    %1957 = vmatmul.mubr.bf16.gmra.mrb[0].mxu0 %v739
    %v1958 = vpop.f32.mrb[0].mxu0
    %v1959 = vadd.f32 %v1526, %v1958
    %v1960 = vpop.f32.mrb[0].mxu0
    %v1961 = vpop.f32.mrb[0].mxu0
    %v1962 = vadd.f32 %v1529, %v1961
    %v1963 = vpop.f32.mrb[0].mxu0
    %1964 = vmatprep.mubr.bf16.mxu0 %v743
    %1965 = vmatmul.mubr.bf16.gmra.mrb[0].mxu0 %v742
    %v1966 = vpop.f32.mrb[0].mxu0
    %v1967 = vadd.f32 %v1534, %v1966
    %v1968 = vpop.f32.mrb[0].mxu0
    %v1969 = vpop.f32.mrb[0].mxu0
    %v1970 = vadd.f32 %v1537, %v1969
    %v1971 = vpop.f32.mrb[0].mxu0
    %1972 = vmatprep.mubr.bf16.mxu0 %v746
    %1973 = vmatmul.mubr.bf16.gmra.mrb[0].mxu0 %v745
    %v1974 = vpop.f32.mrb[0].mxu0
    %v1975 = vadd.f32 %v1542, %v1974
    %v1976 = vpop.f32.mrb[0].mxu0
    %v1977 = vpop.f32.mrb[0].mxu0
    %v1978 = vadd.f32 %v1545, %v1977
    %v1979 = vpop.f32.mrb[0].mxu0
    %1980 = vmatprep.mubr.bf16.mxu0 %v749
    %1981 = vmatmul.mubr.bf16.gmra.mrb[0].mxu0 %v748
    %v1982 = vpop.f32.mrb[0].mxu0
    %v1983 = vadd.f32 %v1550, %v1982
    %v1984 = vpop.f32.mrb[0].mxu0
    %v1985 = vpop.f32.mrb[0].mxu0
    %v1986 = vadd.f32 %v1553, %v1985
    %v1987 = vpop.f32.mrb[0].mxu0
    %1988 = vmatprep.mubr.bf16.mxu0 %v752
    %1989 = vmatmul.mubr.bf16.gmra.mrb[0].mxu0 %v751
    %v1990 = vpop.f32.mrb[0].mxu0
    %v1991 = vadd.f32 %v1558, %v1990
    %v1992 = vpop.f32.mrb[0].mxu0
    %v1993 = vpop.f32.mrb[0].mxu0
    %v1994 = vadd.f32 %v1561, %v1993
    %v1995 = vpop.f32.mrb[0].mxu0
    %1996 = vmatprep.mubr.bf16.mxu0 %v755
    %1997 = vmatmul.mubr.bf16.gmra.mrb[0].mxu0 %v754
    %v1998 = vpop.f32.mrb[0].mxu0
    %v1999 = vadd.f32 %v1566, %v1998
    %v2000 = vpop.f32.mrb[0].mxu0
    %v2001 = vpop.f32.mrb[0].mxu0
    %v2002 = vadd.f32 %v1569, %v2001
    %v2003 = vpop.f32.mrb[0].mxu0
    %2004 = vmatprep.mubr.bf16.mxu0 %v758
    %2005 = vmatmul.mubr.bf16.gmra.mrb[0].mxu0 %v757
    %v2006 = vpop.f32.mrb[0].mxu0
    %v2007 = vadd.f32 %v1574, %v2006
    %v2008 = vpop.f32.mrb[0].mxu0
    %v2009 = vpop.f32.mrb[0].mxu0
    %v2010 = vadd.f32 %v1577, %v2009
    %v2011 = vpop.f32.mrb[0].mxu0
    %2012 = vmatprep.mubr.bf16.mxu0 %v761
    %2013 = vmatmul.mubr.bf16.gmra.mrb[0].mxu0 %v760
    %v2014 = vpop.f32.mrb[0].mxu0
    %v2015 = vadd.f32 %v1582, %v2014
    %v2016 = vpop.f32.mrb[0].mxu0
    %v2017 = vpop.f32.mrb[0].mxu0
    %v2018 = vadd.f32 %v1585, %v2017
    %v2019 = vpop.f32.mrb[0].mxu0
    %2020 = vmatprep.mubr.bf16.mxu0 %v764
    %2021 = vmatmul.mubr.bf16.gmra.mrb[0].mxu0 %v763
    %v2022 = vpop.f32.mrb[0].mxu0
    %v2023 = vadd.f32 %v1590, %v2022
    %v2024 = vpop.f32.mrb[0].mxu0
    %v2025 = vpop.f32.mrb[0].mxu0
    %v2026 = vadd.f32 %v1593, %v2025
    %v2027 = vpop.f32.mrb[0].mxu0
    %2028 = vmatprep.mubr.bf16.mxu0 %v767
    %2029 = vmatmul.mubr.bf16.gmra.mrb[0].mxu0 %v766
    %v2030 = vpop.f32.mrb[0].mxu0
    %v2031 = vadd.f32 %v1598, %v2030
    %v2032 = vpop.f32.mrb[0].mxu0
    %v2033 = vpop.f32.mrb[0].mxu0
    %v2034 = vadd.f32 %v1601, %v2033
    %v2035 = vpop.f32.mrb[0].mxu0
    %2036 = vmatprep.mubr.bf16.mxu0 %v770
    %2037 = vmatmul.mubr.bf16.gmra.mrb[0].mxu0 %v769
    %v2038 = vpop.f32.mrb[0].mxu0
    %v2039 = vadd.f32 %v1606, %v2038
    %v2040 = vpop.f32.mrb[0].mxu0
    %v2041 = vpop.f32.mrb[0].mxu0
    %v2042 = vadd.f32 %v1609, %v2041
    %v2043 = vpop.f32.mrb[0].mxu0
    %2044 = vmatprep.mubr.bf16.mxu0 %v773
    %2045 = vmatmul.mubr.bf16.gmra.mrb[0].mxu0 %v772
    %v2046 = vpop.f32.mrb[0].mxu0
    %v2047 = vadd.f32 %v1614, %v2046
    %v2048 = vpop.f32.mrb[0].mxu0
    %v2049 = vpop.f32.mrb[0].mxu0
    %v2050 = vadd.f32 %v1617, %v2049
    %v2051 = vpop.f32.mrb[0].mxu0
    %2052 = vmatprep.mubr.bf16.mxu0 %v776
    %2053 = vmatmul.mubr.bf16.gmra.mrb[0].mxu0 %v775
    %v2054 = vpop.f32.mrb[0].mxu0
    %v2055 = vadd.f32 %v1622, %v2054
    %v2056 = vpop.f32.mrb[0].mxu0
    %v2057 = vpop.f32.mrb[0].mxu0
    %v2058 = vadd.f32 %v1625, %v2057
    %v2059 = vpop.f32.mrb[0].mxu0
    %2060 = vmatprep.mubr.bf16.mxu0 %v779
    %2061 = vmatmul.mubr.bf16.gmra.mrb[0].mxu0 %v778
    %v2062 = vpop.f32.mrb[0].mxu0
    %v2063 = vadd.f32 %v1630, %v2062
    %v2064 = vpop.f32.mrb[0].mxu0
    %v2065 = vpop.f32.mrb[0].mxu0
    %v2066 = vadd.f32 %v1633, %v2065
    %v2067 = vpop.f32.mrb[0].mxu0
    %2068 = vmatprep.mubr.bf16.mxu0 %v782
    %2069 = vmatmul.mubr.bf16.gmra.mrb[0].mxu0 %v781
    %v2070 = vpop.f32.mrb[0].mxu0
    %v2071 = vadd.f32 %v1638, %v2070
    %v2072 = vpop.f32.mrb[0].mxu0
    %v2073 = vpop.f32.mrb[0].mxu0
    %v2074 = vadd.f32 %v1641, %v2073
    %v2075 = vpop.f32.mrb[0].mxu0
    %2076 = vmatprep.mubr.bf16.mxu0 %v785
    %2077 = vmatmul.mubr.bf16.gmra.mrb[0].mxu0 %v784
    %v2078 = vpop.f32.mrb[0].mxu0
    %v2079 = vadd.f32 %v1646, %v2078
    %v2080 = vpop.f32.mrb[0].mxu0
    %v2081 = vpop.f32.mrb[0].mxu0
    %v2082 = vadd.f32 %v1649, %v2081
    %v2083 = vpop.f32.mrb[0].mxu0
    %2084 = vmatprep.mubr.bf16.mxu0 %v788
    %2085 = vmatmul.mubr.bf16.gmra.mrb[0].mxu0 %v787
    %v2086 = vpop.f32.mrb[0].mxu0
    %v2087 = vadd.f32 %v1654, %v2086
    %v2088 = vpop.f32.mrb[0].mxu0
    %v2089 = vpop.f32.mrb[0].mxu0
    %v2090 = vadd.f32 %v1657, %v2089
    %v2091 = vpop.f32.mrb[0].mxu0
    %2092 = vmatprep.mubr.bf16.mxu0 %v791
    %2093 = vmatmul.mubr.bf16.gmra.mrb[0].mxu0 %v790
    %v2094 = vpop.f32.mrb[0].mxu0
    %v2095 = vadd.f32 %v1662, %v2094
    %v2096 = vpop.f32.mrb[0].mxu0
    %v2097 = vpop.f32.mrb[0].mxu0
    %v2098 = vadd.f32 %v1665, %v2097
    %v2099 = vpop.f32.mrb[0].mxu0
    %2100 = vmatprep.mubr.bf16.mxu0 %v794
    %2101 = vmatmul.mubr.bf16.gmra.mrb[0].mxu0 %v793
    %v2102 = vpop.f32.mrb[0].mxu0
    %v2103 = vadd.f32 %v1670, %v2102
    %v2104 = vpop.f32.mrb[0].mxu0
    %v2105 = vpop.f32.mrb[0].mxu0
    %v2106 = vadd.f32 %v1673, %v2105
    %v2107 = vpop.f32.mrb[0].mxu0
    %2108 = vmatprep.mubr.bf16.mxu0 %v797
    %2109 = vmatmul.mubr.bf16.gmra.mrb[0].mxu0 %v796
    %v2110 = vpop.f32.mrb[0].mxu0
    %v2111 = vadd.f32 %v1678, %v2110
    %v2112 = vpop.f32.mrb[0].mxu0
    %v2113 = vpop.f32.mrb[0].mxu0
    %v2114 = vadd.f32 %v1681, %v2113
    %v2115 = vpop.f32.mrb[0].mxu0
    %2116 = vmatprep.mubr.bf16.mxu0 %v800
    %2117 = vmatmul.mubr.bf16.gmra.mrb[0].mxu0 %v799
    %v2118 = vpop.f32.mrb[0].mxu0
    %v2119 = vadd.f32 %v1686, %v2118
    %v2120 = vpop.f32.mrb[0].mxu0
    %v2121 = vpop.f32.mrb[0].mxu0
    %v2122 = vadd.f32 %v1689, %v2121
    %v2123 = vpop.f32.mrb[0].mxu0
    %2124 = vmatprep.mubr.bf16.mxu0 %v803
    %2125 = vmatmul.mubr.bf16.gmra.mrb[0].mxu0 %v802
    %v2126 = vpop.f32.mrb[0].mxu0
    %v2127 = vadd.f32 %v1694, %v2126
    %v2128 = vpop.f32.mrb[0].mxu0
    %v2129 = vpop.f32.mrb[0].mxu0
    %v2130 = vadd.f32 %v1697, %v2129
    %v2131 = vpop.f32.mrb[0].mxu0
    %2132 = vmatprep.mubr.bf16.mxu0 %v806
    %2133 = vmatmul.mubr.bf16.gmra.mrb[0].mxu0 %v805
    %v2134 = vpop.f32.mrb[0].mxu0
    %v2135 = vadd.f32 %v1702, %v2134
    %v2136 = vpop.f32.mrb[0].mxu0
    %v2137 = vpop.f32.mrb[0].mxu0
    %v2138 = vadd.f32 %v1705, %v2137
    %v2139 = vpop.f32.mrb[0].mxu0
    %2140 = vmatprep.mubr.bf16.mxu0 %v809
    %2141 = vmatmul.mubr.bf16.gmra.mrb[0].mxu0 %v808
    %v2142 = vpop.f32.mrb[0].mxu0
    %v2143 = vadd.f32 %v1710, %v2142
    %v2144 = vpop.f32.mrb[0].mxu0
    %v2145 = vpop.f32.mrb[0].mxu0
    %v2146 = vadd.f32 %v1713, %v2145
    %v2147 = vpop.f32.mrb[0].mxu0
    %2148 = vmatprep.mubr.bf16.mxu0 %v812
    %2149 = vmatmul.mubr.bf16.gmra.mrb[0].mxu0 %v811
    %v2150 = vpop.f32.mrb[0].mxu0
    %v2151 = vadd.f32 %v1718, %v2150
    %v2152 = vpop.f32.mrb[0].mxu0
    %v2153 = vpop.f32.mrb[0].mxu0
    %v2154 = vadd.f32 %v1721, %v2153
    %v2155 = vpop.f32.mrb[0].mxu0
    %2156 = vmatprep.mubr.bf16.mxu0 %v815
    %2157 = vmatmul.mubr.bf16.gmra.mrb[0].mxu0 %v814
    %v2158 = vpop.f32.mrb[0].mxu0
    %v2159 = vadd.f32 %v1726, %v2158
    %v2160 = vpop.f32.mrb[0].mxu0
    %v2161 = vpop.f32.mrb[0].mxu0
    %v2162 = vadd.f32 %v1729, %v2161
    %v2163 = vpop.f32.mrb[0].mxu0
    %2164 = vdwg.mxu0
    %2165 = vmatprep.subr.bf16.mxu0 0
    %2166 = vmatpush1.bf16.msra.mxu0 %v1844
    %2167 = vmatprep.subr.bf16.mxu0 0
    %2168 = vmatpush1.bf16.msra.mxu0 %v1845
    %2169 = vmatprep.subr.bf16.mxu0 0
    %2170 = vmatpush1.bf16.msra.mxu0 %v1846
    %2171 = vmatprep.subr.bf16.mxu0 0
    %2172 = vmatpush1.bf16.msra.mxu0 %v1847
    %2173 = vmatprep.subr.bf16.mxu0 0
    %2174 = vmatpush1.bf16.msra.mxu0 %v1848
    %2175 = vmatprep.subr.bf16.mxu0 0
    %2176 = vmatpush1.bf16.msra.mxu0 %v1849
    %2177 = vmatprep.subr.bf16.mxu0 0
    %2178 = vmatpush1.bf16.msra.mxu0 %v1850
    %2179 = vmatprep.subr.bf16.mxu0 0
    %2180 = vmatpush1.bf16.msra.mxu0 %v1851
    %2181 = vmatprep.subr.bf16.mxu0 0
    %2182 = vmatpush1.bf16.msra.mxu0 0
    %2183 = vmatprep.subr.bf16.mxu0 0
    %2184 = vmatpush1.bf16.msra.mxu0 0
    %2185 = vmatprep.subr.bf16.mxu0 0
    %2186 = vmatpush1.bf16.msra.mxu0 0
    %2187 = vmatprep.subr.bf16.mxu0 0
    %2188 = vmatpush1.bf16.msra.mxu0 0
    %2189 = vmatprep.subr.bf16.mxu0 0
    %2190 = vmatpush1.bf16.msra.mxu0 0
    %2191 = vmatprep.subr.bf16.mxu0 0
    %2192 = vmatpush1.bf16.msra.mxu0 0
    %2193 = vmatprep.subr.bf16.mxu0 0
    %2194 = vmatpush1.bf16.msra.mxu0 0
    %2195 = vmatprep.subr.bf16.mxu0 0
    %2196 = vmatpush1.bf16.msra.mxu0 0
    %2197 = vmatprep.mubr.bf16.mxu0 0
    %2198 = vmatmul.mubr.bf16.gmra.mrb[0].mxu0 %v723
    %v2199 = vpop.f32.mrb[0].mxu0
    %v2200 = vadd.f32 %v1911, %v2199
    %v2201 = vpop.f32.mrb[0].mxu0
    %v2202 = vpop.f32.mrb[0].mxu0
    %v2203 = vadd.f32 %v1914, %v2202
    %v2204 = vpop.f32.mrb[0].mxu0
    %2205 = vmatprep.mubr.bf16.mxu0 0
    %2206 = vmatmul.mubr.bf16.gmra.mrb[0].mxu0 %v726
    %v2207 = vpop.f32.mrb[0].mxu0
    %v2208 = vadd.f32 %v1919, %v2207
    %v2209 = vpop.f32.mrb[0].mxu0
    %v2210 = vpop.f32.mrb[0].mxu0
    %v2211 = vadd.f32 %v1922, %v2210
    %v2212 = vpop.f32.mrb[0].mxu0
    %2213 = vmatprep.mubr.bf16.mxu0 0
    %2214 = vmatmul.mubr.bf16.gmra.mrb[0].mxu0 %v729
    %v2215 = vpop.f32.mrb[0].mxu0
    %v2216 = vadd.f32 %v1927, %v2215
    %v2217 = vpop.f32.mrb[0].mxu0
    %v2218 = vpop.f32.mrb[0].mxu0
    %v2219 = vadd.f32 %v1930, %v2218
    %v2220 = vpop.f32.mrb[0].mxu0
    %2221 = vmatprep.mubr.bf16.mxu0 0
    %2222 = vmatmul.mubr.bf16.gmra.mrb[0].mxu0 %v732
    %v2223 = vpop.f32.mrb[0].mxu0
    %v2224 = vadd.f32 %v1935, %v2223
    %v2225 = vpop.f32.mrb[0].mxu0
    %v2226 = vpop.f32.mrb[0].mxu0
    %v2227 = vadd.f32 %v1938, %v2226
    %v2228 = vpop.f32.mrb[0].mxu0
    %2229 = vmatprep.mubr.bf16.mxu0 0
    %2230 = vmatmul.mubr.bf16.gmra.mrb[0].mxu0 %v735
    %v2231 = vpop.f32.mrb[0].mxu0
    %v2232 = vadd.f32 %v1943, %v2231
    %v2233 = vpop.f32.mrb[0].mxu0
    %v2234 = vpop.f32.mrb[0].mxu0
    %v2235 = vadd.f32 %v1946, %v2234
    %v2236 = vpop.f32.mrb[0].mxu0
    %2237 = vmatprep.mubr.bf16.mxu0 0
    %2238 = vmatmul.mubr.bf16.gmra.mrb[0].mxu0 %v738
    %v2239 = vpop.f32.mrb[0].mxu0
    %v2240 = vadd.f32 %v1951, %v2239
    %v2241 = vpop.f32.mrb[0].mxu0
    %v2242 = vpop.f32.mrb[0].mxu0
    %v2243 = vadd.f32 %v1954, %v2242
    %v2244 = vpop.f32.mrb[0].mxu0
    %2245 = vmatprep.mubr.bf16.mxu0 0
    %2246 = vmatmul.mubr.bf16.gmra.mrb[0].mxu0 %v741
    %v2247 = vpop.f32.mrb[0].mxu0
    %v2248 = vadd.f32 %v1959, %v2247
    %v2249 = vpop.f32.mrb[0].mxu0
    %v2250 = vpop.f32.mrb[0].mxu0
    %v2251 = vadd.f32 %v1962, %v2250
    %v2252 = vpop.f32.mrb[0].mxu0
    %2253 = vmatprep.mubr.bf16.mxu0 0
    %2254 = vmatmul.mubr.bf16.gmra.mrb[0].mxu0 %v744
    %v2255 = vpop.f32.mrb[0].mxu0
    %v2256 = vadd.f32 %v1967, %v2255
    %v2257 = vpop.f32.mrb[0].mxu0
    %v2258 = vpop.f32.mrb[0].mxu0
    %v2259 = vadd.f32 %v1970, %v2258
    %v2260 = vpop.f32.mrb[0].mxu0
    %2261 = vmatprep.mubr.bf16.mxu0 0
    %2262 = vmatmul.mubr.bf16.gmra.mrb[0].mxu0 %v747
    %v2263 = vpop.f32.mrb[0].mxu0
    %v2264 = vadd.f32 %v1975, %v2263
    %v2265 = vpop.f32.mrb[0].mxu0
    %v2266 = vpop.f32.mrb[0].mxu0
    %v2267 = vadd.f32 %v1978, %v2266
    %v2268 = vpop.f32.mrb[0].mxu0
    %2269 = vmatprep.mubr.bf16.mxu0 0
    %2270 = vmatmul.mubr.bf16.gmra.mrb[0].mxu0 %v750
    %v2271 = vpop.f32.mrb[0].mxu0
    %v2272 = vadd.f32 %v1983, %v2271
    %v2273 = vpop.f32.mrb[0].mxu0
    %v2274 = vpop.f32.mrb[0].mxu0
    %v2275 = vadd.f32 %v1986, %v2274
    %v2276 = vpop.f32.mrb[0].mxu0
    %2277 = vmatprep.mubr.bf16.mxu0 0
    %2278 = vmatmul.mubr.bf16.gmra.mrb[0].mxu0 %v753
    %v2279 = vpop.f32.mrb[0].mxu0
    %v2280 = vadd.f32 %v1991, %v2279
    %v2281 = vpop.f32.mrb[0].mxu0
    %v2282 = vpop.f32.mrb[0].mxu0
    %v2283 = vadd.f32 %v1994, %v2282
    %v2284 = vpop.f32.mrb[0].mxu0
    %2285 = vmatprep.mubr.bf16.mxu0 0
    %2286 = vmatmul.mubr.bf16.gmra.mrb[0].mxu0 %v756
    %v2287 = vpop.f32.mrb[0].mxu0
    %v2288 = vadd.f32 %v1999, %v2287
    %v2289 = vpop.f32.mrb[0].mxu0
    %v2290 = vpop.f32.mrb[0].mxu0
    %v2291 = vadd.f32 %v2002, %v2290
    %v2292 = vpop.f32.mrb[0].mxu0
    %2293 = vmatprep.mubr.bf16.mxu0 0
    %2294 = vmatmul.mubr.bf16.gmra.mrb[0].mxu0 %v759
    %v2295 = vpop.f32.mrb[0].mxu0
    %v2296 = vadd.f32 %v2007, %v2295
    %v2297 = vpop.f32.mrb[0].mxu0
    %v2298 = vpop.f32.mrb[0].mxu0
    %v2299 = vadd.f32 %v2010, %v2298
    %v2300 = vpop.f32.mrb[0].mxu0
    %2301 = vmatprep.mubr.bf16.mxu0 0
    %2302 = vmatmul.mubr.bf16.gmra.mrb[0].mxu0 %v762
    %v2303 = vpop.f32.mrb[0].mxu0
    %v2304 = vadd.f32 %v2015, %v2303
    %v2305 = vpop.f32.mrb[0].mxu0
    %v2306 = vpop.f32.mrb[0].mxu0
    %v2307 = vadd.f32 %v2018, %v2306
    %v2308 = vpop.f32.mrb[0].mxu0
    %2309 = vmatprep.mubr.bf16.mxu0 0
    %2310 = vmatmul.mubr.bf16.gmra.mrb[0].mxu0 %v765
    %v2311 = vpop.f32.mrb[0].mxu0
    %v2312 = vadd.f32 %v2023, %v2311
    %v2313 = vpop.f32.mrb[0].mxu0
    %v2314 = vpop.f32.mrb[0].mxu0
    %v2315 = vadd.f32 %v2026, %v2314
    %v2316 = vpop.f32.mrb[0].mxu0
    %2317 = vmatprep.mubr.bf16.mxu0 0
    %2318 = vmatmul.mubr.bf16.gmra.mrb[0].mxu0 %v768
    %v2319 = vpop.f32.mrb[0].mxu0
    %v2320 = vadd.f32 %v2031, %v2319
    %v2321 = vpop.f32.mrb[0].mxu0
    %v2322 = vpop.f32.mrb[0].mxu0
    %v2323 = vadd.f32 %v2034, %v2322
    %v2324 = vpop.f32.mrb[0].mxu0
    %2325 = vmatprep.mubr.bf16.mxu0 0
    %2326 = vmatmul.mubr.bf16.gmra.mrb[0].mxu0 %v771
    %v2327 = vpop.f32.mrb[0].mxu0
    %v2328 = vadd.f32 %v2039, %v2327
    %v2329 = vpop.f32.mrb[0].mxu0
    %v2330 = vpop.f32.mrb[0].mxu0
    %v2331 = vadd.f32 %v2042, %v2330
    %v2332 = vpop.f32.mrb[0].mxu0
    %2333 = vmatprep.mubr.bf16.mxu0 0
    %2334 = vmatmul.mubr.bf16.gmra.mrb[0].mxu0 %v774
    %v2335 = vpop.f32.mrb[0].mxu0
    %v2336 = vadd.f32 %v2047, %v2335
    %v2337 = vpop.f32.mrb[0].mxu0
    %v2338 = vpop.f32.mrb[0].mxu0
    %v2339 = vadd.f32 %v2050, %v2338
    %v2340 = vpop.f32.mrb[0].mxu0
    %2341 = vmatprep.mubr.bf16.mxu0 0
    %2342 = vmatmul.mubr.bf16.gmra.mrb[0].mxu0 %v777
    %v2343 = vpop.f32.mrb[0].mxu0
    %v2344 = vadd.f32 %v2055, %v2343
    %v2345 = vpop.f32.mrb[0].mxu0
    %v2346 = vpop.f32.mrb[0].mxu0
    %v2347 = vadd.f32 %v2058, %v2346
    %v2348 = vpop.f32.mrb[0].mxu0
    %2349 = vmatprep.mubr.bf16.mxu0 0
    %2350 = vmatmul.mubr.bf16.gmra.mrb[0].mxu0 %v780
    %v2351 = vpop.f32.mrb[0].mxu0
    %v2352 = vadd.f32 %v2063, %v2351
    %v2353 = vpop.f32.mrb[0].mxu0
    %v2354 = vpop.f32.mrb[0].mxu0
    %v2355 = vadd.f32 %v2066, %v2354
    %v2356 = vpop.f32.mrb[0].mxu0
    %2357 = vmatprep.mubr.bf16.mxu0 0
    %2358 = vmatmul.mubr.bf16.gmra.mrb[0].mxu0 %v783
    %v2359 = vpop.f32.mrb[0].mxu0
    %v2360 = vadd.f32 %v2071, %v2359
    %v2361 = vpop.f32.mrb[0].mxu0
    %v2362 = vpop.f32.mrb[0].mxu0
    %v2363 = vadd.f32 %v2074, %v2362
    %v2364 = vpop.f32.mrb[0].mxu0
    %2365 = vmatprep.mubr.bf16.mxu0 0
    %2366 = vmatmul.mubr.bf16.gmra.mrb[0].mxu0 %v786
    %v2367 = vpop.f32.mrb[0].mxu0
    %v2368 = vadd.f32 %v2079, %v2367
    %v2369 = vpop.f32.mrb[0].mxu0
    %v2370 = vpop.f32.mrb[0].mxu0
    %v2371 = vadd.f32 %v2082, %v2370
    %v2372 = vpop.f32.mrb[0].mxu0
    %2373 = vmatprep.mubr.bf16.mxu0 0
    %2374 = vmatmul.mubr.bf16.gmra.mrb[0].mxu0 %v789
    %v2375 = vpop.f32.mrb[0].mxu0
    %v2376 = vadd.f32 %v2087, %v2375
    %v2377 = vpop.f32.mrb[0].mxu0
    %v2378 = vpop.f32.mrb[0].mxu0
    %v2379 = vadd.f32 %v2090, %v2378
    %v2380 = vpop.f32.mrb[0].mxu0
    %2381 = vmatprep.mubr.bf16.mxu0 0
    %2382 = vmatmul.mubr.bf16.gmra.mrb[0].mxu0 %v792
    %v2383 = vpop.f32.mrb[0].mxu0
    %v2384 = vadd.f32 %v2095, %v2383
    %v2385 = vpop.f32.mrb[0].mxu0
    %v2386 = vpop.f32.mrb[0].mxu0
    %v2387 = vadd.f32 %v2098, %v2386
    %v2388 = vpop.f32.mrb[0].mxu0
    %2389 = vmatprep.mubr.bf16.mxu0 0
    %2390 = vmatmul.mubr.bf16.gmra.mrb[0].mxu0 %v795
    %v2391 = vpop.f32.mrb[0].mxu0
    %v2392 = vadd.f32 %v2103, %v2391
    %v2393 = vpop.f32.mrb[0].mxu0
    %v2394 = vpop.f32.mrb[0].mxu0
    %v2395 = vadd.f32 %v2106, %v2394
    %v2396 = vpop.f32.mrb[0].mxu0
    %2397 = vmatprep.mubr.bf16.mxu0 0
    %2398 = vmatmul.mubr.bf16.gmra.mrb[0].mxu0 %v798
    %v2399 = vpop.f32.mrb[0].mxu0
    %v2400 = vadd.f32 %v2111, %v2399
    %v2401 = vpop.f32.mrb[0].mxu0
    %v2402 = vpop.f32.mrb[0].mxu0
    %v2403 = vadd.f32 %v2114, %v2402
    %v2404 = vpop.f32.mrb[0].mxu0
    %2405 = vmatprep.mubr.bf16.mxu0 0
    %2406 = vmatmul.mubr.bf16.gmra.mrb[0].mxu0 %v801
    %v2407 = vpop.f32.mrb[0].mxu0
    %v2408 = vadd.f32 %v2119, %v2407
    %v2409 = vpop.f32.mrb[0].mxu0
    %v2410 = vpop.f32.mrb[0].mxu0
    %v2411 = vadd.f32 %v2122, %v2410
    %v2412 = vpop.f32.mrb[0].mxu0
    %2413 = vmatprep.mubr.bf16.mxu0 0
    %2414 = vmatmul.mubr.bf16.gmra.mrb[0].mxu0 %v804
    %v2415 = vpop.f32.mrb[0].mxu0
    %v2416 = vadd.f32 %v2127, %v2415
    %v2417 = vpop.f32.mrb[0].mxu0
    %v2418 = vpop.f32.mrb[0].mxu0
    %v2419 = vadd.f32 %v2130, %v2418
    %v2420 = vpop.f32.mrb[0].mxu0
    %2421 = vmatprep.mubr.bf16.mxu0 0
    %2422 = vmatmul.mubr.bf16.gmra.mrb[0].mxu0 %v807
    %v2423 = vpop.f32.mrb[0].mxu0
    %v2424 = vadd.f32 %v2135, %v2423
    %v2425 = vpop.f32.mrb[0].mxu0
    %v2426 = vpop.f32.mrb[0].mxu0
    %v2427 = vadd.f32 %v2138, %v2426
    %v2428 = vpop.f32.mrb[0].mxu0
    %2429 = vmatprep.mubr.bf16.mxu0 0
    %2430 = vmatmul.mubr.bf16.gmra.mrb[0].mxu0 %v810
    %v2431 = vpop.f32.mrb[0].mxu0
    %v2432 = vadd.f32 %v2143, %v2431
    %v2433 = vpop.f32.mrb[0].mxu0
    %v2434 = vpop.f32.mrb[0].mxu0
    %v2435 = vadd.f32 %v2146, %v2434
    %v2436 = vpop.f32.mrb[0].mxu0
    %2437 = vmatprep.mubr.bf16.mxu0 0
    %2438 = vmatmul.mubr.bf16.gmra.mrb[0].mxu0 %v813
    %v2439 = vpop.f32.mrb[0].mxu0
    %v2440 = vadd.f32 %v2151, %v2439
    %v2441 = vpop.f32.mrb[0].mxu0
    %v2442 = vpop.f32.mrb[0].mxu0
    %v2443 = vadd.f32 %v2154, %v2442
    %v2444 = vpop.f32.mrb[0].mxu0
    %2445 = vmatprep.mubr.bf16.mxu0 0
    %2446 = vmatmul.mubr.bf16.gmra.mrb[0].mxu0 %v816
    %v2447 = vpop.f32.mrb[0].mxu0
    %v2448 = vadd.f32 %v2159, %v2447
    %v2449 = vpop.f32.mrb[0].mxu0
    %v2450 = vpop.f32.mrb[0].mxu0
    %v2451 = vadd.f32 %v2162, %v2450
    %v2452 = vpop.f32.mrb[0].mxu0
    %2453 = vdwg.mxu0
    %s2454 = scalar_lea.vmem [#allocation2], 48
    %v2455 = vld [vmem:[%s2454] sm:$0xff]
    %v2456 = vld [vmem:[%s2454 + $0x8] sm:$0xff]
    %v2457 = vld [vmem:[%s2454 + $0x10] sm:$0xff]
    %v2458 = vld [vmem:[%s2454 + $0x18] sm:$0xff]
    %v2459 = vld [vmem:[%s2454 + $0x20] sm:$0xff]
    %v2460 = vld [vmem:[%s2454 + $0x28] sm:$0xff]
    %v2461 = vld [vmem:[%s2454 + $0x30] sm:$0xff]
    %v2462 = vld [vmem:[%s2454 + $0x38] sm:$0xff]
    %v2463 = vld [vmem:[%s2454 + $0x40] sm:$0xff]
    %v2464 = vld [vmem:[%s2454 + $0x48] sm:$0xff]
    %v2465 = vld [vmem:[%s2454 + $0x50] sm:$0xff]
    %v2466 = vld [vmem:[%s2454 + $0x58] sm:$0xff]
    %v2467 = vld [vmem:[%s2454 + $0x60] sm:$0xff]
    %v2468 = vld [vmem:[%s2454 + $0x68] sm:$0xff]
    %v2469 = vld [vmem:[%s2454 + $0x70] sm:$0xff]
    %v2470 = vld [vmem:[%s2454 + $0x78] sm:$0xff]
    %v2471 = vld [vmem:[%s2454 + $0x80] sm:$0xff]
    %v2472 = vld [vmem:[%s2454 + $0x88] sm:$0xff]
    %v2473 = vld [vmem:[%s2454 + $0x90] sm:$0xff]
    %v2474 = vld [vmem:[%s2454 + $0x98] sm:$0xff]
    %v2475 = vld [vmem:[%s2454 + $0xa0] sm:$0xff]
    %v2476 = vld [vmem:[%s2454 + $0xa8] sm:$0xff]
    %v2477 = vld [vmem:[%s2454 + $0xb0] sm:$0xff]
    %v2478 = vld [vmem:[%s2454 + $0xb8] sm:$0xff]
    %v2479 = vld [vmem:[%s2454 + $0xc0] sm:$0xff]
    %v2480 = vld [vmem:[%s2454 + $0xc8] sm:$0xff]
    %v2481 = vld [vmem:[%s2454 + $0xd0] sm:$0xff]
    %v2482 = vld [vmem:[%s2454 + $0xd8] sm:$0xff]
    %v2483 = vld [vmem:[%s2454 + $0xe0] sm:$0xff]
    %v2484 = vld [vmem:[%s2454 + $0xe8] sm:$0xff]
    %v2485 = vld [vmem:[%s2454 + $0xf0] sm:$0xff]
    %v2486 = vld [vmem:[%s2454 + $0xf8] sm:$0xff]
    %v2487 = vld [vmem:[%s2454 + $0x100] sm:$0xff]
    %v2488 = vld [vmem:[%s2454 + $0x108] sm:$0xff]
    %v2489 = vld [vmem:[%s2454 + $0x110] sm:$0xff]
    %v2490 = vld [vmem:[%s2454 + $0x118] sm:$0xff]
    %v2491 = vld [vmem:[%s2454 + $0x120] sm:$0xff]
    %v2492 = vld [vmem:[%s2454 + $0x128] sm:$0xff]
    %v2493 = vld [vmem:[%s2454 + $0x130] sm:$0xff]
    %v2494 = vld [vmem:[%s2454 + $0x138] sm:$0xff]
    %v2495 = vld [vmem:[%s2454 + $0x140] sm:$0xff]
    %v2496 = vld [vmem:[%s2454 + $0x148] sm:$0xff]
    %v2497 = vld [vmem:[%s2454 + $0x150] sm:$0xff]
    %v2498 = vld [vmem:[%s2454 + $0x158] sm:$0xff]
    %v2499 = vld [vmem:[%s2454 + $0x160] sm:$0xff]
    %v2500 = vld [vmem:[%s2454 + $0x168] sm:$0xff]
    %v2501 = vld [vmem:[%s2454 + $0x170] sm:$0xff]
    %v2502 = vld [vmem:[%s2454 + $0x178] sm:$0xff]
    %v2503 = vld [vmem:[%s2454 + $0x1b0] sm:$0xff]
    %v2504 = vld [vmem:[%s2454 + $0x1b8] sm:$0xff]
    %v2505 = vld [vmem:[%s2454 + $0x1c0] sm:$0xff]
    %v2506 = vld [vmem:[%s2454 + $0x1c8] sm:$0xff]
    %v2507 = vld [vmem:[%s2454 + $0x1d0] sm:$0xff]
    %v2508 = vld [vmem:[%s2454 + $0x1d8] sm:$0xff]
    %v2509 = vld [vmem:[%s2454 + $0x1e0] sm:$0xff]
    %v2510 = vld [vmem:[%s2454 + $0x1e8] sm:$0xff]
    %v2511 = vld [vmem:[%s2454 + $0x1f0] sm:$0xff]
    %v2512 = vld [vmem:[%s2454 + $0x1f8] sm:$0xff]
    %v2513 = vld [vmem:[%s2454 + $0x200] sm:$0xff]
    %v2514 = vld [vmem:[%s2454 + $0x208] sm:$0xff]
    %v2515 = vld [vmem:[%s2454 + $0x210] sm:$0xff]
    %v2516 = vld [vmem:[%s2454 + $0x218] sm:$0xff]
    %v2517 = vld [vmem:[%s2454 + $0x220] sm:$0xff]
    %v2518 = vld [vmem:[%s2454 + $0x228] sm:$0xff]
    %v2519 = vld [vmem:[%s2454 + $0x230] sm:$0xff]
    %v2520 = vld [vmem:[%s2454 + $0x238] sm:$0xff]
    %v2521 = vld [vmem:[%s2454 + $0x240] sm:$0xff]
    %v2522 = vld [vmem:[%s2454 + $0x248] sm:$0xff]
    %v2523 = vld [vmem:[%s2454 + $0x250] sm:$0xff]
    %v2524 = vld [vmem:[%s2454 + $0x258] sm:$0xff]
    %v2525 = vld [vmem:[%s2454 + $0x260] sm:$0xff]
    %v2526 = vld [vmem:[%s2454 + $0x268] sm:$0xff]
    %v2527 = vld [vmem:[%s2454 + $0x270] sm:$0xff]
    %v2528 = vld [vmem:[%s2454 + $0x278] sm:$0xff]
    %v2529 = vld [vmem:[%s2454 + $0x280] sm:$0xff]
    %v2530 = vld [vmem:[%s2454 + $0x288] sm:$0xff]
    %v2531 = vld [vmem:[%s2454 + $0x290] sm:$0xff]
    %v2532 = vld [vmem:[%s2454 + $0x298] sm:$0xff]
    %v2533 = vld [vmem:[%s2454 + $0x2a0] sm:$0xff]
    %v2534 = vld [vmem:[%s2454 + $0x2a8] sm:$0xff]
    %v2535 = vld [vmem:[%s2454 + $0x2b0] sm:$0xff]
    %v2536 = vld [vmem:[%s2454 + $0x2b8] sm:$0xff]
    %v2537 = vld [vmem:[%s2454 + $0x2c0] sm:$0xff]
    %v2538 = vld [vmem:[%s2454 + $0x2c8] sm:$0xff]
    %v2539 = vld [vmem:[%s2454 + $0x2d0] sm:$0xff]
    %v2540 = vld [vmem:[%s2454 + $0x2d8] sm:$0xff]
    %v2541 = vld [vmem:[%s2454 + $0x2e0] sm:$0xff]
    %v2542 = vld [vmem:[%s2454 + $0x2e8] sm:$0xff]
    %v2543 = vld [vmem:[%s2454 + $0x2f0] sm:$0xff]
    %v2544 = vld [vmem:[%s2454 + $0x2f8] sm:$0xff]
    %v2545 = vld [vmem:[%s2454 + $0x300] sm:$0xff]
    %v2546 = vld [vmem:[%s2454 + $0x308] sm:$0xff]
    %v2547 = vld [vmem:[%s2454 + $0x310] sm:$0xff]
    %v2548 = vld [vmem:[%s2454 + $0x318] sm:$0xff]
    %v2549 = vld [vmem:[%s2454 + $0x320] sm:$0xff]
    %v2550 = vld [vmem:[%s2454 + $0x328] sm:$0xff]
    %s2551 = scalar_lea.vmem %s1, 384
    %v2552 = vld [vmem:[%s2551] sm:$0xf]
    %v2553 = vld [vmem:[%s2551 + $0x4] sm:$0xf]
    %v2554 = vld [vmem:[%s2551 + $0x8] sm:$0xf]
    %v2555 = vld [vmem:[%s2551 + $0xc] sm:$0xf]
    %v2556 = vld [vmem:[%s2551 + $0x10] sm:$0xf]
    %v2557 = vld [vmem:[%s2551 + $0x14] sm:$0xf]
    %v2558 = vld [vmem:[%s2551 + $0x18] sm:$0xf]
    %v2559 = vld [vmem:[%s2551 + $0x1c] sm:$0xf]
    %v2560 = vld [vmem:[%s2551 + $0x20] sm:$0xf]
    %v2561 = vld [vmem:[%s2551 + $0x24] sm:$0xf]
    %v2562 = vld [vmem:[%s2551 + $0x28] sm:$0xf]
    %v2563 = vld [vmem:[%s2551 + $0x2c] sm:$0xf]
    %v2564 = vld [vmem:[%s2551 + $0x30] sm:$0xf]
    %v2565 = vld [vmem:[%s2551 + $0x34] sm:$0xf]
    %v2566 = vld [vmem:[%s2551 + $0x38] sm:$0xf]
    %v2567 = vld [vmem:[%s2551 + $0x3c] sm:$0xf]
    %v2568 = vld [vmem:[%s2551 + $0x40] sm:$0xf]
    %v2569 = vld [vmem:[%s2551 + $0x44] sm:$0xf]
    %v2570 = vld [vmem:[%s2551 + $0x48] sm:$0xf]
    %v2571 = vld [vmem:[%s2551 + $0x4c] sm:$0xf]
    %v2572 = vld [vmem:[%s2551 + $0x50] sm:$0xf]
    %v2573 = vld [vmem:[%s2551 + $0x54] sm:$0xf]
    %v2574 = vld [vmem:[%s2551 + $0x58] sm:$0xf]
    %v2575 = vld [vmem:[%s2551 + $0x5c] sm:$0xf]
    %v2576 = vld [vmem:[%s2551 + $0x60] sm:$0xf]
    %v2577 = vld [vmem:[%s2551 + $0x64] sm:$0xf]
    %v2578 = vld [vmem:[%s2551 + $0x68] sm:$0xf]
    %v2579 = vld [vmem:[%s2551 + $0x6c] sm:$0xf]
    %v2580 = vld [vmem:[%s2551 + $0x70] sm:$0xf]
    %v2581 = vld [vmem:[%s2551 + $0x74] sm:$0xf]
    %v2582 = vld [vmem:[%s2551 + $0x78] sm:$0xf]
    %v2583 = vld [vmem:[%s2551 + $0x7c] sm:$0xf]
    %v2584 = vld [vmem:[%s2551 + $0x80] sm:$0xf]
    %v2585 = vld [vmem:[%s2551 + $0x84] sm:$0xf]
    %v2586 = vld [vmem:[%s2551 + $0x88] sm:$0xf]
    %v2587 = vld [vmem:[%s2551 + $0x8c] sm:$0xf]
    %v2588 = vld [vmem:[%s2551 + $0x90] sm:$0xf]
    %v2589 = vld [vmem:[%s2551 + $0x94] sm:$0xf]
    %v2590 = vld [vmem:[%s2551 + $0x98] sm:$0xf]
    %v2591 = vld [vmem:[%s2551 + $0x9c] sm:$0xf]
    %v2592 = vld [vmem:[%s2551 + $0xa0] sm:$0xf]
    %v2593 = vld [vmem:[%s2551 + $0xa4] sm:$0xf]
    %v2594 = vld [vmem:[%s2551 + $0xa8] sm:$0xf]
    %v2595 = vld [vmem:[%s2551 + $0xac] sm:$0xf]
    %v2596 = vld [vmem:[%s2551 + $0xb0] sm:$0xf]
    %v2597 = vld [vmem:[%s2551 + $0xb4] sm:$0xf]
    %v2598 = vld [vmem:[%s2551 + $0xb8] sm:$0xf]
    %v2599 = vld [vmem:[%s2551 + $0xbc] sm:$0xf]
    %v2648 = vunpack.c.l.b16 %v2552
    %v2649 = vunpack.c.l.b16 %v2553
    %v2650 = vunpack.c.l.b16 %v2554
    %v2651 = vunpack.c.l.b16 %v2555
    %v2652 = vunpack.c.l.b16 %v2556
    %v2653 = vunpack.c.l.b16 %v2557
    %v2654 = vunpack.c.l.b16 %v2558
    %v2655 = vunpack.c.l.b16 %v2559
    %v2656 = vunpack.c.l.b16 %v2560
    %v2657 = vunpack.c.l.b16 %v2561
    %v2658 = vunpack.c.l.b16 %v2562
    %v2659 = vunpack.c.l.b16 %v2563
    %v2660 = vunpack.c.l.b16 %v2564
    %v2661 = vunpack.c.l.b16 %v2565
    %v2662 = vunpack.c.l.b16 %v2566
    %v2663 = vunpack.c.l.b16 %v2567
    %v2664 = vunpack.c.l.b16 %v2568
    %v2665 = vunpack.c.l.b16 %v2569
    %v2666 = vunpack.c.l.b16 %v2570
    %v2667 = vunpack.c.l.b16 %v2571
    %v2668 = vunpack.c.l.b16 %v2572
    %v2669 = vunpack.c.l.b16 %v2573
    %v2670 = vunpack.c.l.b16 %v2574
    %v2671 = vunpack.c.l.b16 %v2575
    %v2672 = vunpack.c.l.b16 %v2576
    %v2673 = vunpack.c.l.b16 %v2577
    %v2674 = vunpack.c.l.b16 %v2578
    %v2675 = vunpack.c.l.b16 %v2579
    %v2676 = vunpack.c.l.b16 %v2580
    %v2677 = vunpack.c.l.b16 %v2581
    %v2678 = vunpack.c.l.b16 %v2582
    %v2679 = vunpack.c.l.b16 %v2583
    %v2680 = vunpack.c.l.b16 %v2584
    %v2681 = vunpack.c.l.b16 %v2585
    %v2682 = vunpack.c.l.b16 %v2586
    %v2683 = vunpack.c.l.b16 %v2587
    %v2684 = vunpack.c.l.b16 %v2588
    %v2685 = vunpack.c.l.b16 %v2589
    %v2686 = vunpack.c.l.b16 %v2590
    %v2687 = vunpack.c.l.b16 %v2591
    %v2688 = vunpack.c.l.b16 %v2592
    %v2689 = vunpack.c.l.b16 %v2593
    %v2690 = vunpack.c.l.b16 %v2594
    %v2691 = vunpack.c.l.b16 %v2595
    %v2692 = vunpack.c.l.b16 %v2596
    %v2693 = vunpack.c.l.b16 %v2597
    %v2694 = vunpack.c.l.b16 %v2598
    %v2695 = vunpack.c.l.b16 %v2599
    %v2696 = vpack.c.b16 %v2649, %v2648
    %v2697 = vpack.c.b16 %v2651, %v2650
    %v2698 = vpack.c.b16 %v2653, %v2652
    %v2699 = vpack.c.b16 %v2655, %v2654
    %v2700 = vpack.c.b16 %v2657, %v2656
    %v2701 = vpack.c.b16 %v2659, %v2658
    %v2702 = vpack.c.b16 %v2661, %v2660
    %v2703 = vpack.c.b16 %v2663, %v2662
    %v2704 = vpack.c.b16 %v2665, %v2664
    %v2705 = vpack.c.b16 %v2667, %v2666
    %v2706 = vpack.c.b16 %v2669, %v2668
    %v2707 = vpack.c.b16 %v2671, %v2670
    %v2708 = vpack.c.b16 %v2673, %v2672
    %v2709 = vpack.c.b16 %v2675, %v2674
    %v2710 = vpack.c.b16 %v2677, %v2676
    %v2711 = vpack.c.b16 %v2679, %v2678
    %v2712 = vpack.c.b16 %v2681, %v2680
    %v2713 = vpack.c.b16 %v2683, %v2682
    %v2714 = vpack.c.b16 %v2685, %v2684
    %v2715 = vpack.c.b16 %v2687, %v2686
    %v2716 = vpack.c.b16 %v2689, %v2688
    %v2717 = vpack.c.b16 %v2691, %v2690
    %v2718 = vpack.c.b16 %v2693, %v2692
    %v2719 = vpack.c.b16 %v2695, %v2694
    %2744 = vmatprep.subr.bf16.mxu0 0
    %2745 = vmatpush1.bf16.msra.mxu0 %v2696
    %2746 = vmatprep.subr.bf16.mxu0 0
    %2747 = vmatpush1.bf16.msra.mxu0 %v2697
    %2748 = vmatprep.subr.bf16.mxu0 0
    %2749 = vmatpush1.bf16.msra.mxu0 %v2698
    %2750 = vmatprep.subr.bf16.mxu0 0
    %2751 = vmatpush1.bf16.msra.mxu0 %v2699
    %2752 = vmatprep.subr.bf16.mxu0 0
    %2753 = vmatpush1.bf16.msra.mxu0 %v2700
    %2754 = vmatprep.subr.bf16.mxu0 0
    %2755 = vmatpush1.bf16.msra.mxu0 %v2701
    %2756 = vmatprep.subr.bf16.mxu0 0
    %2757 = vmatpush1.bf16.msra.mxu0 %v2702
    %2758 = vmatprep.subr.bf16.mxu0 0
    %2759 = vmatpush1.bf16.msra.mxu0 %v2703
    %2760 = vmatprep.subr.bf16.mxu0 0
    %2761 = vmatpush1.bf16.msra.mxu0 %v2704
    %2762 = vmatprep.subr.bf16.mxu0 0
    %2763 = vmatpush1.bf16.msra.mxu0 %v2705
    %2764 = vmatprep.subr.bf16.mxu0 0
    %2765 = vmatpush1.bf16.msra.mxu0 %v2706
    %2766 = vmatprep.subr.bf16.mxu0 0
    %2767 = vmatpush1.bf16.msra.mxu0 %v2707
    %2768 = vmatprep.subr.bf16.mxu0 0
    %2769 = vmatpush1.bf16.msra.mxu0 %v2708
    %2770 = vmatprep.subr.bf16.mxu0 0
    %2771 = vmatpush1.bf16.msra.mxu0 %v2709
    %2772 = vmatprep.subr.bf16.mxu0 0
    %2773 = vmatpush1.bf16.msra.mxu0 %v2710
    %2774 = vmatprep.subr.bf16.mxu0 0
    %2775 = vmatpush1.bf16.msra.mxu0 %v2711
    %2776 = vmatprep.mubr.bf16.mxu0 %v2456
    %2777 = vmatmul.mubr.bf16.gmra.mrb[0].mxu0 %v2455
    %v2778 = vpop.f32.mrb[0].mxu0
    %v2779 = vadd.f32 0.0, %v2778
    %v2780 = vpop.f32.mrb[0].mxu0
    %v2781 = vpop.f32.mrb[0].mxu0
    %v2782 = vadd.f32 0.0, %v2781
    %v2783 = vpop.f32.mrb[0].mxu0
    %2784 = vmatprep.mubr.bf16.mxu0 %v2459
    %2785 = vmatmul.mubr.bf16.gmra.mrb[0].mxu0 %v2458
    %v2786 = vpop.f32.mrb[0].mxu0
    %v2787 = vadd.f32 0.0, %v2786
    %v2788 = vpop.f32.mrb[0].mxu0
    %v2789 = vpop.f32.mrb[0].mxu0
    %v2790 = vadd.f32 0.0, %v2789
    %v2791 = vpop.f32.mrb[0].mxu0
    %2792 = vmatprep.mubr.bf16.mxu0 %v2462
    %2793 = vmatmul.mubr.bf16.gmra.mrb[0].mxu0 %v2461
    %v2794 = vpop.f32.mrb[0].mxu0
    %v2795 = vadd.f32 0.0, %v2794
    %v2796 = vpop.f32.mrb[0].mxu0
    %v2797 = vpop.f32.mrb[0].mxu0
    %v2798 = vadd.f32 0.0, %v2797
    %v2799 = vpop.f32.mrb[0].mxu0
    %2800 = vmatprep.mubr.bf16.mxu0 %v2465
    %2801 = vmatmul.mubr.bf16.gmra.mrb[0].mxu0 %v2464
    %v2802 = vpop.f32.mrb[0].mxu0
    %v2803 = vadd.f32 0.0, %v2802
    %v2804 = vpop.f32.mrb[0].mxu0
    %v2805 = vpop.f32.mrb[0].mxu0
    %v2806 = vadd.f32 0.0, %v2805
    %v2807 = vpop.f32.mrb[0].mxu0
    %2808 = vmatprep.mubr.bf16.mxu0 %v2468
    %2809 = vmatmul.mubr.bf16.gmra.mrb[0].mxu0 %v2467
    %v2810 = vpop.f32.mrb[0].mxu0
    %v2811 = vadd.f32 0.0, %v2810
    %v2812 = vpop.f32.mrb[0].mxu0
    %v2813 = vpop.f32.mrb[0].mxu0
    %v2814 = vadd.f32 0.0, %v2813
    %v2815 = vpop.f32.mrb[0].mxu0
    %2816 = vmatprep.mubr.bf16.mxu0 %v2471
    %2817 = vmatmul.mubr.bf16.gmra.mrb[0].mxu0 %v2470
    %v2818 = vpop.f32.mrb[0].mxu0
    %v2819 = vadd.f32 0.0, %v2818
    %v2820 = vpop.f32.mrb[0].mxu0
    %v2821 = vpop.f32.mrb[0].mxu0
    %v2822 = vadd.f32 0.0, %v2821
    %v2823 = vpop.f32.mrb[0].mxu0
    %2824 = vmatprep.mubr.bf16.mxu0 %v2474
    %2825 = vmatmul.mubr.bf16.gmra.mrb[0].mxu0 %v2473
    %v2826 = vpop.f32.mrb[0].mxu0
    %v2827 = vadd.f32 0.0, %v2826
    %v2828 = vpop.f32.mrb[0].mxu0
    %v2829 = vpop.f32.mrb[0].mxu0
    %v2830 = vadd.f32 0.0, %v2829
    %v2831 = vpop.f32.mrb[0].mxu0
    %2832 = vmatprep.mubr.bf16.mxu0 %v2477
    %2833 = vmatmul.mubr.bf16.gmra.mrb[0].mxu0 %v2476
    %v2834 = vpop.f32.mrb[0].mxu0
    %v2835 = vadd.f32 0.0, %v2834
    %v2836 = vpop.f32.mrb[0].mxu0
    %v2837 = vpop.f32.mrb[0].mxu0
    %v2838 = vadd.f32 0.0, %v2837
    %v2839 = vpop.f32.mrb[0].mxu0
    %2840 = vmatprep.mubr.bf16.mxu0 %v2480
    %2841 = vmatmul.mubr.bf16.gmra.mrb[0].mxu0 %v2479
    %v2842 = vpop.f32.mrb[0].mxu0
    %v2843 = vadd.f32 0.0, %v2842
    %v2844 = vpop.f32.mrb[0].mxu0
    %v2845 = vpop.f32.mrb[0].mxu0
    %v2846 = vadd.f32 0.0, %v2845
    %v2847 = vpop.f32.mrb[0].mxu0
    %2848 = vmatprep.mubr.bf16.mxu0 %v2483
    %2849 = vmatmul.mubr.bf16.gmra.mrb[0].mxu0 %v2482
    %v2850 = vpop.f32.mrb[0].mxu0
    %v2851 = vadd.f32 0.0, %v2850
    %v2852 = vpop.f32.mrb[0].mxu0
    %v2853 = vpop.f32.mrb[0].mxu0
    %v2854 = vadd.f32 0.0, %v2853
    %v2855 = vpop.f32.mrb[0].mxu0
    %2856 = vmatprep.mubr.bf16.mxu0 %v2486
    %2857 = vmatmul.mubr.bf16.gmra.mrb[0].mxu0 %v2485
    %v2858 = vpop.f32.mrb[0].mxu0
    %v2859 = vadd.f32 0.0, %v2858
    %v2860 = vpop.f32.mrb[0].mxu0
    %v2861 = vpop.f32.mrb[0].mxu0
    %v2862 = vadd.f32 0.0, %v2861
    %v2863 = vpop.f32.mrb[0].mxu0
    %2864 = vmatprep.mubr.bf16.mxu0 %v2489
    %2865 = vmatmul.mubr.bf16.gmra.mrb[0].mxu0 %v2488
    %v2866 = vpop.f32.mrb[0].mxu0
    %v2867 = vadd.f32 0.0, %v2866
    %v2868 = vpop.f32.mrb[0].mxu0
    %v2869 = vpop.f32.mrb[0].mxu0
    %v2870 = vadd.f32 0.0, %v2869
    %v2871 = vpop.f32.mrb[0].mxu0
    %2872 = vmatprep.mubr.bf16.mxu0 %v2492
    %2873 = vmatmul.mubr.bf16.gmra.mrb[0].mxu0 %v2491
    %v2874 = vpop.f32.mrb[0].mxu0
    %v2875 = vadd.f32 0.0, %v2874
    %v2876 = vpop.f32.mrb[0].mxu0
    %v2877 = vpop.f32.mrb[0].mxu0
    %v2878 = vadd.f32 0.0, %v2877
    %v2879 = vpop.f32.mrb[0].mxu0
    %2880 = vmatprep.mubr.bf16.mxu0 %v2495
    %2881 = vmatmul.mubr.bf16.gmra.mrb[0].mxu0 %v2494
    %v2882 = vpop.f32.mrb[0].mxu0
    %v2883 = vadd.f32 0.0, %v2882
    %v2884 = vpop.f32.mrb[0].mxu0
    %v2885 = vpop.f32.mrb[0].mxu0
    %v2886 = vadd.f32 0.0, %v2885
    %v2887 = vpop.f32.mrb[0].mxu0
    %2888 = vmatprep.mubr.bf16.mxu0 %v2498
    %2889 = vmatmul.mubr.bf16.gmra.mrb[0].mxu0 %v2497
    %v2890 = vpop.f32.mrb[0].mxu0
    %v2891 = vadd.f32 0.0, %v2890
    %v2892 = vpop.f32.mrb[0].mxu0
    %v2893 = vpop.f32.mrb[0].mxu0
    %v2894 = vadd.f32 0.0, %v2893
    %v2895 = vpop.f32.mrb[0].mxu0
    %2896 = vmatprep.mubr.bf16.mxu0 %v2501
    %2897 = vmatmul.mubr.bf16.gmra.mrb[0].mxu0 %v2500
    %v2898 = vpop.f32.mrb[0].mxu0
    %v2899 = vadd.f32 0.0, %v2898
    %v2900 = vpop.f32.mrb[0].mxu0
    %v2901 = vpop.f32.mrb[0].mxu0
    %v2902 = vadd.f32 0.0, %v2901
    %v2903 = vpop.f32.mrb[0].mxu0
    %2904 = vmatprep.mubr.bf16.mxu0 %v2504
    %2905 = vmatmul.mubr.bf16.gmra.mrb[0].mxu0 %v2503
    %v2906 = vpop.f32.mrb[0].mxu0
    %v2907 = vadd.f32 0.0, %v2906
    %v2908 = vpop.f32.mrb[0].mxu0
    %v2909 = vpop.f32.mrb[0].mxu0
    %v2910 = vadd.f32 0.0, %v2909
    %v2911 = vpop.f32.mrb[0].mxu0
    %2912 = vmatprep.mubr.bf16.mxu0 %v2507
    %2913 = vmatmul.mubr.bf16.gmra.mrb[0].mxu0 %v2506
    %v2914 = vpop.f32.mrb[0].mxu0
    %v2915 = vadd.f32 0.0, %v2914
    %v2916 = vpop.f32.mrb[0].mxu0
    %v2917 = vpop.f32.mrb[0].mxu0
    %v2918 = vadd.f32 0.0, %v2917
    %v2919 = vpop.f32.mrb[0].mxu0
    %2920 = vmatprep.mubr.bf16.mxu0 %v2510
    %2921 = vmatmul.mubr.bf16.gmra.mrb[0].mxu0 %v2509
    %v2922 = vpop.f32.mrb[0].mxu0
    %v2923 = vadd.f32 0.0, %v2922
    %v2924 = vpop.f32.mrb[0].mxu0
    %v2925 = vpop.f32.mrb[0].mxu0
    %v2926 = vadd.f32 0.0, %v2925
    %v2927 = vpop.f32.mrb[0].mxu0
    %2928 = vmatprep.mubr.bf16.mxu0 %v2513
    %2929 = vmatmul.mubr.bf16.gmra.mrb[0].mxu0 %v2512
    %v2930 = vpop.f32.mrb[0].mxu0
    %v2931 = vadd.f32 0.0, %v2930
    %v2932 = vpop.f32.mrb[0].mxu0
    %v2933 = vpop.f32.mrb[0].mxu0
    %v2934 = vadd.f32 0.0, %v2933
    %v2935 = vpop.f32.mrb[0].mxu0
    %2936 = vmatprep.mubr.bf16.mxu0 %v2516
    %2937 = vmatmul.mubr.bf16.gmra.mrb[0].mxu0 %v2515
    %v2938 = vpop.f32.mrb[0].mxu0
    %v2939 = vadd.f32 0.0, %v2938
    %v2940 = vpop.f32.mrb[0].mxu0
    %v2941 = vpop.f32.mrb[0].mxu0
    %v2942 = vadd.f32 0.0, %v2941
    %v2943 = vpop.f32.mrb[0].mxu0
    %2944 = vmatprep.mubr.bf16.mxu0 %v2519
    %2945 = vmatmul.mubr.bf16.gmra.mrb[0].mxu0 %v2518
    %v2946 = vpop.f32.mrb[0].mxu0
    %v2947 = vadd.f32 0.0, %v2946
    %v2948 = vpop.f32.mrb[0].mxu0
    %v2949 = vpop.f32.mrb[0].mxu0
    %v2950 = vadd.f32 0.0, %v2949
    %v2951 = vpop.f32.mrb[0].mxu0
    %2952 = vmatprep.mubr.bf16.mxu0 %v2522
    %2953 = vmatmul.mubr.bf16.gmra.mrb[0].mxu0 %v2521
    %v2954 = vpop.f32.mrb[0].mxu0
    %v2955 = vadd.f32 0.0, %v2954
    %v2956 = vpop.f32.mrb[0].mxu0
    %v2957 = vpop.f32.mrb[0].mxu0
    %v2958 = vadd.f32 0.0, %v2957
    %v2959 = vpop.f32.mrb[0].mxu0
    %2960 = vmatprep.mubr.bf16.mxu0 %v2525
    %2961 = vmatmul.mubr.bf16.gmra.mrb[0].mxu0 %v2524
    %v2962 = vpop.f32.mrb[0].mxu0
    %v2963 = vadd.f32 0.0, %v2962
    %v2964 = vpop.f32.mrb[0].mxu0
    %v2965 = vpop.f32.mrb[0].mxu0
    %v2966 = vadd.f32 0.0, %v2965
    %v2967 = vpop.f32.mrb[0].mxu0
    %2968 = vmatprep.mubr.bf16.mxu0 %v2528
    %2969 = vmatmul.mubr.bf16.gmra.mrb[0].mxu0 %v2527
    %v2970 = vpop.f32.mrb[0].mxu0
    %v2971 = vadd.f32 0.0, %v2970
    %v2972 = vpop.f32.mrb[0].mxu0
    %v2973 = vpop.f32.mrb[0].mxu0
    %v2974 = vadd.f32 0.0, %v2973
    %v2975 = vpop.f32.mrb[0].mxu0
    %2976 = vmatprep.mubr.bf16.mxu0 %v2531
    %2977 = vmatmul.mubr.bf16.gmra.mrb[0].mxu0 %v2530
    %v2978 = vpop.f32.mrb[0].mxu0
    %v2979 = vadd.f32 0.0, %v2978
    %v2980 = vpop.f32.mrb[0].mxu0
    %v2981 = vpop.f32.mrb[0].mxu0
    %v2982 = vadd.f32 0.0, %v2981
    %v2983 = vpop.f32.mrb[0].mxu0
    %2984 = vmatprep.mubr.bf16.mxu0 %v2534
    %2985 = vmatmul.mubr.bf16.gmra.mrb[0].mxu0 %v2533
    %v2986 = vpop.f32.mrb[0].mxu0
    %v2987 = vadd.f32 0.0, %v2986
    %v2988 = vpop.f32.mrb[0].mxu0
    %v2989 = vpop.f32.mrb[0].mxu0
    %v2990 = vadd.f32 0.0, %v2989
    %v2991 = vpop.f32.mrb[0].mxu0
    %2992 = vmatprep.mubr.bf16.mxu0 %v2537
    %2993 = vmatmul.mubr.bf16.gmra.mrb[0].mxu0 %v2536
    %v2994 = vpop.f32.mrb[0].mxu0
    %v2995 = vadd.f32 0.0, %v2994
    %v2996 = vpop.f32.mrb[0].mxu0
    %v2997 = vpop.f32.mrb[0].mxu0
    %v2998 = vadd.f32 0.0, %v2997
    %v2999 = vpop.f32.mrb[0].mxu0
    %3000 = vmatprep.mubr.bf16.mxu0 %v2540
    %3001 = vmatmul.mubr.bf16.gmra.mrb[0].mxu0 %v2539
    %v3002 = vpop.f32.mrb[0].mxu0
    %v3003 = vadd.f32 0.0, %v3002
    %v3004 = vpop.f32.mrb[0].mxu0
    %v3005 = vpop.f32.mrb[0].mxu0
    %v3006 = vadd.f32 0.0, %v3005
    %v3007 = vpop.f32.mrb[0].mxu0
    %3008 = vmatprep.mubr.bf16.mxu0 %v2543
    %3009 = vmatmul.mubr.bf16.gmra.mrb[0].mxu0 %v2542
    %v3010 = vpop.f32.mrb[0].mxu0
    %v3011 = vadd.f32 0.0, %v3010
    %v3012 = vpop.f32.mrb[0].mxu0
    %v3013 = vpop.f32.mrb[0].mxu0
    %v3014 = vadd.f32 0.0, %v3013
    %v3015 = vpop.f32.mrb[0].mxu0
    %3016 = vmatprep.mubr.bf16.mxu0 %v2546
    %3017 = vmatmul.mubr.bf16.gmra.mrb[0].mxu0 %v2545
    %v3018 = vpop.f32.mrb[0].mxu0
    %v3019 = vadd.f32 0.0, %v3018
    %v3020 = vpop.f32.mrb[0].mxu0
    %v3021 = vpop.f32.mrb[0].mxu0
    %v3022 = vadd.f32 0.0, %v3021
    %v3023 = vpop.f32.mrb[0].mxu0
    %3024 = vmatprep.mubr.bf16.mxu0 %v2549
    %3025 = vmatmul.mubr.bf16.gmra.mrb[0].mxu0 %v2548
    %v3026 = vpop.f32.mrb[0].mxu0
    %v3027 = vadd.f32 0.0, %v3026
    %v3028 = vpop.f32.mrb[0].mxu0
    %v3029 = vpop.f32.mrb[0].mxu0
    %v3030 = vadd.f32 0.0, %v3029
    %v3031 = vpop.f32.mrb[0].mxu0
    %3032 = vdwg.mxu0
    %3033 = vmatprep.subr.bf16.mxu0 0
    %3034 = vmatpush1.bf16.msra.mxu0 %v2712
    %3035 = vmatprep.subr.bf16.mxu0 0
    %3036 = vmatpush1.bf16.msra.mxu0 %v2713
    %3037 = vmatprep.subr.bf16.mxu0 0
    %3038 = vmatpush1.bf16.msra.mxu0 %v2714
    %3039 = vmatprep.subr.bf16.mxu0 0
    %3040 = vmatpush1.bf16.msra.mxu0 %v2715
    %3041 = vmatprep.subr.bf16.mxu0 0
    %3042 = vmatpush1.bf16.msra.mxu0 %v2716
    %3043 = vmatprep.subr.bf16.mxu0 0
    %3044 = vmatpush1.bf16.msra.mxu0 %v2717
    %3045 = vmatprep.subr.bf16.mxu0 0
    %3046 = vmatpush1.bf16.msra.mxu0 %v2718
    %3047 = vmatprep.subr.bf16.mxu0 0
    %3048 = vmatpush1.bf16.msra.mxu0 %v2719
    %3049 = vmatprep.subr.bf16.mxu0 0
    %3050 = vmatpush1.bf16.msra.mxu0 0
    %3051 = vmatprep.subr.bf16.mxu0 0
    %3052 = vmatpush1.bf16.msra.mxu0 0
    %3053 = vmatprep.subr.bf16.mxu0 0
    %3054 = vmatpush1.bf16.msra.mxu0 0
    %3055 = vmatprep.subr.bf16.mxu0 0
    %3056 = vmatpush1.bf16.msra.mxu0 0
    %3057 = vmatprep.subr.bf16.mxu0 0
    %3058 = vmatpush1.bf16.msra.mxu0 0
    %3059 = vmatprep.subr.bf16.mxu0 0
    %3060 = vmatpush1.bf16.msra.mxu0 0
    %3061 = vmatprep.subr.bf16.mxu0 0
    %3062 = vmatpush1.bf16.msra.mxu0 0
    %3063 = vmatprep.subr.bf16.mxu0 0
    %3064 = vmatpush1.bf16.msra.mxu0 0
    %3065 = vmatprep.mubr.bf16.mxu0 0
    %3066 = vmatmul.mubr.bf16.gmra.mrb[0].mxu0 %v2457
    %v3067 = vpop.f32.mrb[0].mxu0
    %v3068 = vadd.f32 %v2779, %v3067
    %v3069 = vpop.f32.mrb[0].mxu0
    %v3070 = vpop.f32.mrb[0].mxu0
    %v3071 = vadd.f32 %v2782, %v3070
    %v3072 = vpop.f32.mrb[0].mxu0
    %3073 = vmatprep.mubr.bf16.mxu0 0
    %3074 = vmatmul.mubr.bf16.gmra.mrb[0].mxu0 %v2460
    %v3075 = vpop.f32.mrb[0].mxu0
    %v3076 = vadd.f32 %v2787, %v3075
    %v3077 = vpop.f32.mrb[0].mxu0
    %v3078 = vpop.f32.mrb[0].mxu0
    %v3079 = vadd.f32 %v2790, %v3078
    %v3080 = vpop.f32.mrb[0].mxu0
    %3081 = vmatprep.mubr.bf16.mxu0 0
    %3082 = vmatmul.mubr.bf16.gmra.mrb[0].mxu0 %v2463
    %v3083 = vpop.f32.mrb[0].mxu0
    %v3084 = vadd.f32 %v2795, %v3083
    %v3085 = vpop.f32.mrb[0].mxu0
    %v3086 = vpop.f32.mrb[0].mxu0
    %v3087 = vadd.f32 %v2798, %v3086
    %v3088 = vpop.f32.mrb[0].mxu0
    %3089 = vmatprep.mubr.bf16.mxu0 0
    %3090 = vmatmul.mubr.bf16.gmra.mrb[0].mxu0 %v2466
    %v3091 = vpop.f32.mrb[0].mxu0
    %v3092 = vadd.f32 %v2803, %v3091
    %v3093 = vpop.f32.mrb[0].mxu0
    %v3094 = vpop.f32.mrb[0].mxu0
    %v3095 = vadd.f32 %v2806, %v3094
    %v3096 = vpop.f32.mrb[0].mxu0
    %3097 = vmatprep.mubr.bf16.mxu0 0
    %3098 = vmatmul.mubr.bf16.gmra.mrb[0].mxu0 %v2469
    %v3099 = vpop.f32.mrb[0].mxu0
    %v3100 = vadd.f32 %v2811, %v3099
    %v3101 = vpop.f32.mrb[0].mxu0
    %v3102 = vpop.f32.mrb[0].mxu0
    %v3103 = vadd.f32 %v2814, %v3102
    %v3104 = vpop.f32.mrb[0].mxu0
    %3105 = vmatprep.mubr.bf16.mxu0 0
    %3106 = vmatmul.mubr.bf16.gmra.mrb[0].mxu0 %v2472
    %v3107 = vpop.f32.mrb[0].mxu0
    %v3108 = vadd.f32 %v2819, %v3107
    %v3109 = vpop.f32.mrb[0].mxu0
    %v3110 = vpop.f32.mrb[0].mxu0
    %v3111 = vadd.f32 %v2822, %v3110
    %v3112 = vpop.f32.mrb[0].mxu0
    %3113 = vmatprep.mubr.bf16.mxu0 0
    %3114 = vmatmul.mubr.bf16.gmra.mrb[0].mxu0 %v2475
    %v3115 = vpop.f32.mrb[0].mxu0
    %v3116 = vadd.f32 %v2827, %v3115
    %v3117 = vpop.f32.mrb[0].mxu0
    %v3118 = vpop.f32.mrb[0].mxu0
    %v3119 = vadd.f32 %v2830, %v3118
    %v3120 = vpop.f32.mrb[0].mxu0
    %3121 = vmatprep.mubr.bf16.mxu0 0
    %3122 = vmatmul.mubr.bf16.gmra.mrb[0].mxu0 %v2478
    %v3123 = vpop.f32.mrb[0].mxu0
    %v3124 = vadd.f32 %v2835, %v3123
    %v3125 = vpop.f32.mrb[0].mxu0
    %v3126 = vpop.f32.mrb[0].mxu0
    %v3127 = vadd.f32 %v2838, %v3126
    %v3128 = vpop.f32.mrb[0].mxu0
    %3129 = vmatprep.mubr.bf16.mxu0 0
    %3130 = vmatmul.mubr.bf16.gmra.mrb[0].mxu0 %v2481
    %v3131 = vpop.f32.mrb[0].mxu0
    %v3132 = vadd.f32 %v2843, %v3131
    %v3133 = vpop.f32.mrb[0].mxu0
    %v3134 = vpop.f32.mrb[0].mxu0
    %v3135 = vadd.f32 %v2846, %v3134
    %v3136 = vpop.f32.mrb[0].mxu0
    %3137 = vmatprep.mubr.bf16.mxu0 0
    %3138 = vmatmul.mubr.bf16.gmra.mrb[0].mxu0 %v2484
    %v3139 = vpop.f32.mrb[0].mxu0
    %v3140 = vadd.f32 %v2851, %v3139
    %v3141 = vpop.f32.mrb[0].mxu0
    %v3142 = vpop.f32.mrb[0].mxu0
    %v3143 = vadd.f32 %v2854, %v3142
    %v3144 = vpop.f32.mrb[0].mxu0
    %3145 = vmatprep.mubr.bf16.mxu0 0
    %3146 = vmatmul.mubr.bf16.gmra.mrb[0].mxu0 %v2487
    %v3147 = vpop.f32.mrb[0].mxu0
    %v3148 = vadd.f32 %v2859, %v3147
    %v3149 = vpop.f32.mrb[0].mxu0
    %v3150 = vpop.f32.mrb[0].mxu0
    %v3151 = vadd.f32 %v2862, %v3150
    %v3152 = vpop.f32.mrb[0].mxu0
    %3153 = vmatprep.mubr.bf16.mxu0 0
    %3154 = vmatmul.mubr.bf16.gmra.mrb[0].mxu0 %v2490
    %v3155 = vpop.f32.mrb[0].mxu0
    %v3156 = vadd.f32 %v2867, %v3155
    %v3157 = vpop.f32.mrb[0].mxu0
    %v3158 = vpop.f32.mrb[0].mxu0
    %v3159 = vadd.f32 %v2870, %v3158
    %v3160 = vpop.f32.mrb[0].mxu0
    %3161 = vmatprep.mubr.bf16.mxu0 0
    %3162 = vmatmul.mubr.bf16.gmra.mrb[0].mxu0 %v2493
    %v3163 = vpop.f32.mrb[0].mxu0
    %v3164 = vadd.f32 %v2875, %v3163
    %v3165 = vpop.f32.mrb[0].mxu0
    %v3166 = vpop.f32.mrb[0].mxu0
    %v3167 = vadd.f32 %v2878, %v3166
    %v3168 = vpop.f32.mrb[0].mxu0
    %3169 = vmatprep.mubr.bf16.mxu0 0
    %3170 = vmatmul.mubr.bf16.gmra.mrb[0].mxu0 %v2496
    %v3171 = vpop.f32.mrb[0].mxu0
    %v3172 = vadd.f32 %v2883, %v3171
    %v3173 = vpop.f32.mrb[0].mxu0
    %v3174 = vpop.f32.mrb[0].mxu0
    %v3175 = vadd.f32 %v2886, %v3174
    %v3176 = vpop.f32.mrb[0].mxu0
    %3177 = vmatprep.mubr.bf16.mxu0 0
    %3178 = vmatmul.mubr.bf16.gmra.mrb[0].mxu0 %v2499
    %v3179 = vpop.f32.mrb[0].mxu0
    %v3180 = vadd.f32 %v2891, %v3179
    %v3181 = vpop.f32.mrb[0].mxu0
    %v3182 = vpop.f32.mrb[0].mxu0
    %v3183 = vadd.f32 %v2894, %v3182
    %v3184 = vpop.f32.mrb[0].mxu0
    %3185 = vmatprep.mubr.bf16.mxu0 0
    %3186 = vmatmul.mubr.bf16.gmra.mrb[0].mxu0 %v2502
    %v3187 = vpop.f32.mrb[0].mxu0
    %v3188 = vadd.f32 %v2899, %v3187
    %v3189 = vpop.f32.mrb[0].mxu0
    %v3190 = vpop.f32.mrb[0].mxu0
    %v3191 = vadd.f32 %v2902, %v3190
    %v3192 = vpop.f32.mrb[0].mxu0
    %3193 = vmatprep.mubr.bf16.mxu0 0
    %3194 = vmatmul.mubr.bf16.gmra.mrb[0].mxu0 %v2505
    %v3195 = vpop.f32.mrb[0].mxu0
    %v3196 = vadd.f32 %v2907, %v3195
    %v3197 = vpop.f32.mrb[0].mxu0
    %v3198 = vpop.f32.mrb[0].mxu0
    %v3199 = vadd.f32 %v2910, %v3198
    %v3200 = vpop.f32.mrb[0].mxu0
    %3201 = vmatprep.mubr.bf16.mxu0 0
    %3202 = vmatmul.mubr.bf16.gmra.mrb[0].mxu0 %v2508
    %v3203 = vpop.f32.mrb[0].mxu0
    %v3204 = vadd.f32 %v2915, %v3203
    %v3205 = vpop.f32.mrb[0].mxu0
    %v3206 = vpop.f32.mrb[0].mxu0
    %v3207 = vadd.f32 %v2918, %v3206
    %v3208 = vpop.f32.mrb[0].mxu0
    %3209 = vmatprep.mubr.bf16.mxu0 0
    %3210 = vmatmul.mubr.bf16.gmra.mrb[0].mxu0 %v2511
    %v3211 = vpop.f32.mrb[0].mxu0
    %v3212 = vadd.f32 %v2923, %v3211
    %v3213 = vpop.f32.mrb[0].mxu0
    %v3214 = vpop.f32.mrb[0].mxu0
    %v3215 = vadd.f32 %v2926, %v3214
    %v3216 = vpop.f32.mrb[0].mxu0
    %3217 = vmatprep.mubr.bf16.mxu0 0
    %3218 = vmatmul.mubr.bf16.gmra.mrb[0].mxu0 %v2514
    %v3219 = vpop.f32.mrb[0].mxu0
    %v3220 = vadd.f32 %v2931, %v3219
    %v3221 = vpop.f32.mrb[0].mxu0
    %v3222 = vpop.f32.mrb[0].mxu0
    %v3223 = vadd.f32 %v2934, %v3222
    %v3224 = vpop.f32.mrb[0].mxu0
    %3225 = vmatprep.mubr.bf16.mxu0 0
    %3226 = vmatmul.mubr.bf16.gmra.mrb[0].mxu0 %v2517
    %v3227 = vpop.f32.mrb[0].mxu0
    %v3228 = vadd.f32 %v2939, %v3227
    %v3229 = vpop.f32.mrb[0].mxu0
    %v3230 = vpop.f32.mrb[0].mxu0
    %v3231 = vadd.f32 %v2942, %v3230
    %v3232 = vpop.f32.mrb[0].mxu0
    %3233 = vmatprep.mubr.bf16.mxu0 0
    %3234 = vmatmul.mubr.bf16.gmra.mrb[0].mxu0 %v2520
    %v3235 = vpop.f32.mrb[0].mxu0
    %v3236 = vadd.f32 %v2947, %v3235
    %v3237 = vpop.f32.mrb[0].mxu0
    %v3238 = vpop.f32.mrb[0].mxu0
    %v3239 = vadd.f32 %v2950, %v3238
    %v3240 = vpop.f32.mrb[0].mxu0
    %3241 = vmatprep.mubr.bf16.mxu0 0
    %3242 = vmatmul.mubr.bf16.gmra.mrb[0].mxu0 %v2523
    %v3243 = vpop.f32.mrb[0].mxu0
    %v3244 = vadd.f32 %v2955, %v3243
    %v3245 = vpop.f32.mrb[0].mxu0
    %v3246 = vpop.f32.mrb[0].mxu0
    %v3247 = vadd.f32 %v2958, %v3246
    %v3248 = vpop.f32.mrb[0].mxu0
    %3249 = vmatprep.mubr.bf16.mxu0 0
    %3250 = vmatmul.mubr.bf16.gmra.mrb[0].mxu0 %v2526
    %v3251 = vpop.f32.mrb[0].mxu0
    %v3252 = vadd.f32 %v2963, %v3251
    %v3253 = vpop.f32.mrb[0].mxu0
    %v3254 = vpop.f32.mrb[0].mxu0
    %v3255 = vadd.f32 %v2966, %v3254
    %v3256 = vpop.f32.mrb[0].mxu0
    %3257 = vmatprep.mubr.bf16.mxu0 0
    %3258 = vmatmul.mubr.bf16.gmra.mrb[0].mxu0 %v2529
    %v3259 = vpop.f32.mrb[0].mxu0
    %v3260 = vadd.f32 %v2971, %v3259
    %v3261 = vpop.f32.mrb[0].mxu0
    %v3262 = vpop.f32.mrb[0].mxu0
    %v3263 = vadd.f32 %v2974, %v3262
    %v3264 = vpop.f32.mrb[0].mxu0
    %3265 = vmatprep.mubr.bf16.mxu0 0
    %3266 = vmatmul.mubr.bf16.gmra.mrb[0].mxu0 %v2532
    %v3267 = vpop.f32.mrb[0].mxu0
    %v3268 = vadd.f32 %v2979, %v3267
    %v3269 = vpop.f32.mrb[0].mxu0
    %v3270 = vpop.f32.mrb[0].mxu0
    %v3271 = vadd.f32 %v2982, %v3270
    %v3272 = vpop.f32.mrb[0].mxu0
    %3273 = vmatprep.mubr.bf16.mxu0 0
    %3274 = vmatmul.mubr.bf16.gmra.mrb[0].mxu0 %v2535
    %v3275 = vpop.f32.mrb[0].mxu0
    %v3276 = vadd.f32 %v2987, %v3275
    %v3277 = vpop.f32.mrb[0].mxu0
    %v3278 = vpop.f32.mrb[0].mxu0
    %v3279 = vadd.f32 %v2990, %v3278
    %v3280 = vpop.f32.mrb[0].mxu0
    %3281 = vmatprep.mubr.bf16.mxu0 0
    %3282 = vmatmul.mubr.bf16.gmra.mrb[0].mxu0 %v2538
    %v3283 = vpop.f32.mrb[0].mxu0
    %v3284 = vadd.f32 %v2995, %v3283
    %v3285 = vpop.f32.mrb[0].mxu0
    %v3286 = vpop.f32.mrb[0].mxu0
    %v3287 = vadd.f32 %v2998, %v3286
    %v3288 = vpop.f32.mrb[0].mxu0
    %3289 = vmatprep.mubr.bf16.mxu0 0
    %3290 = vmatmul.mubr.bf16.gmra.mrb[0].mxu0 %v2541
    %v3291 = vpop.f32.mrb[0].mxu0
    %v3292 = vadd.f32 %v3003, %v3291
    %v3293 = vpop.f32.mrb[0].mxu0
    %v3294 = vpop.f32.mrb[0].mxu0
    %v3295 = vadd.f32 %v3006, %v3294
    %v3296 = vpop.f32.mrb[0].mxu0
    %3297 = vmatprep.mubr.bf16.mxu0 0
    %3298 = vmatmul.mubr.bf16.gmra.mrb[0].mxu0 %v2544
    %v3299 = vpop.f32.mrb[0].mxu0
    %v3300 = vadd.f32 %v3011, %v3299
    %v3301 = vpop.f32.mrb[0].mxu0
    %v3302 = vpop.f32.mrb[0].mxu0
    %v3303 = vadd.f32 %v3014, %v3302
    %v3304 = vpop.f32.mrb[0].mxu0
    %3305 = vmatprep.mubr.bf16.mxu0 0
    %3306 = vmatmul.mubr.bf16.gmra.mrb[0].mxu0 %v2547
    %v3307 = vpop.f32.mrb[0].mxu0
    %v3308 = vadd.f32 %v3019, %v3307
    %v3309 = vpop.f32.mrb[0].mxu0
    %v3310 = vpop.f32.mrb[0].mxu0
    %v3311 = vadd.f32 %v3022, %v3310
    %v3312 = vpop.f32.mrb[0].mxu0
    %3313 = vmatprep.mubr.bf16.mxu0 0
    %3314 = vmatmul.mubr.bf16.gmra.mrb[0].mxu0 %v2550
    %v3315 = vpop.f32.mrb[0].mxu0
    %v3316 = vadd.f32 %v3027, %v3315
    %v3317 = vpop.f32.mrb[0].mxu0
    %v3318 = vpop.f32.mrb[0].mxu0
    %v3319 = vadd.f32 %v3030, %v3318
    %v3320 = vpop.f32.mrb[0].mxu0
    %3321 = vdwg.mxu0
    %v3322 = vadd.f32 %v2200, %v3068
    %v3323 = vadd.f32 %v2203, %v3071
    %v3324 = vadd.f32 %v2208, %v3076
    %v3325 = vadd.f32 %v2211, %v3079
    %v3326 = vadd.f32 %v2216, %v3084
    %v3327 = vadd.f32 %v2219, %v3087
    %v3328 = vadd.f32 %v2224, %v3092
    %v3329 = vadd.f32 %v2227, %v3095
    %v3330 = vadd.f32 %v2232, %v3100
    %v3331 = vadd.f32 %v2235, %v3103
    %v3332 = vadd.f32 %v2240, %v3108
    %v3333 = vadd.f32 %v2243, %v3111
    %v3334 = vadd.f32 %v2248, %v3116
    %v3335 = vadd.f32 %v2251, %v3119
    %v3336 = vadd.f32 %v2256, %v3124
    %v3337 = vadd.f32 %v2259, %v3127
    %v3338 = vadd.f32 %v2264, %v3132
    %v3339 = vadd.f32 %v2267, %v3135
    %v3340 = vadd.f32 %v2272, %v3140
    %v3341 = vadd.f32 %v2275, %v3143
    %v3342 = vadd.f32 %v2280, %v3148
    %v3343 = vadd.f32 %v2283, %v3151
    %v3344 = vadd.f32 %v2288, %v3156
    %v3345 = vadd.f32 %v2291, %v3159
    %v3346 = vadd.f32 %v2296, %v3164
    %v3347 = vadd.f32 %v2299, %v3167
    %v3348 = vadd.f32 %v2304, %v3172
    %v3349 = vadd.f32 %v2307, %v3175
    %v3350 = vadd.f32 %v2312, %v3180
    %v3351 = vadd.f32 %v2315, %v3183
    %v3352 = vadd.f32 %v2320, %v3188
    %v3353 = vadd.f32 %v2323, %v3191
    %v3354 = vadd.f32 %v2328, %v3196
    %v3355 = vadd.f32 %v2331, %v3199
    %v3356 = vadd.f32 %v2336, %v3204
    %v3357 = vadd.f32 %v2339, %v3207
    %v3358 = vadd.f32 %v2344, %v3212
    %v3359 = vadd.f32 %v2347, %v3215
    %v3360 = vadd.f32 %v2352, %v3220
    %v3361 = vadd.f32 %v2355, %v3223
    %v3362 = vadd.f32 %v2360, %v3228
    %v3363 = vadd.f32 %v2363, %v3231
    %v3364 = vadd.f32 %v2368, %v3236
    %v3365 = vadd.f32 %v2371, %v3239
    %v3366 = vadd.f32 %v2376, %v3244
    %v3367 = vadd.f32 %v2379, %v3247
    %v3368 = vadd.f32 %v2384, %v3252
    %v3369 = vadd.f32 %v2387, %v3255
    %v3370 = vadd.f32 %v2392, %v3260
    %v3371 = vadd.f32 %v2395, %v3263
    %v3372 = vadd.f32 %v2400, %v3268
    %v3373 = vadd.f32 %v2403, %v3271
    %v3374 = vadd.f32 %v2408, %v3276
    %v3375 = vadd.f32 %v2411, %v3279
    %v3376 = vadd.f32 %v2416, %v3284
    %v3377 = vadd.f32 %v2419, %v3287
    %v3378 = vadd.f32 %v2424, %v3292
    %v3379 = vadd.f32 %v2427, %v3295
    %v3380 = vadd.f32 %v2432, %v3300
    %v3381 = vadd.f32 %v2435, %v3303
    %v3382 = vadd.f32 %v2440, %v3308
    %v3383 = vadd.f32 %v2443, %v3311
    %v3384 = vadd.f32 %v2448, %v3316
    %v3385 = vadd.f32 %v2451, %v3319
    %v3386 = vld [vmem:[%s2] sm:$0x1]
    %v3388 = vlaneseq
    %v3389 = vshrl.u32 %v3388, 7
    %v3390 = vsub.s32 0, %v3389
    %v3391 = vrot.slane %v3386, %v3390
    %v3393 = vadd.f32 %v3322, %v3391
    %v3394 = vadd.f32 %v3323, %v3391
    %v3395 = vadd.f32 %v3324, %v3391
    %v3396 = vadd.f32 %v3325, %v3391
    %v3397 = vadd.f32 %v3326, %v3391
    %v3398 = vadd.f32 %v3327, %v3391
    %v3399 = vadd.f32 %v3328, %v3391
    %v3400 = vadd.f32 %v3329, %v3391
    %v3401 = vadd.f32 %v3330, %v3391
    %v3402 = vadd.f32 %v3331, %v3391
    %v3403 = vadd.f32 %v3332, %v3391
    %v3404 = vadd.f32 %v3333, %v3391
    %v3405 = vadd.f32 %v3334, %v3391
    %v3406 = vadd.f32 %v3335, %v3391
    %v3407 = vadd.f32 %v3336, %v3391
    %v3408 = vadd.f32 %v3337, %v3391
    %v3409 = vadd.f32 %v3338, %v3391
    %v3410 = vadd.f32 %v3339, %v3391
    %v3411 = vadd.f32 %v3340, %v3391
    %v3412 = vadd.f32 %v3341, %v3391
    %v3413 = vadd.f32 %v3342, %v3391
    %v3414 = vadd.f32 %v3343, %v3391
    %v3415 = vadd.f32 %v3344, %v3391
    %v3416 = vadd.f32 %v3345, %v3391
    %v3417 = vadd.f32 %v3346, %v3391
    %v3418 = vadd.f32 %v3347, %v3391
    %v3419 = vadd.f32 %v3348, %v3391
    %v3420 = vadd.f32 %v3349, %v3391
    %v3421 = vadd.f32 %v3350, %v3391
    %v3422 = vadd.f32 %v3351, %v3391
    %v3423 = vadd.f32 %v3352, %v3391
    %v3424 = vadd.f32 %v3353, %v3391
    %v3425 = vadd.f32 %v3354, %v3391
    %v3426 = vadd.f32 %v3355, %v3391
    %v3427 = vadd.f32 %v3356, %v3391
    %v3428 = vadd.f32 %v3357, %v3391
    %v3429 = vadd.f32 %v3358, %v3391
    %v3430 = vadd.f32 %v3359, %v3391
    %v3431 = vadd.f32 %v3360, %v3391
    %v3432 = vadd.f32 %v3361, %v3391
    %v3433 = vadd.f32 %v3362, %v3391
    %v3434 = vadd.f32 %v3363, %v3391
    %v3435 = vadd.f32 %v3364, %v3391
    %v3436 = vadd.f32 %v3365, %v3391
    %v3437 = vadd.f32 %v3366, %v3391
    %v3438 = vadd.f32 %v3367, %v3391
    %v3439 = vadd.f32 %v3368, %v3391
    %v3440 = vadd.f32 %v3369, %v3391
    %v3441 = vadd.f32 %v3370, %v3391
    %v3442 = vadd.f32 %v3371, %v3391
    %v3443 = vadd.f32 %v3372, %v3391
    %v3444 = vadd.f32 %v3373, %v3391
    %v3445 = vadd.f32 %v3374, %v3391
    %v3446 = vadd.f32 %v3375, %v3391
    %v3447 = vadd.f32 %v3376, %v3391
    %v3448 = vadd.f32 %v3377, %v3391
    %v3449 = vadd.f32 %v3378, %v3391
    %v3450 = vadd.f32 %v3379, %v3391
    %v3451 = vadd.f32 %v3380, %v3391
    %v3452 = vadd.f32 %v3381, %v3391
    %v3453 = vadd.f32 %v3382, %v3391
    %v3454 = vadd.f32 %v3383, %v3391
    %v3455 = vadd.f32 %v3384, %v3391
    %v3456 = vadd.f32 %v3385, %v3391
    %3457 = vst [vmem:[#allocation3] sm:$0xff] %v3393
    %3458 = vst [vmem:[#allocation3 + $0x8] sm:$0xff] %v3394
    %3459 = vst [vmem:[#allocation3 + $0x10] sm:$0xff] %v3395
    %3460 = vst [vmem:[#allocation3 + $0x18] sm:$0xff] %v3396
    %3461 = vst [vmem:[#allocation3 + $0x20] sm:$0xff] %v3397
    %3462 = vst [vmem:[#allocation3 + $0x28] sm:$0xff] %v3398
    %3463 = vst [vmem:[#allocation3 + $0x30] sm:$0xff] %v3399
    %3464 = vst [vmem:[#allocation3 + $0x38] sm:$0xff] %v3400
    %3465 = vst [vmem:[#allocation3 + $0x40] sm:$0xff] %v3401
    %3466 = vst [vmem:[#allocation3 + $0x48] sm:$0xff] %v3402
    %3467 = vst [vmem:[#allocation3 + $0x50] sm:$0xff] %v3403
    %3468 = vst [vmem:[#allocation3 + $0x58] sm:$0xff] %v3404
    %3469 = vst [vmem:[#allocation3 + $0x60] sm:$0xff] %v3405
    %3470 = vst [vmem:[#allocation3 + $0x68] sm:$0xff] %v3406
    %3471 = vst [vmem:[#allocation3 + $0x70] sm:$0xff] %v3407
    %3472 = vst [vmem:[#allocation3 + $0x78] sm:$0xff] %v3408
    %3473 = vst [vmem:[#allocation3 + $0x80] sm:$0xff] %v3409
    %3474 = vst [vmem:[#allocation3 + $0x88] sm:$0xff] %v3410
    %3475 = vst [vmem:[#allocation3 + $0x90] sm:$0xff] %v3411
    %3476 = vst [vmem:[#allocation3 + $0x98] sm:$0xff] %v3412
    %3477 = vst [vmem:[#allocation3 + $0xa0] sm:$0xff] %v3413
    %3478 = vst [vmem:[#allocation3 + $0xa8] sm:$0xff] %v3414
    %3479 = vst [vmem:[#allocation3 + $0xb0] sm:$0xff] %v3415
    %3480 = vst [vmem:[#allocation3 + $0xb8] sm:$0xff] %v3416
    %3481 = vst [vmem:[#allocation3 + $0xc0] sm:$0xff] %v3417
    %3482 = vst [vmem:[#allocation3 + $0xc8] sm:$0xff] %v3418
    %3483 = vst [vmem:[#allocation3 + $0xd0] sm:$0xff] %v3419
    %3484 = vst [vmem:[#allocation3 + $0xd8] sm:$0xff] %v3420
    %3485 = vst [vmem:[#allocation3 + $0xe0] sm:$0xff] %v3421
    %3486 = vst [vmem:[#allocation3 + $0xe8] sm:$0xff] %v3422
    %3487 = vst [vmem:[#allocation3 + $0xf0] sm:$0xff] %v3423
    %3488 = vst [vmem:[#allocation3 + $0xf8] sm:$0xff] %v3424
    %3489 = vst [vmem:[#allocation3 + $0x100] sm:$0xff] %v3425
    %3490 = vst [vmem:[#allocation3 + $0x108] sm:$0xff] %v3426
    %3491 = vst [vmem:[#allocation3 + $0x110] sm:$0xff] %v3427
    %3492 = vst [vmem:[#allocation3 + $0x118] sm:$0xff] %v3428
    %3493 = vst [vmem:[#allocation3 + $0x120] sm:$0xff] %v3429
    %3494 = vst [vmem:[#allocation3 + $0x128] sm:$0xff] %v3430
    %3495 = vst [vmem:[#allocation3 + $0x130] sm:$0xff] %v3431
    %3496 = vst [vmem:[#allocation3 + $0x138] sm:$0xff] %v3432
    %3497 = vst [vmem:[#allocation3 + $0x140] sm:$0xff] %v3433
    %3498 = vst [vmem:[#allocation3 + $0x148] sm:$0xff] %v3434
    %3499 = vst [vmem:[#allocation3 + $0x150] sm:$0xff] %v3435
    %3500 = vst [vmem:[#allocation3 + $0x158] sm:$0xff] %v3436
    %3501 = vst [vmem:[#allocation3 + $0x160] sm:$0xff] %v3437
    %3502 = vst [vmem:[#allocation3 + $0x168] sm:$0xff] %v3438
    %3503 = vst [vmem:[#allocation3 + $0x170] sm:$0xff] %v3439
    %3504 = vst [vmem:[#allocation3 + $0x178] sm:$0xff] %v3440
    %3505 = vst [vmem:[#allocation3 + $0x180] sm:$0xff] %v3441
    %3506 = vst [vmem:[#allocation3 + $0x188] sm:$0xff] %v3442
    %3507 = vst [vmem:[#allocation3 + $0x190] sm:$0xff] %v3443
    %3508 = vst [vmem:[#allocation3 + $0x198] sm:$0xff] %v3444
    %3509 = vst [vmem:[#allocation3 + $0x1a0] sm:$0xff] %v3445
    %3510 = vst [vmem:[#allocation3 + $0x1a8] sm:$0xff] %v3446
    %3511 = vst [vmem:[#allocation3 + $0x1b0] sm:$0xff] %v3447
    %3512 = vst [vmem:[#allocation3 + $0x1b8] sm:$0xff] %v3448
    %3513 = vst [vmem:[#allocation3 + $0x1c0] sm:$0xff] %v3449
    %3514 = vst [vmem:[#allocation3 + $0x1c8] sm:$0xff] %v3450
    %3515 = vst [vmem:[#allocation3 + $0x1d0] sm:$0xff] %v3451
    %3516 = vst [vmem:[#allocation3 + $0x1d8] sm:$0xff] %v3452
    %3517 = vst [vmem:[#allocation3 + $0x1e0] sm:$0xff] %v3453
    %3518 = vst [vmem:[#allocation3 + $0x1e8] sm:$0xff] %v3454
    %3519 = vst [vmem:[#allocation3 + $0x1f0] sm:$0xff] %v3455
    %3520 = vst [vmem:[#allocation3 + $0x1f8] sm:$0xff] %v3456
    %s3521 = sld [smem:[#allocation4]]
    %s3522 = sld [smem:[#allocation4 + $0x1]]
    %s3523 = sld [smem:[#allocation4 + $0x2]]
    %s3524 = sld [smem:[#allocation4 + $0x80]]
    %s3525 = sld [smem:[#allocation4 + $0x81]]
    %s3526 = sld [smem:[#allocation4 + $0x82]]
    %v3527 = vld [vmem:[#allocation3] sm:$0xff]
    %v3528 = vld [vmem:[#allocation3 + $0x8] sm:$0xff]
    %v3529 = vld [vmem:[#allocation3 + $0x10] sm:$0xff]
    %v3530 = vld [vmem:[#allocation3 + $0x18] sm:$0xff]
    %v3531 = vld [vmem:[#allocation3 + $0x20] sm:$0xff]
    %v3532 = vld [vmem:[#allocation3 + $0x28] sm:$0xff]
    %v3533 = vld [vmem:[#allocation3 + $0x30] sm:$0xff]
    %v3534 = vld [vmem:[#allocation3 + $0x38] sm:$0xff]
    %v3535 = vld [vmem:[#allocation3 + $0x40] sm:$0xff]
    %v3536 = vld [vmem:[#allocation3 + $0x48] sm:$0xff]
    %v3537 = vld [vmem:[#allocation3 + $0x50] sm:$0xff]
    %v3538 = vld [vmem:[#allocation3 + $0x58] sm:$0xff]
    %v3539 = vld [vmem:[#allocation3 + $0x60] sm:$0xff]
    %v3540 = vld [vmem:[#allocation3 + $0x68] sm:$0xff]
    %v3541 = vld [vmem:[#allocation3 + $0x70] sm:$0xff]
    %v3542 = vld [vmem:[#allocation3 + $0x78] sm:$0xff]
    %v3543 = vld [vmem:[#allocation3 + $0x80] sm:$0xff]
    %v3544 = vld [vmem:[#allocation3 + $0x88] sm:$0xff]
    %v3545 = vld [vmem:[#allocation3 + $0x90] sm:$0xff]
    %v3546 = vld [vmem:[#allocation3 + $0x98] sm:$0xff]
    %v3547 = vld [vmem:[#allocation3 + $0xa0] sm:$0xff]
    %v3548 = vld [vmem:[#allocation3 + $0xa8] sm:$0xff]
    %v3549 = vld [vmem:[#allocation3 + $0xb0] sm:$0xff]
    %v3550 = vld [vmem:[#allocation3 + $0xb8] sm:$0xff]
    %v3551 = vld [vmem:[#allocation3 + $0xc0] sm:$0xff]
    %v3552 = vld [vmem:[#allocation3 + $0xc8] sm:$0xff]
    %v3553 = vld [vmem:[#allocation3 + $0xd0] sm:$0xff]
    %v3554 = vld [vmem:[#allocation3 + $0xd8] sm:$0xff]
    %v3555 = vld [vmem:[#allocation3 + $0xe0] sm:$0xff]
    %v3556 = vld [vmem:[#allocation3 + $0xe8] sm:$0xff]
    %v3557 = vld [vmem:[#allocation3 + $0xf0] sm:$0xff]
    %v3558 = vld [vmem:[#allocation3 + $0xf8] sm:$0xff]
    %v3559 = vld [vmem:[#allocation3 + $0x100] sm:$0xff]
    %v3560 = vld [vmem:[#allocation3 + $0x108] sm:$0xff]
    %v3561 = vld [vmem:[#allocation3 + $0x110] sm:$0xff]
    %v3562 = vld [vmem:[#allocation3 + $0x118] sm:$0xff]
    %v3563 = vld [vmem:[#allocation3 + $0x120] sm:$0xff]
    %v3564 = vld [vmem:[#allocation3 + $0x128] sm:$0xff]
    %v3565 = vld [vmem:[#allocation3 + $0x130] sm:$0xff]
    %v3566 = vld [vmem:[#allocation3 + $0x138] sm:$0xff]
    %v3567 = vld [vmem:[#allocation3 + $0x140] sm:$0xff]
    %v3568 = vld [vmem:[#allocation3 + $0x148] sm:$0xff]
    %v3569 = vld [vmem:[#allocation3 + $0x150] sm:$0xff]
    %v3570 = vld [vmem:[#allocation3 + $0x158] sm:$0xff]
    %v3571 = vld [vmem:[#allocation3 + $0x160] sm:$0xff]
    %v3572 = vld [vmem:[#allocation3 + $0x168] sm:$0xff]
    %v3573 = vld [vmem:[#allocation3 + $0x170] sm:$0xff]
    %v3574 = vld [vmem:[#allocation3 + $0x178] sm:$0xff]
    %v3575 = vld [vmem:[#allocation3 + $0x180] sm:$0xff]
    %v3576 = vld [vmem:[#allocation3 + $0x188] sm:$0xff]
    %v3577 = vld [vmem:[#allocation3 + $0x190] sm:$0xff]
    %v3578 = vld [vmem:[#allocation3 + $0x198] sm:$0xff]
    %v3579 = vld [vmem:[#allocation3 + $0x1a0] sm:$0xff]
    %v3580 = vld [vmem:[#allocation3 + $0x1a8] sm:$0xff]
    %v3581 = vld [vmem:[#allocation3 + $0x1b0] sm:$0xff]
    %v3582 = vld [vmem:[#allocation3 + $0x1b8] sm:$0xff]
    %v3583 = vld [vmem:[#allocation3 + $0x1c0] sm:$0xff]
    %v3584 = vld [vmem:[#allocation3 + $0x1c8] sm:$0xff]
    %v3585 = vld [vmem:[#allocation3 + $0x1d0] sm:$0xff]
    %v3586 = vld [vmem:[#allocation3 + $0x1d8] sm:$0xff]
    %v3587 = vld [vmem:[#allocation3 + $0x1e0] sm:$0xff]
    %v3588 = vld [vmem:[#allocation3 + $0x1e8] sm:$0xff]
    %v3589 = vld [vmem:[#allocation3 + $0x1f0] sm:$0xff]
    %v3590 = vld [vmem:[#allocation3 + $0x1f8] sm:$0xff]
    %v3591 = vadd.f32 %v3527, %v3528
    %v3592 = vadd.f32 %v3591, %v3529
    %v3593 = vadd.f32 %v3592, %v3530
    %v3594 = vadd.f32 %v3593, %v3531
    %v3595 = vadd.f32 %v3594, %v3532
    %v3596 = vadd.f32 %v3595, %v3533
    %v3597 = vadd.f32 %v3596, %v3534
    %v3598 = vadd.f32 %v3597, %v3535
    %v3599 = vadd.f32 %v3598, %v3536
    %v3600 = vadd.f32 %v3599, %v3537
    %v3601 = vadd.f32 %v3600, %v3538
    %v3602 = vadd.f32 %v3601, %v3539
    %v3603 = vadd.f32 %v3602, %v3540
    %v3604 = vadd.f32 %v3603, %v3541
    %v3605 = vadd.f32 %v3604, %v3542
    %v3606 = vadd.f32 %v3605, %v3543
    %v3607 = vadd.f32 %v3606, %v3544
    %v3608 = vadd.f32 %v3607, %v3545
    %v3609 = vadd.f32 %v3608, %v3546
    %v3610 = vadd.f32 %v3609, %v3547
    %v3611 = vadd.f32 %v3610, %v3548
    %v3612 = vadd.f32 %v3611, %v3549
    %v3613 = vadd.f32 %v3612, %v3550
    %v3614 = vadd.f32 %v3613, %v3551
    %v3615 = vadd.f32 %v3614, %v3552
    %v3616 = vadd.f32 %v3615, %v3553
    %v3617 = vadd.f32 %v3616, %v3554
    %v3618 = vadd.f32 %v3617, %v3555
    %v3619 = vadd.f32 %v3618, %v3556
    %v3620 = vadd.f32 %v3619, %v3557
    %v3621 = vadd.f32 %v3620, %v3558
    %v3622 = vrot.slane %v3621, 4
    %v3623 = vadd.f32 %v3621, %v3622
    %v3624 = vrot.slane %v3623, 2
    %v3625 = vadd.f32 %v3623, %v3624
    %v3626 = vrot.slane %v3625, 1
    %v3627 = vadd.f32 %v3625, %v3626
    %v3628 = vadd.f32 %v3559, %v3560
    %v3629 = vadd.f32 %v3628, %v3561
    %v3630 = vadd.f32 %v3629, %v3562
    %v3631 = vadd.f32 %v3630, %v3563
    %v3632 = vadd.f32 %v3631, %v3564
    %v3633 = vadd.f32 %v3632, %v3565
    %v3634 = vadd.f32 %v3633, %v3566
    %v3635 = vadd.f32 %v3634, %v3567
    %v3636 = vadd.f32 %v3635, %v3568
    %v3637 = vadd.f32 %v3636, %v3569
    %v3638 = vadd.f32 %v3637, %v3570
    %v3639 = vadd.f32 %v3638, %v3571
    %v3640 = vadd.f32 %v3639, %v3572
    %v3641 = vadd.f32 %v3640, %v3573
    %v3642 = vadd.f32 %v3641, %v3574
    %v3643 = vadd.f32 %v3642, %v3575
    %v3644 = vadd.f32 %v3643, %v3576
    %v3645 = vadd.f32 %v3644, %v3577
    %v3646 = vadd.f32 %v3645, %v3578
    %v3647 = vadd.f32 %v3646, %v3579
    %v3648 = vadd.f32 %v3647, %v3580
    %v3649 = vadd.f32 %v3648, %v3581
    %v3650 = vadd.f32 %v3649, %v3582
    %v3651 = vadd.f32 %v3650, %v3583
    %v3652 = vadd.f32 %v3651, %v3584
    %v3653 = vadd.f32 %v3652, %v3585
    %v3654 = vadd.f32 %v3653, %v3586
    %v3655 = vadd.f32 %v3654, %v3587
    %v3656 = vadd.f32 %v3655, %v3588
    %v3657 = vadd.f32 %v3656, %v3589
    %v3658 = vadd.f32 %v3657, %v3590
    %v3659 = vrot.slane %v3658, 4
    %v3660 = vadd.f32 %v3658, %v3659
    %v3661 = vrot.slane %v3660, 2
    %v3662 = vadd.f32 %v3660, %v3661
    %v3663 = vrot.slane %v3662, 1
    %v3664 = vadd.f32 %v3662, %v3663
    %v3665 = vrcp.pop 256.0
    %v3666 = vmul.f32 %v3627, %v3665
    %v3667 = vmul.f32 %v3664, %v3665
    %v3668 = vmul.f32 %v3527, %v3527
    %v3669 = vmul.f32 %v3528, %v3528
    %v3670 = vmul.f32 %v3529, %v3529
    %v3671 = vmul.f32 %v3530, %v3530
    %v3672 = vmul.f32 %v3531, %v3531
    %v3673 = vmul.f32 %v3532, %v3532
    %v3674 = vmul.f32 %v3533, %v3533
    %v3675 = vmul.f32 %v3534, %v3534
    %v3676 = vmul.f32 %v3535, %v3535
    %v3677 = vmul.f32 %v3536, %v3536
    %v3678 = vmul.f32 %v3537, %v3537
    %v3679 = vmul.f32 %v3538, %v3538
    %v3680 = vmul.f32 %v3539, %v3539
    %v3681 = vmul.f32 %v3540, %v3540
    %v3682 = vmul.f32 %v3541, %v3541
    %v3683 = vmul.f32 %v3542, %v3542
    %v3684 = vmul.f32 %v3543, %v3543
    %v3685 = vmul.f32 %v3544, %v3544
    %v3686 = vmul.f32 %v3545, %v3545
    %v3687 = vmul.f32 %v3546, %v3546
    %v3688 = vmul.f32 %v3547, %v3547
    %v3689 = vmul.f32 %v3548, %v3548
    %v3690 = vmul.f32 %v3549, %v3549
    %v3691 = vmul.f32 %v3550, %v3550
    %v3692 = vmul.f32 %v3551, %v3551
    %v3693 = vmul.f32 %v3552, %v3552
    %v3694 = vmul.f32 %v3553, %v3553
    %v3695 = vmul.f32 %v3554, %v3554
    %v3696 = vmul.f32 %v3555, %v3555
    %v3697 = vmul.f32 %v3556, %v3556
    %v3698 = vmul.f32 %v3557, %v3557
    %v3699 = vmul.f32 %v3558, %v3558
    %v3700 = vmul.f32 %v3559, %v3559
    %v3701 = vmul.f32 %v3560, %v3560
    %v3702 = vmul.f32 %v3561, %v3561
    %v3703 = vmul.f32 %v3562, %v3562
    %v3704 = vmul.f32 %v3563, %v3563
    %v3705 = vmul.f32 %v3564, %v3564
    %v3706 = vmul.f32 %v3565, %v3565
    %v3707 = vmul.f32 %v3566, %v3566
    %v3708 = vmul.f32 %v3567, %v3567
    %v3709 = vmul.f32 %v3568, %v3568
    %v3710 = vmul.f32 %v3569, %v3569
    %v3711 = vmul.f32 %v3570, %v3570
    %v3712 = vmul.f32 %v3571, %v3571
    %v3713 = vmul.f32 %v3572, %v3572
    %v3714 = vmul.f32 %v3573, %v3573
    %v3715 = vmul.f32 %v3574, %v3574
    %v3716 = vmul.f32 %v3575, %v3575
    %v3717 = vmul.f32 %v3576, %v3576
    %v3718 = vmul.f32 %v3577, %v3577
    %v3719 = vmul.f32 %v3578, %v3578
    %v3720 = vmul.f32 %v3579, %v3579
    %v3721 = vmul.f32 %v3580, %v3580
    %v3722 = vmul.f32 %v3581, %v3581
    %v3723 = vmul.f32 %v3582, %v3582
    %v3724 = vmul.f32 %v3583, %v3583
    %v3725 = vmul.f32 %v3584, %v3584
    %v3726 = vmul.f32 %v3585, %v3585
    %v3727 = vmul.f32 %v3586, %v3586
    %v3728 = vmul.f32 %v3587, %v3587
    %v3729 = vmul.f32 %v3588, %v3588
    %v3730 = vmul.f32 %v3589, %v3589
    %v3731 = vmul.f32 %v3590, %v3590
    %v3732 = vadd.f32 %v3668, %v3669
    %v3733 = vadd.f32 %v3732, %v3670
    %v3734 = vadd.f32 %v3733, %v3671
    %v3735 = vadd.f32 %v3734, %v3672
    %v3736 = vadd.f32 %v3735, %v3673
    %v3737 = vadd.f32 %v3736, %v3674
    %v3738 = vadd.f32 %v3737, %v3675
    %v3739 = vadd.f32 %v3738, %v3676
    %v3740 = vadd.f32 %v3739, %v3677
    %v3741 = vadd.f32 %v3740, %v3678
    %v3742 = vadd.f32 %v3741, %v3679
    %v3743 = vadd.f32 %v3742, %v3680
    %v3744 = vadd.f32 %v3743, %v3681
    %v3745 = vadd.f32 %v3744, %v3682
    %v3746 = vadd.f32 %v3745, %v3683
    %v3747 = vadd.f32 %v3746, %v3684
    %v3748 = vadd.f32 %v3747, %v3685
    %v3749 = vadd.f32 %v3748, %v3686
    %v3750 = vadd.f32 %v3749, %v3687
    %v3751 = vadd.f32 %v3750, %v3688
    %v3752 = vadd.f32 %v3751, %v3689
    %v3753 = vadd.f32 %v3752, %v3690
    %v3754 = vadd.f32 %v3753, %v3691
    %v3755 = vadd.f32 %v3754, %v3692
    %v3756 = vadd.f32 %v3755, %v3693
    %v3757 = vadd.f32 %v3756, %v3694
    %v3758 = vadd.f32 %v3757, %v3695
    %v3759 = vadd.f32 %v3758, %v3696
    %v3760 = vadd.f32 %v3759, %v3697
    %v3761 = vadd.f32 %v3760, %v3698
    %v3762 = vadd.f32 %v3761, %v3699
    %v3763 = vrot.slane %v3762, 4
    %v3764 = vadd.f32 %v3762, %v3763
    %v3765 = vrot.slane %v3764, 2
    %v3766 = vadd.f32 %v3764, %v3765
    %v3767 = vrot.slane %v3766, 1
    %v3768 = vadd.f32 %v3766, %v3767
    %v3769 = vadd.f32 %v3700, %v3701
    %v3770 = vadd.f32 %v3769, %v3702
    %v3771 = vadd.f32 %v3770, %v3703
    %v3772 = vadd.f32 %v3771, %v3704
    %v3773 = vadd.f32 %v3772, %v3705
    %v3774 = vadd.f32 %v3773, %v3706
    %v3775 = vadd.f32 %v3774, %v3707
    %v3776 = vadd.f32 %v3775, %v3708
    %v3777 = vadd.f32 %v3776, %v3709
    %v3778 = vadd.f32 %v3777, %v3710
    %v3779 = vadd.f32 %v3778, %v3711
    %v3780 = vadd.f32 %v3779, %v3712
    %v3781 = vadd.f32 %v3780, %v3713
    %v3782 = vadd.f32 %v3781, %v3714
    %v3783 = vadd.f32 %v3782, %v3715
    %v3784 = vadd.f32 %v3783, %v3716
    %v3785 = vadd.f32 %v3784, %v3717
    %v3786 = vadd.f32 %v3785, %v3718
    %v3787 = vadd.f32 %v3786, %v3719
    %v3788 = vadd.f32 %v3787, %v3720
    %v3789 = vadd.f32 %v3788, %v3721
    %v3790 = vadd.f32 %v3789, %v3722
    %v3791 = vadd.f32 %v3790, %v3723
    %v3792 = vadd.f32 %v3791, %v3724
    %v3793 = vadd.f32 %v3792, %v3725
    %v3794 = vadd.f32 %v3793, %v3726
    %v3795 = vadd.f32 %v3794, %v3727
    %v3796 = vadd.f32 %v3795, %v3728
    %v3797 = vadd.f32 %v3796, %v3729
    %v3798 = vadd.f32 %v3797, %v3730
    %v3799 = vadd.f32 %v3798, %v3731
    %v3800 = vrot.slane %v3799, 4
    %v3801 = vadd.f32 %v3799, %v3800
    %v3802 = vrot.slane %v3801, 2
    %v3803 = vadd.f32 %v3801, %v3802
    %v3804 = vrot.slane %v3803, 1
    %v3805 = vadd.f32 %v3803, %v3804
    %v3806 = vmul.f32 %v3768, %v3665
    %v3807 = vmul.f32 %v3805, %v3665
    %v3808 = vmul.f32 %v3666, %v3666
    %v3809 = vmul.f32 %v3667, %v3667
    %v3810 = vsub.f32 %v3806, %v3808
    %v3811 = vsub.f32 %v3807, %v3809
    %v3812 = vmul.f32 %v3810, 1.0039216
    %v3813 = vmul.f32 %v3811, 1.0039216
    %3814 = vadd.xlane.f32.xlu0 %v3666
    %v3815 = vpop.xlane.xlu0 %3814
    %3816 = vadd.xlane.f32.xlu0 %v3667
    %v3817 = vpop.xlane.xlu0 %3816
    %v3818 = vrcp.pop 128.0
    %v3819 = vmul.f32 %v3815, %v3818
    %v3820 = vmul.f32 %v3817, %v3818
    %v3821 = vadd.f32 %v3812, %v3808
    %v3822 = vadd.f32 %v3813, %v3809
    %3823 = vadd.xlane.f32.xlu0 %v3821
    %v3824 = vpop.xlane.xlu0 %3823
    %3825 = vadd.xlane.f32.xlu0 %v3822
    %v3826 = vpop.xlane.xlu0 %3825
    %v3827 = vmul.f32 %v3824, %v3818
    %v3828 = vmul.f32 %v3826, %v3818
    %v3829 = vmul.f32 %v3819, %v3819
    %v3830 = vmul.f32 %v3820, %v3820
    %v3831 = vsub.f32 %v3827, %v3829
    %v3832 = vsub.f32 %v3828, %v3830
    %v3833 = vadd.f32 %v3666, %v3667
    %v3834 = vrcp.pop 2.0
    %v3835 = vmul.f32 %v3833, %v3834
    %v3836 = vadd.f32 %v3821, %v3822
    %v3837 = vmul.f32 %v3836, %v3834
    %v3838 = vmul.f32 %v3835, %v3835
    %v3839 = vsub.f32 %v3837, %v3838
    %v3840 = vstv %s3521
    %v3841 = vmul.f32 %v3840, %v3666
    %v3842 = vmul.f32 %v3840, %v3667
    %v3843 = vstv %s3522
    %v3844 = vmul.f32 %v3843, %v3819
    %v3845 = vmul.f32 %v3843, %v3820
    %v3846 = vadd.f32 %v3841, %v3844
    %v3847 = vadd.f32 %v3842, %v3845
    %v3848 = vstv %s3523
    %v3849 = vmul.f32 %v3848, %v3835
    %v3850 = vadd.f32 %v3846, %v3849
    %v3851 = vadd.f32 %v3847, %v3849
    %v3852 = vstv %s3524
    %v3853 = vmul.f32 %v3852, %v3812
    %v3854 = vmul.f32 %v3852, %v3813
    %v3855 = vstv %s3525
    %v3856 = vmul.f32 %v3855, %v3831
    %v3857 = vmul.f32 %v3855, %v3832
    %v3858 = vadd.f32 %v3853, %v3856
    %v3859 = vadd.f32 %v3854, %v3857
    %v3860 = vstv %s3526
    %v3861 = vmul.f32 %v3860, %v3839
    %v3862 = vadd.f32 %v3858, %v3861
    %v3863 = vadd.f32 %v3859, %v3861
    %v3864 = vmax.f32 %v3862, 0.0
    %v3865 = vmax.f32 %v3863, 0.0
    %v3866 = vadd.f32 %v3864, 1e-05
    %v3867 = vadd.f32 %v3865, 1e-05
    %v3868 = vrsqrt.pop %v3866
    %v3869 = vrsqrt.pop %v3867
    %v3870 = vld [vmem:[%s3] sm:$0x1]
    %v3871 = vmul.f32 %v3868, %v3870
    %v3872 = vmul.f32 %v3869, %v3870
    %v3873 = vld [vmem:[%s4] sm:$0x1]
    %v3874 = vmul.f32 %v3850, %v3871
    %v3875 = vmul.f32 %v3851, %v3872
    %v3876 = vsub.f32 %v3873, %v3874
    %v3877 = vsub.f32 %v3873, %v3875
    %v3878 = vlaneseq
    %v3879 = vshrl.u32 %v3878, 7
    %v3880 = vsub.s32 0, %v3879
    %v3881 = vrot.slane %v3871, %v3880
    %v3882 = vlaneseq
    %v3883 = vshrl.u32 %v3882, 7
    %v3884 = vsub.s32 0, %v3883
    %v3885 = vrot.slane %v3872, %v3884
    %v3886 = vmul.f32 %v3527, %v3881
    %v3887 = vmul.f32 %v3528, %v3881
    %v3888 = vmul.f32 %v3529, %v3881
    %v3889 = vmul.f32 %v3530, %v3881
    %v3890 = vmul.f32 %v3531, %v3881
    %v3891 = vmul.f32 %v3532, %v3881
    %v3892 = vmul.f32 %v3533, %v3881
    %v3893 = vmul.f32 %v3534, %v3881
    %v3894 = vmul.f32 %v3535, %v3881
    %v3895 = vmul.f32 %v3536, %v3881
    %v3896 = vmul.f32 %v3537, %v3881
    %v3897 = vmul.f32 %v3538, %v3881
    %v3898 = vmul.f32 %v3539, %v3881
    %v3899 = vmul.f32 %v3540, %v3881
    %v3900 = vmul.f32 %v3541, %v3881
    %v3901 = vmul.f32 %v3542, %v3881
    %v3902 = vmul.f32 %v3543, %v3881
    %v3903 = vmul.f32 %v3544, %v3881
    %v3904 = vmul.f32 %v3545, %v3881
    %v3905 = vmul.f32 %v3546, %v3881
    %v3906 = vmul.f32 %v3547, %v3881
    %v3907 = vmul.f32 %v3548, %v3881
    %v3908 = vmul.f32 %v3549, %v3881
    %v3909 = vmul.f32 %v3550, %v3881
    %v3910 = vmul.f32 %v3551, %v3881
    %v3911 = vmul.f32 %v3552, %v3881
    %v3912 = vmul.f32 %v3553, %v3881
    %v3913 = vmul.f32 %v3554, %v3881
    %v3914 = vmul.f32 %v3555, %v3881
    %v3915 = vmul.f32 %v3556, %v3881
    %v3916 = vmul.f32 %v3557, %v3881
    %v3917 = vmul.f32 %v3558, %v3881
    %v3918 = vmul.f32 %v3559, %v3885
    %v3919 = vmul.f32 %v3560, %v3885
    %v3920 = vmul.f32 %v3561, %v3885
    %v3921 = vmul.f32 %v3562, %v3885
    %v3922 = vmul.f32 %v3563, %v3885
    %v3923 = vmul.f32 %v3564, %v3885
    %v3924 = vmul.f32 %v3565, %v3885
    %v3925 = vmul.f32 %v3566, %v3885
    %v3926 = vmul.f32 %v3567, %v3885
    %v3927 = vmul.f32 %v3568, %v3885
    %v3928 = vmul.f32 %v3569, %v3885
    %v3929 = vmul.f32 %v3570, %v3885
    %v3930 = vmul.f32 %v3571, %v3885
    %v3931 = vmul.f32 %v3572, %v3885
    %v3932 = vmul.f32 %v3573, %v3885
    %v3933 = vmul.f32 %v3574, %v3885
    %v3934 = vmul.f32 %v3575, %v3885
    %v3935 = vmul.f32 %v3576, %v3885
    %v3936 = vmul.f32 %v3577, %v3885
    %v3937 = vmul.f32 %v3578, %v3885
    %v3938 = vmul.f32 %v3579, %v3885
    %v3939 = vmul.f32 %v3580, %v3885
    %v3940 = vmul.f32 %v3581, %v3885
    %v3941 = vmul.f32 %v3582, %v3885
    %v3942 = vmul.f32 %v3583, %v3885
    %v3943 = vmul.f32 %v3584, %v3885
    %v3944 = vmul.f32 %v3585, %v3885
    %v3945 = vmul.f32 %v3586, %v3885
    %v3946 = vmul.f32 %v3587, %v3885
    %v3947 = vmul.f32 %v3588, %v3885
    %v3948 = vmul.f32 %v3589, %v3885
    %v3949 = vmul.f32 %v3590, %v3885
    %v3952 = vlaneseq
    %v3953 = vshrl.u32 %v3952, 7
    %v3954 = vsub.s32 0, %v3953
    %v3955 = vrot.slane %v3876, %v3954
    %v3956 = vlaneseq
    %v3957 = vshrl.u32 %v3956, 7
    %v3958 = vsub.s32 0, %v3957
    %v3959 = vrot.slane %v3877, %v3958
    %v3962 = vadd.f32 %v3886, %v3955
    %v3963 = vadd.f32 %v3887, %v3955
    %v3964 = vadd.f32 %v3888, %v3955
    %v3965 = vadd.f32 %v3889, %v3955
    %v3966 = vadd.f32 %v3890, %v3955
    %v3967 = vadd.f32 %v3891, %v3955
    %v3968 = vadd.f32 %v3892, %v3955
    %v3969 = vadd.f32 %v3893, %v3955
    %v3970 = vadd.f32 %v3894, %v3955
    %v3971 = vadd.f32 %v3895, %v3955
    %v3972 = vadd.f32 %v3896, %v3955
    %v3973 = vadd.f32 %v3897, %v3955
    %v3974 = vadd.f32 %v3898, %v3955
    %v3975 = vadd.f32 %v3899, %v3955
    %v3976 = vadd.f32 %v3900, %v3955
    %v3977 = vadd.f32 %v3901, %v3955
    %v3978 = vadd.f32 %v3902, %v3955
    %v3979 = vadd.f32 %v3903, %v3955
    %v3980 = vadd.f32 %v3904, %v3955
    %v3981 = vadd.f32 %v3905, %v3955
    %v3982 = vadd.f32 %v3906, %v3955
    %v3983 = vadd.f32 %v3907, %v3955
    %v3984 = vadd.f32 %v3908, %v3955
    %v3985 = vadd.f32 %v3909, %v3955
    %v3986 = vadd.f32 %v3910, %v3955
    %v3987 = vadd.f32 %v3911, %v3955
    %v3988 = vadd.f32 %v3912, %v3955
    %v3989 = vadd.f32 %v3913, %v3955
    %v3990 = vadd.f32 %v3914, %v3955
    %v3991 = vadd.f32 %v3915, %v3955
    %v3992 = vadd.f32 %v3916, %v3955
    %v3993 = vadd.f32 %v3917, %v3955
    %v3994 = vadd.f32 %v3918, %v3959
    %v3995 = vadd.f32 %v3919, %v3959
    %v3996 = vadd.f32 %v3920, %v3959
    %v3997 = vadd.f32 %v3921, %v3959
    %v3998 = vadd.f32 %v3922, %v3959
    %v3999 = vadd.f32 %v3923, %v3959
    %v4000 = vadd.f32 %v3924, %v3959
    %v4001 = vadd.f32 %v3925, %v3959
    %v4002 = vadd.f32 %v3926, %v3959
    %v4003 = vadd.f32 %v3927, %v3959
    %v4004 = vadd.f32 %v3928, %v3959
    %v4005 = vadd.f32 %v3929, %v3959
    %v4006 = vadd.f32 %v3930, %v3959
    %v4007 = vadd.f32 %v3931, %v3959
    %v4008 = vadd.f32 %v3932, %v3959
    %v4009 = vadd.f32 %v3933, %v3959
    %v4010 = vadd.f32 %v3934, %v3959
    %v4011 = vadd.f32 %v3935, %v3959
    %v4012 = vadd.f32 %v3936, %v3959
    %v4013 = vadd.f32 %v3937, %v3959
    %v4014 = vadd.f32 %v3938, %v3959
    %v4015 = vadd.f32 %v3939, %v3959
    %v4016 = vadd.f32 %v3940, %v3959
    %v4017 = vadd.f32 %v3941, %v3959
    %v4018 = vadd.f32 %v3942, %v3959
    %v4019 = vadd.f32 %v3943, %v3959
    %v4020 = vadd.f32 %v3944, %v3959
    %v4021 = vadd.f32 %v3945, %v3959
    %v4022 = vadd.f32 %v3946, %v3959
    %v4023 = vadd.f32 %v3947, %v3959
    %v4024 = vadd.f32 %v3948, %v3959
    %v4025 = vadd.f32 %v3949, %v3959
    %v4026 = vmax.f32 %v3962, 0.0
    %v4027 = vmax.f32 %v3963, 0.0
    %v4028 = vmax.f32 %v3964, 0.0
    %v4029 = vmax.f32 %v3965, 0.0
    %v4030 = vmax.f32 %v3966, 0.0
    %v4031 = vmax.f32 %v3967, 0.0
    %v4032 = vmax.f32 %v3968, 0.0
    %v4033 = vmax.f32 %v3969, 0.0
    %v4034 = vmax.f32 %v3970, 0.0
    %v4035 = vmax.f32 %v3971, 0.0
    %v4036 = vmax.f32 %v3972, 0.0
    %v4037 = vmax.f32 %v3973, 0.0
    %v4038 = vmax.f32 %v3974, 0.0
    %v4039 = vmax.f32 %v3975, 0.0
    %v4040 = vmax.f32 %v3976, 0.0
    %v4041 = vmax.f32 %v3977, 0.0
    %v4042 = vmax.f32 %v3978, 0.0
    %v4043 = vmax.f32 %v3979, 0.0
    %v4044 = vmax.f32 %v3980, 0.0
    %v4045 = vmax.f32 %v3981, 0.0
    %v4046 = vmax.f32 %v3982, 0.0
    %v4047 = vmax.f32 %v3983, 0.0
    %v4048 = vmax.f32 %v3984, 0.0
    %v4049 = vmax.f32 %v3985, 0.0
    %v4050 = vmax.f32 %v3986, 0.0
    %v4051 = vmax.f32 %v3987, 0.0
    %v4052 = vmax.f32 %v3988, 0.0
    %v4053 = vmax.f32 %v3989, 0.0
    %v4054 = vmax.f32 %v3990, 0.0
    %v4055 = vmax.f32 %v3991, 0.0
    %v4056 = vmax.f32 %v3992, 0.0
    %v4057 = vmax.f32 %v3993, 0.0
    %v4058 = vmax.f32 %v3994, 0.0
    %v4059 = vmax.f32 %v3995, 0.0
    %v4060 = vmax.f32 %v3996, 0.0
    %v4061 = vmax.f32 %v3997, 0.0
    %v4062 = vmax.f32 %v3998, 0.0
    %v4063 = vmax.f32 %v3999, 0.0
    %v4064 = vmax.f32 %v4000, 0.0
    %v4065 = vmax.f32 %v4001, 0.0
    %v4066 = vmax.f32 %v4002, 0.0
    %v4067 = vmax.f32 %v4003, 0.0
    %v4068 = vmax.f32 %v4004, 0.0
    %v4069 = vmax.f32 %v4005, 0.0
    %v4070 = vmax.f32 %v4006, 0.0
    %v4071 = vmax.f32 %v4007, 0.0
    %v4072 = vmax.f32 %v4008, 0.0
    %v4073 = vmax.f32 %v4009, 0.0
    %v4074 = vmax.f32 %v4010, 0.0
    %v4075 = vmax.f32 %v4011, 0.0
    %v4076 = vmax.f32 %v4012, 0.0
    %v4077 = vmax.f32 %v4013, 0.0
    %v4078 = vmax.f32 %v4014, 0.0
    %v4079 = vmax.f32 %v4015, 0.0
    %v4080 = vmax.f32 %v4016, 0.0
    %v4081 = vmax.f32 %v4017, 0.0
    %v4082 = vmax.f32 %v4018, 0.0
    %v4083 = vmax.f32 %v4019, 0.0
    %v4084 = vmax.f32 %v4020, 0.0
    %v4085 = vmax.f32 %v4021, 0.0
    %v4086 = vmax.f32 %v4022, 0.0
    %v4087 = vmax.f32 %v4023, 0.0
    %v4088 = vmax.f32 %v4024, 0.0
    %v4089 = vmax.f32 %v4025, 0.0
    %4090 = vst [vmem:[#allocation3] sm:$0xff] %v4026
    %4091 = vst [vmem:[#allocation3 + $0x8] sm:$0xff] %v4027
    %4092 = vst [vmem:[#allocation3 + $0x10] sm:$0xff] %v4028
    %4093 = vst [vmem:[#allocation3 + $0x18] sm:$0xff] %v4029
    %4094 = vst [vmem:[#allocation3 + $0x20] sm:$0xff] %v4030
    %4095 = vst [vmem:[#allocation3 + $0x28] sm:$0xff] %v4031
    %4096 = vst [vmem:[#allocation3 + $0x30] sm:$0xff] %v4032
    %4097 = vst [vmem:[#allocation3 + $0x38] sm:$0xff] %v4033
    %4098 = vst [vmem:[#allocation3 + $0x40] sm:$0xff] %v4034
    %4099 = vst [vmem:[#allocation3 + $0x48] sm:$0xff] %v4035
    %4100 = vst [vmem:[#allocation3 + $0x50] sm:$0xff] %v4036
    %4101 = vst [vmem:[#allocation3 + $0x58] sm:$0xff] %v4037
    %4102 = vst [vmem:[#allocation3 + $0x60] sm:$0xff] %v4038
    %4103 = vst [vmem:[#allocation3 + $0x68] sm:$0xff] %v4039
    %4104 = vst [vmem:[#allocation3 + $0x70] sm:$0xff] %v4040
    %4105 = vst [vmem:[#allocation3 + $0x78] sm:$0xff] %v4041
    %4106 = vst [vmem:[#allocation3 + $0x80] sm:$0xff] %v4042
    %4107 = vst [vmem:[#allocation3 + $0x88] sm:$0xff] %v4043
    %4108 = vst [vmem:[#allocation3 + $0x90] sm:$0xff] %v4044
    %4109 = vst [vmem:[#allocation3 + $0x98] sm:$0xff] %v4045
    %4110 = vst [vmem:[#allocation3 + $0xa0] sm:$0xff] %v4046
    %4111 = vst [vmem:[#allocation3 + $0xa8] sm:$0xff] %v4047
    %4112 = vst [vmem:[#allocation3 + $0xb0] sm:$0xff] %v4048
    %4113 = vst [vmem:[#allocation3 + $0xb8] sm:$0xff] %v4049
    %4114 = vst [vmem:[#allocation3 + $0xc0] sm:$0xff] %v4050
    %4115 = vst [vmem:[#allocation3 + $0xc8] sm:$0xff] %v4051
    %4116 = vst [vmem:[#allocation3 + $0xd0] sm:$0xff] %v4052
    %4117 = vst [vmem:[#allocation3 + $0xd8] sm:$0xff] %v4053
    %4118 = vst [vmem:[#allocation3 + $0xe0] sm:$0xff] %v4054
    %4119 = vst [vmem:[#allocation3 + $0xe8] sm:$0xff] %v4055
    %4120 = vst [vmem:[#allocation3 + $0xf0] sm:$0xff] %v4056
    %4121 = vst [vmem:[#allocation3 + $0xf8] sm:$0xff] %v4057
    %4122 = vst [vmem:[#allocation3 + $0x100] sm:$0xff] %v4058
    %4123 = vst [vmem:[#allocation3 + $0x108] sm:$0xff] %v4059
    %4124 = vst [vmem:[#allocation3 + $0x110] sm:$0xff] %v4060
    %4125 = vst [vmem:[#allocation3 + $0x118] sm:$0xff] %v4061
    %4126 = vst [vmem:[#allocation3 + $0x120] sm:$0xff] %v4062
    %4127 = vst [vmem:[#allocation3 + $0x128] sm:$0xff] %v4063
    %4128 = vst [vmem:[#allocation3 + $0x130] sm:$0xff] %v4064
    %4129 = vst [vmem:[#allocation3 + $0x138] sm:$0xff] %v4065
    %4130 = vst [vmem:[#allocation3 + $0x140] sm:$0xff] %v4066
    %4131 = vst [vmem:[#allocation3 + $0x148] sm:$0xff] %v4067
    %4132 = vst [vmem:[#allocation3 + $0x150] sm:$0xff] %v4068
    %4133 = vst [vmem:[#allocation3 + $0x158] sm:$0xff] %v4069
    %4134 = vst [vmem:[#allocation3 + $0x160] sm:$0xff] %v4070
    %4135 = vst [vmem:[#allocation3 + $0x168] sm:$0xff] %v4071
    %4136 = vst [vmem:[#allocation3 + $0x170] sm:$0xff] %v4072
    %4137 = vst [vmem:[#allocation3 + $0x178] sm:$0xff] %v4073
    %4138 = vst [vmem:[#allocation3 + $0x180] sm:$0xff] %v4074
    %4139 = vst [vmem:[#allocation3 + $0x188] sm:$0xff] %v4075
    %4140 = vst [vmem:[#allocation3 + $0x190] sm:$0xff] %v4076
    %4141 = vst [vmem:[#allocation3 + $0x198] sm:$0xff] %v4077
    %4142 = vst [vmem:[#allocation3 + $0x1a0] sm:$0xff] %v4078
    %4143 = vst [vmem:[#allocation3 + $0x1a8] sm:$0xff] %v4079
    %4144 = vst [vmem:[#allocation3 + $0x1b0] sm:$0xff] %v4080
    %4145 = vst [vmem:[#allocation3 + $0x1b8] sm:$0xff] %v4081
    %4146 = vst [vmem:[#allocation3 + $0x1c0] sm:$0xff] %v4082
    %4147 = vst [vmem:[#allocation3 + $0x1c8] sm:$0xff] %v4083
    %4148 = vst [vmem:[#allocation3 + $0x1d0] sm:$0xff] %v4084
    %4149 = vst [vmem:[#allocation3 + $0x1d8] sm:$0xff] %v4085
    %4150 = vst [vmem:[#allocation3 + $0x1e0] sm:$0xff] %v4086
    %4151 = vst [vmem:[#allocation3 + $0x1e8] sm:$0xff] %v4087
    %4152 = vst [vmem:[#allocation3 + $0x1f0] sm:$0xff] %v4088
    %4153 = vst [vmem:[#allocation3 + $0x1f8] sm:$0xff] %v4089
    %v4154 = vld [vmem:[#allocation3] sm:$0xff]
    %v4155 = vld [vmem:[#allocation3 + $0x8] sm:$0xff]
    %v4156 = vld [vmem:[#allocation3 + $0x10] sm:$0xff]
    %v4157 = vld [vmem:[#allocation3 + $0x18] sm:$0xff]
    %v4158 = vld [vmem:[#allocation3 + $0x20] sm:$0xff]
    %v4159 = vld [vmem:[#allocation3 + $0x28] sm:$0xff]
    %v4160 = vld [vmem:[#allocation3 + $0x30] sm:$0xff]
    %v4161 = vld [vmem:[#allocation3 + $0x38] sm:$0xff]
    %v4162 = vld [vmem:[#allocation3 + $0x40] sm:$0xff]
    %v4163 = vld [vmem:[#allocation3 + $0x48] sm:$0xff]
    %v4164 = vld [vmem:[#allocation3 + $0x50] sm:$0xff]
    %v4165 = vld [vmem:[#allocation3 + $0x58] sm:$0xff]
    %v4166 = vld [vmem:[#allocation3 + $0x60] sm:$0xff]
    %v4167 = vld [vmem:[#allocation3 + $0x68] sm:$0xff]
    %v4168 = vld [vmem:[#allocation3 + $0x70] sm:$0xff]
    %v4169 = vld [vmem:[#allocation3 + $0x78] sm:$0xff]
    %v4170 = vld [vmem:[#allocation3 + $0x80] sm:$0xff]
    %v4171 = vld [vmem:[#allocation3 + $0x88] sm:$0xff]
    %v4172 = vld [vmem:[#allocation3 + $0x90] sm:$0xff]
    %v4173 = vld [vmem:[#allocation3 + $0x98] sm:$0xff]
    %v4174 = vld [vmem:[#allocation3 + $0xa0] sm:$0xff]
    %v4175 = vld [vmem:[#allocation3 + $0xa8] sm:$0xff]
    %v4176 = vld [vmem:[#allocation3 + $0xb0] sm:$0xff]
    %v4177 = vld [vmem:[#allocation3 + $0xb8] sm:$0xff]
    %v4178 = vld [vmem:[#allocation3 + $0xc0] sm:$0xff]
    %v4179 = vld [vmem:[#allocation3 + $0xc8] sm:$0xff]
    %v4180 = vld [vmem:[#allocation3 + $0xd0] sm:$0xff]
    %v4181 = vld [vmem:[#allocation3 + $0xd8] sm:$0xff]
    %v4182 = vld [vmem:[#allocation3 + $0xe0] sm:$0xff]
    %v4183 = vld [vmem:[#allocation3 + $0xe8] sm:$0xff]
    %v4184 = vld [vmem:[#allocation3 + $0xf0] sm:$0xff]
    %v4185 = vld [vmem:[#allocation3 + $0xf8] sm:$0xff]
    %v4186 = vld [vmem:[#allocation3 + $0x100] sm:$0xff]
    %v4187 = vld [vmem:[#allocation3 + $0x108] sm:$0xff]
    %v4188 = vld [vmem:[#allocation3 + $0x110] sm:$0xff]
    %v4189 = vld [vmem:[#allocation3 + $0x118] sm:$0xff]
    %v4190 = vld [vmem:[#allocation3 + $0x120] sm:$0xff]
    %v4191 = vld [vmem:[#allocation3 + $0x128] sm:$0xff]
    %v4192 = vld [vmem:[#allocation3 + $0x130] sm:$0xff]
    %v4193 = vld [vmem:[#allocation3 + $0x138] sm:$0xff]
    %v4194 = vld [vmem:[#allocation3 + $0x140] sm:$0xff]
    %v4195 = vld [vmem:[#allocation3 + $0x148] sm:$0xff]
    %v4196 = vld [vmem:[#allocation3 + $0x150] sm:$0xff]
    %v4197 = vld [vmem:[#allocation3 + $0x158] sm:$0xff]
    %v4198 = vld [vmem:[#allocation3 + $0x160] sm:$0xff]
    %v4199 = vld [vmem:[#allocation3 + $0x168] sm:$0xff]
    %v4200 = vld [vmem:[#allocation3 + $0x170] sm:$0xff]
    %v4201 = vld [vmem:[#allocation3 + $0x178] sm:$0xff]
    %v4202 = vld [vmem:[#allocation3 + $0x180] sm:$0xff]
    %v4203 = vld [vmem:[#allocation3 + $0x188] sm:$0xff]
    %v4204 = vld [vmem:[#allocation3 + $0x190] sm:$0xff]
    %v4205 = vld [vmem:[#allocation3 + $0x198] sm:$0xff]
    %v4206 = vld [vmem:[#allocation3 + $0x1a0] sm:$0xff]
    %v4207 = vld [vmem:[#allocation3 + $0x1a8] sm:$0xff]
    %v4208 = vld [vmem:[#allocation3 + $0x1b0] sm:$0xff]
    %v4209 = vld [vmem:[#allocation3 + $0x1b8] sm:$0xff]
    %v4210 = vld [vmem:[#allocation3 + $0x1c0] sm:$0xff]
    %v4211 = vld [vmem:[#allocation3 + $0x1c8] sm:$0xff]
    %v4212 = vld [vmem:[#allocation3 + $0x1d0] sm:$0xff]
    %v4213 = vld [vmem:[#allocation3 + $0x1d8] sm:$0xff]
    %v4214 = vld [vmem:[#allocation3 + $0x1e0] sm:$0xff]
    %v4215 = vld [vmem:[#allocation3 + $0x1e8] sm:$0xff]
    %v4216 = vld [vmem:[#allocation3 + $0x1f0] sm:$0xff]
    %v4217 = vld [vmem:[#allocation3 + $0x1f8] sm:$0xff]
    %v4218 = vrot.slane %v4154, 7
    %v4219 = vrot.slane %v4156, 7
    %v4220 = vrot.slane %v4158, 7
    %v4221 = vrot.slane %v4160, 7
    %v4222 = vrot.slane %v4162, 7
    %v4223 = vrot.slane %v4164, 7
    %v4224 = vrot.slane %v4166, 7
    %v4225 = vrot.slane %v4168, 7
    %v4226 = vrot.slane %v4170, 7
    %v4227 = vrot.slane %v4172, 7
    %v4228 = vrot.slane %v4174, 7
    %v4229 = vrot.slane %v4176, 7
    %v4230 = vrot.slane %v4178, 7
    %v4231 = vrot.slane %v4180, 7
    %v4232 = vrot.slane %v4182, 7
    %v4233 = vrot.slane %v4184, 7
    %v4234 = vrot.slane %v4186, 7
    %v4235 = vrot.slane %v4188, 7
    %v4236 = vrot.slane %v4190, 7
    %v4237 = vrot.slane %v4192, 7
    %v4238 = vrot.slane %v4194, 7
    %v4239 = vrot.slane %v4196, 7
    %v4240 = vrot.slane %v4198, 7
    %v4241 = vrot.slane %v4200, 7
    %v4242 = vrot.slane %v4202, 7
    %v4243 = vrot.slane %v4204, 7
    %v4244 = vrot.slane %v4206, 7
    %v4245 = vrot.slane %v4208, 7
    %v4246 = vrot.slane %v4210, 7
    %v4247 = vrot.slane %v4212, 7
    %v4248 = vrot.slane %v4214, 7
    %v4249 = vrot.slane %v4216, 7
    %v4250 = vrot.slane %v4155, 7
    %v4251 = vrot.slane %v4157, 7
    %v4252 = vrot.slane %v4159, 7
    %v4253 = vrot.slane %v4161, 7
    %v4254 = vrot.slane %v4163, 7
    %v4255 = vrot.slane %v4165, 7
    %v4256 = vrot.slane %v4167, 7
    %v4257 = vrot.slane %v4169, 7
    %v4258 = vrot.slane %v4171, 7
    %v4259 = vrot.slane %v4173, 7
    %v4260 = vrot.slane %v4175, 7
    %v4261 = vrot.slane %v4177, 7
    %v4262 = vrot.slane %v4179, 7
    %v4263 = vrot.slane %v4181, 7
    %v4264 = vrot.slane %v4183, 7
    %v4265 = vrot.slane %v4185, 7
    %v4266 = vrot.slane %v4187, 7
    %v4267 = vrot.slane %v4189, 7
    %v4268 = vrot.slane %v4191, 7
    %v4269 = vrot.slane %v4193, 7
    %v4270 = vrot.slane %v4195, 7
    %v4271 = vrot.slane %v4197, 7
    %v4272 = vrot.slane %v4199, 7
    %v4273 = vrot.slane %v4201, 7
    %v4274 = vrot.slane %v4203, 7
    %v4275 = vrot.slane %v4205, 7
    %v4276 = vrot.slane %v4207, 7
    %v4277 = vrot.slane %v4209, 7
    %v4278 = vrot.slane %v4211, 7
    %v4279 = vrot.slane %v4213, 7
    %v4280 = vrot.slane %v4215, 7
    %v4281 = vrot.slane %v4217, 7
    %v4282 = vsel %vm206, %v4218, %v4250
    %v4283 = vsel %vm206, %v4219, %v4251
    %v4284 = vsel %vm206, %v4220, %v4252
    %v4285 = vsel %vm206, %v4221, %v4253
    %v4286 = vsel %vm206, %v4222, %v4254
    %v4287 = vsel %vm206, %v4223, %v4255
    %v4288 = vsel %vm206, %v4224, %v4256
    %v4289 = vsel %vm206, %v4225, %v4257
    %v4290 = vsel %vm206, %v4226, %v4258
    %v4291 = vsel %vm206, %v4227, %v4259
    %v4292 = vsel %vm206, %v4228, %v4260
    %v4293 = vsel %vm206, %v4229, %v4261
    %v4294 = vsel %vm206, %v4230, %v4262
    %v4295 = vsel %vm206, %v4231, %v4263
    %v4296 = vsel %vm206, %v4232, %v4264
    %v4297 = vsel %vm206, %v4233, %v4265
    %v4298 = vsel %vm206, %v4234, %v4266
    %v4299 = vsel %vm206, %v4235, %v4267
    %v4300 = vsel %vm206, %v4236, %v4268
    %v4301 = vsel %vm206, %v4237, %v4269
    %v4302 = vsel %vm206, %v4238, %v4270
    %v4303 = vsel %vm206, %v4239, %v4271
    %v4304 = vsel %vm206, %v4240, %v4272
    %v4305 = vsel %vm206, %v4241, %v4273
    %v4306 = vsel %vm206, %v4242, %v4274
    %v4307 = vsel %vm206, %v4243, %v4275
    %v4308 = vsel %vm206, %v4244, %v4276
    %v4309 = vsel %vm206, %v4245, %v4277
    %v4310 = vsel %vm206, %v4246, %v4278
    %v4311 = vsel %vm206, %v4247, %v4279
    %v4312 = vsel %vm206, %v4248, %v4280
    %v4313 = vsel %vm206, %v4249, %v4281
    %v4314 = vsel %vm206, %v4250, %v4218
    %v4315 = vsel %vm206, %v4251, %v4219
    %v4316 = vsel %vm206, %v4252, %v4220
    %v4317 = vsel %vm206, %v4253, %v4221
    %v4318 = vsel %vm206, %v4254, %v4222
    %v4319 = vsel %vm206, %v4255, %v4223
    %v4320 = vsel %vm206, %v4256, %v4224
    %v4321 = vsel %vm206, %v4257, %v4225
    %v4322 = vsel %vm206, %v4258, %v4226
    %v4323 = vsel %vm206, %v4259, %v4227
    %v4324 = vsel %vm206, %v4260, %v4228
    %v4325 = vsel %vm206, %v4261, %v4229
    %v4326 = vsel %vm206, %v4262, %v4230
    %v4327 = vsel %vm206, %v4263, %v4231
    %v4328 = vsel %vm206, %v4264, %v4232
    %v4329 = vsel %vm206, %v4265, %v4233
    %v4330 = vsel %vm206, %v4266, %v4234
    %v4331 = vsel %vm206, %v4267, %v4235
    %v4332 = vsel %vm206, %v4268, %v4236
    %v4333 = vsel %vm206, %v4269, %v4237
    %v4334 = vsel %vm206, %v4270, %v4238
    %v4335 = vsel %vm206, %v4271, %v4239
    %v4336 = vsel %vm206, %v4272, %v4240
    %v4337 = vsel %vm206, %v4273, %v4241
    %v4338 = vsel %vm206, %v4274, %v4242
    %v4339 = vsel %vm206, %v4275, %v4243
    %v4340 = vsel %vm206, %v4276, %v4244
    %v4341 = vsel %vm206, %v4277, %v4245
    %v4342 = vsel %vm206, %v4278, %v4246
    %v4343 = vsel %vm206, %v4279, %v4247
    %v4344 = vsel %vm206, %v4280, %v4248
    %v4345 = vsel %vm206, %v4281, %v4249
    %v4346 = vmul.f32 %v4314, %v70
    %v4347 = vmul.f32 %v4282, %v71
    %v4348 = vmul.f32 %v4315, %v70
    %v4349 = vmul.f32 %v4283, %v71
    %v4350 = vmul.f32 %v4316, %v70
    %v4351 = vmul.f32 %v4284, %v71
    %v4352 = vmul.f32 %v4317, %v70
    %v4353 = vmul.f32 %v4285, %v71
    %v4354 = vmul.f32 %v4318, %v70
    %v4355 = vmul.f32 %v4286, %v71
    %v4356 = vmul.f32 %v4319, %v70
    %v4357 = vmul.f32 %v4287, %v71
    %v4358 = vmul.f32 %v4320, %v70
    %v4359 = vmul.f32 %v4288, %v71
    %v4360 = vmul.f32 %v4321, %v70
    %v4361 = vmul.f32 %v4289, %v71
    %v4362 = vmul.f32 %v4322, %v70
    %v4363 = vmul.f32 %v4290, %v71
    %v4364 = vmul.f32 %v4323, %v70
    %v4365 = vmul.f32 %v4291, %v71
    %v4366 = vmul.f32 %v4324, %v70
    %v4367 = vmul.f32 %v4292, %v71
    %v4368 = vmul.f32 %v4325, %v70
    %v4369 = vmul.f32 %v4293, %v71
    %v4370 = vmul.f32 %v4326, %v70
    %v4371 = vmul.f32 %v4294, %v71
    %v4372 = vmul.f32 %v4327, %v70
    %v4373 = vmul.f32 %v4295, %v71
    %v4374 = vmul.f32 %v4328, %v70
    %v4375 = vmul.f32 %v4296, %v71
    %v4376 = vmul.f32 %v4329, %v70
    %v4377 = vmul.f32 %v4297, %v71
    %v4378 = vmul.f32 %v4330, %v70
    %v4379 = vmul.f32 %v4298, %v71
    %v4380 = vmul.f32 %v4331, %v70
    %v4381 = vmul.f32 %v4299, %v71
    %v4382 = vmul.f32 %v4332, %v70
    %v4383 = vmul.f32 %v4300, %v71
    %v4384 = vmul.f32 %v4333, %v70
    %v4385 = vmul.f32 %v4301, %v71
    %v4386 = vmul.f32 %v4334, %v70
    %v4387 = vmul.f32 %v4302, %v71
    %v4388 = vmul.f32 %v4335, %v70
    %v4389 = vmul.f32 %v4303, %v71
    %v4390 = vmul.f32 %v4336, %v70
    %v4391 = vmul.f32 %v4304, %v71
    %v4392 = vmul.f32 %v4337, %v70
    %v4393 = vmul.f32 %v4305, %v71
    %v4394 = vmul.f32 %v4338, %v70
    %v4395 = vmul.f32 %v4306, %v71
    %v4396 = vmul.f32 %v4339, %v70
    %v4397 = vmul.f32 %v4307, %v71
    %v4398 = vmul.f32 %v4340, %v70
    %v4399 = vmul.f32 %v4308, %v71
    %v4400 = vmul.f32 %v4341, %v70
    %v4401 = vmul.f32 %v4309, %v71
    %v4402 = vmul.f32 %v4342, %v70
    %v4403 = vmul.f32 %v4310, %v71
    %v4404 = vmul.f32 %v4343, %v70
    %v4405 = vmul.f32 %v4311, %v71
    %v4406 = vmul.f32 %v4344, %v70
    %v4407 = vmul.f32 %v4312, %v71
    %v4408 = vmul.f32 %v4345, %v70
    %v4409 = vmul.f32 %v4313, %v71
    %v4410 = vrot.slane %v4154, 1
    %v4411 = vrot.slane %v4156, 1
    %v4412 = vrot.slane %v4158, 1
    %v4413 = vrot.slane %v4160, 1
    %v4414 = vrot.slane %v4162, 1
    %v4415 = vrot.slane %v4164, 1
    %v4416 = vrot.slane %v4166, 1
    %v4417 = vrot.slane %v4168, 1
    %v4418 = vrot.slane %v4170, 1
    %v4419 = vrot.slane %v4172, 1
    %v4420 = vrot.slane %v4174, 1
    %v4421 = vrot.slane %v4176, 1
    %v4422 = vrot.slane %v4178, 1
    %v4423 = vrot.slane %v4180, 1
    %v4424 = vrot.slane %v4182, 1
    %v4425 = vrot.slane %v4184, 1
    %v4426 = vrot.slane %v4186, 1
    %v4427 = vrot.slane %v4188, 1
    %v4428 = vrot.slane %v4190, 1
    %v4429 = vrot.slane %v4192, 1
    %v4430 = vrot.slane %v4194, 1
    %v4431 = vrot.slane %v4196, 1
    %v4432 = vrot.slane %v4198, 1
    %v4433 = vrot.slane %v4200, 1
    %v4434 = vrot.slane %v4202, 1
    %v4435 = vrot.slane %v4204, 1
    %v4436 = vrot.slane %v4206, 1
    %v4437 = vrot.slane %v4208, 1
    %v4438 = vrot.slane %v4210, 1
    %v4439 = vrot.slane %v4212, 1
    %v4440 = vrot.slane %v4214, 1
    %v4441 = vrot.slane %v4216, 1
    %v4442 = vrot.slane %v4155, 1
    %v4443 = vrot.slane %v4157, 1
    %v4444 = vrot.slane %v4159, 1
    %v4445 = vrot.slane %v4161, 1
    %v4446 = vrot.slane %v4163, 1
    %v4447 = vrot.slane %v4165, 1
    %v4448 = vrot.slane %v4167, 1
    %v4449 = vrot.slane %v4169, 1
    %v4450 = vrot.slane %v4171, 1
    %v4451 = vrot.slane %v4173, 1
    %v4452 = vrot.slane %v4175, 1
    %v4453 = vrot.slane %v4177, 1
    %v4454 = vrot.slane %v4179, 1
    %v4455 = vrot.slane %v4181, 1
    %v4456 = vrot.slane %v4183, 1
    %v4457 = vrot.slane %v4185, 1
    %v4458 = vrot.slane %v4187, 1
    %v4459 = vrot.slane %v4189, 1
    %v4460 = vrot.slane %v4191, 1
    %v4461 = vrot.slane %v4193, 1
    %v4462 = vrot.slane %v4195, 1
    %v4463 = vrot.slane %v4197, 1
    %v4464 = vrot.slane %v4199, 1
    %v4465 = vrot.slane %v4201, 1
    %v4466 = vrot.slane %v4203, 1
    %v4467 = vrot.slane %v4205, 1
    %v4468 = vrot.slane %v4207, 1
    %v4469 = vrot.slane %v4209, 1
    %v4470 = vrot.slane %v4211, 1
    %v4471 = vrot.slane %v4213, 1
    %v4472 = vrot.slane %v4215, 1
    %v4473 = vrot.slane %v4217, 1
    %v4474 = vsel %vm399, %v4410, %v4442
    %v4475 = vsel %vm399, %v4411, %v4443
    %v4476 = vsel %vm399, %v4412, %v4444
    %v4477 = vsel %vm399, %v4413, %v4445
    %v4478 = vsel %vm399, %v4414, %v4446
    %v4479 = vsel %vm399, %v4415, %v4447
    %v4480 = vsel %vm399, %v4416, %v4448
    %v4481 = vsel %vm399, %v4417, %v4449
    %v4482 = vsel %vm399, %v4418, %v4450
    %v4483 = vsel %vm399, %v4419, %v4451
    %v4484 = vsel %vm399, %v4420, %v4452
    %v4485 = vsel %vm399, %v4421, %v4453
    %v4486 = vsel %vm399, %v4422, %v4454
    %v4487 = vsel %vm399, %v4423, %v4455
    %v4488 = vsel %vm399, %v4424, %v4456
    %v4489 = vsel %vm399, %v4425, %v4457
    %v4490 = vsel %vm399, %v4426, %v4458
    %v4491 = vsel %vm399, %v4427, %v4459
    %v4492 = vsel %vm399, %v4428, %v4460
    %v4493 = vsel %vm399, %v4429, %v4461
    %v4494 = vsel %vm399, %v4430, %v4462
    %v4495 = vsel %vm399, %v4431, %v4463
    %v4496 = vsel %vm399, %v4432, %v4464
    %v4497 = vsel %vm399, %v4433, %v4465
    %v4498 = vsel %vm399, %v4434, %v4466
    %v4499 = vsel %vm399, %v4435, %v4467
    %v4500 = vsel %vm399, %v4436, %v4468
    %v4501 = vsel %vm399, %v4437, %v4469
    %v4502 = vsel %vm399, %v4438, %v4470
    %v4503 = vsel %vm399, %v4439, %v4471
    %v4504 = vsel %vm399, %v4440, %v4472
    %v4505 = vsel %vm399, %v4441, %v4473
    %v4506 = vsel %vm399, %v4442, %v4410
    %v4507 = vsel %vm399, %v4443, %v4411
    %v4508 = vsel %vm399, %v4444, %v4412
    %v4509 = vsel %vm399, %v4445, %v4413
    %v4510 = vsel %vm399, %v4446, %v4414
    %v4511 = vsel %vm399, %v4447, %v4415
    %v4512 = vsel %vm399, %v4448, %v4416
    %v4513 = vsel %vm399, %v4449, %v4417
    %v4514 = vsel %vm399, %v4450, %v4418
    %v4515 = vsel %vm399, %v4451, %v4419
    %v4516 = vsel %vm399, %v4452, %v4420
    %v4517 = vsel %vm399, %v4453, %v4421
    %v4518 = vsel %vm399, %v4454, %v4422
    %v4519 = vsel %vm399, %v4455, %v4423
    %v4520 = vsel %vm399, %v4456, %v4424
    %v4521 = vsel %vm399, %v4457, %v4425
    %v4522 = vsel %vm399, %v4458, %v4426
    %v4523 = vsel %vm399, %v4459, %v4427
    %v4524 = vsel %vm399, %v4460, %v4428
    %v4525 = vsel %vm399, %v4461, %v4429
    %v4526 = vsel %vm399, %v4462, %v4430
    %v4527 = vsel %vm399, %v4463, %v4431
    %v4528 = vsel %vm399, %v4464, %v4432
    %v4529 = vsel %vm399, %v4465, %v4433
    %v4530 = vsel %vm399, %v4466, %v4434
    %v4531 = vsel %vm399, %v4467, %v4435
    %v4532 = vsel %vm399, %v4468, %v4436
    %v4533 = vsel %vm399, %v4469, %v4437
    %v4534 = vsel %vm399, %v4470, %v4438
    %v4535 = vsel %vm399, %v4471, %v4439
    %v4536 = vsel %vm399, %v4472, %v4440
    %v4537 = vsel %vm399, %v4473, %v4441
    %v4538 = vmul.f32 %v4474, %v76
    %v4539 = vmul.f32 %v4506, %v77
    %v4540 = vmul.f32 %v4475, %v76
    %v4541 = vmul.f32 %v4507, %v77
    %v4542 = vmul.f32 %v4476, %v76
    %v4543 = vmul.f32 %v4508, %v77
    %v4544 = vmul.f32 %v4477, %v76
    %v4545 = vmul.f32 %v4509, %v77
    %v4546 = vmul.f32 %v4478, %v76
    %v4547 = vmul.f32 %v4510, %v77
    %v4548 = vmul.f32 %v4479, %v76
    %v4549 = vmul.f32 %v4511, %v77
    %v4550 = vmul.f32 %v4480, %v76
    %v4551 = vmul.f32 %v4512, %v77
    %v4552 = vmul.f32 %v4481, %v76
    %v4553 = vmul.f32 %v4513, %v77
    %v4554 = vmul.f32 %v4482, %v76
    %v4555 = vmul.f32 %v4514, %v77
    %v4556 = vmul.f32 %v4483, %v76
    %v4557 = vmul.f32 %v4515, %v77
    %v4558 = vmul.f32 %v4484, %v76
    %v4559 = vmul.f32 %v4516, %v77
    %v4560 = vmul.f32 %v4485, %v76
    %v4561 = vmul.f32 %v4517, %v77
    %v4562 = vmul.f32 %v4486, %v76
    %v4563 = vmul.f32 %v4518, %v77
    %v4564 = vmul.f32 %v4487, %v76
    %v4565 = vmul.f32 %v4519, %v77
    %v4566 = vmul.f32 %v4488, %v76
    %v4567 = vmul.f32 %v4520, %v77
    %v4568 = vmul.f32 %v4489, %v76
    %v4569 = vmul.f32 %v4521, %v77
    %v4570 = vmul.f32 %v4490, %v76
    %v4571 = vmul.f32 %v4522, %v77
    %v4572 = vmul.f32 %v4491, %v76
    %v4573 = vmul.f32 %v4523, %v77
    %v4574 = vmul.f32 %v4492, %v76
    %v4575 = vmul.f32 %v4524, %v77
    %v4576 = vmul.f32 %v4493, %v76
    %v4577 = vmul.f32 %v4525, %v77
    %v4578 = vmul.f32 %v4494, %v76
    %v4579 = vmul.f32 %v4526, %v77
    %v4580 = vmul.f32 %v4495, %v76
    %v4581 = vmul.f32 %v4527, %v77
    %v4582 = vmul.f32 %v4496, %v76
    %v4583 = vmul.f32 %v4528, %v77
    %v4584 = vmul.f32 %v4497, %v76
    %v4585 = vmul.f32 %v4529, %v77
    %v4586 = vmul.f32 %v4498, %v76
    %v4587 = vmul.f32 %v4530, %v77
    %v4588 = vmul.f32 %v4499, %v76
    %v4589 = vmul.f32 %v4531, %v77
    %v4590 = vmul.f32 %v4500, %v76
    %v4591 = vmul.f32 %v4532, %v77
    %v4592 = vmul.f32 %v4501, %v76
    %v4593 = vmul.f32 %v4533, %v77
    %v4594 = vmul.f32 %v4502, %v76
    %v4595 = vmul.f32 %v4534, %v77
    %v4596 = vmul.f32 %v4503, %v76
    %v4597 = vmul.f32 %v4535, %v77
    %v4598 = vmul.f32 %v4504, %v76
    %v4599 = vmul.f32 %v4536, %v77
    %v4600 = vmul.f32 %v4505, %v76
    %v4601 = vmul.f32 %v4537, %v77
    %v4602 = vpack.c.bf16 %v4347, %v4346
    %v4603 = vpack.c.bf16 %v4349, %v4348
    %v4604 = vpack.c.bf16 %v4351, %v4350
    %v4605 = vpack.c.bf16 %v4353, %v4352
    %v4606 = vpack.c.bf16 %v4355, %v4354
    %v4607 = vpack.c.bf16 %v4357, %v4356
    %v4608 = vpack.c.bf16 %v4359, %v4358
    %v4609 = vpack.c.bf16 %v4361, %v4360
    %v4610 = vpack.c.bf16 %v4363, %v4362
    %v4611 = vpack.c.bf16 %v4365, %v4364
    %v4612 = vpack.c.bf16 %v4367, %v4366
    %v4613 = vpack.c.bf16 %v4369, %v4368
    %v4614 = vpack.c.bf16 %v4371, %v4370
    %v4615 = vpack.c.bf16 %v4373, %v4372
    %v4616 = vpack.c.bf16 %v4375, %v4374
    %v4617 = vpack.c.bf16 %v4377, %v4376
    %v4618 = vpack.c.bf16 %v4379, %v4378
    %v4619 = vpack.c.bf16 %v4381, %v4380
    %v4620 = vpack.c.bf16 %v4383, %v4382
    %v4621 = vpack.c.bf16 %v4385, %v4384
    %v4622 = vpack.c.bf16 %v4387, %v4386
    %v4623 = vpack.c.bf16 %v4389, %v4388
    %v4624 = vpack.c.bf16 %v4391, %v4390
    %v4625 = vpack.c.bf16 %v4393, %v4392
    %v4626 = vpack.c.bf16 %v4395, %v4394
    %v4627 = vpack.c.bf16 %v4397, %v4396
    %v4628 = vpack.c.bf16 %v4399, %v4398
    %v4629 = vpack.c.bf16 %v4401, %v4400
    %v4630 = vpack.c.bf16 %v4403, %v4402
    %v4631 = vpack.c.bf16 %v4405, %v4404
    %v4632 = vpack.c.bf16 %v4407, %v4406
    %v4633 = vpack.c.bf16 %v4409, %v4408
    %4634 = vst [vmem:[%s560] sm:$0xff] %v4602
    %4635 = vst [vmem:[%s560 + $0x18] sm:$0xff] %v4603
    %4636 = vst [vmem:[%s560 + $0x30] sm:$0xff] %v4604
    %4637 = vst [vmem:[%s560 + $0x48] sm:$0xff] %v4605
    %4638 = vst [vmem:[%s560 + $0x60] sm:$0xff] %v4606
    %4639 = vst [vmem:[%s560 + $0x78] sm:$0xff] %v4607
    %4640 = vst [vmem:[%s560 + $0x90] sm:$0xff] %v4608
    %4641 = vst [vmem:[%s560 + $0xa8] sm:$0xff] %v4609
    %4642 = vst [vmem:[%s560 + $0xc0] sm:$0xff] %v4610
    %4643 = vst [vmem:[%s560 + $0xd8] sm:$0xff] %v4611
    %4644 = vst [vmem:[%s560 + $0xf0] sm:$0xff] %v4612
    %4645 = vst [vmem:[%s560 + $0x108] sm:$0xff] %v4613
    %4646 = vst [vmem:[%s560 + $0x120] sm:$0xff] %v4614
    %4647 = vst [vmem:[%s560 + $0x138] sm:$0xff] %v4615
    %4648 = vst [vmem:[%s560 + $0x150] sm:$0xff] %v4616
    %4649 = vst [vmem:[%s560 + $0x168] sm:$0xff] %v4617
    %4650 = vst [vmem:[%s560 + $0x1b0] sm:$0xff] %v4618
    %4651 = vst [vmem:[%s560 + $0x1c8] sm:$0xff] %v4619
    %4652 = vst [vmem:[%s560 + $0x1e0] sm:$0xff] %v4620
    %4653 = vst [vmem:[%s560 + $0x1f8] sm:$0xff] %v4621
    %4654 = vst [vmem:[%s560 + $0x210] sm:$0xff] %v4622
    %4655 = vst [vmem:[%s560 + $0x228] sm:$0xff] %v4623
    %4656 = vst [vmem:[%s560 + $0x240] sm:$0xff] %v4624
    %4657 = vst [vmem:[%s560 + $0x258] sm:$0xff] %v4625
    %4658 = vst [vmem:[%s560 + $0x270] sm:$0xff] %v4626
    %4659 = vst [vmem:[%s560 + $0x288] sm:$0xff] %v4627
    %4660 = vst [vmem:[%s560 + $0x2a0] sm:$0xff] %v4628
    %4661 = vst [vmem:[%s560 + $0x2b8] sm:$0xff] %v4629
    %4662 = vst [vmem:[%s560 + $0x2d0] sm:$0xff] %v4630
    %4663 = vst [vmem:[%s560 + $0x2e8] sm:$0xff] %v4631
    %4664 = vst [vmem:[%s560 + $0x300] sm:$0xff] %v4632
    %4665 = vst [vmem:[%s560 + $0x318] sm:$0xff] %v4633
    %v4666 = vpack.c.bf16 %v4155, %v4154
    %v4667 = vpack.c.bf16 %v4157, %v4156
    %v4668 = vpack.c.bf16 %v4159, %v4158
    %v4669 = vpack.c.bf16 %v4161, %v4160
    %v4670 = vpack.c.bf16 %v4163, %v4162
    %v4671 = vpack.c.bf16 %v4165, %v4164
    %v4672 = vpack.c.bf16 %v4167, %v4166
    %v4673 = vpack.c.bf16 %v4169, %v4168
    %v4674 = vpack.c.bf16 %v4171, %v4170
    %v4675 = vpack.c.bf16 %v4173, %v4172
    %v4676 = vpack.c.bf16 %v4175, %v4174
    %v4677 = vpack.c.bf16 %v4177, %v4176
    %v4678 = vpack.c.bf16 %v4179, %v4178
    %v4679 = vpack.c.bf16 %v4181, %v4180
    %v4680 = vpack.c.bf16 %v4183, %v4182
    %v4681 = vpack.c.bf16 %v4185, %v4184
    %v4682 = vpack.c.bf16 %v4187, %v4186
    %v4683 = vpack.c.bf16 %v4189, %v4188
    %v4684 = vpack.c.bf16 %v4191, %v4190
    %v4685 = vpack.c.bf16 %v4193, %v4192
    %v4686 = vpack.c.bf16 %v4195, %v4194
    %v4687 = vpack.c.bf16 %v4197, %v4196
    %v4688 = vpack.c.bf16 %v4199, %v4198
    %v4689 = vpack.c.bf16 %v4201, %v4200
    %v4690 = vpack.c.bf16 %v4203, %v4202
    %v4691 = vpack.c.bf16 %v4205, %v4204
    %v4692 = vpack.c.bf16 %v4207, %v4206
    %v4693 = vpack.c.bf16 %v4209, %v4208
    %v4694 = vpack.c.bf16 %v4211, %v4210
    %v4695 = vpack.c.bf16 %v4213, %v4212
    %v4696 = vpack.c.bf16 %v4215, %v4214
    %v4697 = vpack.c.bf16 %v4217, %v4216
    %4698 = vst [vmem:[%s560 + $0x8] sm:$0xff] %v4666
    %4699 = vst [vmem:[%s560 + $0x20] sm:$0xff] %v4667
    %4700 = vst [vmem:[%s560 + $0x38] sm:$0xff] %v4668
    %4701 = vst [vmem:[%s560 + $0x50] sm:$0xff] %v4669
    %4702 = vst [vmem:[%s560 + $0x68] sm:$0xff] %v4670
    %4703 = vst [vmem:[%s560 + $0x80] sm:$0xff] %v4671
    %4704 = vst [vmem:[%s560 + $0x98] sm:$0xff] %v4672
    %4705 = vst [vmem:[%s560 + $0xb0] sm:$0xff] %v4673
    %4706 = vst [vmem:[%s560 + $0xc8] sm:$0xff] %v4674
    %4707 = vst [vmem:[%s560 + $0xe0] sm:$0xff] %v4675
    %4708 = vst [vmem:[%s560 + $0xf8] sm:$0xff] %v4676
    %4709 = vst [vmem:[%s560 + $0x110] sm:$0xff] %v4677
    %4710 = vst [vmem:[%s560 + $0x128] sm:$0xff] %v4678
    %4711 = vst [vmem:[%s560 + $0x140] sm:$0xff] %v4679
    %4712 = vst [vmem:[%s560 + $0x158] sm:$0xff] %v4680
    %4713 = vst [vmem:[%s560 + $0x170] sm:$0xff] %v4681
    %4714 = vst [vmem:[%s560 + $0x1b8] sm:$0xff] %v4682
    %4715 = vst [vmem:[%s560 + $0x1d0] sm:$0xff] %v4683
    %4716 = vst [vmem:[%s560 + $0x1e8] sm:$0xff] %v4684
    %4717 = vst [vmem:[%s560 + $0x200] sm:$0xff] %v4685
    %4718 = vst [vmem:[%s560 + $0x218] sm:$0xff] %v4686
    %4719 = vst [vmem:[%s560 + $0x230] sm:$0xff] %v4687
    %4720 = vst [vmem:[%s560 + $0x248] sm:$0xff] %v4688
    %4721 = vst [vmem:[%s560 + $0x260] sm:$0xff] %v4689
    %4722 = vst [vmem:[%s560 + $0x278] sm:$0xff] %v4690
    %4723 = vst [vmem:[%s560 + $0x290] sm:$0xff] %v4691
    %4724 = vst [vmem:[%s560 + $0x2a8] sm:$0xff] %v4692
    %4725 = vst [vmem:[%s560 + $0x2c0] sm:$0xff] %v4693
    %4726 = vst [vmem:[%s560 + $0x2d8] sm:$0xff] %v4694
    %4727 = vst [vmem:[%s560 + $0x2f0] sm:$0xff] %v4695
    %4728 = vst [vmem:[%s560 + $0x308] sm:$0xff] %v4696
    %4729 = vst [vmem:[%s560 + $0x320] sm:$0xff] %v4697
    %v4730 = vpack.c.bf16 %v4539, %v4538
    %v4731 = vpack.c.bf16 %v4541, %v4540
    %v4732 = vpack.c.bf16 %v4543, %v4542
    %v4733 = vpack.c.bf16 %v4545, %v4544
    %v4734 = vpack.c.bf16 %v4547, %v4546
    %v4735 = vpack.c.bf16 %v4549, %v4548
    %v4736 = vpack.c.bf16 %v4551, %v4550
    %v4737 = vpack.c.bf16 %v4553, %v4552
    %v4738 = vpack.c.bf16 %v4555, %v4554
    %v4739 = vpack.c.bf16 %v4557, %v4556
    %v4740 = vpack.c.bf16 %v4559, %v4558
    %v4741 = vpack.c.bf16 %v4561, %v4560
    %v4742 = vpack.c.bf16 %v4563, %v4562
    %v4743 = vpack.c.bf16 %v4565, %v4564
    %v4744 = vpack.c.bf16 %v4567, %v4566
    %v4745 = vpack.c.bf16 %v4569, %v4568
    %v4746 = vpack.c.bf16 %v4571, %v4570
    %v4747 = vpack.c.bf16 %v4573, %v4572
    %v4748 = vpack.c.bf16 %v4575, %v4574
    %v4749 = vpack.c.bf16 %v4577, %v4576
    %v4750 = vpack.c.bf16 %v4579, %v4578
    %v4751 = vpack.c.bf16 %v4581, %v4580
    %v4752 = vpack.c.bf16 %v4583, %v4582
    %v4753 = vpack.c.bf16 %v4585, %v4584
    %v4754 = vpack.c.bf16 %v4587, %v4586
    %v4755 = vpack.c.bf16 %v4589, %v4588
    %v4756 = vpack.c.bf16 %v4591, %v4590
    %v4757 = vpack.c.bf16 %v4593, %v4592
    %v4758 = vpack.c.bf16 %v4595, %v4594
    %v4759 = vpack.c.bf16 %v4597, %v4596
    %v4760 = vpack.c.bf16 %v4599, %v4598
    %v4761 = vpack.c.bf16 %v4601, %v4600
    %4762 = vst [vmem:[%s560 + $0x10] sm:$0xff] %v4730
    %4763 = vst [vmem:[%s560 + $0x28] sm:$0xff] %v4731
    %4764 = vst [vmem:[%s560 + $0x40] sm:$0xff] %v4732
    %4765 = vst [vmem:[%s560 + $0x58] sm:$0xff] %v4733
    %4766 = vst [vmem:[%s560 + $0x70] sm:$0xff] %v4734
    %4767 = vst [vmem:[%s560 + $0x88] sm:$0xff] %v4735
    %4768 = vst [vmem:[%s560 + $0xa0] sm:$0xff] %v4736
    %4769 = vst [vmem:[%s560 + $0xb8] sm:$0xff] %v4737
    %4770 = vst [vmem:[%s560 + $0xd0] sm:$0xff] %v4738
    %4771 = vst [vmem:[%s560 + $0xe8] sm:$0xff] %v4739
    %4772 = vst [vmem:[%s560 + $0x100] sm:$0xff] %v4740
    %4773 = vst [vmem:[%s560 + $0x118] sm:$0xff] %v4741
    %4774 = vst [vmem:[%s560 + $0x130] sm:$0xff] %v4742
    %4775 = vst [vmem:[%s560 + $0x148] sm:$0xff] %v4743
    %4776 = vst [vmem:[%s560 + $0x160] sm:$0xff] %v4744
    %4777 = vst [vmem:[%s560 + $0x178] sm:$0xff] %v4745
    %4778 = vst [vmem:[%s560 + $0x1c0] sm:$0xff] %v4746
    %4779 = vst [vmem:[%s560 + $0x1d8] sm:$0xff] %v4747
    %4780 = vst [vmem:[%s560 + $0x1f0] sm:$0xff] %v4748
    %4781 = vst [vmem:[%s560 + $0x208] sm:$0xff] %v4749
    %4782 = vst [vmem:[%s560 + $0x220] sm:$0xff] %v4750
    %4783 = vst [vmem:[%s560 + $0x238] sm:$0xff] %v4751
    %4784 = vst [vmem:[%s560 + $0x250] sm:$0xff] %v4752
    %4785 = vst [vmem:[%s560 + $0x268] sm:$0xff] %v4753
    %4786 = vst [vmem:[%s560 + $0x280] sm:$0xff] %v4754
    %4787 = vst [vmem:[%s560 + $0x298] sm:$0xff] %v4755
    %4788 = vst [vmem:[%s560 + $0x2b0] sm:$0xff] %v4756
    %4789 = vst [vmem:[%s560 + $0x2c8] sm:$0xff] %v4757
    %4790 = vst [vmem:[%s560 + $0x2e0] sm:$0xff] %v4758
    %4791 = vst [vmem:[%s560 + $0x2f8] sm:$0xff] %v4759
    %4792 = vst [vmem:[%s560 + $0x310] sm:$0xff] %v4760
    %4793 = vst [vmem:[%s560 + $0x328] sm:$0xff] %v4761
    %v4794 = vld [vmem:[#allocation2] sm:$0xff]
    %v4795 = vld [vmem:[#allocation2 + $0x8] sm:$0xff]
    %v4796 = vld [vmem:[#allocation2 + $0x10] sm:$0xff]
    %v4797 = vld [vmem:[#allocation2 + $0x18] sm:$0xff]
    %v4798 = vld [vmem:[#allocation2 + $0x20] sm:$0xff]
    %v4799 = vld [vmem:[#allocation2 + $0x28] sm:$0xff]
    %v4800 = vld [vmem:[#allocation2 + $0x30] sm:$0xff]
    %v4801 = vld [vmem:[#allocation2 + $0x38] sm:$0xff]
    %v4802 = vld [vmem:[#allocation2 + $0x40] sm:$0xff]
    %v4803 = vld [vmem:[#allocation2 + $0x48] sm:$0xff]
    %v4804 = vld [vmem:[#allocation2 + $0x50] sm:$0xff]
    %v4805 = vld [vmem:[#allocation2 + $0x58] sm:$0xff]
    %v4806 = vld [vmem:[#allocation2 + $0x60] sm:$0xff]
    %v4807 = vld [vmem:[#allocation2 + $0x68] sm:$0xff]
    %v4808 = vld [vmem:[#allocation2 + $0x70] sm:$0xff]
    %v4809 = vld [vmem:[#allocation2 + $0x78] sm:$0xff]
    %v4810 = vld [vmem:[#allocation2 + $0x80] sm:$0xff]
    %v4811 = vld [vmem:[#allocation2 + $0x88] sm:$0xff]
    %v4812 = vld [vmem:[#allocation2 + $0x90] sm:$0xff]
    %v4813 = vld [vmem:[#allocation2 + $0x98] sm:$0xff]
    %v4814 = vld [vmem:[#allocation2 + $0xa0] sm:$0xff]
    %v4815 = vld [vmem:[#allocation2 + $0xa8] sm:$0xff]
    %v4816 = vld [vmem:[#allocation2 + $0xb0] sm:$0xff]
    %v4817 = vld [vmem:[#allocation2 + $0xb8] sm:$0xff]
    %v4818 = vld [vmem:[#allocation2 + $0xc0] sm:$0xff]
    %v4819 = vld [vmem:[#allocation2 + $0xc8] sm:$0xff]
    %v4820 = vld [vmem:[#allocation2 + $0xd0] sm:$0xff]
    %v4821 = vld [vmem:[#allocation2 + $0xd8] sm:$0xff]
    %v4822 = vld [vmem:[#allocation2 + $0xe0] sm:$0xff]
    %v4823 = vld [vmem:[#allocation2 + $0xe8] sm:$0xff]
    %v4824 = vld [vmem:[#allocation2 + $0xf0] sm:$0xff]
    %v4825 = vld [vmem:[#allocation2 + $0xf8] sm:$0xff]
    %v4826 = vld [vmem:[#allocation2 + $0x100] sm:$0xff]
    %v4827 = vld [vmem:[#allocation2 + $0x108] sm:$0xff]
    %v4828 = vld [vmem:[#allocation2 + $0x110] sm:$0xff]
    %v4829 = vld [vmem:[#allocation2 + $0x118] sm:$0xff]
    %v4830 = vld [vmem:[#allocation2 + $0x120] sm:$0xff]
    %v4831 = vld [vmem:[#allocation2 + $0x128] sm:$0xff]
    %v4832 = vld [vmem:[#allocation2 + $0x130] sm:$0xff]
    %v4833 = vld [vmem:[#allocation2 + $0x138] sm:$0xff]
    %v4834 = vld [vmem:[#allocation2 + $0x140] sm:$0xff]
    %v4835 = vld [vmem:[#allocation2 + $0x148] sm:$0xff]
    %v4836 = vld [vmem:[#allocation2 + $0x150] sm:$0xff]
    %v4837 = vld [vmem:[#allocation2 + $0x158] sm:$0xff]
    %v4838 = vld [vmem:[#allocation2 + $0x160] sm:$0xff]
    %v4839 = vld [vmem:[#allocation2 + $0x168] sm:$0xff]
    %v4840 = vld [vmem:[#allocation2 + $0x170] sm:$0xff]
    %v4841 = vld [vmem:[#allocation2 + $0x178] sm:$0xff]
    %v4842 = vld [vmem:[#allocation2 + $0x1b0] sm:$0xff]
    %v4843 = vld [vmem:[#allocation2 + $0x1b8] sm:$0xff]
    %v4844 = vld [vmem:[#allocation2 + $0x1c0] sm:$0xff]
    %v4845 = vld [vmem:[#allocation2 + $0x1c8] sm:$0xff]
    %v4846 = vld [vmem:[#allocation2 + $0x1d0] sm:$0xff]
    %v4847 = vld [vmem:[#allocation2 + $0x1d8] sm:$0xff]
    %v4848 = vld [vmem:[#allocation2 + $0x1e0] sm:$0xff]
    %v4849 = vld [vmem:[#allocation2 + $0x1e8] sm:$0xff]
    %v4850 = vld [vmem:[#allocation2 + $0x1f0] sm:$0xff]
    %v4851 = vld [vmem:[#allocation2 + $0x1f8] sm:$0xff]
    %v4852 = vld [vmem:[#allocation2 + $0x200] sm:$0xff]
    %v4853 = vld [vmem:[#allocation2 + $0x208] sm:$0xff]
    %v4854 = vld [vmem:[#allocation2 + $0x210] sm:$0xff]
    %v4855 = vld [vmem:[#allocation2 + $0x218] sm:$0xff]
    %v4856 = vld [vmem:[#allocation2 + $0x220] sm:$0xff]
    %v4857 = vld [vmem:[#allocation2 + $0x228] sm:$0xff]
    %v4858 = vld [vmem:[#allocation2 + $0x230] sm:$0xff]
    %v4859 = vld [vmem:[#allocation2 + $0x238] sm:$0xff]
    %v4860 = vld [vmem:[#allocation2 + $0x240] sm:$0xff]
    %v4861 = vld [vmem:[#allocation2 + $0x248] sm:$0xff]
    %v4862 = vld [vmem:[#allocation2 + $0x250] sm:$0xff]
    %v4863 = vld [vmem:[#allocation2 + $0x258] sm:$0xff]
    %v4864 = vld [vmem:[#allocation2 + $0x260] sm:$0xff]
    %v4865 = vld [vmem:[#allocation2 + $0x268] sm:$0xff]
    %v4866 = vld [vmem:[#allocation2 + $0x270] sm:$0xff]
    %v4867 = vld [vmem:[#allocation2 + $0x278] sm:$0xff]
    %v4868 = vld [vmem:[#allocation2 + $0x280] sm:$0xff]
    %v4869 = vld [vmem:[#allocation2 + $0x288] sm:$0xff]
    %v4870 = vld [vmem:[#allocation2 + $0x290] sm:$0xff]
    %v4871 = vld [vmem:[#allocation2 + $0x298] sm:$0xff]
    %v4872 = vld [vmem:[#allocation2 + $0x2a0] sm:$0xff]
    %v4873 = vld [vmem:[#allocation2 + $0x2a8] sm:$0xff]
    %v4874 = vld [vmem:[#allocation2 + $0x2b0] sm:$0xff]
    %v4875 = vld [vmem:[#allocation2 + $0x2b8] sm:$0xff]
    %v4876 = vld [vmem:[#allocation2 + $0x2c0] sm:$0xff]
    %v4877 = vld [vmem:[#allocation2 + $0x2c8] sm:$0xff]
    %v4878 = vld [vmem:[#allocation2 + $0x2d0] sm:$0xff]
    %v4879 = vld [vmem:[#allocation2 + $0x2d8] sm:$0xff]
    %v4880 = vld [vmem:[#allocation2 + $0x2e0] sm:$0xff]
    %v4881 = vld [vmem:[#allocation2 + $0x2e8] sm:$0xff]
    %v4882 = vld [vmem:[#allocation2 + $0x2f0] sm:$0xff]
    %v4883 = vld [vmem:[#allocation2 + $0x2f8] sm:$0xff]
    %v4884 = vld [vmem:[#allocation2 + $0x300] sm:$0xff]
    %v4885 = vld [vmem:[#allocation2 + $0x308] sm:$0xff]
    %v4886 = vld [vmem:[#allocation2 + $0x310] sm:$0xff]
    %v4887 = vld [vmem:[#allocation2 + $0x318] sm:$0xff]
    %v4888 = vld [vmem:[#allocation2 + $0x320] sm:$0xff]
    %v4889 = vld [vmem:[#allocation2 + $0x328] sm:$0xff]
    %v4890 = vld [vmem:[%s5] sm:$0xf]
    %v4891 = vld [vmem:[%s5 + $0x4] sm:$0xf]
    %v4892 = vld [vmem:[%s5 + $0x8] sm:$0xf]
    %v4893 = vld [vmem:[%s5 + $0xc] sm:$0xf]
    %v4894 = vld [vmem:[%s5 + $0x10] sm:$0xf]
    %v4895 = vld [vmem:[%s5 + $0x14] sm:$0xf]
    %v4896 = vld [vmem:[%s5 + $0x18] sm:$0xf]
    %v4897 = vld [vmem:[%s5 + $0x1c] sm:$0xf]
    %v4898 = vld [vmem:[%s5 + $0x20] sm:$0xf]
    %v4899 = vld [vmem:[%s5 + $0x24] sm:$0xf]
    %v4900 = vld [vmem:[%s5 + $0x28] sm:$0xf]
    %v4901 = vld [vmem:[%s5 + $0x2c] sm:$0xf]
    %v4902 = vld [vmem:[%s5 + $0x30] sm:$0xf]
    %v4903 = vld [vmem:[%s5 + $0x34] sm:$0xf]
    %v4904 = vld [vmem:[%s5 + $0x38] sm:$0xf]
    %v4905 = vld [vmem:[%s5 + $0x3c] sm:$0xf]
    %v4906 = vld [vmem:[%s5 + $0x40] sm:$0xf]
    %v4907 = vld [vmem:[%s5 + $0x44] sm:$0xf]
    %v4908 = vld [vmem:[%s5 + $0x48] sm:$0xf]
    %v4909 = vld [vmem:[%s5 + $0x4c] sm:$0xf]
    %v4910 = vld [vmem:[%s5 + $0x50] sm:$0xf]
    %v4911 = vld [vmem:[%s5 + $0x54] sm:$0xf]
    %v4912 = vld [vmem:[%s5 + $0x58] sm:$0xf]
    %v4913 = vld [vmem:[%s5 + $0x5c] sm:$0xf]
    %v4914 = vld [vmem:[%s5 + $0x60] sm:$0xf]
    %v4915 = vld [vmem:[%s5 + $0x64] sm:$0xf]
    %v4916 = vld [vmem:[%s5 + $0x68] sm:$0xf]
    %v4917 = vld [vmem:[%s5 + $0x6c] sm:$0xf]
    %v4918 = vld [vmem:[%s5 + $0x70] sm:$0xf]
    %v4919 = vld [vmem:[%s5 + $0x74] sm:$0xf]
    %v4920 = vld [vmem:[%s5 + $0x78] sm:$0xf]
    %v4921 = vld [vmem:[%s5 + $0x7c] sm:$0xf]
    %v4922 = vld [vmem:[%s5 + $0x80] sm:$0xf]
    %v4923 = vld [vmem:[%s5 + $0x84] sm:$0xf]
    %v4924 = vld [vmem:[%s5 + $0x88] sm:$0xf]
    %v4925 = vld [vmem:[%s5 + $0x8c] sm:$0xf]
    %v4926 = vld [vmem:[%s5 + $0x90] sm:$0xf]
    %v4927 = vld [vmem:[%s5 + $0x94] sm:$0xf]
    %v4928 = vld [vmem:[%s5 + $0x98] sm:$0xf]
    %v4929 = vld [vmem:[%s5 + $0x9c] sm:$0xf]
    %v4930 = vld [vmem:[%s5 + $0xa0] sm:$0xf]
    %v4931 = vld [vmem:[%s5 + $0xa4] sm:$0xf]
    %v4932 = vld [vmem:[%s5 + $0xa8] sm:$0xf]
    %v4933 = vld [vmem:[%s5 + $0xac] sm:$0xf]
    %v4934 = vld [vmem:[%s5 + $0xb0] sm:$0xf]
    %v4935 = vld [vmem:[%s5 + $0xb4] sm:$0xf]
    %v4936 = vld [vmem:[%s5 + $0xb8] sm:$0xf]
    %v4937 = vld [vmem:[%s5 + $0xbc] sm:$0xf]
    %v4938 = vld [vmem:[%s560] sm:$0xff]
    %v4939 = vld [vmem:[%s560 + $0x8] sm:$0xff]
    %v4940 = vld [vmem:[%s560 + $0x10] sm:$0xff]
    %v4941 = vld [vmem:[%s560 + $0x18] sm:$0xff]
    %v4942 = vld [vmem:[%s560 + $0x20] sm:$0xff]
    %v4943 = vld [vmem:[%s560 + $0x28] sm:$0xff]
    %v4944 = vld [vmem:[%s560 + $0x30] sm:$0xff]
    %v4945 = vld [vmem:[%s560 + $0x38] sm:$0xff]
    %v4946 = vld [vmem:[%s560 + $0x40] sm:$0xff]
    %v4947 = vld [vmem:[%s560 + $0x48] sm:$0xff]
    %v4948 = vld [vmem:[%s560 + $0x50] sm:$0xff]
    %v4949 = vld [vmem:[%s560 + $0x58] sm:$0xff]
    %v4950 = vld [vmem:[%s560 + $0x60] sm:$0xff]
    %v4951 = vld [vmem:[%s560 + $0x68] sm:$0xff]
    %v4952 = vld [vmem:[%s560 + $0x70] sm:$0xff]
    %v4953 = vld [vmem:[%s560 + $0x78] sm:$0xff]
    %v4954 = vld [vmem:[%s560 + $0x80] sm:$0xff]
    %v4955 = vld [vmem:[%s560 + $0x88] sm:$0xff]
    %v4956 = vld [vmem:[%s560 + $0x90] sm:$0xff]
    %v4957 = vld [vmem:[%s560 + $0x98] sm:$0xff]
    %v4958 = vld [vmem:[%s560 + $0xa0] sm:$0xff]
    %v4959 = vld [vmem:[%s560 + $0xa8] sm:$0xff]
    %v4960 = vld [vmem:[%s560 + $0xb0] sm:$0xff]
    %v4961 = vld [vmem:[%s560 + $0xb8] sm:$0xff]
    %v4962 = vld [vmem:[%s560 + $0xc0] sm:$0xff]
    %v4963 = vld [vmem:[%s560 + $0xc8] sm:$0xff]
    %v4964 = vld [vmem:[%s560 + $0xd0] sm:$0xff]
    %v4965 = vld [vmem:[%s560 + $0xd8] sm:$0xff]
    %v4966 = vld [vmem:[%s560 + $0xe0] sm:$0xff]
    %v4967 = vld [vmem:[%s560 + $0xe8] sm:$0xff]
    %v4968 = vld [vmem:[%s560 + $0xf0] sm:$0xff]
    %v4969 = vld [vmem:[%s560 + $0xf8] sm:$0xff]
    %v4970 = vld [vmem:[%s560 + $0x100] sm:$0xff]
    %v4971 = vld [vmem:[%s560 + $0x108] sm:$0xff]
    %v4972 = vld [vmem:[%s560 + $0x110] sm:$0xff]
    %v4973 = vld [vmem:[%s560 + $0x118] sm:$0xff]
    %v4974 = vld [vmem:[%s560 + $0x120] sm:$0xff]
    %v4975 = vld [vmem:[%s560 + $0x128] sm:$0xff]
    %v4976 = vld [vmem:[%s560 + $0x130] sm:$0xff]
    %v4977 = vld [vmem:[%s560 + $0x138] sm:$0xff]
    %v4978 = vld [vmem:[%s560 + $0x140] sm:$0xff]
    %v4979 = vld [vmem:[%s560 + $0x148] sm:$0xff]
    %v4980 = vld [vmem:[%s560 + $0x150] sm:$0xff]
    %v4981 = vld [vmem:[%s560 + $0x158] sm:$0xff]
    %v4982 = vld [vmem:[%s560 + $0x160] sm:$0xff]
    %v4983 = vld [vmem:[%s560 + $0x168] sm:$0xff]
    %v4984 = vld [vmem:[%s560 + $0x170] sm:$0xff]
    %v4985 = vld [vmem:[%s560 + $0x178] sm:$0xff]
    %v4986 = vld [vmem:[%s560 + $0x1b0] sm:$0xff]
    %v4987 = vld [vmem:[%s560 + $0x1b8] sm:$0xff]
    %v4988 = vld [vmem:[%s560 + $0x1c0] sm:$0xff]
    %v4989 = vld [vmem:[%s560 + $0x1c8] sm:$0xff]
    %v4990 = vld [vmem:[%s560 + $0x1d0] sm:$0xff]
    %v4991 = vld [vmem:[%s560 + $0x1d8] sm:$0xff]
    %v4992 = vld [vmem:[%s560 + $0x1e0] sm:$0xff]
    %v4993 = vld [vmem:[%s560 + $0x1e8] sm:$0xff]
    %v4994 = vld [vmem:[%s560 + $0x1f0] sm:$0xff]
    %v4995 = vld [vmem:[%s560 + $0x1f8] sm:$0xff]
    %v4996 = vld [vmem:[%s560 + $0x200] sm:$0xff]
    %v4997 = vld [vmem:[%s560 + $0x208] sm:$0xff]
    %v4998 = vld [vmem:[%s560 + $0x210] sm:$0xff]
    %v4999 = vld [vmem:[%s560 + $0x218] sm:$0xff]
    %v5000 = vld [vmem:[%s560 + $0x220] sm:$0xff]
    %v5001 = vld [vmem:[%s560 + $0x228] sm:$0xff]
    %v5002 = vld [vmem:[%s560 + $0x230] sm:$0xff]
    %v5003 = vld [vmem:[%s560 + $0x238] sm:$0xff]
    %v5004 = vld [vmem:[%s560 + $0x240] sm:$0xff]
    %v5005 = vld [vmem:[%s560 + $0x248] sm:$0xff]
    %v5006 = vld [vmem:[%s560 + $0x250] sm:$0xff]
    %v5007 = vld [vmem:[%s560 + $0x258] sm:$0xff]
    %v5008 = vld [vmem:[%s560 + $0x260] sm:$0xff]
    %v5009 = vld [vmem:[%s560 + $0x268] sm:$0xff]
    %v5010 = vld [vmem:[%s560 + $0x270] sm:$0xff]
    %v5011 = vld [vmem:[%s560 + $0x278] sm:$0xff]
    %v5012 = vld [vmem:[%s560 + $0x280] sm:$0xff]
    %v5013 = vld [vmem:[%s560 + $0x288] sm:$0xff]
    %v5014 = vld [vmem:[%s560 + $0x290] sm:$0xff]
    %v5015 = vld [vmem:[%s560 + $0x298] sm:$0xff]
    %v5016 = vld [vmem:[%s560 + $0x2a0] sm:$0xff]
    %v5017 = vld [vmem:[%s560 + $0x2a8] sm:$0xff]
    %v5018 = vld [vmem:[%s560 + $0x2b0] sm:$0xff]
    %v5019 = vld [vmem:[%s560 + $0x2b8] sm:$0xff]
    %v5020 = vld [vmem:[%s560 + $0x2c0] sm:$0xff]
    %v5021 = vld [vmem:[%s560 + $0x2c8] sm:$0xff]
    %v5022 = vld [vmem:[%s560 + $0x2d0] sm:$0xff]
    %v5023 = vld [vmem:[%s560 + $0x2d8] sm:$0xff]
    %v5024 = vld [vmem:[%s560 + $0x2e0] sm:$0xff]
    %v5025 = vld [vmem:[%s560 + $0x2e8] sm:$0xff]
    %v5026 = vld [vmem:[%s560 + $0x2f0] sm:$0xff]
    %v5027 = vld [vmem:[%s560 + $0x2f8] sm:$0xff]
    %v5028 = vld [vmem:[%s560 + $0x300] sm:$0xff]
    %v5029 = vld [vmem:[%s560 + $0x308] sm:$0xff]
    %v5030 = vld [vmem:[%s560 + $0x310] sm:$0xff]
    %v5031 = vld [vmem:[%s560 + $0x318] sm:$0xff]
    %v5032 = vld [vmem:[%s560 + $0x320] sm:$0xff]
    %v5033 = vld [vmem:[%s560 + $0x328] sm:$0xff]
    %s5034 = scalar_lea.vmem %s5, 192
    %v5035 = vld [vmem:[%s5034] sm:$0xf]
    %v5036 = vld [vmem:[%s5034 + $0x4] sm:$0xf]
    %v5037 = vld [vmem:[%s5034 + $0x8] sm:$0xf]
    %v5038 = vld [vmem:[%s5034 + $0xc] sm:$0xf]
    %v5039 = vld [vmem:[%s5034 + $0x10] sm:$0xf]
    %v5040 = vld [vmem:[%s5034 + $0x14] sm:$0xf]
    %v5041 = vld [vmem:[%s5034 + $0x18] sm:$0xf]
    %v5042 = vld [vmem:[%s5034 + $0x1c] sm:$0xf]
    %v5043 = vld [vmem:[%s5034 + $0x20] sm:$0xf]
    %v5044 = vld [vmem:[%s5034 + $0x24] sm:$0xf]
    %v5045 = vld [vmem:[%s5034 + $0x28] sm:$0xf]
    %v5046 = vld [vmem:[%s5034 + $0x2c] sm:$0xf]
    %v5047 = vld [vmem:[%s5034 + $0x30] sm:$0xf]
    %v5048 = vld [vmem:[%s5034 + $0x34] sm:$0xf]
    %v5049 = vld [vmem:[%s5034 + $0x38] sm:$0xf]
    %v5050 = vld [vmem:[%s5034 + $0x3c] sm:$0xf]
    %v5051 = vld [vmem:[%s5034 + $0x40] sm:$0xf]
    %v5052 = vld [vmem:[%s5034 + $0x44] sm:$0xf]
    %v5053 = vld [vmem:[%s5034 + $0x48] sm:$0xf]
    %v5054 = vld [vmem:[%s5034 + $0x4c] sm:$0xf]
    %v5055 = vld [vmem:[%s5034 + $0x50] sm:$0xf]
    %v5056 = vld [vmem:[%s5034 + $0x54] sm:$0xf]
    %v5057 = vld [vmem:[%s5034 + $0x58] sm:$0xf]
    %v5058 = vld [vmem:[%s5034 + $0x5c] sm:$0xf]
    %v5059 = vld [vmem:[%s5034 + $0x60] sm:$0xf]
    %v5060 = vld [vmem:[%s5034 + $0x64] sm:$0xf]
    %v5061 = vld [vmem:[%s5034 + $0x68] sm:$0xf]
    %v5062 = vld [vmem:[%s5034 + $0x6c] sm:$0xf]
    %v5063 = vld [vmem:[%s5034 + $0x70] sm:$0xf]
    %v5064 = vld [vmem:[%s5034 + $0x74] sm:$0xf]
    %v5065 = vld [vmem:[%s5034 + $0x78] sm:$0xf]
    %v5066 = vld [vmem:[%s5034 + $0x7c] sm:$0xf]
    %v5067 = vld [vmem:[%s5034 + $0x80] sm:$0xf]
    %v5068 = vld [vmem:[%s5034 + $0x84] sm:$0xf]
    %v5069 = vld [vmem:[%s5034 + $0x88] sm:$0xf]
    %v5070 = vld [vmem:[%s5034 + $0x8c] sm:$0xf]
    %v5071 = vld [vmem:[%s5034 + $0x90] sm:$0xf]
    %v5072 = vld [vmem:[%s5034 + $0x94] sm:$0xf]
    %v5073 = vld [vmem:[%s5034 + $0x98] sm:$0xf]
    %v5074 = vld [vmem:[%s5034 + $0x9c] sm:$0xf]
    %v5075 = vld [vmem:[%s5034 + $0xa0] sm:$0xf]
    %v5076 = vld [vmem:[%s5034 + $0xa4] sm:$0xf]
    %v5077 = vld [vmem:[%s5034 + $0xa8] sm:$0xf]
    %v5078 = vld [vmem:[%s5034 + $0xac] sm:$0xf]
    %v5079 = vld [vmem:[%s5034 + $0xb0] sm:$0xf]
    %v5080 = vld [vmem:[%s5034 + $0xb4] sm:$0xf]
    %v5081 = vld [vmem:[%s5034 + $0xb8] sm:$0xf]
    %v5082 = vld [vmem:[%s5034 + $0xbc] sm:$0xf]
    %v5131 = vunpack.c.l.b16 %v5035
    %v5132 = vunpack.c.l.b16 %v5036
    %v5133 = vunpack.c.l.b16 %v5037
    %v5134 = vunpack.c.l.b16 %v5038
    %v5135 = vunpack.c.l.b16 %v5039
    %v5136 = vunpack.c.l.b16 %v5040
    %v5137 = vunpack.c.l.b16 %v5041
    %v5138 = vunpack.c.l.b16 %v5042
    %v5139 = vunpack.c.l.b16 %v5043
    %v5140 = vunpack.c.l.b16 %v5044
    %v5141 = vunpack.c.l.b16 %v5045
    %v5142 = vunpack.c.l.b16 %v5046
    %v5143 = vunpack.c.l.b16 %v5047
    %v5144 = vunpack.c.l.b16 %v5048
    %v5145 = vunpack.c.l.b16 %v5049
    %v5146 = vunpack.c.l.b16 %v5050
    %v5147 = vunpack.c.l.b16 %v5051
    %v5148 = vunpack.c.l.b16 %v5052
    %v5149 = vunpack.c.l.b16 %v5053
    %v5150 = vunpack.c.l.b16 %v5054
    %v5151 = vunpack.c.l.b16 %v5055
    %v5152 = vunpack.c.l.b16 %v5056
    %v5153 = vunpack.c.l.b16 %v5057
    %v5154 = vunpack.c.l.b16 %v5058
    %v5155 = vunpack.c.l.b16 %v5059
    %v5156 = vunpack.c.l.b16 %v5060
    %v5157 = vunpack.c.l.b16 %v5061
    %v5158 = vunpack.c.l.b16 %v5062
    %v5159 = vunpack.c.l.b16 %v5063
    %v5160 = vunpack.c.l.b16 %v5064
    %v5161 = vunpack.c.l.b16 %v5065
    %v5162 = vunpack.c.l.b16 %v5066
    %v5163 = vunpack.c.l.b16 %v5067
    %v5164 = vunpack.c.l.b16 %v5068
    %v5165 = vunpack.c.l.b16 %v5069
    %v5166 = vunpack.c.l.b16 %v5070
    %v5167 = vunpack.c.l.b16 %v5071
    %v5168 = vunpack.c.l.b16 %v5072
    %v5169 = vunpack.c.l.b16 %v5073
    %v5170 = vunpack.c.l.b16 %v5074
    %v5171 = vunpack.c.l.b16 %v5075
    %v5172 = vunpack.c.l.b16 %v5076
    %v5173 = vunpack.c.l.b16 %v5077
    %v5174 = vunpack.c.l.b16 %v5078
    %v5175 = vunpack.c.l.b16 %v5079
    %v5176 = vunpack.c.l.b16 %v5080
    %v5177 = vunpack.c.l.b16 %v5081
    %v5178 = vunpack.c.l.b16 %v5082
    %v5179 = vpack.c.b16 %v5132, %v5131
    %v5180 = vpack.c.b16 %v5134, %v5133
    %v5181 = vpack.c.b16 %v5136, %v5135
    %v5182 = vpack.c.b16 %v5138, %v5137
    %v5183 = vpack.c.b16 %v5140, %v5139
    %v5184 = vpack.c.b16 %v5142, %v5141
    %v5185 = vpack.c.b16 %v5144, %v5143
    %v5186 = vpack.c.b16 %v5146, %v5145
    %v5187 = vpack.c.b16 %v5148, %v5147
    %v5188 = vpack.c.b16 %v5150, %v5149
    %v5189 = vpack.c.b16 %v5152, %v5151
    %v5190 = vpack.c.b16 %v5154, %v5153
    %v5191 = vpack.c.b16 %v5156, %v5155
    %v5192 = vpack.c.b16 %v5158, %v5157
    %v5193 = vpack.c.b16 %v5160, %v5159
    %v5194 = vpack.c.b16 %v5162, %v5161
    %v5195 = vpack.c.b16 %v5164, %v5163
    %v5196 = vpack.c.b16 %v5166, %v5165
    %v5197 = vpack.c.b16 %v5168, %v5167
    %v5198 = vpack.c.b16 %v5170, %v5169
    %v5199 = vpack.c.b16 %v5172, %v5171
    %v5200 = vpack.c.b16 %v5174, %v5173
    %v5201 = vpack.c.b16 %v5176, %v5175
    %v5202 = vpack.c.b16 %v5178, %v5177
    %5227 = vmatprep.subr.bf16.mxu0 0
    %5228 = vmatpush1.bf16.msra.mxu0 %v5179
    %5229 = vmatprep.subr.bf16.mxu0 0
    %5230 = vmatpush1.bf16.msra.mxu0 %v5180
    %5231 = vmatprep.subr.bf16.mxu0 0
    %5232 = vmatpush1.bf16.msra.mxu0 %v5181
    %5233 = vmatprep.subr.bf16.mxu0 0
    %5234 = vmatpush1.bf16.msra.mxu0 %v5182
    %5235 = vmatprep.subr.bf16.mxu0 0
    %5236 = vmatpush1.bf16.msra.mxu0 %v5183
    %5237 = vmatprep.subr.bf16.mxu0 0
    %5238 = vmatpush1.bf16.msra.mxu0 %v5184
    %5239 = vmatprep.subr.bf16.mxu0 0
    %5240 = vmatpush1.bf16.msra.mxu0 %v5185
    %5241 = vmatprep.subr.bf16.mxu0 0
    %5242 = vmatpush1.bf16.msra.mxu0 %v5186
    %5243 = vmatprep.subr.bf16.mxu0 0
    %5244 = vmatpush1.bf16.msra.mxu0 %v5187
    %5245 = vmatprep.subr.bf16.mxu0 0
    %5246 = vmatpush1.bf16.msra.mxu0 %v5188
    %5247 = vmatprep.subr.bf16.mxu0 0
    %5248 = vmatpush1.bf16.msra.mxu0 %v5189
    %5249 = vmatprep.subr.bf16.mxu0 0
    %5250 = vmatpush1.bf16.msra.mxu0 %v5190
    %5251 = vmatprep.subr.bf16.mxu0 0
    %5252 = vmatpush1.bf16.msra.mxu0 %v5191
    %5253 = vmatprep.subr.bf16.mxu0 0
    %5254 = vmatpush1.bf16.msra.mxu0 %v5192
    %5255 = vmatprep.subr.bf16.mxu0 0
    %5256 = vmatpush1.bf16.msra.mxu0 %v5193
    %5257 = vmatprep.subr.bf16.mxu0 0
    %5258 = vmatpush1.bf16.msra.mxu0 %v5194
    %5259 = vmatprep.mubr.bf16.mxu0 %v4939
    %5260 = vmatmul.mubr.bf16.gmra.mrb[0].mxu0 %v4938
    %v5261 = vpop.f32.mrb[0].mxu0
    %v5262 = vadd.f32 0.0, %v5261
    %v5263 = vpop.f32.mrb[0].mxu0
    %v5264 = vpop.f32.mrb[0].mxu0
    %v5265 = vadd.f32 0.0, %v5264
    %v5266 = vpop.f32.mrb[0].mxu0
    %5267 = vmatprep.mubr.bf16.mxu0 %v4942
    %5268 = vmatmul.mubr.bf16.gmra.mrb[0].mxu0 %v4941
    %v5269 = vpop.f32.mrb[0].mxu0
    %v5270 = vadd.f32 0.0, %v5269
    %v5271 = vpop.f32.mrb[0].mxu0
    %v5272 = vpop.f32.mrb[0].mxu0
    %v5273 = vadd.f32 0.0, %v5272
    %v5274 = vpop.f32.mrb[0].mxu0
    %5275 = vmatprep.mubr.bf16.mxu0 %v4945
    %5276 = vmatmul.mubr.bf16.gmra.mrb[0].mxu0 %v4944
    %v5277 = vpop.f32.mrb[0].mxu0
    %v5278 = vadd.f32 0.0, %v5277
    %v5279 = vpop.f32.mrb[0].mxu0
    %v5280 = vpop.f32.mrb[0].mxu0
    %v5281 = vadd.f32 0.0, %v5280
    %v5282 = vpop.f32.mrb[0].mxu0
    %5283 = vmatprep.mubr.bf16.mxu0 %v4948
    %5284 = vmatmul.mubr.bf16.gmra.mrb[0].mxu0 %v4947
    %v5285 = vpop.f32.mrb[0].mxu0
    %v5286 = vadd.f32 0.0, %v5285
    %v5287 = vpop.f32.mrb[0].mxu0
    %v5288 = vpop.f32.mrb[0].mxu0
    %v5289 = vadd.f32 0.0, %v5288
    %v5290 = vpop.f32.mrb[0].mxu0
    %5291 = vmatprep.mubr.bf16.mxu0 %v4951
    %5292 = vmatmul.mubr.bf16.gmra.mrb[0].mxu0 %v4950
    %v5293 = vpop.f32.mrb[0].mxu0
    %v5294 = vadd.f32 0.0, %v5293
    %v5295 = vpop.f32.mrb[0].mxu0
    %v5296 = vpop.f32.mrb[0].mxu0
    %v5297 = vadd.f32 0.0, %v5296
    %v5298 = vpop.f32.mrb[0].mxu0
    %5299 = vmatprep.mubr.bf16.mxu0 %v4954
    %5300 = vmatmul.mubr.bf16.gmra.mrb[0].mxu0 %v4953
    %v5301 = vpop.f32.mrb[0].mxu0
    %v5302 = vadd.f32 0.0, %v5301
    %v5303 = vpop.f32.mrb[0].mxu0
    %v5304 = vpop.f32.mrb[0].mxu0
    %v5305 = vadd.f32 0.0, %v5304
    %v5306 = vpop.f32.mrb[0].mxu0
    %5307 = vmatprep.mubr.bf16.mxu0 %v4957
    %5308 = vmatmul.mubr.bf16.gmra.mrb[0].mxu0 %v4956
    %v5309 = vpop.f32.mrb[0].mxu0
    %v5310 = vadd.f32 0.0, %v5309
    %v5311 = vpop.f32.mrb[0].mxu0
    %v5312 = vpop.f32.mrb[0].mxu0
    %v5313 = vadd.f32 0.0, %v5312
    %v5314 = vpop.f32.mrb[0].mxu0
    %5315 = vmatprep.mubr.bf16.mxu0 %v4960
    %5316 = vmatmul.mubr.bf16.gmra.mrb[0].mxu0 %v4959
    %v5317 = vpop.f32.mrb[0].mxu0
    %v5318 = vadd.f32 0.0, %v5317
    %v5319 = vpop.f32.mrb[0].mxu0
    %v5320 = vpop.f32.mrb[0].mxu0
    %v5321 = vadd.f32 0.0, %v5320
    %v5322 = vpop.f32.mrb[0].mxu0
    %5323 = vmatprep.mubr.bf16.mxu0 %v4963
    %5324 = vmatmul.mubr.bf16.gmra.mrb[0].mxu0 %v4962
    %v5325 = vpop.f32.mrb[0].mxu0
    %v5326 = vadd.f32 0.0, %v5325
    %v5327 = vpop.f32.mrb[0].mxu0
    %v5328 = vpop.f32.mrb[0].mxu0
    %v5329 = vadd.f32 0.0, %v5328
    %v5330 = vpop.f32.mrb[0].mxu0
    %5331 = vmatprep.mubr.bf16.mxu0 %v4966
    %5332 = vmatmul.mubr.bf16.gmra.mrb[0].mxu0 %v4965
    %v5333 = vpop.f32.mrb[0].mxu0
    %v5334 = vadd.f32 0.0, %v5333
    %v5335 = vpop.f32.mrb[0].mxu0
    %v5336 = vpop.f32.mrb[0].mxu0
    %v5337 = vadd.f32 0.0, %v5336
    %v5338 = vpop.f32.mrb[0].mxu0
    %5339 = vmatprep.mubr.bf16.mxu0 %v4969
    %5340 = vmatmul.mubr.bf16.gmra.mrb[0].mxu0 %v4968
    %v5341 = vpop.f32.mrb[0].mxu0
    %v5342 = vadd.f32 0.0, %v5341
    %v5343 = vpop.f32.mrb[0].mxu0
    %v5344 = vpop.f32.mrb[0].mxu0
    %v5345 = vadd.f32 0.0, %v5344
    %v5346 = vpop.f32.mrb[0].mxu0
    %5347 = vmatprep.mubr.bf16.mxu0 %v4972
    %5348 = vmatmul.mubr.bf16.gmra.mrb[0].mxu0 %v4971
    %v5349 = vpop.f32.mrb[0].mxu0
    %v5350 = vadd.f32 0.0, %v5349
    %v5351 = vpop.f32.mrb[0].mxu0
    %v5352 = vpop.f32.mrb[0].mxu0
    %v5353 = vadd.f32 0.0, %v5352
    %v5354 = vpop.f32.mrb[0].mxu0
    %5355 = vmatprep.mubr.bf16.mxu0 %v4975
    %5356 = vmatmul.mubr.bf16.gmra.mrb[0].mxu0 %v4974
    %v5357 = vpop.f32.mrb[0].mxu0
    %v5358 = vadd.f32 0.0, %v5357
    %v5359 = vpop.f32.mrb[0].mxu0
    %v5360 = vpop.f32.mrb[0].mxu0
    %v5361 = vadd.f32 0.0, %v5360
    %v5362 = vpop.f32.mrb[0].mxu0
    %5363 = vmatprep.mubr.bf16.mxu0 %v4978
    %5364 = vmatmul.mubr.bf16.gmra.mrb[0].mxu0 %v4977
    %v5365 = vpop.f32.mrb[0].mxu0
    %v5366 = vadd.f32 0.0, %v5365
    %v5367 = vpop.f32.mrb[0].mxu0
    %v5368 = vpop.f32.mrb[0].mxu0
    %v5369 = vadd.f32 0.0, %v5368
    %v5370 = vpop.f32.mrb[0].mxu0
    %5371 = vmatprep.mubr.bf16.mxu0 %v4981
    %5372 = vmatmul.mubr.bf16.gmra.mrb[0].mxu0 %v4980
    %v5373 = vpop.f32.mrb[0].mxu0
    %v5374 = vadd.f32 0.0, %v5373
    %v5375 = vpop.f32.mrb[0].mxu0
    %v5376 = vpop.f32.mrb[0].mxu0
    %v5377 = vadd.f32 0.0, %v5376
    %v5378 = vpop.f32.mrb[0].mxu0
    %5379 = vmatprep.mubr.bf16.mxu0 %v4984
    %5380 = vmatmul.mubr.bf16.gmra.mrb[0].mxu0 %v4983
    %v5381 = vpop.f32.mrb[0].mxu0
    %v5382 = vadd.f32 0.0, %v5381
    %v5383 = vpop.f32.mrb[0].mxu0
    %v5384 = vpop.f32.mrb[0].mxu0
    %v5385 = vadd.f32 0.0, %v5384
    %v5386 = vpop.f32.mrb[0].mxu0
    %5387 = vmatprep.mubr.bf16.mxu0 %v4987
    %5388 = vmatmul.mubr.bf16.gmra.mrb[0].mxu0 %v4986
    %v5389 = vpop.f32.mrb[0].mxu0
    %v5390 = vadd.f32 0.0, %v5389
    %v5391 = vpop.f32.mrb[0].mxu0
    %v5392 = vpop.f32.mrb[0].mxu0
    %v5393 = vadd.f32 0.0, %v5392
    %v5394 = vpop.f32.mrb[0].mxu0
    %5395 = vmatprep.mubr.bf16.mxu0 %v4990
    %5396 = vmatmul.mubr.bf16.gmra.mrb[0].mxu0 %v4989
    %v5397 = vpop.f32.mrb[0].mxu0
    %v5398 = vadd.f32 0.0, %v5397
    %v5399 = vpop.f32.mrb[0].mxu0
    %v5400 = vpop.f32.mrb[0].mxu0
    %v5401 = vadd.f32 0.0, %v5400
    %v5402 = vpop.f32.mrb[0].mxu0
    %5403 = vmatprep.mubr.bf16.mxu0 %v4993
    %5404 = vmatmul.mubr.bf16.gmra.mrb[0].mxu0 %v4992
    %v5405 = vpop.f32.mrb[0].mxu0
    %v5406 = vadd.f32 0.0, %v5405
    %v5407 = vpop.f32.mrb[0].mxu0
    %v5408 = vpop.f32.mrb[0].mxu0
    %v5409 = vadd.f32 0.0, %v5408
    %v5410 = vpop.f32.mrb[0].mxu0
    %5411 = vmatprep.mubr.bf16.mxu0 %v4996
    %5412 = vmatmul.mubr.bf16.gmra.mrb[0].mxu0 %v4995
    %v5413 = vpop.f32.mrb[0].mxu0
    %v5414 = vadd.f32 0.0, %v5413
    %v5415 = vpop.f32.mrb[0].mxu0
    %v5416 = vpop.f32.mrb[0].mxu0
    %v5417 = vadd.f32 0.0, %v5416
    %v5418 = vpop.f32.mrb[0].mxu0
    %5419 = vmatprep.mubr.bf16.mxu0 %v4999
    %5420 = vmatmul.mubr.bf16.gmra.mrb[0].mxu0 %v4998
    %v5421 = vpop.f32.mrb[0].mxu0
    %v5422 = vadd.f32 0.0, %v5421
    %v5423 = vpop.f32.mrb[0].mxu0
    %v5424 = vpop.f32.mrb[0].mxu0
    %v5425 = vadd.f32 0.0, %v5424
    %v5426 = vpop.f32.mrb[0].mxu0
    %5427 = vmatprep.mubr.bf16.mxu0 %v5002
    %5428 = vmatmul.mubr.bf16.gmra.mrb[0].mxu0 %v5001
    %v5429 = vpop.f32.mrb[0].mxu0
    %v5430 = vadd.f32 0.0, %v5429
    %v5431 = vpop.f32.mrb[0].mxu0
    %v5432 = vpop.f32.mrb[0].mxu0
    %v5433 = vadd.f32 0.0, %v5432
    %v5434 = vpop.f32.mrb[0].mxu0
    %5435 = vmatprep.mubr.bf16.mxu0 %v5005
    %5436 = vmatmul.mubr.bf16.gmra.mrb[0].mxu0 %v5004
    %v5437 = vpop.f32.mrb[0].mxu0
    %v5438 = vadd.f32 0.0, %v5437
    %v5439 = vpop.f32.mrb[0].mxu0
    %v5440 = vpop.f32.mrb[0].mxu0
    %v5441 = vadd.f32 0.0, %v5440
    %v5442 = vpop.f32.mrb[0].mxu0
    %5443 = vmatprep.mubr.bf16.mxu0 %v5008
    %5444 = vmatmul.mubr.bf16.gmra.mrb[0].mxu0 %v5007
    %v5445 = vpop.f32.mrb[0].mxu0
    %v5446 = vadd.f32 0.0, %v5445
    %v5447 = vpop.f32.mrb[0].mxu0
    %v5448 = vpop.f32.mrb[0].mxu0
    %v5449 = vadd.f32 0.0, %v5448
    %v5450 = vpop.f32.mrb[0].mxu0
    %5451 = vmatprep.mubr.bf16.mxu0 %v5011
    %5452 = vmatmul.mubr.bf16.gmra.mrb[0].mxu0 %v5010
    %v5453 = vpop.f32.mrb[0].mxu0
    %v5454 = vadd.f32 0.0, %v5453
    %v5455 = vpop.f32.mrb[0].mxu0
    %v5456 = vpop.f32.mrb[0].mxu0
    %v5457 = vadd.f32 0.0, %v5456
    %v5458 = vpop.f32.mrb[0].mxu0
    %5459 = vmatprep.mubr.bf16.mxu0 %v5014
    %5460 = vmatmul.mubr.bf16.gmra.mrb[0].mxu0 %v5013
    %v5461 = vpop.f32.mrb[0].mxu0
    %v5462 = vadd.f32 0.0, %v5461
    %v5463 = vpop.f32.mrb[0].mxu0
    %v5464 = vpop.f32.mrb[0].mxu0
    %v5465 = vadd.f32 0.0, %v5464
    %v5466 = vpop.f32.mrb[0].mxu0
    %5467 = vmatprep.mubr.bf16.mxu0 %v5017
    %5468 = vmatmul.mubr.bf16.gmra.mrb[0].mxu0 %v5016
    %v5469 = vpop.f32.mrb[0].mxu0
    %v5470 = vadd.f32 0.0, %v5469
    %v5471 = vpop.f32.mrb[0].mxu0
    %v5472 = vpop.f32.mrb[0].mxu0
    %v5473 = vadd.f32 0.0, %v5472
    %v5474 = vpop.f32.mrb[0].mxu0
    %5475 = vmatprep.mubr.bf16.mxu0 %v5020
    %5476 = vmatmul.mubr.bf16.gmra.mrb[0].mxu0 %v5019
    %v5477 = vpop.f32.mrb[0].mxu0
    %v5478 = vadd.f32 0.0, %v5477
    %v5479 = vpop.f32.mrb[0].mxu0
    %v5480 = vpop.f32.mrb[0].mxu0
    %v5481 = vadd.f32 0.0, %v5480
    %v5482 = vpop.f32.mrb[0].mxu0
    %5483 = vmatprep.mubr.bf16.mxu0 %v5023
    %5484 = vmatmul.mubr.bf16.gmra.mrb[0].mxu0 %v5022
    %v5485 = vpop.f32.mrb[0].mxu0
    %v5486 = vadd.f32 0.0, %v5485
    %v5487 = vpop.f32.mrb[0].mxu0
    %v5488 = vpop.f32.mrb[0].mxu0
    %v5489 = vadd.f32 0.0, %v5488
    %v5490 = vpop.f32.mrb[0].mxu0
    %5491 = vmatprep.mubr.bf16.mxu0 %v5026
    %5492 = vmatmul.mubr.bf16.gmra.mrb[0].mxu0 %v5025
    %v5493 = vpop.f32.mrb[0].mxu0
    %v5494 = vadd.f32 0.0, %v5493
    %v5495 = vpop.f32.mrb[0].mxu0
    %v5496 = vpop.f32.mrb[0].mxu0
    %v5497 = vadd.f32 0.0, %v5496
    %v5498 = vpop.f32.mrb[0].mxu0
    %5499 = vmatprep.mubr.bf16.mxu0 %v5029
    %5500 = vmatmul.mubr.bf16.gmra.mrb[0].mxu0 %v5028
    %v5501 = vpop.f32.mrb[0].mxu0
    %v5502 = vadd.f32 0.0, %v5501
    %v5503 = vpop.f32.mrb[0].mxu0
    %v5504 = vpop.f32.mrb[0].mxu0
    %v5505 = vadd.f32 0.0, %v5504
    %v5506 = vpop.f32.mrb[0].mxu0
    %5507 = vmatprep.mubr.bf16.mxu0 %v5032
    %5508 = vmatmul.mubr.bf16.gmra.mrb[0].mxu0 %v5031
    %v5509 = vpop.f32.mrb[0].mxu0
    %v5510 = vadd.f32 0.0, %v5509
    %v5511 = vpop.f32.mrb[0].mxu0
    %v5512 = vpop.f32.mrb[0].mxu0
    %v5513 = vadd.f32 0.0, %v5512
    %v5514 = vpop.f32.mrb[0].mxu0
    %5515 = vdwg.mxu0
    %5516 = vmatprep.subr.bf16.mxu0 0
    %5517 = vmatpush1.bf16.msra.mxu0 %v5195
    %5518 = vmatprep.subr.bf16.mxu0 0
    %5519 = vmatpush1.bf16.msra.mxu0 %v5196
    %5520 = vmatprep.subr.bf16.mxu0 0
    %5521 = vmatpush1.bf16.msra.mxu0 %v5197
    %5522 = vmatprep.subr.bf16.mxu0 0
    %5523 = vmatpush1.bf16.msra.mxu0 %v5198
    %5524 = vmatprep.subr.bf16.mxu0 0
    %5525 = vmatpush1.bf16.msra.mxu0 %v5199
    %5526 = vmatprep.subr.bf16.mxu0 0
    %5527 = vmatpush1.bf16.msra.mxu0 %v5200
    %5528 = vmatprep.subr.bf16.mxu0 0
    %5529 = vmatpush1.bf16.msra.mxu0 %v5201
    %5530 = vmatprep.subr.bf16.mxu0 0
    %5531 = vmatpush1.bf16.msra.mxu0 %v5202
    %5532 = vmatprep.subr.bf16.mxu0 0
    %5533 = vmatpush1.bf16.msra.mxu0 0
    %5534 = vmatprep.subr.bf16.mxu0 0
    %5535 = vmatpush1.bf16.msra.mxu0 0
    %5536 = vmatprep.subr.bf16.mxu0 0
    %5537 = vmatpush1.bf16.msra.mxu0 0
    %5538 = vmatprep.subr.bf16.mxu0 0
    %5539 = vmatpush1.bf16.msra.mxu0 0
    %5540 = vmatprep.subr.bf16.mxu0 0
    %5541 = vmatpush1.bf16.msra.mxu0 0
    %5542 = vmatprep.subr.bf16.mxu0 0
    %5543 = vmatpush1.bf16.msra.mxu0 0
    %5544 = vmatprep.subr.bf16.mxu0 0
    %5545 = vmatpush1.bf16.msra.mxu0 0
    %5546 = vmatprep.subr.bf16.mxu0 0
    %5547 = vmatpush1.bf16.msra.mxu0 0
    %5548 = vmatprep.mubr.bf16.mxu0 0
    %5549 = vmatmul.mubr.bf16.gmra.mrb[0].mxu0 %v4940
    %v5550 = vpop.f32.mrb[0].mxu0
    %v5551 = vadd.f32 %v5262, %v5550
    %v5552 = vpop.f32.mrb[0].mxu0
    %v5553 = vpop.f32.mrb[0].mxu0
    %v5554 = vadd.f32 %v5265, %v5553
    %v5555 = vpop.f32.mrb[0].mxu0
    %5556 = vmatprep.mubr.bf16.mxu0 0
    %5557 = vmatmul.mubr.bf16.gmra.mrb[0].mxu0 %v4943
    %v5558 = vpop.f32.mrb[0].mxu0
    %v5559 = vadd.f32 %v5270, %v5558
    %v5560 = vpop.f32.mrb[0].mxu0
    %v5561 = vpop.f32.mrb[0].mxu0
    %v5562 = vadd.f32 %v5273, %v5561
    %v5563 = vpop.f32.mrb[0].mxu0
    %5564 = vmatprep.mubr.bf16.mxu0 0
    %5565 = vmatmul.mubr.bf16.gmra.mrb[0].mxu0 %v4946
    %v5566 = vpop.f32.mrb[0].mxu0
    %v5567 = vadd.f32 %v5278, %v5566
    %v5568 = vpop.f32.mrb[0].mxu0
    %v5569 = vpop.f32.mrb[0].mxu0
    %v5570 = vadd.f32 %v5281, %v5569
    %v5571 = vpop.f32.mrb[0].mxu0
    %5572 = vmatprep.mubr.bf16.mxu0 0
    %5573 = vmatmul.mubr.bf16.gmra.mrb[0].mxu0 %v4949
    %v5574 = vpop.f32.mrb[0].mxu0
    %v5575 = vadd.f32 %v5286, %v5574
    %v5576 = vpop.f32.mrb[0].mxu0
    %v5577 = vpop.f32.mrb[0].mxu0
    %v5578 = vadd.f32 %v5289, %v5577
    %v5579 = vpop.f32.mrb[0].mxu0
    %5580 = vmatprep.mubr.bf16.mxu0 0
    %5581 = vmatmul.mubr.bf16.gmra.mrb[0].mxu0 %v4952
    %v5582 = vpop.f32.mrb[0].mxu0
    %v5583 = vadd.f32 %v5294, %v5582
    %v5584 = vpop.f32.mrb[0].mxu0
    %v5585 = vpop.f32.mrb[0].mxu0
    %v5586 = vadd.f32 %v5297, %v5585
    %v5587 = vpop.f32.mrb[0].mxu0
    %5588 = vmatprep.mubr.bf16.mxu0 0
    %5589 = vmatmul.mubr.bf16.gmra.mrb[0].mxu0 %v4955
    %v5590 = vpop.f32.mrb[0].mxu0
    %v5591 = vadd.f32 %v5302, %v5590
    %v5592 = vpop.f32.mrb[0].mxu0
    %v5593 = vpop.f32.mrb[0].mxu0
    %v5594 = vadd.f32 %v5305, %v5593
    %v5595 = vpop.f32.mrb[0].mxu0
    %5596 = vmatprep.mubr.bf16.mxu0 0
    %5597 = vmatmul.mubr.bf16.gmra.mrb[0].mxu0 %v4958
    %v5598 = vpop.f32.mrb[0].mxu0
    %v5599 = vadd.f32 %v5310, %v5598
    %v5600 = vpop.f32.mrb[0].mxu0
    %v5601 = vpop.f32.mrb[0].mxu0
    %v5602 = vadd.f32 %v5313, %v5601
    %v5603 = vpop.f32.mrb[0].mxu0
    %5604 = vmatprep.mubr.bf16.mxu0 0
    %5605 = vmatmul.mubr.bf16.gmra.mrb[0].mxu0 %v4961
    %v5606 = vpop.f32.mrb[0].mxu0
    %v5607 = vadd.f32 %v5318, %v5606
    %v5608 = vpop.f32.mrb[0].mxu0
    %v5609 = vpop.f32.mrb[0].mxu0
    %v5610 = vadd.f32 %v5321, %v5609
    %v5611 = vpop.f32.mrb[0].mxu0
    %5612 = vmatprep.mubr.bf16.mxu0 0
    %5613 = vmatmul.mubr.bf16.gmra.mrb[0].mxu0 %v4964
    %v5614 = vpop.f32.mrb[0].mxu0
    %v5615 = vadd.f32 %v5326, %v5614
    %v5616 = vpop.f32.mrb[0].mxu0
    %v5617 = vpop.f32.mrb[0].mxu0
    %v5618 = vadd.f32 %v5329, %v5617
    %v5619 = vpop.f32.mrb[0].mxu0
    %5620 = vmatprep.mubr.bf16.mxu0 0
    %5621 = vmatmul.mubr.bf16.gmra.mrb[0].mxu0 %v4967
    %v5622 = vpop.f32.mrb[0].mxu0
    %v5623 = vadd.f32 %v5334, %v5622
    %v5624 = vpop.f32.mrb[0].mxu0
    %v5625 = vpop.f32.mrb[0].mxu0
    %v5626 = vadd.f32 %v5337, %v5625
    %v5627 = vpop.f32.mrb[0].mxu0
    %5628 = vmatprep.mubr.bf16.mxu0 0
    %5629 = vmatmul.mubr.bf16.gmra.mrb[0].mxu0 %v4970
    %v5630 = vpop.f32.mrb[0].mxu0
    %v5631 = vadd.f32 %v5342, %v5630
    %v5632 = vpop.f32.mrb[0].mxu0
    %v5633 = vpop.f32.mrb[0].mxu0
    %v5634 = vadd.f32 %v5345, %v5633
    %v5635 = vpop.f32.mrb[0].mxu0
    %5636 = vmatprep.mubr.bf16.mxu0 0
    %5637 = vmatmul.mubr.bf16.gmra.mrb[0].mxu0 %v4973
    %v5638 = vpop.f32.mrb[0].mxu0
    %v5639 = vadd.f32 %v5350, %v5638
    %v5640 = vpop.f32.mrb[0].mxu0
    %v5641 = vpop.f32.mrb[0].mxu0
    %v5642 = vadd.f32 %v5353, %v5641
    %v5643 = vpop.f32.mrb[0].mxu0
    %5644 = vmatprep.mubr.bf16.mxu0 0
    %5645 = vmatmul.mubr.bf16.gmra.mrb[0].mxu0 %v4976
    %v5646 = vpop.f32.mrb[0].mxu0
    %v5647 = vadd.f32 %v5358, %v5646
    %v5648 = vpop.f32.mrb[0].mxu0
    %v5649 = vpop.f32.mrb[0].mxu0
    %v5650 = vadd.f32 %v5361, %v5649
    %v5651 = vpop.f32.mrb[0].mxu0
    %5652 = vmatprep.mubr.bf16.mxu0 0
    %5653 = vmatmul.mubr.bf16.gmra.mrb[0].mxu0 %v4979
    %v5654 = vpop.f32.mrb[0].mxu0
    %v5655 = vadd.f32 %v5366, %v5654
    %v5656 = vpop.f32.mrb[0].mxu0
    %v5657 = vpop.f32.mrb[0].mxu0
    %v5658 = vadd.f32 %v5369, %v5657
    %v5659 = vpop.f32.mrb[0].mxu0
    %5660 = vmatprep.mubr.bf16.mxu0 0
    %5661 = vmatmul.mubr.bf16.gmra.mrb[0].mxu0 %v4982
    %v5662 = vpop.f32.mrb[0].mxu0
    %v5663 = vadd.f32 %v5374, %v5662
    %v5664 = vpop.f32.mrb[0].mxu0
    %v5665 = vpop.f32.mrb[0].mxu0
    %v5666 = vadd.f32 %v5377, %v5665
    %v5667 = vpop.f32.mrb[0].mxu0
    %5668 = vmatprep.mubr.bf16.mxu0 0
    %5669 = vmatmul.mubr.bf16.gmra.mrb[0].mxu0 %v4985
    %v5670 = vpop.f32.mrb[0].mxu0
    %v5671 = vadd.f32 %v5382, %v5670
    %v5672 = vpop.f32.mrb[0].mxu0
    %v5673 = vpop.f32.mrb[0].mxu0
    %v5674 = vadd.f32 %v5385, %v5673
    %v5675 = vpop.f32.mrb[0].mxu0
    %5676 = vmatprep.mubr.bf16.mxu0 0
    %5677 = vmatmul.mubr.bf16.gmra.mrb[0].mxu0 %v4988
    %v5678 = vpop.f32.mrb[0].mxu0
    %v5679 = vadd.f32 %v5390, %v5678
    %v5680 = vpop.f32.mrb[0].mxu0
    %v5681 = vpop.f32.mrb[0].mxu0
    %v5682 = vadd.f32 %v5393, %v5681
    %v5683 = vpop.f32.mrb[0].mxu0
    %5684 = vmatprep.mubr.bf16.mxu0 0
    %5685 = vmatmul.mubr.bf16.gmra.mrb[0].mxu0 %v4991
    %v5686 = vpop.f32.mrb[0].mxu0
    %v5687 = vadd.f32 %v5398, %v5686
    %v5688 = vpop.f32.mrb[0].mxu0
    %v5689 = vpop.f32.mrb[0].mxu0
    %v5690 = vadd.f32 %v5401, %v5689
    %v5691 = vpop.f32.mrb[0].mxu0
    %5692 = vmatprep.mubr.bf16.mxu0 0
    %5693 = vmatmul.mubr.bf16.gmra.mrb[0].mxu0 %v4994
    %v5694 = vpop.f32.mrb[0].mxu0
    %v5695 = vadd.f32 %v5406, %v5694
    %v5696 = vpop.f32.mrb[0].mxu0
    %v5697 = vpop.f32.mrb[0].mxu0
    %v5698 = vadd.f32 %v5409, %v5697
    %v5699 = vpop.f32.mrb[0].mxu0
    %5700 = vmatprep.mubr.bf16.mxu0 0
    %5701 = vmatmul.mubr.bf16.gmra.mrb[0].mxu0 %v4997
    %v5702 = vpop.f32.mrb[0].mxu0
    %v5703 = vadd.f32 %v5414, %v5702
    %v5704 = vpop.f32.mrb[0].mxu0
    %v5705 = vpop.f32.mrb[0].mxu0
    %v5706 = vadd.f32 %v5417, %v5705
    %v5707 = vpop.f32.mrb[0].mxu0
    %5708 = vmatprep.mubr.bf16.mxu0 0
    %5709 = vmatmul.mubr.bf16.gmra.mrb[0].mxu0 %v5000
    %v5710 = vpop.f32.mrb[0].mxu0
    %v5711 = vadd.f32 %v5422, %v5710
    %v5712 = vpop.f32.mrb[0].mxu0
    %v5713 = vpop.f32.mrb[0].mxu0
    %v5714 = vadd.f32 %v5425, %v5713
    %v5715 = vpop.f32.mrb[0].mxu0
    %5716 = vmatprep.mubr.bf16.mxu0 0
    %5717 = vmatmul.mubr.bf16.gmra.mrb[0].mxu0 %v5003
    %v5718 = vpop.f32.mrb[0].mxu0
    %v5719 = vadd.f32 %v5430, %v5718
    %v5720 = vpop.f32.mrb[0].mxu0
    %v5721 = vpop.f32.mrb[0].mxu0
    %v5722 = vadd.f32 %v5433, %v5721
    %v5723 = vpop.f32.mrb[0].mxu0
    %5724 = vmatprep.mubr.bf16.mxu0 0
    %5725 = vmatmul.mubr.bf16.gmra.mrb[0].mxu0 %v5006
    %v5726 = vpop.f32.mrb[0].mxu0
    %v5727 = vadd.f32 %v5438, %v5726
    %v5728 = vpop.f32.mrb[0].mxu0
    %v5729 = vpop.f32.mrb[0].mxu0
    %v5730 = vadd.f32 %v5441, %v5729
    %v5731 = vpop.f32.mrb[0].mxu0
    %5732 = vmatprep.mubr.bf16.mxu0 0
    %5733 = vmatmul.mubr.bf16.gmra.mrb[0].mxu0 %v5009
    %v5734 = vpop.f32.mrb[0].mxu0
    %v5735 = vadd.f32 %v5446, %v5734
    %v5736 = vpop.f32.mrb[0].mxu0
    %v5737 = vpop.f32.mrb[0].mxu0
    %v5738 = vadd.f32 %v5449, %v5737
    %v5739 = vpop.f32.mrb[0].mxu0
    %5740 = vmatprep.mubr.bf16.mxu0 0
    %5741 = vmatmul.mubr.bf16.gmra.mrb[0].mxu0 %v5012
    %v5742 = vpop.f32.mrb[0].mxu0
    %v5743 = vadd.f32 %v5454, %v5742
    %v5744 = vpop.f32.mrb[0].mxu0
    %v5745 = vpop.f32.mrb[0].mxu0
    %v5746 = vadd.f32 %v5457, %v5745
    %v5747 = vpop.f32.mrb[0].mxu0
    %5748 = vmatprep.mubr.bf16.mxu0 0
    %5749 = vmatmul.mubr.bf16.gmra.mrb[0].mxu0 %v5015
    %v5750 = vpop.f32.mrb[0].mxu0
    %v5751 = vadd.f32 %v5462, %v5750
    %v5752 = vpop.f32.mrb[0].mxu0
    %v5753 = vpop.f32.mrb[0].mxu0
    %v5754 = vadd.f32 %v5465, %v5753
    %v5755 = vpop.f32.mrb[0].mxu0
    %5756 = vmatprep.mubr.bf16.mxu0 0
    %5757 = vmatmul.mubr.bf16.gmra.mrb[0].mxu0 %v5018
    %v5758 = vpop.f32.mrb[0].mxu0
    %v5759 = vadd.f32 %v5470, %v5758
    %v5760 = vpop.f32.mrb[0].mxu0
    %v5761 = vpop.f32.mrb[0].mxu0
    %v5762 = vadd.f32 %v5473, %v5761
    %v5763 = vpop.f32.mrb[0].mxu0
    %5764 = vmatprep.mubr.bf16.mxu0 0
    %5765 = vmatmul.mubr.bf16.gmra.mrb[0].mxu0 %v5021
    %v5766 = vpop.f32.mrb[0].mxu0
    %v5767 = vadd.f32 %v5478, %v5766
    %v5768 = vpop.f32.mrb[0].mxu0
    %v5769 = vpop.f32.mrb[0].mxu0
    %v5770 = vadd.f32 %v5481, %v5769
    %v5771 = vpop.f32.mrb[0].mxu0
    %5772 = vmatprep.mubr.bf16.mxu0 0
    %5773 = vmatmul.mubr.bf16.gmra.mrb[0].mxu0 %v5024
    %v5774 = vpop.f32.mrb[0].mxu0
    %v5775 = vadd.f32 %v5486, %v5774
    %v5776 = vpop.f32.mrb[0].mxu0
    %v5777 = vpop.f32.mrb[0].mxu0
    %v5778 = vadd.f32 %v5489, %v5777
    %v5779 = vpop.f32.mrb[0].mxu0
    %5780 = vmatprep.mubr.bf16.mxu0 0
    %5781 = vmatmul.mubr.bf16.gmra.mrb[0].mxu0 %v5027
    %v5782 = vpop.f32.mrb[0].mxu0
    %v5783 = vadd.f32 %v5494, %v5782
    %v5784 = vpop.f32.mrb[0].mxu0
    %v5785 = vpop.f32.mrb[0].mxu0
    %v5786 = vadd.f32 %v5497, %v5785
    %v5787 = vpop.f32.mrb[0].mxu0
    %5788 = vmatprep.mubr.bf16.mxu0 0
    %5789 = vmatmul.mubr.bf16.gmra.mrb[0].mxu0 %v5030
    %v5790 = vpop.f32.mrb[0].mxu0
    %v5791 = vadd.f32 %v5502, %v5790
    %v5792 = vpop.f32.mrb[0].mxu0
    %v5793 = vpop.f32.mrb[0].mxu0
    %v5794 = vadd.f32 %v5505, %v5793
    %v5795 = vpop.f32.mrb[0].mxu0
    %5796 = vmatprep.mubr.bf16.mxu0 0
    %5797 = vmatmul.mubr.bf16.gmra.mrb[0].mxu0 %v5033
    %v5798 = vpop.f32.mrb[0].mxu0
    %v5799 = vadd.f32 %v5510, %v5798
    %v5800 = vpop.f32.mrb[0].mxu0
    %v5801 = vpop.f32.mrb[0].mxu0
    %v5802 = vadd.f32 %v5513, %v5801
    %v5803 = vpop.f32.mrb[0].mxu0
    %5804 = vdwg.mxu0
    %v5853 = vunpack.c.l.b16 %v4890
    %v5854 = vunpack.c.l.b16 %v4891
    %v5855 = vunpack.c.l.b16 %v4892
    %v5856 = vunpack.c.l.b16 %v4893
    %v5857 = vunpack.c.l.b16 %v4894
    %v5858 = vunpack.c.l.b16 %v4895
    %v5859 = vunpack.c.l.b16 %v4896
    %v5860 = vunpack.c.l.b16 %v4897
    %v5861 = vunpack.c.l.b16 %v4898
    %v5862 = vunpack.c.l.b16 %v4899
    %v5863 = vunpack.c.l.b16 %v4900
    %v5864 = vunpack.c.l.b16 %v4901
    %v5865 = vunpack.c.l.b16 %v4902
    %v5866 = vunpack.c.l.b16 %v4903
    %v5867 = vunpack.c.l.b16 %v4904
    %v5868 = vunpack.c.l.b16 %v4905
    %v5869 = vunpack.c.l.b16 %v4906
    %v5870 = vunpack.c.l.b16 %v4907
    %v5871 = vunpack.c.l.b16 %v4908
    %v5872 = vunpack.c.l.b16 %v4909
    %v5873 = vunpack.c.l.b16 %v4910
    %v5874 = vunpack.c.l.b16 %v4911
    %v5875 = vunpack.c.l.b16 %v4912
    %v5876 = vunpack.c.l.b16 %v4913
    %v5877 = vunpack.c.l.b16 %v4914
    %v5878 = vunpack.c.l.b16 %v4915
    %v5879 = vunpack.c.l.b16 %v4916
    %v5880 = vunpack.c.l.b16 %v4917
    %v5881 = vunpack.c.l.b16 %v4918
    %v5882 = vunpack.c.l.b16 %v4919
    %v5883 = vunpack.c.l.b16 %v4920
    %v5884 = vunpack.c.l.b16 %v4921
    %v5885 = vunpack.c.l.b16 %v4922
    %v5886 = vunpack.c.l.b16 %v4923
    %v5887 = vunpack.c.l.b16 %v4924
    %v5888 = vunpack.c.l.b16 %v4925
    %v5889 = vunpack.c.l.b16 %v4926
    %v5890 = vunpack.c.l.b16 %v4927
    %v5891 = vunpack.c.l.b16 %v4928
    %v5892 = vunpack.c.l.b16 %v4929
    %v5893 = vunpack.c.l.b16 %v4930
    %v5894 = vunpack.c.l.b16 %v4931
    %v5895 = vunpack.c.l.b16 %v4932
    %v5896 = vunpack.c.l.b16 %v4933
    %v5897 = vunpack.c.l.b16 %v4934
    %v5898 = vunpack.c.l.b16 %v4935
    %v5899 = vunpack.c.l.b16 %v4936
    %v5900 = vunpack.c.l.b16 %v4937
    %v5901 = vpack.c.b16 %v5854, %v5853
    %v5902 = vpack.c.b16 %v5856, %v5855
    %v5903 = vpack.c.b16 %v5858, %v5857
    %v5904 = vpack.c.b16 %v5860, %v5859
    %v5905 = vpack.c.b16 %v5862, %v5861
    %v5906 = vpack.c.b16 %v5864, %v5863
    %v5907 = vpack.c.b16 %v5866, %v5865
    %v5908 = vpack.c.b16 %v5868, %v5867
    %v5909 = vpack.c.b16 %v5870, %v5869
    %v5910 = vpack.c.b16 %v5872, %v5871
    %v5911 = vpack.c.b16 %v5874, %v5873
    %v5912 = vpack.c.b16 %v5876, %v5875
    %v5913 = vpack.c.b16 %v5878, %v5877
    %v5914 = vpack.c.b16 %v5880, %v5879
    %v5915 = vpack.c.b16 %v5882, %v5881
    %v5916 = vpack.c.b16 %v5884, %v5883
    %v5917 = vpack.c.b16 %v5886, %v5885
    %v5918 = vpack.c.b16 %v5888, %v5887
    %v5919 = vpack.c.b16 %v5890, %v5889
    %v5920 = vpack.c.b16 %v5892, %v5891
    %v5921 = vpack.c.b16 %v5894, %v5893
    %v5922 = vpack.c.b16 %v5896, %v5895
    %v5923 = vpack.c.b16 %v5898, %v5897
    %v5924 = vpack.c.b16 %v5900, %v5899
    %5949 = vmatprep.subr.bf16.mxu0 0
    %5950 = vmatpush1.bf16.msra.mxu0 %v5901
    %5951 = vmatprep.subr.bf16.mxu0 0
    %5952 = vmatpush1.bf16.msra.mxu0 %v5902
    %5953 = vmatprep.subr.bf16.mxu0 0
    %5954 = vmatpush1.bf16.msra.mxu0 %v5903
    %5955 = vmatprep.subr.bf16.mxu0 0
    %5956 = vmatpush1.bf16.msra.mxu0 %v5904
    %5957 = vmatprep.subr.bf16.mxu0 0
    %5958 = vmatpush1.bf16.msra.mxu0 %v5905
    %5959 = vmatprep.subr.bf16.mxu0 0
    %5960 = vmatpush1.bf16.msra.mxu0 %v5906
    %5961 = vmatprep.subr.bf16.mxu0 0
    %5962 = vmatpush1.bf16.msra.mxu0 %v5907
    %5963 = vmatprep.subr.bf16.mxu0 0
    %5964 = vmatpush1.bf16.msra.mxu0 %v5908
    %5965 = vmatprep.subr.bf16.mxu0 0
    %5966 = vmatpush1.bf16.msra.mxu0 %v5909
    %5967 = vmatprep.subr.bf16.mxu0 0
    %5968 = vmatpush1.bf16.msra.mxu0 %v5910
    %5969 = vmatprep.subr.bf16.mxu0 0
    %5970 = vmatpush1.bf16.msra.mxu0 %v5911
    %5971 = vmatprep.subr.bf16.mxu0 0
    %5972 = vmatpush1.bf16.msra.mxu0 %v5912
    %5973 = vmatprep.subr.bf16.mxu0 0
    %5974 = vmatpush1.bf16.msra.mxu0 %v5913
    %5975 = vmatprep.subr.bf16.mxu0 0
    %5976 = vmatpush1.bf16.msra.mxu0 %v5914
    %5977 = vmatprep.subr.bf16.mxu0 0
    %5978 = vmatpush1.bf16.msra.mxu0 %v5915
    %5979 = vmatprep.subr.bf16.mxu0 0
    %5980 = vmatpush1.bf16.msra.mxu0 %v5916
    %5981 = vmatprep.mubr.bf16.mxu0 %v4795
    %5982 = vmatmul.mubr.bf16.gmra.mrb[0].mxu0 %v4794
    %v5983 = vpop.f32.mrb[0].mxu0
    %v5984 = vadd.f32 %v5551, %v5983
    %v5985 = vpop.f32.mrb[0].mxu0
    %v5986 = vpop.f32.mrb[0].mxu0
    %v5987 = vadd.f32 %v5554, %v5986
    %v5988 = vpop.f32.mrb[0].mxu0
    %5989 = vmatprep.mubr.bf16.mxu0 %v4798
    %5990 = vmatmul.mubr.bf16.gmra.mrb[0].mxu0 %v4797
    %v5991 = vpop.f32.mrb[0].mxu0
    %v5992 = vadd.f32 %v5559, %v5991
    %v5993 = vpop.f32.mrb[0].mxu0
    %v5994 = vpop.f32.mrb[0].mxu0
    %v5995 = vadd.f32 %v5562, %v5994
    %v5996 = vpop.f32.mrb[0].mxu0
    %5997 = vmatprep.mubr.bf16.mxu0 %v4801
    %5998 = vmatmul.mubr.bf16.gmra.mrb[0].mxu0 %v4800
    %v5999 = vpop.f32.mrb[0].mxu0
    %v6000 = vadd.f32 %v5567, %v5999
    %v6001 = vpop.f32.mrb[0].mxu0
    %v6002 = vpop.f32.mrb[0].mxu0
    %v6003 = vadd.f32 %v5570, %v6002
    %v6004 = vpop.f32.mrb[0].mxu0
    %6005 = vmatprep.mubr.bf16.mxu0 %v4804
    %6006 = vmatmul.mubr.bf16.gmra.mrb[0].mxu0 %v4803
    %v6007 = vpop.f32.mrb[0].mxu0
    %v6008 = vadd.f32 %v5575, %v6007
    %v6009 = vpop.f32.mrb[0].mxu0
    %v6010 = vpop.f32.mrb[0].mxu0
    %v6011 = vadd.f32 %v5578, %v6010
    %v6012 = vpop.f32.mrb[0].mxu0
    %6013 = vmatprep.mubr.bf16.mxu0 %v4807
    %6014 = vmatmul.mubr.bf16.gmra.mrb[0].mxu0 %v4806
    %v6015 = vpop.f32.mrb[0].mxu0
    %v6016 = vadd.f32 %v5583, %v6015
    %v6017 = vpop.f32.mrb[0].mxu0
    %v6018 = vpop.f32.mrb[0].mxu0
    %v6019 = vadd.f32 %v5586, %v6018
    %v6020 = vpop.f32.mrb[0].mxu0
    %6021 = vmatprep.mubr.bf16.mxu0 %v4810
    %6022 = vmatmul.mubr.bf16.gmra.mrb[0].mxu0 %v4809
    %v6023 = vpop.f32.mrb[0].mxu0
    %v6024 = vadd.f32 %v5591, %v6023
    %v6025 = vpop.f32.mrb[0].mxu0
    %v6026 = vpop.f32.mrb[0].mxu0
    %v6027 = vadd.f32 %v5594, %v6026
    %v6028 = vpop.f32.mrb[0].mxu0
    %6029 = vmatprep.mubr.bf16.mxu0 %v4813
    %6030 = vmatmul.mubr.bf16.gmra.mrb[0].mxu0 %v4812
    %v6031 = vpop.f32.mrb[0].mxu0
    %v6032 = vadd.f32 %v5599, %v6031
    %v6033 = vpop.f32.mrb[0].mxu0
    %v6034 = vpop.f32.mrb[0].mxu0
    %v6035 = vadd.f32 %v5602, %v6034
    %v6036 = vpop.f32.mrb[0].mxu0
    %6037 = vmatprep.mubr.bf16.mxu0 %v4816
    %6038 = vmatmul.mubr.bf16.gmra.mrb[0].mxu0 %v4815
    %v6039 = vpop.f32.mrb[0].mxu0
    %v6040 = vadd.f32 %v5607, %v6039
    %v6041 = vpop.f32.mrb[0].mxu0
    %v6042 = vpop.f32.mrb[0].mxu0
    %v6043 = vadd.f32 %v5610, %v6042
    %v6044 = vpop.f32.mrb[0].mxu0
    %6045 = vmatprep.mubr.bf16.mxu0 %v4819
    %6046 = vmatmul.mubr.bf16.gmra.mrb[0].mxu0 %v4818
    %v6047 = vpop.f32.mrb[0].mxu0
    %v6048 = vadd.f32 %v5615, %v6047
    %v6049 = vpop.f32.mrb[0].mxu0
    %v6050 = vpop.f32.mrb[0].mxu0
    %v6051 = vadd.f32 %v5618, %v6050
    %v6052 = vpop.f32.mrb[0].mxu0
    %6053 = vmatprep.mubr.bf16.mxu0 %v4822
    %6054 = vmatmul.mubr.bf16.gmra.mrb[0].mxu0 %v4821
    %v6055 = vpop.f32.mrb[0].mxu0
    %v6056 = vadd.f32 %v5623, %v6055
    %v6057 = vpop.f32.mrb[0].mxu0
    %v6058 = vpop.f32.mrb[0].mxu0
    %v6059 = vadd.f32 %v5626, %v6058
    %v6060 = vpop.f32.mrb[0].mxu0
    %6061 = vmatprep.mubr.bf16.mxu0 %v4825
    %6062 = vmatmul.mubr.bf16.gmra.mrb[0].mxu0 %v4824
    %v6063 = vpop.f32.mrb[0].mxu0
    %v6064 = vadd.f32 %v5631, %v6063
    %v6065 = vpop.f32.mrb[0].mxu0
    %v6066 = vpop.f32.mrb[0].mxu0
    %v6067 = vadd.f32 %v5634, %v6066
    %v6068 = vpop.f32.mrb[0].mxu0
    %6069 = vmatprep.mubr.bf16.mxu0 %v4828
    %6070 = vmatmul.mubr.bf16.gmra.mrb[0].mxu0 %v4827
    %v6071 = vpop.f32.mrb[0].mxu0
    %v6072 = vadd.f32 %v5639, %v6071
    %v6073 = vpop.f32.mrb[0].mxu0
    %v6074 = vpop.f32.mrb[0].mxu0
    %v6075 = vadd.f32 %v5642, %v6074
    %v6076 = vpop.f32.mrb[0].mxu0
    %6077 = vmatprep.mubr.bf16.mxu0 %v4831
    %6078 = vmatmul.mubr.bf16.gmra.mrb[0].mxu0 %v4830
    %v6079 = vpop.f32.mrb[0].mxu0
    %v6080 = vadd.f32 %v5647, %v6079
    %v6081 = vpop.f32.mrb[0].mxu0
    %v6082 = vpop.f32.mrb[0].mxu0
    %v6083 = vadd.f32 %v5650, %v6082
    %v6084 = vpop.f32.mrb[0].mxu0
    %6085 = vmatprep.mubr.bf16.mxu0 %v4834
    %6086 = vmatmul.mubr.bf16.gmra.mrb[0].mxu0 %v4833
    %v6087 = vpop.f32.mrb[0].mxu0
    %v6088 = vadd.f32 %v5655, %v6087
    %v6089 = vpop.f32.mrb[0].mxu0
    %v6090 = vpop.f32.mrb[0].mxu0
    %v6091 = vadd.f32 %v5658, %v6090
    %v6092 = vpop.f32.mrb[0].mxu0
    %6093 = vmatprep.mubr.bf16.mxu0 %v4837
    %6094 = vmatmul.mubr.bf16.gmra.mrb[0].mxu0 %v4836
    %v6095 = vpop.f32.mrb[0].mxu0
    %v6096 = vadd.f32 %v5663, %v6095
    %v6097 = vpop.f32.mrb[0].mxu0
    %v6098 = vpop.f32.mrb[0].mxu0
    %v6099 = vadd.f32 %v5666, %v6098
    %v6100 = vpop.f32.mrb[0].mxu0
    %6101 = vmatprep.mubr.bf16.mxu0 %v4840
    %6102 = vmatmul.mubr.bf16.gmra.mrb[0].mxu0 %v4839
    %v6103 = vpop.f32.mrb[0].mxu0
    %v6104 = vadd.f32 %v5671, %v6103
    %v6105 = vpop.f32.mrb[0].mxu0
    %v6106 = vpop.f32.mrb[0].mxu0
    %v6107 = vadd.f32 %v5674, %v6106
    %v6108 = vpop.f32.mrb[0].mxu0
    %6109 = vmatprep.mubr.bf16.mxu0 %v4843
    %6110 = vmatmul.mubr.bf16.gmra.mrb[0].mxu0 %v4842
    %v6111 = vpop.f32.mrb[0].mxu0
    %v6112 = vadd.f32 %v5679, %v6111
    %v6113 = vpop.f32.mrb[0].mxu0
    %v6114 = vpop.f32.mrb[0].mxu0
    %v6115 = vadd.f32 %v5682, %v6114
    %v6116 = vpop.f32.mrb[0].mxu0
    %6117 = vmatprep.mubr.bf16.mxu0 %v4846
    %6118 = vmatmul.mubr.bf16.gmra.mrb[0].mxu0 %v4845
    %v6119 = vpop.f32.mrb[0].mxu0
    %v6120 = vadd.f32 %v5687, %v6119
    %v6121 = vpop.f32.mrb[0].mxu0
    %v6122 = vpop.f32.mrb[0].mxu0
    %v6123 = vadd.f32 %v5690, %v6122
    %v6124 = vpop.f32.mrb[0].mxu0
    %6125 = vmatprep.mubr.bf16.mxu0 %v4849
    %6126 = vmatmul.mubr.bf16.gmra.mrb[0].mxu0 %v4848
    %v6127 = vpop.f32.mrb[0].mxu0
    %v6128 = vadd.f32 %v5695, %v6127
    %v6129 = vpop.f32.mrb[0].mxu0
    %v6130 = vpop.f32.mrb[0].mxu0
    %v6131 = vadd.f32 %v5698, %v6130
    %v6132 = vpop.f32.mrb[0].mxu0
    %6133 = vmatprep.mubr.bf16.mxu0 %v4852
    %6134 = vmatmul.mubr.bf16.gmra.mrb[0].mxu0 %v4851
    %v6135 = vpop.f32.mrb[0].mxu0
    %v6136 = vadd.f32 %v5703, %v6135
    %v6137 = vpop.f32.mrb[0].mxu0
    %v6138 = vpop.f32.mrb[0].mxu0
    %v6139 = vadd.f32 %v5706, %v6138
    %v6140 = vpop.f32.mrb[0].mxu0
    %6141 = vmatprep.mubr.bf16.mxu0 %v4855
    %6142 = vmatmul.mubr.bf16.gmra.mrb[0].mxu0 %v4854
    %v6143 = vpop.f32.mrb[0].mxu0
    %v6144 = vadd.f32 %v5711, %v6143
    %v6145 = vpop.f32.mrb[0].mxu0
    %v6146 = vpop.f32.mrb[0].mxu0
    %v6147 = vadd.f32 %v5714, %v6146
    %v6148 = vpop.f32.mrb[0].mxu0
    %6149 = vmatprep.mubr.bf16.mxu0 %v4858
    %6150 = vmatmul.mubr.bf16.gmra.mrb[0].mxu0 %v4857
    %v6151 = vpop.f32.mrb[0].mxu0
    %v6152 = vadd.f32 %v5719, %v6151
    %v6153 = vpop.f32.mrb[0].mxu0
    %v6154 = vpop.f32.mrb[0].mxu0
    %v6155 = vadd.f32 %v5722, %v6154
    %v6156 = vpop.f32.mrb[0].mxu0
    %6157 = vmatprep.mubr.bf16.mxu0 %v4861
    %6158 = vmatmul.mubr.bf16.gmra.mrb[0].mxu0 %v4860
    %v6159 = vpop.f32.mrb[0].mxu0
    %v6160 = vadd.f32 %v5727, %v6159
    %v6161 = vpop.f32.mrb[0].mxu0
    %v6162 = vpop.f32.mrb[0].mxu0
    %v6163 = vadd.f32 %v5730, %v6162
    %v6164 = vpop.f32.mrb[0].mxu0
    %6165 = vmatprep.mubr.bf16.mxu0 %v4864
    %6166 = vmatmul.mubr.bf16.gmra.mrb[0].mxu0 %v4863
    %v6167 = vpop.f32.mrb[0].mxu0
    %v6168 = vadd.f32 %v5735, %v6167
    %v6169 = vpop.f32.mrb[0].mxu0
    %v6170 = vpop.f32.mrb[0].mxu0
    %v6171 = vadd.f32 %v5738, %v6170
    %v6172 = vpop.f32.mrb[0].mxu0
    %6173 = vmatprep.mubr.bf16.mxu0 %v4867
    %6174 = vmatmul.mubr.bf16.gmra.mrb[0].mxu0 %v4866
    %v6175 = vpop.f32.mrb[0].mxu0
    %v6176 = vadd.f32 %v5743, %v6175
    %v6177 = vpop.f32.mrb[0].mxu0
    %v6178 = vpop.f32.mrb[0].mxu0
    %v6179 = vadd.f32 %v5746, %v6178
    %v6180 = vpop.f32.mrb[0].mxu0
    %6181 = vmatprep.mubr.bf16.mxu0 %v4870
    %6182 = vmatmul.mubr.bf16.gmra.mrb[0].mxu0 %v4869
    %v6183 = vpop.f32.mrb[0].mxu0
    %v6184 = vadd.f32 %v5751, %v6183
    %v6185 = vpop.f32.mrb[0].mxu0
    %v6186 = vpop.f32.mrb[0].mxu0
    %v6187 = vadd.f32 %v5754, %v6186
    %v6188 = vpop.f32.mrb[0].mxu0
    %6189 = vmatprep.mubr.bf16.mxu0 %v4873
    %6190 = vmatmul.mubr.bf16.gmra.mrb[0].mxu0 %v4872
    %v6191 = vpop.f32.mrb[0].mxu0
    %v6192 = vadd.f32 %v5759, %v6191
    %v6193 = vpop.f32.mrb[0].mxu0
    %v6194 = vpop.f32.mrb[0].mxu0
    %v6195 = vadd.f32 %v5762, %v6194
    %v6196 = vpop.f32.mrb[0].mxu0
    %6197 = vmatprep.mubr.bf16.mxu0 %v4876
    %6198 = vmatmul.mubr.bf16.gmra.mrb[0].mxu0 %v4875
    %v6199 = vpop.f32.mrb[0].mxu0
    %v6200 = vadd.f32 %v5767, %v6199
    %v6201 = vpop.f32.mrb[0].mxu0
    %v6202 = vpop.f32.mrb[0].mxu0
    %v6203 = vadd.f32 %v5770, %v6202
    %v6204 = vpop.f32.mrb[0].mxu0
    %6205 = vmatprep.mubr.bf16.mxu0 %v4879
    %6206 = vmatmul.mubr.bf16.gmra.mrb[0].mxu0 %v4878
    %v6207 = vpop.f32.mrb[0].mxu0
    %v6208 = vadd.f32 %v5775, %v6207
    %v6209 = vpop.f32.mrb[0].mxu0
    %v6210 = vpop.f32.mrb[0].mxu0
    %v6211 = vadd.f32 %v5778, %v6210
    %v6212 = vpop.f32.mrb[0].mxu0
    %6213 = vmatprep.mubr.bf16.mxu0 %v4882
    %6214 = vmatmul.mubr.bf16.gmra.mrb[0].mxu0 %v4881
    %v6215 = vpop.f32.mrb[0].mxu0
    %v6216 = vadd.f32 %v5783, %v6215
    %v6217 = vpop.f32.mrb[0].mxu0
    %v6218 = vpop.f32.mrb[0].mxu0
    %v6219 = vadd.f32 %v5786, %v6218
    %v6220 = vpop.f32.mrb[0].mxu0
    %6221 = vmatprep.mubr.bf16.mxu0 %v4885
    %6222 = vmatmul.mubr.bf16.gmra.mrb[0].mxu0 %v4884
    %v6223 = vpop.f32.mrb[0].mxu0
    %v6224 = vadd.f32 %v5791, %v6223
    %v6225 = vpop.f32.mrb[0].mxu0
    %v6226 = vpop.f32.mrb[0].mxu0
    %v6227 = vadd.f32 %v5794, %v6226
    %v6228 = vpop.f32.mrb[0].mxu0
    %6229 = vmatprep.mubr.bf16.mxu0 %v4888
    %6230 = vmatmul.mubr.bf16.gmra.mrb[0].mxu0 %v4887
    %v6231 = vpop.f32.mrb[0].mxu0
    %v6232 = vadd.f32 %v5799, %v6231
    %v6233 = vpop.f32.mrb[0].mxu0
    %v6234 = vpop.f32.mrb[0].mxu0
    %v6235 = vadd.f32 %v5802, %v6234
    %v6236 = vpop.f32.mrb[0].mxu0
    %6237 = vdwg.mxu0
    %6238 = vmatprep.subr.bf16.mxu0 0
    %6239 = vmatpush1.bf16.msra.mxu0 %v5917
    %6240 = vmatprep.subr.bf16.mxu0 0
    %6241 = vmatpush1.bf16.msra.mxu0 %v5918
    %6242 = vmatprep.subr.bf16.mxu0 0
    %6243 = vmatpush1.bf16.msra.mxu0 %v5919
    %6244 = vmatprep.subr.bf16.mxu0 0
    %6245 = vmatpush1.bf16.msra.mxu0 %v5920
    %6246 = vmatprep.subr.bf16.mxu0 0
    %6247 = vmatpush1.bf16.msra.mxu0 %v5921
    %6248 = vmatprep.subr.bf16.mxu0 0
    %6249 = vmatpush1.bf16.msra.mxu0 %v5922
    %6250 = vmatprep.subr.bf16.mxu0 0
    %6251 = vmatpush1.bf16.msra.mxu0 %v5923
    %6252 = vmatprep.subr.bf16.mxu0 0
    %6253 = vmatpush1.bf16.msra.mxu0 %v5924
    %6254 = vmatprep.subr.bf16.mxu0 0
    %6255 = vmatpush1.bf16.msra.mxu0 0
    %6256 = vmatprep.subr.bf16.mxu0 0
    %6257 = vmatpush1.bf16.msra.mxu0 0
    %6258 = vmatprep.subr.bf16.mxu0 0
    %6259 = vmatpush1.bf16.msra.mxu0 0
    %6260 = vmatprep.subr.bf16.mxu0 0
    %6261 = vmatpush1.bf16.msra.mxu0 0
    %6262 = vmatprep.subr.bf16.mxu0 0
    %6263 = vmatpush1.bf16.msra.mxu0 0
    %6264 = vmatprep.subr.bf16.mxu0 0
    %6265 = vmatpush1.bf16.msra.mxu0 0
    %6266 = vmatprep.subr.bf16.mxu0 0
    %6267 = vmatpush1.bf16.msra.mxu0 0
    %6268 = vmatprep.subr.bf16.mxu0 0
    %6269 = vmatpush1.bf16.msra.mxu0 0
    %6270 = vmatprep.mubr.bf16.mxu0 0
    %6271 = vmatmul.mubr.bf16.gmra.mrb[0].mxu0 %v4796
    %v6272 = vpop.f32.mrb[0].mxu0
    %v6273 = vadd.f32 %v5984, %v6272
    %v6274 = vpop.f32.mrb[0].mxu0
    %v6275 = vpop.f32.mrb[0].mxu0
    %v6276 = vadd.f32 %v5987, %v6275
    %v6277 = vpop.f32.mrb[0].mxu0
    %6278 = vmatprep.mubr.bf16.mxu0 0
    %6279 = vmatmul.mubr.bf16.gmra.mrb[0].mxu0 %v4799
    %v6280 = vpop.f32.mrb[0].mxu0
    %v6281 = vadd.f32 %v5992, %v6280
    %v6282 = vpop.f32.mrb[0].mxu0
    %v6283 = vpop.f32.mrb[0].mxu0
    %v6284 = vadd.f32 %v5995, %v6283
    %v6285 = vpop.f32.mrb[0].mxu0
    %6286 = vmatprep.mubr.bf16.mxu0 0
    %6287 = vmatmul.mubr.bf16.gmra.mrb[0].mxu0 %v4802
    %v6288 = vpop.f32.mrb[0].mxu0
    %v6289 = vadd.f32 %v6000, %v6288
    %v6290 = vpop.f32.mrb[0].mxu0
    %v6291 = vpop.f32.mrb[0].mxu0
    %v6292 = vadd.f32 %v6003, %v6291
    %v6293 = vpop.f32.mrb[0].mxu0
    %6294 = vmatprep.mubr.bf16.mxu0 0
    %6295 = vmatmul.mubr.bf16.gmra.mrb[0].mxu0 %v4805
    %v6296 = vpop.f32.mrb[0].mxu0
    %v6297 = vadd.f32 %v6008, %v6296
    %v6298 = vpop.f32.mrb[0].mxu0
    %v6299 = vpop.f32.mrb[0].mxu0
    %v6300 = vadd.f32 %v6011, %v6299
    %v6301 = vpop.f32.mrb[0].mxu0
    %6302 = vmatprep.mubr.bf16.mxu0 0
    %6303 = vmatmul.mubr.bf16.gmra.mrb[0].mxu0 %v4808
    %v6304 = vpop.f32.mrb[0].mxu0
    %v6305 = vadd.f32 %v6016, %v6304
    %v6306 = vpop.f32.mrb[0].mxu0
    %v6307 = vpop.f32.mrb[0].mxu0
    %v6308 = vadd.f32 %v6019, %v6307
    %v6309 = vpop.f32.mrb[0].mxu0
    %6310 = vmatprep.mubr.bf16.mxu0 0
    %6311 = vmatmul.mubr.bf16.gmra.mrb[0].mxu0 %v4811
    %v6312 = vpop.f32.mrb[0].mxu0
    %v6313 = vadd.f32 %v6024, %v6312
    %v6314 = vpop.f32.mrb[0].mxu0
    %v6315 = vpop.f32.mrb[0].mxu0
    %v6316 = vadd.f32 %v6027, %v6315
    %v6317 = vpop.f32.mrb[0].mxu0
    %6318 = vmatprep.mubr.bf16.mxu0 0
    %6319 = vmatmul.mubr.bf16.gmra.mrb[0].mxu0 %v4814
    %v6320 = vpop.f32.mrb[0].mxu0
    %v6321 = vadd.f32 %v6032, %v6320
    %v6322 = vpop.f32.mrb[0].mxu0
    %v6323 = vpop.f32.mrb[0].mxu0
    %v6324 = vadd.f32 %v6035, %v6323
    %v6325 = vpop.f32.mrb[0].mxu0
    %6326 = vmatprep.mubr.bf16.mxu0 0
    %6327 = vmatmul.mubr.bf16.gmra.mrb[0].mxu0 %v4817
    %v6328 = vpop.f32.mrb[0].mxu0
    %v6329 = vadd.f32 %v6040, %v6328
    %v6330 = vpop.f32.mrb[0].mxu0
    %v6331 = vpop.f32.mrb[0].mxu0
    %v6332 = vadd.f32 %v6043, %v6331
    %v6333 = vpop.f32.mrb[0].mxu0
    %6334 = vmatprep.mubr.bf16.mxu0 0
    %6335 = vmatmul.mubr.bf16.gmra.mrb[0].mxu0 %v4820
    %v6336 = vpop.f32.mrb[0].mxu0
    %v6337 = vadd.f32 %v6048, %v6336
    %v6338 = vpop.f32.mrb[0].mxu0
    %v6339 = vpop.f32.mrb[0].mxu0
    %v6340 = vadd.f32 %v6051, %v6339
    %v6341 = vpop.f32.mrb[0].mxu0
    %6342 = vmatprep.mubr.bf16.mxu0 0
    %6343 = vmatmul.mubr.bf16.gmra.mrb[0].mxu0 %v4823
    %v6344 = vpop.f32.mrb[0].mxu0
    %v6345 = vadd.f32 %v6056, %v6344
    %v6346 = vpop.f32.mrb[0].mxu0
    %v6347 = vpop.f32.mrb[0].mxu0
    %v6348 = vadd.f32 %v6059, %v6347
    %v6349 = vpop.f32.mrb[0].mxu0
    %6350 = vmatprep.mubr.bf16.mxu0 0
    %6351 = vmatmul.mubr.bf16.gmra.mrb[0].mxu0 %v4826
    %v6352 = vpop.f32.mrb[0].mxu0
    %v6353 = vadd.f32 %v6064, %v6352
    %v6354 = vpop.f32.mrb[0].mxu0
    %v6355 = vpop.f32.mrb[0].mxu0
    %v6356 = vadd.f32 %v6067, %v6355
    %v6357 = vpop.f32.mrb[0].mxu0
    %6358 = vmatprep.mubr.bf16.mxu0 0
    %6359 = vmatmul.mubr.bf16.gmra.mrb[0].mxu0 %v4829
    %v6360 = vpop.f32.mrb[0].mxu0
    %v6361 = vadd.f32 %v6072, %v6360
    %v6362 = vpop.f32.mrb[0].mxu0
    %v6363 = vpop.f32.mrb[0].mxu0
    %v6364 = vadd.f32 %v6075, %v6363
    %v6365 = vpop.f32.mrb[0].mxu0
    %6366 = vmatprep.mubr.bf16.mxu0 0
    %6367 = vmatmul.mubr.bf16.gmra.mrb[0].mxu0 %v4832
    %v6368 = vpop.f32.mrb[0].mxu0
    %v6369 = vadd.f32 %v6080, %v6368
    %v6370 = vpop.f32.mrb[0].mxu0
    %v6371 = vpop.f32.mrb[0].mxu0
    %v6372 = vadd.f32 %v6083, %v6371
    %v6373 = vpop.f32.mrb[0].mxu0
    %6374 = vmatprep.mubr.bf16.mxu0 0
    %6375 = vmatmul.mubr.bf16.gmra.mrb[0].mxu0 %v4835
    %v6376 = vpop.f32.mrb[0].mxu0
    %v6377 = vadd.f32 %v6088, %v6376
    %v6378 = vpop.f32.mrb[0].mxu0
    %v6379 = vpop.f32.mrb[0].mxu0
    %v6380 = vadd.f32 %v6091, %v6379
    %v6381 = vpop.f32.mrb[0].mxu0
    %6382 = vmatprep.mubr.bf16.mxu0 0
    %6383 = vmatmul.mubr.bf16.gmra.mrb[0].mxu0 %v4838
    %v6384 = vpop.f32.mrb[0].mxu0
    %v6385 = vadd.f32 %v6096, %v6384
    %v6386 = vpop.f32.mrb[0].mxu0
    %v6387 = vpop.f32.mrb[0].mxu0
    %v6388 = vadd.f32 %v6099, %v6387
    %v6389 = vpop.f32.mrb[0].mxu0
    %6390 = vmatprep.mubr.bf16.mxu0 0
    %6391 = vmatmul.mubr.bf16.gmra.mrb[0].mxu0 %v4841
    %v6392 = vpop.f32.mrb[0].mxu0
    %v6393 = vadd.f32 %v6104, %v6392
    %v6394 = vpop.f32.mrb[0].mxu0
    %v6395 = vpop.f32.mrb[0].mxu0
    %v6396 = vadd.f32 %v6107, %v6395
    %v6397 = vpop.f32.mrb[0].mxu0
    %6398 = vmatprep.mubr.bf16.mxu0 0
    %6399 = vmatmul.mubr.bf16.gmra.mrb[0].mxu0 %v4844
    %v6400 = vpop.f32.mrb[0].mxu0
    %v6401 = vadd.f32 %v6112, %v6400
    %v6402 = vpop.f32.mrb[0].mxu0
    %v6403 = vpop.f32.mrb[0].mxu0
    %v6404 = vadd.f32 %v6115, %v6403
    %v6405 = vpop.f32.mrb[0].mxu0
    %6406 = vmatprep.mubr.bf16.mxu0 0
    %6407 = vmatmul.mubr.bf16.gmra.mrb[0].mxu0 %v4847
    %v6408 = vpop.f32.mrb[0].mxu0
    %v6409 = vadd.f32 %v6120, %v6408
    %v6410 = vpop.f32.mrb[0].mxu0
    %v6411 = vpop.f32.mrb[0].mxu0
    %v6412 = vadd.f32 %v6123, %v6411
    %v6413 = vpop.f32.mrb[0].mxu0
    %6414 = vmatprep.mubr.bf16.mxu0 0
    %6415 = vmatmul.mubr.bf16.gmra.mrb[0].mxu0 %v4850
    %v6416 = vpop.f32.mrb[0].mxu0
    %v6417 = vadd.f32 %v6128, %v6416
    %v6418 = vpop.f32.mrb[0].mxu0
    %v6419 = vpop.f32.mrb[0].mxu0
    %v6420 = vadd.f32 %v6131, %v6419
    %v6421 = vpop.f32.mrb[0].mxu0
    %6422 = vmatprep.mubr.bf16.mxu0 0
    %6423 = vmatmul.mubr.bf16.gmra.mrb[0].mxu0 %v4853
    %v6424 = vpop.f32.mrb[0].mxu0
    %v6425 = vadd.f32 %v6136, %v6424
    %v6426 = vpop.f32.mrb[0].mxu0
    %v6427 = vpop.f32.mrb[0].mxu0
    %v6428 = vadd.f32 %v6139, %v6427
    %v6429 = vpop.f32.mrb[0].mxu0
    %6430 = vmatprep.mubr.bf16.mxu0 0
    %6431 = vmatmul.mubr.bf16.gmra.mrb[0].mxu0 %v4856
    %v6432 = vpop.f32.mrb[0].mxu0
    %v6433 = vadd.f32 %v6144, %v6432
    %v6434 = vpop.f32.mrb[0].mxu0
    %v6435 = vpop.f32.mrb[0].mxu0
    %v6436 = vadd.f32 %v6147, %v6435
    %v6437 = vpop.f32.mrb[0].mxu0
    %6438 = vmatprep.mubr.bf16.mxu0 0
    %6439 = vmatmul.mubr.bf16.gmra.mrb[0].mxu0 %v4859
    %v6440 = vpop.f32.mrb[0].mxu0
    %v6441 = vadd.f32 %v6152, %v6440
    %v6442 = vpop.f32.mrb[0].mxu0
    %v6443 = vpop.f32.mrb[0].mxu0
    %v6444 = vadd.f32 %v6155, %v6443
    %v6445 = vpop.f32.mrb[0].mxu0
    %6446 = vmatprep.mubr.bf16.mxu0 0
    %6447 = vmatmul.mubr.bf16.gmra.mrb[0].mxu0 %v4862
    %v6448 = vpop.f32.mrb[0].mxu0
    %v6449 = vadd.f32 %v6160, %v6448
    %v6450 = vpop.f32.mrb[0].mxu0
    %v6451 = vpop.f32.mrb[0].mxu0
    %v6452 = vadd.f32 %v6163, %v6451
    %v6453 = vpop.f32.mrb[0].mxu0
    %6454 = vmatprep.mubr.bf16.mxu0 0
    %6455 = vmatmul.mubr.bf16.gmra.mrb[0].mxu0 %v4865
    %v6456 = vpop.f32.mrb[0].mxu0
    %v6457 = vadd.f32 %v6168, %v6456
    %v6458 = vpop.f32.mrb[0].mxu0
    %v6459 = vpop.f32.mrb[0].mxu0
    %v6460 = vadd.f32 %v6171, %v6459
    %v6461 = vpop.f32.mrb[0].mxu0
    %6462 = vmatprep.mubr.bf16.mxu0 0
    %6463 = vmatmul.mubr.bf16.gmra.mrb[0].mxu0 %v4868
    %v6464 = vpop.f32.mrb[0].mxu0
    %v6465 = vadd.f32 %v6176, %v6464
    %v6466 = vpop.f32.mrb[0].mxu0
    %v6467 = vpop.f32.mrb[0].mxu0
    %v6468 = vadd.f32 %v6179, %v6467
    %v6469 = vpop.f32.mrb[0].mxu0
    %6470 = vmatprep.mubr.bf16.mxu0 0
    %6471 = vmatmul.mubr.bf16.gmra.mrb[0].mxu0 %v4871
    %v6472 = vpop.f32.mrb[0].mxu0
    %v6473 = vadd.f32 %v6184, %v6472
    %v6474 = vpop.f32.mrb[0].mxu0
    %v6475 = vpop.f32.mrb[0].mxu0
    %v6476 = vadd.f32 %v6187, %v6475
    %v6477 = vpop.f32.mrb[0].mxu0
    %6478 = vmatprep.mubr.bf16.mxu0 0
    %6479 = vmatmul.mubr.bf16.gmra.mrb[0].mxu0 %v4874
    %v6480 = vpop.f32.mrb[0].mxu0
    %v6481 = vadd.f32 %v6192, %v6480
    %v6482 = vpop.f32.mrb[0].mxu0
    %v6483 = vpop.f32.mrb[0].mxu0
    %v6484 = vadd.f32 %v6195, %v6483
    %v6485 = vpop.f32.mrb[0].mxu0
    %6486 = vmatprep.mubr.bf16.mxu0 0
    %6487 = vmatmul.mubr.bf16.gmra.mrb[0].mxu0 %v4877
    %v6488 = vpop.f32.mrb[0].mxu0
    %v6489 = vadd.f32 %v6200, %v6488
    %v6490 = vpop.f32.mrb[0].mxu0
    %v6491 = vpop.f32.mrb[0].mxu0
    %v6492 = vadd.f32 %v6203, %v6491
    %v6493 = vpop.f32.mrb[0].mxu0
    %6494 = vmatprep.mubr.bf16.mxu0 0
    %6495 = vmatmul.mubr.bf16.gmra.mrb[0].mxu0 %v4880
    %v6496 = vpop.f32.mrb[0].mxu0
    %v6497 = vadd.f32 %v6208, %v6496
    %v6498 = vpop.f32.mrb[0].mxu0
    %v6499 = vpop.f32.mrb[0].mxu0
    %v6500 = vadd.f32 %v6211, %v6499
    %v6501 = vpop.f32.mrb[0].mxu0
    %6502 = vmatprep.mubr.bf16.mxu0 0
    %6503 = vmatmul.mubr.bf16.gmra.mrb[0].mxu0 %v4883
    %v6504 = vpop.f32.mrb[0].mxu0
    %v6505 = vadd.f32 %v6216, %v6504
    %v6506 = vpop.f32.mrb[0].mxu0
    %v6507 = vpop.f32.mrb[0].mxu0
    %v6508 = vadd.f32 %v6219, %v6507
    %v6509 = vpop.f32.mrb[0].mxu0
    %6510 = vmatprep.mubr.bf16.mxu0 0
    %6511 = vmatmul.mubr.bf16.gmra.mrb[0].mxu0 %v4886
    %v6512 = vpop.f32.mrb[0].mxu0
    %v6513 = vadd.f32 %v6224, %v6512
    %v6514 = vpop.f32.mrb[0].mxu0
    %v6515 = vpop.f32.mrb[0].mxu0
    %v6516 = vadd.f32 %v6227, %v6515
    %v6517 = vpop.f32.mrb[0].mxu0
    %6518 = vmatprep.mubr.bf16.mxu0 0
    %6519 = vmatmul.mubr.bf16.gmra.mrb[0].mxu0 %v4889
    %v6520 = vpop.f32.mrb[0].mxu0
    %v6521 = vadd.f32 %v6232, %v6520
    %v6522 = vpop.f32.mrb[0].mxu0
    %v6523 = vpop.f32.mrb[0].mxu0
    %v6524 = vadd.f32 %v6235, %v6523
    %v6525 = vpop.f32.mrb[0].mxu0
    %6526 = vdwg.mxu0
    %v6527 = vld [vmem:[%s2454] sm:$0xff]
    %v6528 = vld [vmem:[%s2454 + $0x8] sm:$0xff]
    %v6529 = vld [vmem:[%s2454 + $0x10] sm:$0xff]
    %v6530 = vld [vmem:[%s2454 + $0x18] sm:$0xff]
    %v6531 = vld [vmem:[%s2454 + $0x20] sm:$0xff]
    %v6532 = vld [vmem:[%s2454 + $0x28] sm:$0xff]
    %v6533 = vld [vmem:[%s2454 + $0x30] sm:$0xff]
    %v6534 = vld [vmem:[%s2454 + $0x38] sm:$0xff]
    %v6535 = vld [vmem:[%s2454 + $0x40] sm:$0xff]
    %v6536 = vld [vmem:[%s2454 + $0x48] sm:$0xff]
    %v6537 = vld [vmem:[%s2454 + $0x50] sm:$0xff]
    %v6538 = vld [vmem:[%s2454 + $0x58] sm:$0xff]
    %v6539 = vld [vmem:[%s2454 + $0x60] sm:$0xff]
    %v6540 = vld [vmem:[%s2454 + $0x68] sm:$0xff]
    %v6541 = vld [vmem:[%s2454 + $0x70] sm:$0xff]
    %v6542 = vld [vmem:[%s2454 + $0x78] sm:$0xff]
    %v6543 = vld [vmem:[%s2454 + $0x80] sm:$0xff]
    %v6544 = vld [vmem:[%s2454 + $0x88] sm:$0xff]
    %v6545 = vld [vmem:[%s2454 + $0x90] sm:$0xff]
    %v6546 = vld [vmem:[%s2454 + $0x98] sm:$0xff]
    %v6547 = vld [vmem:[%s2454 + $0xa0] sm:$0xff]
    %v6548 = vld [vmem:[%s2454 + $0xa8] sm:$0xff]
    %v6549 = vld [vmem:[%s2454 + $0xb0] sm:$0xff]
    %v6550 = vld [vmem:[%s2454 + $0xb8] sm:$0xff]
    %v6551 = vld [vmem:[%s2454 + $0xc0] sm:$0xff]
    %v6552 = vld [vmem:[%s2454 + $0xc8] sm:$0xff]
    %v6553 = vld [vmem:[%s2454 + $0xd0] sm:$0xff]
    %v6554 = vld [vmem:[%s2454 + $0xd8] sm:$0xff]
    %v6555 = vld [vmem:[%s2454 + $0xe0] sm:$0xff]
    %v6556 = vld [vmem:[%s2454 + $0xe8] sm:$0xff]
    %v6557 = vld [vmem:[%s2454 + $0xf0] sm:$0xff]
    %v6558 = vld [vmem:[%s2454 + $0xf8] sm:$0xff]
    %v6559 = vld [vmem:[%s2454 + $0x100] sm:$0xff]
    %v6560 = vld [vmem:[%s2454 + $0x108] sm:$0xff]
    %v6561 = vld [vmem:[%s2454 + $0x110] sm:$0xff]
    %v6562 = vld [vmem:[%s2454 + $0x118] sm:$0xff]
    %v6563 = vld [vmem:[%s2454 + $0x120] sm:$0xff]
    %v6564 = vld [vmem:[%s2454 + $0x128] sm:$0xff]
    %v6565 = vld [vmem:[%s2454 + $0x130] sm:$0xff]
    %v6566 = vld [vmem:[%s2454 + $0x138] sm:$0xff]
    %v6567 = vld [vmem:[%s2454 + $0x140] sm:$0xff]
    %v6568 = vld [vmem:[%s2454 + $0x148] sm:$0xff]
    %v6569 = vld [vmem:[%s2454 + $0x150] sm:$0xff]
    %v6570 = vld [vmem:[%s2454 + $0x158] sm:$0xff]
    %v6571 = vld [vmem:[%s2454 + $0x160] sm:$0xff]
    %v6572 = vld [vmem:[%s2454 + $0x168] sm:$0xff]
    %v6573 = vld [vmem:[%s2454 + $0x170] sm:$0xff]
    %v6574 = vld [vmem:[%s2454 + $0x178] sm:$0xff]
    %v6575 = vld [vmem:[%s2454 + $0x1b0] sm:$0xff]
    %v6576 = vld [vmem:[%s2454 + $0x1b8] sm:$0xff]
    %v6577 = vld [vmem:[%s2454 + $0x1c0] sm:$0xff]
    %v6578 = vld [vmem:[%s2454 + $0x1c8] sm:$0xff]
    %v6579 = vld [vmem:[%s2454 + $0x1d0] sm:$0xff]
    %v6580 = vld [vmem:[%s2454 + $0x1d8] sm:$0xff]
    %v6581 = vld [vmem:[%s2454 + $0x1e0] sm:$0xff]
    %v6582 = vld [vmem:[%s2454 + $0x1e8] sm:$0xff]
    %v6583 = vld [vmem:[%s2454 + $0x1f0] sm:$0xff]
    %v6584 = vld [vmem:[%s2454 + $0x1f8] sm:$0xff]
    %v6585 = vld [vmem:[%s2454 + $0x200] sm:$0xff]
    %v6586 = vld [vmem:[%s2454 + $0x208] sm:$0xff]
    %v6587 = vld [vmem:[%s2454 + $0x210] sm:$0xff]
    %v6588 = vld [vmem:[%s2454 + $0x218] sm:$0xff]
    %v6589 = vld [vmem:[%s2454 + $0x220] sm:$0xff]
    %v6590 = vld [vmem:[%s2454 + $0x228] sm:$0xff]
    %v6591 = vld [vmem:[%s2454 + $0x230] sm:$0xff]
    %v6592 = vld [vmem:[%s2454 + $0x238] sm:$0xff]
    %v6593 = vld [vmem:[%s2454 + $0x240] sm:$0xff]
    %v6594 = vld [vmem:[%s2454 + $0x248] sm:$0xff]
    %v6595 = vld [vmem:[%s2454 + $0x250] sm:$0xff]
    %v6596 = vld [vmem:[%s2454 + $0x258] sm:$0xff]
    %v6597 = vld [vmem:[%s2454 + $0x260] sm:$0xff]
    %v6598 = vld [vmem:[%s2454 + $0x268] sm:$0xff]
    %v6599 = vld [vmem:[%s2454 + $0x270] sm:$0xff]
    %v6600 = vld [vmem:[%s2454 + $0x278] sm:$0xff]
    %v6601 = vld [vmem:[%s2454 + $0x280] sm:$0xff]
    %v6602 = vld [vmem:[%s2454 + $0x288] sm:$0xff]
    %v6603 = vld [vmem:[%s2454 + $0x290] sm:$0xff]
    %v6604 = vld [vmem:[%s2454 + $0x298] sm:$0xff]
    %v6605 = vld [vmem:[%s2454 + $0x2a0] sm:$0xff]
    %v6606 = vld [vmem:[%s2454 + $0x2a8] sm:$0xff]
    %v6607 = vld [vmem:[%s2454 + $0x2b0] sm:$0xff]
    %v6608 = vld [vmem:[%s2454 + $0x2b8] sm:$0xff]
    %v6609 = vld [vmem:[%s2454 + $0x2c0] sm:$0xff]
    %v6610 = vld [vmem:[%s2454 + $0x2c8] sm:$0xff]
    %v6611 = vld [vmem:[%s2454 + $0x2d0] sm:$0xff]
    %v6612 = vld [vmem:[%s2454 + $0x2d8] sm:$0xff]
    %v6613 = vld [vmem:[%s2454 + $0x2e0] sm:$0xff]
    %v6614 = vld [vmem:[%s2454 + $0x2e8] sm:$0xff]
    %v6615 = vld [vmem:[%s2454 + $0x2f0] sm:$0xff]
    %v6616 = vld [vmem:[%s2454 + $0x2f8] sm:$0xff]
    %v6617 = vld [vmem:[%s2454 + $0x300] sm:$0xff]
    %v6618 = vld [vmem:[%s2454 + $0x308] sm:$0xff]
    %v6619 = vld [vmem:[%s2454 + $0x310] sm:$0xff]
    %v6620 = vld [vmem:[%s2454 + $0x318] sm:$0xff]
    %v6621 = vld [vmem:[%s2454 + $0x320] sm:$0xff]
    %v6622 = vld [vmem:[%s2454 + $0x328] sm:$0xff]
    %s6623 = scalar_lea.vmem %s5, 384
    %v6624 = vld [vmem:[%s6623] sm:$0xf]
    %v6625 = vld [vmem:[%s6623 + $0x4] sm:$0xf]
    %v6626 = vld [vmem:[%s6623 + $0x8] sm:$0xf]
    %v6627 = vld [vmem:[%s6623 + $0xc] sm:$0xf]
    %v6628 = vld [vmem:[%s6623 + $0x10] sm:$0xf]
    %v6629 = vld [vmem:[%s6623 + $0x14] sm:$0xf]
    %v6630 = vld [vmem:[%s6623 + $0x18] sm:$0xf]
    %v6631 = vld [vmem:[%s6623 + $0x1c] sm:$0xf]
    %v6632 = vld [vmem:[%s6623 + $0x20] sm:$0xf]
    %v6633 = vld [vmem:[%s6623 + $0x24] sm:$0xf]
    %v6634 = vld [vmem:[%s6623 + $0x28] sm:$0xf]
    %v6635 = vld [vmem:[%s6623 + $0x2c] sm:$0xf]
    %v6636 = vld [vmem:[%s6623 + $0x30] sm:$0xf]
    %v6637 = vld [vmem:[%s6623 + $0x34] sm:$0xf]
    %v6638 = vld [vmem:[%s6623 + $0x38] sm:$0xf]
    %v6639 = vld [vmem:[%s6623 + $0x3c] sm:$0xf]
    %v6640 = vld [vmem:[%s6623 + $0x40] sm:$0xf]
    %v6641 = vld [vmem:[%s6623 + $0x44] sm:$0xf]
    %v6642 = vld [vmem:[%s6623 + $0x48] sm:$0xf]
    %v6643 = vld [vmem:[%s6623 + $0x4c] sm:$0xf]
    %v6644 = vld [vmem:[%s6623 + $0x50] sm:$0xf]
    %v6645 = vld [vmem:[%s6623 + $0x54] sm:$0xf]
    %v6646 = vld [vmem:[%s6623 + $0x58] sm:$0xf]
    %v6647 = vld [vmem:[%s6623 + $0x5c] sm:$0xf]
    %v6648 = vld [vmem:[%s6623 + $0x60] sm:$0xf]
    %v6649 = vld [vmem:[%s6623 + $0x64] sm:$0xf]
    %v6650 = vld [vmem:[%s6623 + $0x68] sm:$0xf]
    %v6651 = vld [vmem:[%s6623 + $0x6c] sm:$0xf]
    %v6652 = vld [vmem:[%s6623 + $0x70] sm:$0xf]
    %v6653 = vld [vmem:[%s6623 + $0x74] sm:$0xf]
    %v6654 = vld [vmem:[%s6623 + $0x78] sm:$0xf]
    %v6655 = vld [vmem:[%s6623 + $0x7c] sm:$0xf]
    %v6656 = vld [vmem:[%s6623 + $0x80] sm:$0xf]
    %v6657 = vld [vmem:[%s6623 + $0x84] sm:$0xf]
    %v6658 = vld [vmem:[%s6623 + $0x88] sm:$0xf]
    %v6659 = vld [vmem:[%s6623 + $0x8c] sm:$0xf]
    %v6660 = vld [vmem:[%s6623 + $0x90] sm:$0xf]
    %v6661 = vld [vmem:[%s6623 + $0x94] sm:$0xf]
    %v6662 = vld [vmem:[%s6623 + $0x98] sm:$0xf]
    %v6663 = vld [vmem:[%s6623 + $0x9c] sm:$0xf]
    %v6664 = vld [vmem:[%s6623 + $0xa0] sm:$0xf]
    %v6665 = vld [vmem:[%s6623 + $0xa4] sm:$0xf]
    %v6666 = vld [vmem:[%s6623 + $0xa8] sm:$0xf]
    %v6667 = vld [vmem:[%s6623 + $0xac] sm:$0xf]
    %v6668 = vld [vmem:[%s6623 + $0xb0] sm:$0xf]
    %v6669 = vld [vmem:[%s6623 + $0xb4] sm:$0xf]
    %v6670 = vld [vmem:[%s6623 + $0xb8] sm:$0xf]
    %v6671 = vld [vmem:[%s6623 + $0xbc] sm:$0xf]
    %v6720 = vunpack.c.l.b16 %v6624
    %v6721 = vunpack.c.l.b16 %v6625
    %v6722 = vunpack.c.l.b16 %v6626
    %v6723 = vunpack.c.l.b16 %v6627
    %v6724 = vunpack.c.l.b16 %v6628
    %v6725 = vunpack.c.l.b16 %v6629
    %v6726 = vunpack.c.l.b16 %v6630
    %v6727 = vunpack.c.l.b16 %v6631
    %v6728 = vunpack.c.l.b16 %v6632
    %v6729 = vunpack.c.l.b16 %v6633
    %v6730 = vunpack.c.l.b16 %v6634
    %v6731 = vunpack.c.l.b16 %v6635
    %v6732 = vunpack.c.l.b16 %v6636
    %v6733 = vunpack.c.l.b16 %v6637
    %v6734 = vunpack.c.l.b16 %v6638
    %v6735 = vunpack.c.l.b16 %v6639
    %v6736 = vunpack.c.l.b16 %v6640
    %v6737 = vunpack.c.l.b16 %v6641
    %v6738 = vunpack.c.l.b16 %v6642
    %v6739 = vunpack.c.l.b16 %v6643
    %v6740 = vunpack.c.l.b16 %v6644
    %v6741 = vunpack.c.l.b16 %v6645
    %v6742 = vunpack.c.l.b16 %v6646
    %v6743 = vunpack.c.l.b16 %v6647
    %v6744 = vunpack.c.l.b16 %v6648
    %v6745 = vunpack.c.l.b16 %v6649
    %v6746 = vunpack.c.l.b16 %v6650
    %v6747 = vunpack.c.l.b16 %v6651
    %v6748 = vunpack.c.l.b16 %v6652
    %v6749 = vunpack.c.l.b16 %v6653
    %v6750 = vunpack.c.l.b16 %v6654
    %v6751 = vunpack.c.l.b16 %v6655
    %v6752 = vunpack.c.l.b16 %v6656
    %v6753 = vunpack.c.l.b16 %v6657
    %v6754 = vunpack.c.l.b16 %v6658
    %v6755 = vunpack.c.l.b16 %v6659
    %v6756 = vunpack.c.l.b16 %v6660
    %v6757 = vunpack.c.l.b16 %v6661
    %v6758 = vunpack.c.l.b16 %v6662
    %v6759 = vunpack.c.l.b16 %v6663
    %v6760 = vunpack.c.l.b16 %v6664
    %v6761 = vunpack.c.l.b16 %v6665
    %v6762 = vunpack.c.l.b16 %v6666
    %v6763 = vunpack.c.l.b16 %v6667
    %v6764 = vunpack.c.l.b16 %v6668
    %v6765 = vunpack.c.l.b16 %v6669
    %v6766 = vunpack.c.l.b16 %v6670
    %v6767 = vunpack.c.l.b16 %v6671
    %v6768 = vpack.c.b16 %v6721, %v6720
    %v6769 = vpack.c.b16 %v6723, %v6722
    %v6770 = vpack.c.b16 %v6725, %v6724
    %v6771 = vpack.c.b16 %v6727, %v6726
    %v6772 = vpack.c.b16 %v6729, %v6728
    %v6773 = vpack.c.b16 %v6731, %v6730
    %v6774 = vpack.c.b16 %v6733, %v6732
    %v6775 = vpack.c.b16 %v6735, %v6734
    %v6776 = vpack.c.b16 %v6737, %v6736
    %v6777 = vpack.c.b16 %v6739, %v6738
    %v6778 = vpack.c.b16 %v6741, %v6740
    %v6779 = vpack.c.b16 %v6743, %v6742
    %v6780 = vpack.c.b16 %v6745, %v6744
    %v6781 = vpack.c.b16 %v6747, %v6746
    %v6782 = vpack.c.b16 %v6749, %v6748
    %v6783 = vpack.c.b16 %v6751, %v6750
    %v6784 = vpack.c.b16 %v6753, %v6752
    %v6785 = vpack.c.b16 %v6755, %v6754
    %v6786 = vpack.c.b16 %v6757, %v6756
    %v6787 = vpack.c.b16 %v6759, %v6758
    %v6788 = vpack.c.b16 %v6761, %v6760
    %v6789 = vpack.c.b16 %v6763, %v6762
    %v6790 = vpack.c.b16 %v6765, %v6764
    %v6791 = vpack.c.b16 %v6767, %v6766
    %6816 = vmatprep.subr.bf16.mxu0 0
    %6817 = vmatpush1.bf16.msra.mxu0 %v6768
    %6818 = vmatprep.subr.bf16.mxu0 0
    %6819 = vmatpush1.bf16.msra.mxu0 %v6769
    %6820 = vmatprep.subr.bf16.mxu0 0
    %6821 = vmatpush1.bf16.msra.mxu0 %v6770
    %6822 = vmatprep.subr.bf16.mxu0 0
    %6823 = vmatpush1.bf16.msra.mxu0 %v6771
    %6824 = vmatprep.subr.bf16.mxu0 0
    %6825 = vmatpush1.bf16.msra.mxu0 %v6772
    %6826 = vmatprep.subr.bf16.mxu0 0
    %6827 = vmatpush1.bf16.msra.mxu0 %v6773
    %6828 = vmatprep.subr.bf16.mxu0 0
    %6829 = vmatpush1.bf16.msra.mxu0 %v6774
    %6830 = vmatprep.subr.bf16.mxu0 0
    %6831 = vmatpush1.bf16.msra.mxu0 %v6775
    %6832 = vmatprep.subr.bf16.mxu0 0
    %6833 = vmatpush1.bf16.msra.mxu0 %v6776
    %6834 = vmatprep.subr.bf16.mxu0 0
    %6835 = vmatpush1.bf16.msra.mxu0 %v6777
    %6836 = vmatprep.subr.bf16.mxu0 0
    %6837 = vmatpush1.bf16.msra.mxu0 %v6778
    %6838 = vmatprep.subr.bf16.mxu0 0
    %6839 = vmatpush1.bf16.msra.mxu0 %v6779
    %6840 = vmatprep.subr.bf16.mxu0 0
    %6841 = vmatpush1.bf16.msra.mxu0 %v6780
    %6842 = vmatprep.subr.bf16.mxu0 0
    %6843 = vmatpush1.bf16.msra.mxu0 %v6781
    %6844 = vmatprep.subr.bf16.mxu0 0
    %6845 = vmatpush1.bf16.msra.mxu0 %v6782
    %6846 = vmatprep.subr.bf16.mxu0 0
    %6847 = vmatpush1.bf16.msra.mxu0 %v6783
    %6848 = vmatprep.mubr.bf16.mxu0 %v6528
    %6849 = vmatmul.mubr.bf16.gmra.mrb[0].mxu0 %v6527
    %v6850 = vpop.f32.mrb[0].mxu0
    %v6851 = vadd.f32 0.0, %v6850
    %v6852 = vpop.f32.mrb[0].mxu0
    %v6853 = vpop.f32.mrb[0].mxu0
    %v6854 = vadd.f32 0.0, %v6853
    %v6855 = vpop.f32.mrb[0].mxu0
    %6856 = vmatprep.mubr.bf16.mxu0 %v6531
    %6857 = vmatmul.mubr.bf16.gmra.mrb[0].mxu0 %v6530
    %v6858 = vpop.f32.mrb[0].mxu0
    %v6859 = vadd.f32 0.0, %v6858
    %v6860 = vpop.f32.mrb[0].mxu0
    %v6861 = vpop.f32.mrb[0].mxu0
    %v6862 = vadd.f32 0.0, %v6861
    %v6863 = vpop.f32.mrb[0].mxu0
    %6864 = vmatprep.mubr.bf16.mxu0 %v6534
    %6865 = vmatmul.mubr.bf16.gmra.mrb[0].mxu0 %v6533
    %v6866 = vpop.f32.mrb[0].mxu0
    %v6867 = vadd.f32 0.0, %v6866
    %v6868 = vpop.f32.mrb[0].mxu0
    %v6869 = vpop.f32.mrb[0].mxu0
    %v6870 = vadd.f32 0.0, %v6869
    %v6871 = vpop.f32.mrb[0].mxu0
    %6872 = vmatprep.mubr.bf16.mxu0 %v6537
    %6873 = vmatmul.mubr.bf16.gmra.mrb[0].mxu0 %v6536
    %v6874 = vpop.f32.mrb[0].mxu0
    %v6875 = vadd.f32 0.0, %v6874
    %v6876 = vpop.f32.mrb[0].mxu0
    %v6877 = vpop.f32.mrb[0].mxu0
    %v6878 = vadd.f32 0.0, %v6877
    %v6879 = vpop.f32.mrb[0].mxu0
    %6880 = vmatprep.mubr.bf16.mxu0 %v6540
    %6881 = vmatmul.mubr.bf16.gmra.mrb[0].mxu0 %v6539
    %v6882 = vpop.f32.mrb[0].mxu0
    %v6883 = vadd.f32 0.0, %v6882
    %v6884 = vpop.f32.mrb[0].mxu0
    %v6885 = vpop.f32.mrb[0].mxu0
    %v6886 = vadd.f32 0.0, %v6885
    %v6887 = vpop.f32.mrb[0].mxu0
    %6888 = vmatprep.mubr.bf16.mxu0 %v6543
    %6889 = vmatmul.mubr.bf16.gmra.mrb[0].mxu0 %v6542
    %v6890 = vpop.f32.mrb[0].mxu0
    %v6891 = vadd.f32 0.0, %v6890
    %v6892 = vpop.f32.mrb[0].mxu0
    %v6893 = vpop.f32.mrb[0].mxu0
    %v6894 = vadd.f32 0.0, %v6893
    %v6895 = vpop.f32.mrb[0].mxu0
    %6896 = vmatprep.mubr.bf16.mxu0 %v6546
    %6897 = vmatmul.mubr.bf16.gmra.mrb[0].mxu0 %v6545
    %v6898 = vpop.f32.mrb[0].mxu0
    %v6899 = vadd.f32 0.0, %v6898
    %v6900 = vpop.f32.mrb[0].mxu0
    %v6901 = vpop.f32.mrb[0].mxu0
    %v6902 = vadd.f32 0.0, %v6901
    %v6903 = vpop.f32.mrb[0].mxu0
    %6904 = vmatprep.mubr.bf16.mxu0 %v6549
    %6905 = vmatmul.mubr.bf16.gmra.mrb[0].mxu0 %v6548
    %v6906 = vpop.f32.mrb[0].mxu0
    %v6907 = vadd.f32 0.0, %v6906
    %v6908 = vpop.f32.mrb[0].mxu0
    %v6909 = vpop.f32.mrb[0].mxu0
    %v6910 = vadd.f32 0.0, %v6909
    %v6911 = vpop.f32.mrb[0].mxu0
    %6912 = vmatprep.mubr.bf16.mxu0 %v6552
    %6913 = vmatmul.mubr.bf16.gmra.mrb[0].mxu0 %v6551
    %v6914 = vpop.f32.mrb[0].mxu0
    %v6915 = vadd.f32 0.0, %v6914
    %v6916 = vpop.f32.mrb[0].mxu0
    %v6917 = vpop.f32.mrb[0].mxu0
    %v6918 = vadd.f32 0.0, %v6917
    %v6919 = vpop.f32.mrb[0].mxu0
    %6920 = vmatprep.mubr.bf16.mxu0 %v6555
    %6921 = vmatmul.mubr.bf16.gmra.mrb[0].mxu0 %v6554
    %v6922 = vpop.f32.mrb[0].mxu0
    %v6923 = vadd.f32 0.0, %v6922
    %v6924 = vpop.f32.mrb[0].mxu0
    %v6925 = vpop.f32.mrb[0].mxu0
    %v6926 = vadd.f32 0.0, %v6925
    %v6927 = vpop.f32.mrb[0].mxu0
    %6928 = vmatprep.mubr.bf16.mxu0 %v6558
    %6929 = vmatmul.mubr.bf16.gmra.mrb[0].mxu0 %v6557
    %v6930 = vpop.f32.mrb[0].mxu0
    %v6931 = vadd.f32 0.0, %v6930
    %v6932 = vpop.f32.mrb[0].mxu0
    %v6933 = vpop.f32.mrb[0].mxu0
    %v6934 = vadd.f32 0.0, %v6933
    %v6935 = vpop.f32.mrb[0].mxu0
    %6936 = vmatprep.mubr.bf16.mxu0 %v6561
    %6937 = vmatmul.mubr.bf16.gmra.mrb[0].mxu0 %v6560
    %v6938 = vpop.f32.mrb[0].mxu0
    %v6939 = vadd.f32 0.0, %v6938
    %v6940 = vpop.f32.mrb[0].mxu0
    %v6941 = vpop.f32.mrb[0].mxu0
    %v6942 = vadd.f32 0.0, %v6941
    %v6943 = vpop.f32.mrb[0].mxu0
    %6944 = vmatprep.mubr.bf16.mxu0 %v6564
    %6945 = vmatmul.mubr.bf16.gmra.mrb[0].mxu0 %v6563
    %v6946 = vpop.f32.mrb[0].mxu0
    %v6947 = vadd.f32 0.0, %v6946
    %v6948 = vpop.f32.mrb[0].mxu0
    %v6949 = vpop.f32.mrb[0].mxu0
    %v6950 = vadd.f32 0.0, %v6949
    %v6951 = vpop.f32.mrb[0].mxu0
    %6952 = vmatprep.mubr.bf16.mxu0 %v6567
    %6953 = vmatmul.mubr.bf16.gmra.mrb[0].mxu0 %v6566
    %v6954 = vpop.f32.mrb[0].mxu0
    %v6955 = vadd.f32 0.0, %v6954
    %v6956 = vpop.f32.mrb[0].mxu0
    %v6957 = vpop.f32.mrb[0].mxu0
    %v6958 = vadd.f32 0.0, %v6957
    %v6959 = vpop.f32.mrb[0].mxu0
    %6960 = vmatprep.mubr.bf16.mxu0 %v6570
    %6961 = vmatmul.mubr.bf16.gmra.mrb[0].mxu0 %v6569
    %v6962 = vpop.f32.mrb[0].mxu0
    %v6963 = vadd.f32 0.0, %v6962
    %v6964 = vpop.f32.mrb[0].mxu0
    %v6965 = vpop.f32.mrb[0].mxu0
    %v6966 = vadd.f32 0.0, %v6965
    %v6967 = vpop.f32.mrb[0].mxu0
    %6968 = vmatprep.mubr.bf16.mxu0 %v6573
    %6969 = vmatmul.mubr.bf16.gmra.mrb[0].mxu0 %v6572
    %v6970 = vpop.f32.mrb[0].mxu0
    %v6971 = vadd.f32 0.0, %v6970
    %v6972 = vpop.f32.mrb[0].mxu0
    %v6973 = vpop.f32.mrb[0].mxu0
    %v6974 = vadd.f32 0.0, %v6973
    %v6975 = vpop.f32.mrb[0].mxu0
    %6976 = vmatprep.mubr.bf16.mxu0 %v6576
    %6977 = vmatmul.mubr.bf16.gmra.mrb[0].mxu0 %v6575
    %v6978 = vpop.f32.mrb[0].mxu0
    %v6979 = vadd.f32 0.0, %v6978
    %v6980 = vpop.f32.mrb[0].mxu0
    %v6981 = vpop.f32.mrb[0].mxu0
    %v6982 = vadd.f32 0.0, %v6981
    %v6983 = vpop.f32.mrb[0].mxu0
    %6984 = vmatprep.mubr.bf16.mxu0 %v6579
    %6985 = vmatmul.mubr.bf16.gmra.mrb[0].mxu0 %v6578
    %v6986 = vpop.f32.mrb[0].mxu0
    %v6987 = vadd.f32 0.0, %v6986
    %v6988 = vpop.f32.mrb[0].mxu0
    %v6989 = vpop.f32.mrb[0].mxu0
    %v6990 = vadd.f32 0.0, %v6989
    %v6991 = vpop.f32.mrb[0].mxu0
    %6992 = vmatprep.mubr.bf16.mxu0 %v6582
    %6993 = vmatmul.mubr.bf16.gmra.mrb[0].mxu0 %v6581
    %v6994 = vpop.f32.mrb[0].mxu0
    %v6995 = vadd.f32 0.0, %v6994
    %v6996 = vpop.f32.mrb[0].mxu0
    %v6997 = vpop.f32.mrb[0].mxu0
    %v6998 = vadd.f32 0.0, %v6997
    %v6999 = vpop.f32.mrb[0].mxu0
    %7000 = vmatprep.mubr.bf16.mxu0 %v6585
    %7001 = vmatmul.mubr.bf16.gmra.mrb[0].mxu0 %v6584
    %v7002 = vpop.f32.mrb[0].mxu0
    %v7003 = vadd.f32 0.0, %v7002
    %v7004 = vpop.f32.mrb[0].mxu0
    %v7005 = vpop.f32.mrb[0].mxu0
    %v7006 = vadd.f32 0.0, %v7005
    %v7007 = vpop.f32.mrb[0].mxu0
    %7008 = vmatprep.mubr.bf16.mxu0 %v6588
    %7009 = vmatmul.mubr.bf16.gmra.mrb[0].mxu0 %v6587
    %v7010 = vpop.f32.mrb[0].mxu0
    %v7011 = vadd.f32 0.0, %v7010
    %v7012 = vpop.f32.mrb[0].mxu0
    %v7013 = vpop.f32.mrb[0].mxu0
    %v7014 = vadd.f32 0.0, %v7013
    %v7015 = vpop.f32.mrb[0].mxu0
    %7016 = vmatprep.mubr.bf16.mxu0 %v6591
    %7017 = vmatmul.mubr.bf16.gmra.mrb[0].mxu0 %v6590
    %v7018 = vpop.f32.mrb[0].mxu0
    %v7019 = vadd.f32 0.0, %v7018
    %v7020 = vpop.f32.mrb[0].mxu0
    %v7021 = vpop.f32.mrb[0].mxu0
    %v7022 = vadd.f32 0.0, %v7021
    %v7023 = vpop.f32.mrb[0].mxu0
    %7024 = vmatprep.mubr.bf16.mxu0 %v6594
    %7025 = vmatmul.mubr.bf16.gmra.mrb[0].mxu0 %v6593
    %v7026 = vpop.f32.mrb[0].mxu0
    %v7027 = vadd.f32 0.0, %v7026
    %v7028 = vpop.f32.mrb[0].mxu0
    %v7029 = vpop.f32.mrb[0].mxu0
    %v7030 = vadd.f32 0.0, %v7029
    %v7031 = vpop.f32.mrb[0].mxu0
    %7032 = vmatprep.mubr.bf16.mxu0 %v6597
    %7033 = vmatmul.mubr.bf16.gmra.mrb[0].mxu0 %v6596
    %v7034 = vpop.f32.mrb[0].mxu0
    %v7035 = vadd.f32 0.0, %v7034
    %v7036 = vpop.f32.mrb[0].mxu0
    %v7037 = vpop.f32.mrb[0].mxu0
    %v7038 = vadd.f32 0.0, %v7037
    %v7039 = vpop.f32.mrb[0].mxu0
    %7040 = vmatprep.mubr.bf16.mxu0 %v6600
    %7041 = vmatmul.mubr.bf16.gmra.mrb[0].mxu0 %v6599
    %v7042 = vpop.f32.mrb[0].mxu0
    %v7043 = vadd.f32 0.0, %v7042
    %v7044 = vpop.f32.mrb[0].mxu0
    %v7045 = vpop.f32.mrb[0].mxu0
    %v7046 = vadd.f32 0.0, %v7045
    %v7047 = vpop.f32.mrb[0].mxu0
    %7048 = vmatprep.mubr.bf16.mxu0 %v6603
    %7049 = vmatmul.mubr.bf16.gmra.mrb[0].mxu0 %v6602
    %v7050 = vpop.f32.mrb[0].mxu0
    %v7051 = vadd.f32 0.0, %v7050
    %v7052 = vpop.f32.mrb[0].mxu0
    %v7053 = vpop.f32.mrb[0].mxu0
    %v7054 = vadd.f32 0.0, %v7053
    %v7055 = vpop.f32.mrb[0].mxu0
    %7056 = vmatprep.mubr.bf16.mxu0 %v6606
    %7057 = vmatmul.mubr.bf16.gmra.mrb[0].mxu0 %v6605
    %v7058 = vpop.f32.mrb[0].mxu0
    %v7059 = vadd.f32 0.0, %v7058
    %v7060 = vpop.f32.mrb[0].mxu0
    %v7061 = vpop.f32.mrb[0].mxu0
    %v7062 = vadd.f32 0.0, %v7061
    %v7063 = vpop.f32.mrb[0].mxu0
    %7064 = vmatprep.mubr.bf16.mxu0 %v6609
    %7065 = vmatmul.mubr.bf16.gmra.mrb[0].mxu0 %v6608
    %v7066 = vpop.f32.mrb[0].mxu0
    %v7067 = vadd.f32 0.0, %v7066
    %v7068 = vpop.f32.mrb[0].mxu0
    %v7069 = vpop.f32.mrb[0].mxu0
    %v7070 = vadd.f32 0.0, %v7069
    %v7071 = vpop.f32.mrb[0].mxu0
    %7072 = vmatprep.mubr.bf16.mxu0 %v6612
    %7073 = vmatmul.mubr.bf16.gmra.mrb[0].mxu0 %v6611
    %v7074 = vpop.f32.mrb[0].mxu0
    %v7075 = vadd.f32 0.0, %v7074
    %v7076 = vpop.f32.mrb[0].mxu0
    %v7077 = vpop.f32.mrb[0].mxu0
    %v7078 = vadd.f32 0.0, %v7077
    %v7079 = vpop.f32.mrb[0].mxu0
    %7080 = vmatprep.mubr.bf16.mxu0 %v6615
    %7081 = vmatmul.mubr.bf16.gmra.mrb[0].mxu0 %v6614
    %v7082 = vpop.f32.mrb[0].mxu0
    %v7083 = vadd.f32 0.0, %v7082
    %v7084 = vpop.f32.mrb[0].mxu0
    %v7085 = vpop.f32.mrb[0].mxu0
    %v7086 = vadd.f32 0.0, %v7085
    %v7087 = vpop.f32.mrb[0].mxu0
    %7088 = vmatprep.mubr.bf16.mxu0 %v6618
    %7089 = vmatmul.mubr.bf16.gmra.mrb[0].mxu0 %v6617
    %v7090 = vpop.f32.mrb[0].mxu0
    %v7091 = vadd.f32 0.0, %v7090
    %v7092 = vpop.f32.mrb[0].mxu0
    %v7093 = vpop.f32.mrb[0].mxu0
    %v7094 = vadd.f32 0.0, %v7093
    %v7095 = vpop.f32.mrb[0].mxu0
    %7096 = vmatprep.mubr.bf16.mxu0 %v6621
    %7097 = vmatmul.mubr.bf16.gmra.mrb[0].mxu0 %v6620
    %v7098 = vpop.f32.mrb[0].mxu0
    %v7099 = vadd.f32 0.0, %v7098
    %v7100 = vpop.f32.mrb[0].mxu0
    %v7101 = vpop.f32.mrb[0].mxu0
    %v7102 = vadd.f32 0.0, %v7101
    %v7103 = vpop.f32.mrb[0].mxu0
    %7104 = vdwg.mxu0
    %7105 = vmatprep.subr.bf16.mxu0 0
    %7106 = vmatpush1.bf16.msra.mxu0 %v6784
    %7107 = vmatprep.subr.bf16.mxu0 0
    %7108 = vmatpush1.bf16.msra.mxu0 %v6785
    %7109 = vmatprep.subr.bf16.mxu0 0
    %7110 = vmatpush1.bf16.msra.mxu0 %v6786
    %7111 = vmatprep.subr.bf16.mxu0 0
    %7112 = vmatpush1.bf16.msra.mxu0 %v6787
    %7113 = vmatprep.subr.bf16.mxu0 0
    %7114 = vmatpush1.bf16.msra.mxu0 %v6788
    %7115 = vmatprep.subr.bf16.mxu0 0
    %7116 = vmatpush1.bf16.msra.mxu0 %v6789
    %7117 = vmatprep.subr.bf16.mxu0 0
    %7118 = vmatpush1.bf16.msra.mxu0 %v6790
    %7119 = vmatprep.subr.bf16.mxu0 0
    %7120 = vmatpush1.bf16.msra.mxu0 %v6791
    %7121 = vmatprep.subr.bf16.mxu0 0
    %7122 = vmatpush1.bf16.msra.mxu0 0
    %7123 = vmatprep.subr.bf16.mxu0 0
    %7124 = vmatpush1.bf16.msra.mxu0 0
    %7125 = vmatprep.subr.bf16.mxu0 0
    %7126 = vmatpush1.bf16.msra.mxu0 0
    %7127 = vmatprep.subr.bf16.mxu0 0
    %7128 = vmatpush1.bf16.msra.mxu0 0
    %7129 = vmatprep.subr.bf16.mxu0 0
    %7130 = vmatpush1.bf16.msra.mxu0 0
    %7131 = vmatprep.subr.bf16.mxu0 0
    %7132 = vmatpush1.bf16.msra.mxu0 0
    %7133 = vmatprep.subr.bf16.mxu0 0
    %7134 = vmatpush1.bf16.msra.mxu0 0
    %7135 = vmatprep.subr.bf16.mxu0 0
    %7136 = vmatpush1.bf16.msra.mxu0 0
    %7137 = vmatprep.mubr.bf16.mxu0 0
    %7138 = vmatmul.mubr.bf16.gmra.mrb[0].mxu0 %v6529
    %v7139 = vpop.f32.mrb[0].mxu0
    %v7140 = vadd.f32 %v6851, %v7139
    %v7141 = vpop.f32.mrb[0].mxu0
    %v7142 = vpop.f32.mrb[0].mxu0
    %v7143 = vadd.f32 %v6854, %v7142
    %v7144 = vpop.f32.mrb[0].mxu0
    %7145 = vmatprep.mubr.bf16.mxu0 0
    %7146 = vmatmul.mubr.bf16.gmra.mrb[0].mxu0 %v6532
    %v7147 = vpop.f32.mrb[0].mxu0
    %v7148 = vadd.f32 %v6859, %v7147
    %v7149 = vpop.f32.mrb[0].mxu0
    %v7150 = vpop.f32.mrb[0].mxu0
    %v7151 = vadd.f32 %v6862, %v7150
    %v7152 = vpop.f32.mrb[0].mxu0
    %7153 = vmatprep.mubr.bf16.mxu0 0
    %7154 = vmatmul.mubr.bf16.gmra.mrb[0].mxu0 %v6535
    %v7155 = vpop.f32.mrb[0].mxu0
    %v7156 = vadd.f32 %v6867, %v7155
    %v7157 = vpop.f32.mrb[0].mxu0
    %v7158 = vpop.f32.mrb[0].mxu0
    %v7159 = vadd.f32 %v6870, %v7158
    %v7160 = vpop.f32.mrb[0].mxu0
    %7161 = vmatprep.mubr.bf16.mxu0 0
    %7162 = vmatmul.mubr.bf16.gmra.mrb[0].mxu0 %v6538
    %v7163 = vpop.f32.mrb[0].mxu0
    %v7164 = vadd.f32 %v6875, %v7163
    %v7165 = vpop.f32.mrb[0].mxu0
    %v7166 = vpop.f32.mrb[0].mxu0
    %v7167 = vadd.f32 %v6878, %v7166
    %v7168 = vpop.f32.mrb[0].mxu0
    %7169 = vmatprep.mubr.bf16.mxu0 0
    %7170 = vmatmul.mubr.bf16.gmra.mrb[0].mxu0 %v6541
    %v7171 = vpop.f32.mrb[0].mxu0
    %v7172 = vadd.f32 %v6883, %v7171
    %v7173 = vpop.f32.mrb[0].mxu0
    %v7174 = vpop.f32.mrb[0].mxu0
    %v7175 = vadd.f32 %v6886, %v7174
    %v7176 = vpop.f32.mrb[0].mxu0
    %7177 = vmatprep.mubr.bf16.mxu0 0
    %7178 = vmatmul.mubr.bf16.gmra.mrb[0].mxu0 %v6544
    %v7179 = vpop.f32.mrb[0].mxu0
    %v7180 = vadd.f32 %v6891, %v7179
    %v7181 = vpop.f32.mrb[0].mxu0
    %v7182 = vpop.f32.mrb[0].mxu0
    %v7183 = vadd.f32 %v6894, %v7182
    %v7184 = vpop.f32.mrb[0].mxu0
    %7185 = vmatprep.mubr.bf16.mxu0 0
    %7186 = vmatmul.mubr.bf16.gmra.mrb[0].mxu0 %v6547
    %v7187 = vpop.f32.mrb[0].mxu0
    %v7188 = vadd.f32 %v6899, %v7187
    %v7189 = vpop.f32.mrb[0].mxu0
    %v7190 = vpop.f32.mrb[0].mxu0
    %v7191 = vadd.f32 %v6902, %v7190
    %v7192 = vpop.f32.mrb[0].mxu0
    %7193 = vmatprep.mubr.bf16.mxu0 0
    %7194 = vmatmul.mubr.bf16.gmra.mrb[0].mxu0 %v6550
    %v7195 = vpop.f32.mrb[0].mxu0
    %v7196 = vadd.f32 %v6907, %v7195
    %v7197 = vpop.f32.mrb[0].mxu0
    %v7198 = vpop.f32.mrb[0].mxu0
    %v7199 = vadd.f32 %v6910, %v7198
    %v7200 = vpop.f32.mrb[0].mxu0
    %7201 = vmatprep.mubr.bf16.mxu0 0
    %7202 = vmatmul.mubr.bf16.gmra.mrb[0].mxu0 %v6553
    %v7203 = vpop.f32.mrb[0].mxu0
    %v7204 = vadd.f32 %v6915, %v7203
    %v7205 = vpop.f32.mrb[0].mxu0
    %v7206 = vpop.f32.mrb[0].mxu0
    %v7207 = vadd.f32 %v6918, %v7206
    %v7208 = vpop.f32.mrb[0].mxu0
    %7209 = vmatprep.mubr.bf16.mxu0 0
    %7210 = vmatmul.mubr.bf16.gmra.mrb[0].mxu0 %v6556
    %v7211 = vpop.f32.mrb[0].mxu0
    %v7212 = vadd.f32 %v6923, %v7211
    %v7213 = vpop.f32.mrb[0].mxu0
    %v7214 = vpop.f32.mrb[0].mxu0
    %v7215 = vadd.f32 %v6926, %v7214
    %v7216 = vpop.f32.mrb[0].mxu0
    %7217 = vmatprep.mubr.bf16.mxu0 0
    %7218 = vmatmul.mubr.bf16.gmra.mrb[0].mxu0 %v6559
    %v7219 = vpop.f32.mrb[0].mxu0
    %v7220 = vadd.f32 %v6931, %v7219
    %v7221 = vpop.f32.mrb[0].mxu0
    %v7222 = vpop.f32.mrb[0].mxu0
    %v7223 = vadd.f32 %v6934, %v7222
    %v7224 = vpop.f32.mrb[0].mxu0
    %7225 = vmatprep.mubr.bf16.mxu0 0
    %7226 = vmatmul.mubr.bf16.gmra.mrb[0].mxu0 %v6562
    %v7227 = vpop.f32.mrb[0].mxu0
    %v7228 = vadd.f32 %v6939, %v7227
    %v7229 = vpop.f32.mrb[0].mxu0
    %v7230 = vpop.f32.mrb[0].mxu0
    %v7231 = vadd.f32 %v6942, %v7230
    %v7232 = vpop.f32.mrb[0].mxu0
    %7233 = vmatprep.mubr.bf16.mxu0 0
    %7234 = vmatmul.mubr.bf16.gmra.mrb[0].mxu0 %v6565
    %v7235 = vpop.f32.mrb[0].mxu0
    %v7236 = vadd.f32 %v6947, %v7235
    %v7237 = vpop.f32.mrb[0].mxu0
    %v7238 = vpop.f32.mrb[0].mxu0
    %v7239 = vadd.f32 %v6950, %v7238
    %v7240 = vpop.f32.mrb[0].mxu0
    %7241 = vmatprep.mubr.bf16.mxu0 0
    %7242 = vmatmul.mubr.bf16.gmra.mrb[0].mxu0 %v6568
    %v7243 = vpop.f32.mrb[0].mxu0
    %v7244 = vadd.f32 %v6955, %v7243
    %v7245 = vpop.f32.mrb[0].mxu0
    %v7246 = vpop.f32.mrb[0].mxu0
    %v7247 = vadd.f32 %v6958, %v7246
    %v7248 = vpop.f32.mrb[0].mxu0
    %7249 = vmatprep.mubr.bf16.mxu0 0
    %7250 = vmatmul.mubr.bf16.gmra.mrb[0].mxu0 %v6571
    %v7251 = vpop.f32.mrb[0].mxu0
    %v7252 = vadd.f32 %v6963, %v7251
    %v7253 = vpop.f32.mrb[0].mxu0
    %v7254 = vpop.f32.mrb[0].mxu0
    %v7255 = vadd.f32 %v6966, %v7254
    %v7256 = vpop.f32.mrb[0].mxu0
    %7257 = vmatprep.mubr.bf16.mxu0 0
    %7258 = vmatmul.mubr.bf16.gmra.mrb[0].mxu0 %v6574
    %v7259 = vpop.f32.mrb[0].mxu0
    %v7260 = vadd.f32 %v6971, %v7259
    %v7261 = vpop.f32.mrb[0].mxu0
    %v7262 = vpop.f32.mrb[0].mxu0
    %v7263 = vadd.f32 %v6974, %v7262
    %v7264 = vpop.f32.mrb[0].mxu0
    %7265 = vmatprep.mubr.bf16.mxu0 0
    %7266 = vmatmul.mubr.bf16.gmra.mrb[0].mxu0 %v6577
    %v7267 = vpop.f32.mrb[0].mxu0
    %v7268 = vadd.f32 %v6979, %v7267
    %v7269 = vpop.f32.mrb[0].mxu0
    %v7270 = vpop.f32.mrb[0].mxu0
    %v7271 = vadd.f32 %v6982, %v7270
    %v7272 = vpop.f32.mrb[0].mxu0
    %7273 = vmatprep.mubr.bf16.mxu0 0
    %7274 = vmatmul.mubr.bf16.gmra.mrb[0].mxu0 %v6580
    %v7275 = vpop.f32.mrb[0].mxu0
    %v7276 = vadd.f32 %v6987, %v7275
    %v7277 = vpop.f32.mrb[0].mxu0
    %v7278 = vpop.f32.mrb[0].mxu0
    %v7279 = vadd.f32 %v6990, %v7278
    %v7280 = vpop.f32.mrb[0].mxu0
    %7281 = vmatprep.mubr.bf16.mxu0 0
    %7282 = vmatmul.mubr.bf16.gmra.mrb[0].mxu0 %v6583
    %v7283 = vpop.f32.mrb[0].mxu0
    %v7284 = vadd.f32 %v6995, %v7283
    %v7285 = vpop.f32.mrb[0].mxu0
    %v7286 = vpop.f32.mrb[0].mxu0
    %v7287 = vadd.f32 %v6998, %v7286
    %v7288 = vpop.f32.mrb[0].mxu0
    %7289 = vmatprep.mubr.bf16.mxu0 0
    %7290 = vmatmul.mubr.bf16.gmra.mrb[0].mxu0 %v6586
    %v7291 = vpop.f32.mrb[0].mxu0
    %v7292 = vadd.f32 %v7003, %v7291
    %v7293 = vpop.f32.mrb[0].mxu0
    %v7294 = vpop.f32.mrb[0].mxu0
    %v7295 = vadd.f32 %v7006, %v7294
    %v7296 = vpop.f32.mrb[0].mxu0
    %7297 = vmatprep.mubr.bf16.mxu0 0
    %7298 = vmatmul.mubr.bf16.gmra.mrb[0].mxu0 %v6589
    %v7299 = vpop.f32.mrb[0].mxu0
    %v7300 = vadd.f32 %v7011, %v7299
    %v7301 = vpop.f32.mrb[0].mxu0
    %v7302 = vpop.f32.mrb[0].mxu0
    %v7303 = vadd.f32 %v7014, %v7302
    %v7304 = vpop.f32.mrb[0].mxu0
    %7305 = vmatprep.mubr.bf16.mxu0 0
    %7306 = vmatmul.mubr.bf16.gmra.mrb[0].mxu0 %v6592
    %v7307 = vpop.f32.mrb[0].mxu0
    %v7308 = vadd.f32 %v7019, %v7307
    %v7309 = vpop.f32.mrb[0].mxu0
    %v7310 = vpop.f32.mrb[0].mxu0
    %v7311 = vadd.f32 %v7022, %v7310
    %v7312 = vpop.f32.mrb[0].mxu0
    %7313 = vmatprep.mubr.bf16.mxu0 0
    %7314 = vmatmul.mubr.bf16.gmra.mrb[0].mxu0 %v6595
    %v7315 = vpop.f32.mrb[0].mxu0
    %v7316 = vadd.f32 %v7027, %v7315
    %v7317 = vpop.f32.mrb[0].mxu0
    %v7318 = vpop.f32.mrb[0].mxu0
    %v7319 = vadd.f32 %v7030, %v7318
    %v7320 = vpop.f32.mrb[0].mxu0
    %7321 = vmatprep.mubr.bf16.mxu0 0
    %7322 = vmatmul.mubr.bf16.gmra.mrb[0].mxu0 %v6598
    %v7323 = vpop.f32.mrb[0].mxu0
    %v7324 = vadd.f32 %v7035, %v7323
    %v7325 = vpop.f32.mrb[0].mxu0
    %v7326 = vpop.f32.mrb[0].mxu0
    %v7327 = vadd.f32 %v7038, %v7326
    %v7328 = vpop.f32.mrb[0].mxu0
    %7329 = vmatprep.mubr.bf16.mxu0 0
    %7330 = vmatmul.mubr.bf16.gmra.mrb[0].mxu0 %v6601
    %v7331 = vpop.f32.mrb[0].mxu0
    %v7332 = vadd.f32 %v7043, %v7331
    %v7333 = vpop.f32.mrb[0].mxu0
    %v7334 = vpop.f32.mrb[0].mxu0
    %v7335 = vadd.f32 %v7046, %v7334
    %v7336 = vpop.f32.mrb[0].mxu0
    %7337 = vmatprep.mubr.bf16.mxu0 0
    %7338 = vmatmul.mubr.bf16.gmra.mrb[0].mxu0 %v6604
    %v7339 = vpop.f32.mrb[0].mxu0
    %v7340 = vadd.f32 %v7051, %v7339
    %v7341 = vpop.f32.mrb[0].mxu0
    %v7342 = vpop.f32.mrb[0].mxu0
    %v7343 = vadd.f32 %v7054, %v7342
    %v7344 = vpop.f32.mrb[0].mxu0
    %7345 = vmatprep.mubr.bf16.mxu0 0
    %7346 = vmatmul.mubr.bf16.gmra.mrb[0].mxu0 %v6607
    %v7347 = vpop.f32.mrb[0].mxu0
    %v7348 = vadd.f32 %v7059, %v7347
    %v7349 = vpop.f32.mrb[0].mxu0
    %v7350 = vpop.f32.mrb[0].mxu0
    %v7351 = vadd.f32 %v7062, %v7350
    %v7352 = vpop.f32.mrb[0].mxu0
    %7353 = vmatprep.mubr.bf16.mxu0 0
    %7354 = vmatmul.mubr.bf16.gmra.mrb[0].mxu0 %v6610
    %v7355 = vpop.f32.mrb[0].mxu0
    %v7356 = vadd.f32 %v7067, %v7355
    %v7357 = vpop.f32.mrb[0].mxu0
    %v7358 = vpop.f32.mrb[0].mxu0
    %v7359 = vadd.f32 %v7070, %v7358
    %v7360 = vpop.f32.mrb[0].mxu0
    %7361 = vmatprep.mubr.bf16.mxu0 0
    %7362 = vmatmul.mubr.bf16.gmra.mrb[0].mxu0 %v6613
    %v7363 = vpop.f32.mrb[0].mxu0
    %v7364 = vadd.f32 %v7075, %v7363
    %v7365 = vpop.f32.mrb[0].mxu0
    %v7366 = vpop.f32.mrb[0].mxu0
    %v7367 = vadd.f32 %v7078, %v7366
    %v7368 = vpop.f32.mrb[0].mxu0
    %7369 = vmatprep.mubr.bf16.mxu0 0
    %7370 = vmatmul.mubr.bf16.gmra.mrb[0].mxu0 %v6616
    %v7371 = vpop.f32.mrb[0].mxu0
    %v7372 = vadd.f32 %v7083, %v7371
    %v7373 = vpop.f32.mrb[0].mxu0
    %v7374 = vpop.f32.mrb[0].mxu0
    %v7375 = vadd.f32 %v7086, %v7374
    %v7376 = vpop.f32.mrb[0].mxu0
    %7377 = vmatprep.mubr.bf16.mxu0 0
    %7378 = vmatmul.mubr.bf16.gmra.mrb[0].mxu0 %v6619
    %v7379 = vpop.f32.mrb[0].mxu0
    %v7380 = vadd.f32 %v7091, %v7379
    %v7381 = vpop.f32.mrb[0].mxu0
    %v7382 = vpop.f32.mrb[0].mxu0
    %v7383 = vadd.f32 %v7094, %v7382
    %v7384 = vpop.f32.mrb[0].mxu0
    %7385 = vmatprep.mubr.bf16.mxu0 0
    %7386 = vmatmul.mubr.bf16.gmra.mrb[0].mxu0 %v6622
    %v7387 = vpop.f32.mrb[0].mxu0
    %v7388 = vadd.f32 %v7099, %v7387
    %v7389 = vpop.f32.mrb[0].mxu0
    %v7390 = vpop.f32.mrb[0].mxu0
    %v7391 = vadd.f32 %v7102, %v7390
    %v7392 = vpop.f32.mrb[0].mxu0
    %7393 = vdwg.mxu0
    %v7394 = vadd.f32 %v6273, %v7140
    %v7395 = vadd.f32 %v6276, %v7143
    %v7396 = vadd.f32 %v6281, %v7148
    %v7397 = vadd.f32 %v6284, %v7151
    %v7398 = vadd.f32 %v6289, %v7156
    %v7399 = vadd.f32 %v6292, %v7159
    %v7400 = vadd.f32 %v6297, %v7164
    %v7401 = vadd.f32 %v6300, %v7167
    %v7402 = vadd.f32 %v6305, %v7172
    %v7403 = vadd.f32 %v6308, %v7175
    %v7404 = vadd.f32 %v6313, %v7180
    %v7405 = vadd.f32 %v6316, %v7183
    %v7406 = vadd.f32 %v6321, %v7188
    %v7407 = vadd.f32 %v6324, %v7191
    %v7408 = vadd.f32 %v6329, %v7196
    %v7409 = vadd.f32 %v6332, %v7199
    %v7410 = vadd.f32 %v6337, %v7204
    %v7411 = vadd.f32 %v6340, %v7207
    %v7412 = vadd.f32 %v6345, %v7212
    %v7413 = vadd.f32 %v6348, %v7215
    %v7414 = vadd.f32 %v6353, %v7220
    %v7415 = vadd.f32 %v6356, %v7223
    %v7416 = vadd.f32 %v6361, %v7228
    %v7417 = vadd.f32 %v6364, %v7231
    %v7418 = vadd.f32 %v6369, %v7236
    %v7419 = vadd.f32 %v6372, %v7239
    %v7420 = vadd.f32 %v6377, %v7244
    %v7421 = vadd.f32 %v6380, %v7247
    %v7422 = vadd.f32 %v6385, %v7252
    %v7423 = vadd.f32 %v6388, %v7255
    %v7424 = vadd.f32 %v6393, %v7260
    %v7425 = vadd.f32 %v6396, %v7263
    %v7426 = vadd.f32 %v6401, %v7268
    %v7427 = vadd.f32 %v6404, %v7271
    %v7428 = vadd.f32 %v6409, %v7276
    %v7429 = vadd.f32 %v6412, %v7279
    %v7430 = vadd.f32 %v6417, %v7284
    %v7431 = vadd.f32 %v6420, %v7287
    %v7432 = vadd.f32 %v6425, %v7292
    %v7433 = vadd.f32 %v6428, %v7295
    %v7434 = vadd.f32 %v6433, %v7300
    %v7435 = vadd.f32 %v6436, %v7303
    %v7436 = vadd.f32 %v6441, %v7308
    %v7437 = vadd.f32 %v6444, %v7311
    %v7438 = vadd.f32 %v6449, %v7316
    %v7439 = vadd.f32 %v6452, %v7319
    %v7440 = vadd.f32 %v6457, %v7324
    %v7441 = vadd.f32 %v6460, %v7327
    %v7442 = vadd.f32 %v6465, %v7332
    %v7443 = vadd.f32 %v6468, %v7335
    %v7444 = vadd.f32 %v6473, %v7340
    %v7445 = vadd.f32 %v6476, %v7343
    %v7446 = vadd.f32 %v6481, %v7348
    %v7447 = vadd.f32 %v6484, %v7351
    %v7448 = vadd.f32 %v6489, %v7356
    %v7449 = vadd.f32 %v6492, %v7359
    %v7450 = vadd.f32 %v6497, %v7364
    %v7451 = vadd.f32 %v6500, %v7367
    %v7452 = vadd.f32 %v6505, %v7372
    %v7453 = vadd.f32 %v6508, %v7375
    %v7454 = vadd.f32 %v6513, %v7380
    %v7455 = vadd.f32 %v6516, %v7383
    %v7456 = vadd.f32 %v6521, %v7388
    %v7457 = vadd.f32 %v6524, %v7391
    %v7458 = vld [vmem:[%s6] sm:$0x1]
    %v7460 = vlaneseq
    %v7461 = vshrl.u32 %v7460, 7
    %v7462 = vsub.s32 0, %v7461
    %v7463 = vrot.slane %v7458, %v7462
    %v7465 = vadd.f32 %v7394, %v7463
    %v7466 = vadd.f32 %v7395, %v7463
    %v7467 = vadd.f32 %v7396, %v7463
    %v7468 = vadd.f32 %v7397, %v7463
    %v7469 = vadd.f32 %v7398, %v7463
    %v7470 = vadd.f32 %v7399, %v7463
    %v7471 = vadd.f32 %v7400, %v7463
    %v7472 = vadd.f32 %v7401, %v7463
    %v7473 = vadd.f32 %v7402, %v7463
    %v7474 = vadd.f32 %v7403, %v7463
    %v7475 = vadd.f32 %v7404, %v7463
    %v7476 = vadd.f32 %v7405, %v7463
    %v7477 = vadd.f32 %v7406, %v7463
    %v7478 = vadd.f32 %v7407, %v7463
    %v7479 = vadd.f32 %v7408, %v7463
    %v7480 = vadd.f32 %v7409, %v7463
    %v7481 = vadd.f32 %v7410, %v7463
    %v7482 = vadd.f32 %v7411, %v7463
    %v7483 = vadd.f32 %v7412, %v7463
    %v7484 = vadd.f32 %v7413, %v7463
    %v7485 = vadd.f32 %v7414, %v7463
    %v7486 = vadd.f32 %v7415, %v7463
    %v7487 = vadd.f32 %v7416, %v7463
    %v7488 = vadd.f32 %v7417, %v7463
    %v7489 = vadd.f32 %v7418, %v7463
    %v7490 = vadd.f32 %v7419, %v7463
    %v7491 = vadd.f32 %v7420, %v7463
    %v7492 = vadd.f32 %v7421, %v7463
    %v7493 = vadd.f32 %v7422, %v7463
    %v7494 = vadd.f32 %v7423, %v7463
    %v7495 = vadd.f32 %v7424, %v7463
    %v7496 = vadd.f32 %v7425, %v7463
    %v7497 = vadd.f32 %v7426, %v7463
    %v7498 = vadd.f32 %v7427, %v7463
    %v7499 = vadd.f32 %v7428, %v7463
    %v7500 = vadd.f32 %v7429, %v7463
    %v7501 = vadd.f32 %v7430, %v7463
    %v7502 = vadd.f32 %v7431, %v7463
    %v7503 = vadd.f32 %v7432, %v7463
    %v7504 = vadd.f32 %v7433, %v7463
    %v7505 = vadd.f32 %v7434, %v7463
    %v7506 = vadd.f32 %v7435, %v7463
    %v7507 = vadd.f32 %v7436, %v7463
    %v7508 = vadd.f32 %v7437, %v7463
    %v7509 = vadd.f32 %v7438, %v7463
    %v7510 = vadd.f32 %v7439, %v7463
    %v7511 = vadd.f32 %v7440, %v7463
    %v7512 = vadd.f32 %v7441, %v7463
    %v7513 = vadd.f32 %v7442, %v7463
    %v7514 = vadd.f32 %v7443, %v7463
    %v7515 = vadd.f32 %v7444, %v7463
    %v7516 = vadd.f32 %v7445, %v7463
    %v7517 = vadd.f32 %v7446, %v7463
    %v7518 = vadd.f32 %v7447, %v7463
    %v7519 = vadd.f32 %v7448, %v7463
    %v7520 = vadd.f32 %v7449, %v7463
    %v7521 = vadd.f32 %v7450, %v7463
    %v7522 = vadd.f32 %v7451, %v7463
    %v7523 = vadd.f32 %v7452, %v7463
    %v7524 = vadd.f32 %v7453, %v7463
    %v7525 = vadd.f32 %v7454, %v7463
    %v7526 = vadd.f32 %v7455, %v7463
    %v7527 = vadd.f32 %v7456, %v7463
    %v7528 = vadd.f32 %v7457, %v7463
    %7529 = vst [vmem:[#allocation3] sm:$0xff] %v7465
    %7530 = vst [vmem:[#allocation3 + $0x8] sm:$0xff] %v7466
    %7531 = vst [vmem:[#allocation3 + $0x10] sm:$0xff] %v7467
    %7532 = vst [vmem:[#allocation3 + $0x18] sm:$0xff] %v7468
    %7533 = vst [vmem:[#allocation3 + $0x20] sm:$0xff] %v7469
    %7534 = vst [vmem:[#allocation3 + $0x28] sm:$0xff] %v7470
    %7535 = vst [vmem:[#allocation3 + $0x30] sm:$0xff] %v7471
    %7536 = vst [vmem:[#allocation3 + $0x38] sm:$0xff] %v7472
    %7537 = vst [vmem:[#allocation3 + $0x40] sm:$0xff] %v7473
    %7538 = vst [vmem:[#allocation3 + $0x48] sm:$0xff] %v7474
    %7539 = vst [vmem:[#allocation3 + $0x50] sm:$0xff] %v7475
    %7540 = vst [vmem:[#allocation3 + $0x58] sm:$0xff] %v7476
    %7541 = vst [vmem:[#allocation3 + $0x60] sm:$0xff] %v7477
    %7542 = vst [vmem:[#allocation3 + $0x68] sm:$0xff] %v7478
    %7543 = vst [vmem:[#allocation3 + $0x70] sm:$0xff] %v7479
    %7544 = vst [vmem:[#allocation3 + $0x78] sm:$0xff] %v7480
    %7545 = vst [vmem:[#allocation3 + $0x80] sm:$0xff] %v7481
    %7546 = vst [vmem:[#allocation3 + $0x88] sm:$0xff] %v7482
    %7547 = vst [vmem:[#allocation3 + $0x90] sm:$0xff] %v7483
    %7548 = vst [vmem:[#allocation3 + $0x98] sm:$0xff] %v7484
    %7549 = vst [vmem:[#allocation3 + $0xa0] sm:$0xff] %v7485
    %7550 = vst [vmem:[#allocation3 + $0xa8] sm:$0xff] %v7486
    %7551 = vst [vmem:[#allocation3 + $0xb0] sm:$0xff] %v7487
    %7552 = vst [vmem:[#allocation3 + $0xb8] sm:$0xff] %v7488
    %7553 = vst [vmem:[#allocation3 + $0xc0] sm:$0xff] %v7489
    %7554 = vst [vmem:[#allocation3 + $0xc8] sm:$0xff] %v7490
    %7555 = vst [vmem:[#allocation3 + $0xd0] sm:$0xff] %v7491
    %7556 = vst [vmem:[#allocation3 + $0xd8] sm:$0xff] %v7492
    %7557 = vst [vmem:[#allocation3 + $0xe0] sm:$0xff] %v7493
    %7558 = vst [vmem:[#allocation3 + $0xe8] sm:$0xff] %v7494
    %7559 = vst [vmem:[#allocation3 + $0xf0] sm:$0xff] %v7495
    %7560 = vst [vmem:[#allocation3 + $0xf8] sm:$0xff] %v7496
    %7561 = vst [vmem:[#allocation3 + $0x100] sm:$0xff] %v7497
    %7562 = vst [vmem:[#allocation3 + $0x108] sm:$0xff] %v7498
    %7563 = vst [vmem:[#allocation3 + $0x110] sm:$0xff] %v7499
    %7564 = vst [vmem:[#allocation3 + $0x118] sm:$0xff] %v7500
    %7565 = vst [vmem:[#allocation3 + $0x120] sm:$0xff] %v7501
    %7566 = vst [vmem:[#allocation3 + $0x128] sm:$0xff] %v7502
    %7567 = vst [vmem:[#allocation3 + $0x130] sm:$0xff] %v7503
    %7568 = vst [vmem:[#allocation3 + $0x138] sm:$0xff] %v7504
    %7569 = vst [vmem:[#allocation3 + $0x140] sm:$0xff] %v7505
    %7570 = vst [vmem:[#allocation3 + $0x148] sm:$0xff] %v7506
    %7571 = vst [vmem:[#allocation3 + $0x150] sm:$0xff] %v7507
    %7572 = vst [vmem:[#allocation3 + $0x158] sm:$0xff] %v7508
    %7573 = vst [vmem:[#allocation3 + $0x160] sm:$0xff] %v7509
    %7574 = vst [vmem:[#allocation3 + $0x168] sm:$0xff] %v7510
    %7575 = vst [vmem:[#allocation3 + $0x170] sm:$0xff] %v7511
    %7576 = vst [vmem:[#allocation3 + $0x178] sm:$0xff] %v7512
    %7577 = vst [vmem:[#allocation3 + $0x180] sm:$0xff] %v7513
    %7578 = vst [vmem:[#allocation3 + $0x188] sm:$0xff] %v7514
    %7579 = vst [vmem:[#allocation3 + $0x190] sm:$0xff] %v7515
    %7580 = vst [vmem:[#allocation3 + $0x198] sm:$0xff] %v7516
    %7581 = vst [vmem:[#allocation3 + $0x1a0] sm:$0xff] %v7517
    %7582 = vst [vmem:[#allocation3 + $0x1a8] sm:$0xff] %v7518
    %7583 = vst [vmem:[#allocation3 + $0x1b0] sm:$0xff] %v7519
    %7584 = vst [vmem:[#allocation3 + $0x1b8] sm:$0xff] %v7520
    %7585 = vst [vmem:[#allocation3 + $0x1c0] sm:$0xff] %v7521
    %7586 = vst [vmem:[#allocation3 + $0x1c8] sm:$0xff] %v7522
    %7587 = vst [vmem:[#allocation3 + $0x1d0] sm:$0xff] %v7523
    %7588 = vst [vmem:[#allocation3 + $0x1d8] sm:$0xff] %v7524
    %7589 = vst [vmem:[#allocation3 + $0x1e0] sm:$0xff] %v7525
    %7590 = vst [vmem:[#allocation3 + $0x1e8] sm:$0xff] %v7526
    %7591 = vst [vmem:[#allocation3 + $0x1f0] sm:$0xff] %v7527
    %7592 = vst [vmem:[#allocation3 + $0x1f8] sm:$0xff] %v7528
    %s7593 = sld [smem:[#allocation4 + $0x100]]
    %s7594 = sld [smem:[#allocation4 + $0x101]]
    %s7595 = sld [smem:[#allocation4 + $0x102]]
    %s7596 = sld [smem:[#allocation4 + $0x180]]
    %s7597 = sld [smem:[#allocation4 + $0x181]]
    %s7598 = sld [smem:[#allocation4 + $0x182]]
    %v7599 = vld [vmem:[#allocation3] sm:$0xff]
    %v7600 = vld [vmem:[#allocation3 + $0x8] sm:$0xff]
    %v7601 = vld [vmem:[#allocation3 + $0x10] sm:$0xff]
    %v7602 = vld [vmem:[#allocation3 + $0x18] sm:$0xff]
    %v7603 = vld [vmem:[#allocation3 + $0x20] sm:$0xff]
    %v7604 = vld [vmem:[#allocation3 + $0x28] sm:$0xff]
    %v7605 = vld [vmem:[#allocation3 + $0x30] sm:$0xff]
    %v7606 = vld [vmem:[#allocation3 + $0x38] sm:$0xff]
    %v7607 = vld [vmem:[#allocation3 + $0x40] sm:$0xff]
    %v7608 = vld [vmem:[#allocation3 + $0x48] sm:$0xff]
    %v7609 = vld [vmem:[#allocation3 + $0x50] sm:$0xff]
    %v7610 = vld [vmem:[#allocation3 + $0x58] sm:$0xff]
    %v7611 = vld [vmem:[#allocation3 + $0x60] sm:$0xff]
    %v7612 = vld [vmem:[#allocation3 + $0x68] sm:$0xff]
    %v7613 = vld [vmem:[#allocation3 + $0x70] sm:$0xff]
    %v7614 = vld [vmem:[#allocation3 + $0x78] sm:$0xff]
    %v7615 = vld [vmem:[#allocation3 + $0x80] sm:$0xff]
    %v7616 = vld [vmem:[#allocation3 + $0x88] sm:$0xff]
    %v7617 = vld [vmem:[#allocation3 + $0x90] sm:$0xff]
    %v7618 = vld [vmem:[#allocation3 + $0x98] sm:$0xff]
    %v7619 = vld [vmem:[#allocation3 + $0xa0] sm:$0xff]
    %v7620 = vld [vmem:[#allocation3 + $0xa8] sm:$0xff]
    %v7621 = vld [vmem:[#allocation3 + $0xb0] sm:$0xff]
    %v7622 = vld [vmem:[#allocation3 + $0xb8] sm:$0xff]
    %v7623 = vld [vmem:[#allocation3 + $0xc0] sm:$0xff]
    %v7624 = vld [vmem:[#allocation3 + $0xc8] sm:$0xff]
    %v7625 = vld [vmem:[#allocation3 + $0xd0] sm:$0xff]
    %v7626 = vld [vmem:[#allocation3 + $0xd8] sm:$0xff]
    %v7627 = vld [vmem:[#allocation3 + $0xe0] sm:$0xff]
    %v7628 = vld [vmem:[#allocation3 + $0xe8] sm:$0xff]
    %v7629 = vld [vmem:[#allocation3 + $0xf0] sm:$0xff]
    %v7630 = vld [vmem:[#allocation3 + $0xf8] sm:$0xff]
    %v7631 = vld [vmem:[#allocation3 + $0x100] sm:$0xff]
    %v7632 = vld [vmem:[#allocation3 + $0x108] sm:$0xff]
    %v7633 = vld [vmem:[#allocation3 + $0x110] sm:$0xff]
    %v7634 = vld [vmem:[#allocation3 + $0x118] sm:$0xff]
    %v7635 = vld [vmem:[#allocation3 + $0x120] sm:$0xff]
    %v7636 = vld [vmem:[#allocation3 + $0x128] sm:$0xff]
    %v7637 = vld [vmem:[#allocation3 + $0x130] sm:$0xff]
    %v7638 = vld [vmem:[#allocation3 + $0x138] sm:$0xff]
    %v7639 = vld [vmem:[#allocation3 + $0x140] sm:$0xff]
    %v7640 = vld [vmem:[#allocation3 + $0x148] sm:$0xff]
    %v7641 = vld [vmem:[#allocation3 + $0x150] sm:$0xff]
    %v7642 = vld [vmem:[#allocation3 + $0x158] sm:$0xff]
    %v7643 = vld [vmem:[#allocation3 + $0x160] sm:$0xff]
    %v7644 = vld [vmem:[#allocation3 + $0x168] sm:$0xff]
    %v7645 = vld [vmem:[#allocation3 + $0x170] sm:$0xff]
    %v7646 = vld [vmem:[#allocation3 + $0x178] sm:$0xff]
    %v7647 = vld [vmem:[#allocation3 + $0x180] sm:$0xff]
    %v7648 = vld [vmem:[#allocation3 + $0x188] sm:$0xff]
    %v7649 = vld [vmem:[#allocation3 + $0x190] sm:$0xff]
    %v7650 = vld [vmem:[#allocation3 + $0x198] sm:$0xff]
    %v7651 = vld [vmem:[#allocation3 + $0x1a0] sm:$0xff]
    %v7652 = vld [vmem:[#allocation3 + $0x1a8] sm:$0xff]
    %v7653 = vld [vmem:[#allocation3 + $0x1b0] sm:$0xff]
    %v7654 = vld [vmem:[#allocation3 + $0x1b8] sm:$0xff]
    %v7655 = vld [vmem:[#allocation3 + $0x1c0] sm:$0xff]
    %v7656 = vld [vmem:[#allocation3 + $0x1c8] sm:$0xff]
    %v7657 = vld [vmem:[#allocation3 + $0x1d0] sm:$0xff]
    %v7658 = vld [vmem:[#allocation3 + $0x1d8] sm:$0xff]
    %v7659 = vld [vmem:[#allocation3 + $0x1e0] sm:$0xff]
    %v7660 = vld [vmem:[#allocation3 + $0x1e8] sm:$0xff]
    %v7661 = vld [vmem:[#allocation3 + $0x1f0] sm:$0xff]
    %v7662 = vld [vmem:[#allocation3 + $0x1f8] sm:$0xff]
    %v7663 = vadd.f32 %v7599, %v7600
    %v7664 = vadd.f32 %v7663, %v7601
    %v7665 = vadd.f32 %v7664, %v7602
    %v7666 = vadd.f32 %v7665, %v7603
    %v7667 = vadd.f32 %v7666, %v7604
    %v7668 = vadd.f32 %v7667, %v7605
    %v7669 = vadd.f32 %v7668, %v7606
    %v7670 = vadd.f32 %v7669, %v7607
    %v7671 = vadd.f32 %v7670, %v7608
    %v7672 = vadd.f32 %v7671, %v7609
    %v7673 = vadd.f32 %v7672, %v7610
    %v7674 = vadd.f32 %v7673, %v7611
    %v7675 = vadd.f32 %v7674, %v7612
    %v7676 = vadd.f32 %v7675, %v7613
    %v7677 = vadd.f32 %v7676, %v7614
    %v7678 = vadd.f32 %v7677, %v7615
    %v7679 = vadd.f32 %v7678, %v7616
    %v7680 = vadd.f32 %v7679, %v7617
    %v7681 = vadd.f32 %v7680, %v7618
    %v7682 = vadd.f32 %v7681, %v7619
    %v7683 = vadd.f32 %v7682, %v7620
    %v7684 = vadd.f32 %v7683, %v7621
    %v7685 = vadd.f32 %v7684, %v7622
    %v7686 = vadd.f32 %v7685, %v7623
    %v7687 = vadd.f32 %v7686, %v7624
    %v7688 = vadd.f32 %v7687, %v7625
    %v7689 = vadd.f32 %v7688, %v7626
    %v7690 = vadd.f32 %v7689, %v7627
    %v7691 = vadd.f32 %v7690, %v7628
    %v7692 = vadd.f32 %v7691, %v7629
    %v7693 = vadd.f32 %v7692, %v7630
    %v7694 = vrot.slane %v7693, 4
    %v7695 = vadd.f32 %v7693, %v7694
    %v7696 = vrot.slane %v7695, 2
    %v7697 = vadd.f32 %v7695, %v7696
    %v7698 = vrot.slane %v7697, 1
    %v7699 = vadd.f32 %v7697, %v7698
    %v7700 = vadd.f32 %v7631, %v7632
    %v7701 = vadd.f32 %v7700, %v7633
    %v7702 = vadd.f32 %v7701, %v7634
    %v7703 = vadd.f32 %v7702, %v7635
    %v7704 = vadd.f32 %v7703, %v7636
    %v7705 = vadd.f32 %v7704, %v7637
    %v7706 = vadd.f32 %v7705, %v7638
    %v7707 = vadd.f32 %v7706, %v7639
    %v7708 = vadd.f32 %v7707, %v7640
    %v7709 = vadd.f32 %v7708, %v7641
    %v7710 = vadd.f32 %v7709, %v7642
    %v7711 = vadd.f32 %v7710, %v7643
    %v7712 = vadd.f32 %v7711, %v7644
    %v7713 = vadd.f32 %v7712, %v7645
    %v7714 = vadd.f32 %v7713, %v7646
    %v7715 = vadd.f32 %v7714, %v7647
    %v7716 = vadd.f32 %v7715, %v7648
    %v7717 = vadd.f32 %v7716, %v7649
    %v7718 = vadd.f32 %v7717, %v7650
    %v7719 = vadd.f32 %v7718, %v7651
    %v7720 = vadd.f32 %v7719, %v7652
    %v7721 = vadd.f32 %v7720, %v7653
    %v7722 = vadd.f32 %v7721, %v7654
    %v7723 = vadd.f32 %v7722, %v7655
    %v7724 = vadd.f32 %v7723, %v7656
    %v7725 = vadd.f32 %v7724, %v7657
    %v7726 = vadd.f32 %v7725, %v7658
    %v7727 = vadd.f32 %v7726, %v7659
    %v7728 = vadd.f32 %v7727, %v7660
    %v7729 = vadd.f32 %v7728, %v7661
    %v7730 = vadd.f32 %v7729, %v7662
    %v7731 = vrot.slane %v7730, 4
    %v7732 = vadd.f32 %v7730, %v7731
    %v7733 = vrot.slane %v7732, 2
    %v7734 = vadd.f32 %v7732, %v7733
    %v7735 = vrot.slane %v7734, 1
    %v7736 = vadd.f32 %v7734, %v7735
    %v7737 = vmul.f32 %v7699, %v3665
    %v7738 = vmul.f32 %v7736, %v3665
    %v7739 = vmul.f32 %v7599, %v7599
    %v7740 = vmul.f32 %v7600, %v7600
    %v7741 = vmul.f32 %v7601, %v7601
    %v7742 = vmul.f32 %v7602, %v7602
    %v7743 = vmul.f32 %v7603, %v7603
    %v7744 = vmul.f32 %v7604, %v7604
    %v7745 = vmul.f32 %v7605, %v7605
    %v7746 = vmul.f32 %v7606, %v7606
    %v7747 = vmul.f32 %v7607, %v7607
    %v7748 = vmul.f32 %v7608, %v7608
    %v7749 = vmul.f32 %v7609, %v7609
    %v7750 = vmul.f32 %v7610, %v7610
    %v7751 = vmul.f32 %v7611, %v7611
    %v7752 = vmul.f32 %v7612, %v7612
    %v7753 = vmul.f32 %v7613, %v7613
    %v7754 = vmul.f32 %v7614, %v7614
    %v7755 = vmul.f32 %v7615, %v7615
    %v7756 = vmul.f32 %v7616, %v7616
    %v7757 = vmul.f32 %v7617, %v7617
    %v7758 = vmul.f32 %v7618, %v7618
    %v7759 = vmul.f32 %v7619, %v7619
    %v7760 = vmul.f32 %v7620, %v7620
    %v7761 = vmul.f32 %v7621, %v7621
    %v7762 = vmul.f32 %v7622, %v7622
    %v7763 = vmul.f32 %v7623, %v7623
    %v7764 = vmul.f32 %v7624, %v7624
    %v7765 = vmul.f32 %v7625, %v7625
    %v7766 = vmul.f32 %v7626, %v7626
    %v7767 = vmul.f32 %v7627, %v7627
    %v7768 = vmul.f32 %v7628, %v7628
    %v7769 = vmul.f32 %v7629, %v7629
    %v7770 = vmul.f32 %v7630, %v7630
    %v7771 = vmul.f32 %v7631, %v7631
    %v7772 = vmul.f32 %v7632, %v7632
    %v7773 = vmul.f32 %v7633, %v7633
    %v7774 = vmul.f32 %v7634, %v7634
    %v7775 = vmul.f32 %v7635, %v7635
    %v7776 = vmul.f32 %v7636, %v7636
    %v7777 = vmul.f32 %v7637, %v7637
    %v7778 = vmul.f32 %v7638, %v7638
    %v7779 = vmul.f32 %v7639, %v7639
    %v7780 = vmul.f32 %v7640, %v7640
    %v7781 = vmul.f32 %v7641, %v7641
    %v7782 = vmul.f32 %v7642, %v7642
    %v7783 = vmul.f32 %v7643, %v7643
    %v7784 = vmul.f32 %v7644, %v7644
    %v7785 = vmul.f32 %v7645, %v7645
    %v7786 = vmul.f32 %v7646, %v7646
    %v7787 = vmul.f32 %v7647, %v7647
    %v7788 = vmul.f32 %v7648, %v7648
    %v7789 = vmul.f32 %v7649, %v7649
    %v7790 = vmul.f32 %v7650, %v7650
    %v7791 = vmul.f32 %v7651, %v7651
    %v7792 = vmul.f32 %v7652, %v7652
    %v7793 = vmul.f32 %v7653, %v7653
    %v7794 = vmul.f32 %v7654, %v7654
    %v7795 = vmul.f32 %v7655, %v7655
    %v7796 = vmul.f32 %v7656, %v7656
    %v7797 = vmul.f32 %v7657, %v7657
    %v7798 = vmul.f32 %v7658, %v7658
    %v7799 = vmul.f32 %v7659, %v7659
    %v7800 = vmul.f32 %v7660, %v7660
    %v7801 = vmul.f32 %v7661, %v7661
    %v7802 = vmul.f32 %v7662, %v7662
    %v7803 = vadd.f32 %v7739, %v7740
    %v7804 = vadd.f32 %v7803, %v7741
    %v7805 = vadd.f32 %v7804, %v7742
    %v7806 = vadd.f32 %v7805, %v7743
    %v7807 = vadd.f32 %v7806, %v7744
    %v7808 = vadd.f32 %v7807, %v7745
    %v7809 = vadd.f32 %v7808, %v7746
    %v7810 = vadd.f32 %v7809, %v7747
    %v7811 = vadd.f32 %v7810, %v7748
    %v7812 = vadd.f32 %v7811, %v7749
    %v7813 = vadd.f32 %v7812, %v7750
    %v7814 = vadd.f32 %v7813, %v7751
    %v7815 = vadd.f32 %v7814, %v7752
    %v7816 = vadd.f32 %v7815, %v7753
    %v7817 = vadd.f32 %v7816, %v7754
    %v7818 = vadd.f32 %v7817, %v7755
    %v7819 = vadd.f32 %v7818, %v7756
    %v7820 = vadd.f32 %v7819, %v7757
    %v7821 = vadd.f32 %v7820, %v7758
    %v7822 = vadd.f32 %v7821, %v7759
    %v7823 = vadd.f32 %v7822, %v7760
    %v7824 = vadd.f32 %v7823, %v7761
    %v7825 = vadd.f32 %v7824, %v7762
    %v7826 = vadd.f32 %v7825, %v7763
    %v7827 = vadd.f32 %v7826, %v7764
    %v7828 = vadd.f32 %v7827, %v7765
    %v7829 = vadd.f32 %v7828, %v7766
    %v7830 = vadd.f32 %v7829, %v7767
    %v7831 = vadd.f32 %v7830, %v7768
    %v7832 = vadd.f32 %v7831, %v7769
    %v7833 = vadd.f32 %v7832, %v7770
    %v7834 = vrot.slane %v7833, 4
    %v7835 = vadd.f32 %v7833, %v7834
    %v7836 = vrot.slane %v7835, 2
    %v7837 = vadd.f32 %v7835, %v7836
    %v7838 = vrot.slane %v7837, 1
    %v7839 = vadd.f32 %v7837, %v7838
    %v7840 = vadd.f32 %v7771, %v7772
    %v7841 = vadd.f32 %v7840, %v7773
    %v7842 = vadd.f32 %v7841, %v7774
    %v7843 = vadd.f32 %v7842, %v7775
    %v7844 = vadd.f32 %v7843, %v7776
    %v7845 = vadd.f32 %v7844, %v7777
    %v7846 = vadd.f32 %v7845, %v7778
    %v7847 = vadd.f32 %v7846, %v7779
    %v7848 = vadd.f32 %v7847, %v7780
    %v7849 = vadd.f32 %v7848, %v7781
    %v7850 = vadd.f32 %v7849, %v7782
    %v7851 = vadd.f32 %v7850, %v7783
    %v7852 = vadd.f32 %v7851, %v7784
    %v7853 = vadd.f32 %v7852, %v7785
    %v7854 = vadd.f32 %v7853, %v7786
    %v7855 = vadd.f32 %v7854, %v7787
    %v7856 = vadd.f32 %v7855, %v7788
    %v7857 = vadd.f32 %v7856, %v7789
    %v7858 = vadd.f32 %v7857, %v7790
    %v7859 = vadd.f32 %v7858, %v7791
    %v7860 = vadd.f32 %v7859, %v7792
    %v7861 = vadd.f32 %v7860, %v7793
    %v7862 = vadd.f32 %v7861, %v7794
    %v7863 = vadd.f32 %v7862, %v7795
    %v7864 = vadd.f32 %v7863, %v7796
    %v7865 = vadd.f32 %v7864, %v7797
    %v7866 = vadd.f32 %v7865, %v7798
    %v7867 = vadd.f32 %v7866, %v7799
    %v7868 = vadd.f32 %v7867, %v7800
    %v7869 = vadd.f32 %v7868, %v7801
    %v7870 = vadd.f32 %v7869, %v7802
    %v7871 = vrot.slane %v7870, 4
    %v7872 = vadd.f32 %v7870, %v7871
    %v7873 = vrot.slane %v7872, 2
    %v7874 = vadd.f32 %v7872, %v7873
    %v7875 = vrot.slane %v7874, 1
    %v7876 = vadd.f32 %v7874, %v7875
    %v7877 = vmul.f32 %v7839, %v3665
    %v7878 = vmul.f32 %v7876, %v3665
    %v7879 = vmul.f32 %v7737, %v7737
    %v7880 = vmul.f32 %v7738, %v7738
    %v7881 = vsub.f32 %v7877, %v7879
    %v7882 = vsub.f32 %v7878, %v7880
    %v7883 = vmul.f32 %v7881, 1.0039216
    %v7884 = vmul.f32 %v7882, 1.0039216
    %7885 = vadd.xlane.f32.xlu0 %v7737
    %v7886 = vpop.xlane.xlu0 %7885
    %7887 = vadd.xlane.f32.xlu0 %v7738
    %v7888 = vpop.xlane.xlu0 %7887
    %v7889 = vmul.f32 %v7886, %v3818
    %v7890 = vmul.f32 %v7888, %v3818
    %v7891 = vadd.f32 %v7883, %v7879
    %v7892 = vadd.f32 %v7884, %v7880
    %7893 = vadd.xlane.f32.xlu0 %v7891
    %v7894 = vpop.xlane.xlu0 %7893
    %7895 = vadd.xlane.f32.xlu0 %v7892
    %v7896 = vpop.xlane.xlu0 %7895
    %v7897 = vmul.f32 %v7894, %v3818
    %v7898 = vmul.f32 %v7896, %v3818
    %v7899 = vmul.f32 %v7889, %v7889
    %v7900 = vmul.f32 %v7890, %v7890
    %v7901 = vsub.f32 %v7897, %v7899
    %v7902 = vsub.f32 %v7898, %v7900
    %v7903 = vadd.f32 %v7737, %v7738
    %v7904 = vmul.f32 %v7903, %v3834
    %v7905 = vadd.f32 %v7891, %v7892
    %v7906 = vmul.f32 %v7905, %v3834
    %v7907 = vmul.f32 %v7904, %v7904
    %v7908 = vsub.f32 %v7906, %v7907
    %v7909 = vstv %s7593
    %v7910 = vmul.f32 %v7909, %v7737
    %v7911 = vmul.f32 %v7909, %v7738
    %v7912 = vstv %s7594
    %v7913 = vmul.f32 %v7912, %v7889
    %v7914 = vmul.f32 %v7912, %v7890
    %v7915 = vadd.f32 %v7910, %v7913
    %v7916 = vadd.f32 %v7911, %v7914
    %v7917 = vstv %s7595
    %v7918 = vmul.f32 %v7917, %v7904
    %v7919 = vadd.f32 %v7915, %v7918
    %v7920 = vadd.f32 %v7916, %v7918
    %v7921 = vstv %s7596
    %v7922 = vmul.f32 %v7921, %v7883
    %v7923 = vmul.f32 %v7921, %v7884
    %v7924 = vstv %s7597
    %v7925 = vmul.f32 %v7924, %v7901
    %v7926 = vmul.f32 %v7924, %v7902
    %v7927 = vadd.f32 %v7922, %v7925
    %v7928 = vadd.f32 %v7923, %v7926
    %v7929 = vstv %s7598
    %v7930 = vmul.f32 %v7929, %v7908
    %v7931 = vadd.f32 %v7927, %v7930
    %v7932 = vadd.f32 %v7928, %v7930
    %v7933 = vmax.f32 %v7931, 0.0
    %v7934 = vmax.f32 %v7932, 0.0
    %v7935 = vadd.f32 %v7933, 1e-05
    %v7936 = vadd.f32 %v7934, 1e-05
    %v7937 = vrsqrt.pop %v7935
    %v7938 = vrsqrt.pop %v7936
    %v7939 = vld [vmem:[%s7] sm:$0x1]
    %v7940 = vmul.f32 %v7937, %v7939
    %v7941 = vmul.f32 %v7938, %v7939
    %v7942 = vld [vmem:[%s8] sm:$0x1]
    %v7943 = vmul.f32 %v7919, %v7940
    %v7944 = vmul.f32 %v7920, %v7941
    %v7945 = vsub.f32 %v7942, %v7943
    %v7946 = vsub.f32 %v7942, %v7944
    %v7947 = vlaneseq
    %v7948 = vshrl.u32 %v7947, 7
    %v7949 = vsub.s32 0, %v7948
    %v7950 = vrot.slane %v7940, %v7949
    %v7951 = vlaneseq
    %v7952 = vshrl.u32 %v7951, 7
    %v7953 = vsub.s32 0, %v7952
    %v7954 = vrot.slane %v7941, %v7953
    %v7955 = vmul.f32 %v7599, %v7950
    %v7956 = vmul.f32 %v7600, %v7950
    %v7957 = vmul.f32 %v7601, %v7950
    %v7958 = vmul.f32 %v7602, %v7950
    %v7959 = vmul.f32 %v7603, %v7950
    %v7960 = vmul.f32 %v7604, %v7950
    %v7961 = vmul.f32 %v7605, %v7950
    %v7962 = vmul.f32 %v7606, %v7950
    %v7963 = vmul.f32 %v7607, %v7950
    %v7964 = vmul.f32 %v7608, %v7950
    %v7965 = vmul.f32 %v7609, %v7950
    %v7966 = vmul.f32 %v7610, %v7950
    %v7967 = vmul.f32 %v7611, %v7950
    %v7968 = vmul.f32 %v7612, %v7950
    %v7969 = vmul.f32 %v7613, %v7950
    %v7970 = vmul.f32 %v7614, %v7950
    %v7971 = vmul.f32 %v7615, %v7950
    %v7972 = vmul.f32 %v7616, %v7950
    %v7973 = vmul.f32 %v7617, %v7950
    %v7974 = vmul.f32 %v7618, %v7950
    %v7975 = vmul.f32 %v7619, %v7950
    %v7976 = vmul.f32 %v7620, %v7950
    %v7977 = vmul.f32 %v7621, %v7950
    %v7978 = vmul.f32 %v7622, %v7950
    %v7979 = vmul.f32 %v7623, %v7950
    %v7980 = vmul.f32 %v7624, %v7950
    %v7981 = vmul.f32 %v7625, %v7950
    %v7982 = vmul.f32 %v7626, %v7950
    %v7983 = vmul.f32 %v7627, %v7950
    %v7984 = vmul.f32 %v7628, %v7950
    %v7985 = vmul.f32 %v7629, %v7950
    %v7986 = vmul.f32 %v7630, %v7950
    %v7987 = vmul.f32 %v7631, %v7954
    %v7988 = vmul.f32 %v7632, %v7954
    %v7989 = vmul.f32 %v7633, %v7954
    %v7990 = vmul.f32 %v7634, %v7954
    %v7991 = vmul.f32 %v7635, %v7954
    %v7992 = vmul.f32 %v7636, %v7954
    %v7993 = vmul.f32 %v7637, %v7954
    %v7994 = vmul.f32 %v7638, %v7954
    %v7995 = vmul.f32 %v7639, %v7954
    %v7996 = vmul.f32 %v7640, %v7954
    %v7997 = vmul.f32 %v7641, %v7954
    %v7998 = vmul.f32 %v7642, %v7954
    %v7999 = vmul.f32 %v7643, %v7954
    %v8000 = vmul.f32 %v7644, %v7954
    %v8001 = vmul.f32 %v7645, %v7954
    %v8002 = vmul.f32 %v7646, %v7954
    %v8003 = vmul.f32 %v7647, %v7954
    %v8004 = vmul.f32 %v7648, %v7954
    %v8005 = vmul.f32 %v7649, %v7954
    %v8006 = vmul.f32 %v7650, %v7954
    %v8007 = vmul.f32 %v7651, %v7954
    %v8008 = vmul.f32 %v7652, %v7954
    %v8009 = vmul.f32 %v7653, %v7954
    %v8010 = vmul.f32 %v7654, %v7954
    %v8011 = vmul.f32 %v7655, %v7954
    %v8012 = vmul.f32 %v7656, %v7954
    %v8013 = vmul.f32 %v7657, %v7954
    %v8014 = vmul.f32 %v7658, %v7954
    %v8015 = vmul.f32 %v7659, %v7954
    %v8016 = vmul.f32 %v7660, %v7954
    %v8017 = vmul.f32 %v7661, %v7954
    %v8018 = vmul.f32 %v7662, %v7954
    %v8021 = vlaneseq
    %v8022 = vshrl.u32 %v8021, 7
    %v8023 = vsub.s32 0, %v8022
    %v8024 = vrot.slane %v7945, %v8023
    %v8025 = vlaneseq
    %v8026 = vshrl.u32 %v8025, 7
    %v8027 = vsub.s32 0, %v8026
    %v8028 = vrot.slane %v7946, %v8027
    %v8031 = vadd.f32 %v7955, %v8024
    %v8032 = vadd.f32 %v7956, %v8024
    %v8033 = vadd.f32 %v7957, %v8024
    %v8034 = vadd.f32 %v7958, %v8024
    %v8035 = vadd.f32 %v7959, %v8024
    %v8036 = vadd.f32 %v7960, %v8024
    %v8037 = vadd.f32 %v7961, %v8024
    %v8038 = vadd.f32 %v7962, %v8024
    %v8039 = vadd.f32 %v7963, %v8024
    %v8040 = vadd.f32 %v7964, %v8024
    %v8041 = vadd.f32 %v7965, %v8024
    %v8042 = vadd.f32 %v7966, %v8024
    %v8043 = vadd.f32 %v7967, %v8024
    %v8044 = vadd.f32 %v7968, %v8024
    %v8045 = vadd.f32 %v7969, %v8024
    %v8046 = vadd.f32 %v7970, %v8024
    %v8047 = vadd.f32 %v7971, %v8024
    %v8048 = vadd.f32 %v7972, %v8024
    %v8049 = vadd.f32 %v7973, %v8024
    %v8050 = vadd.f32 %v7974, %v8024
    %v8051 = vadd.f32 %v7975, %v8024
    %v8052 = vadd.f32 %v7976, %v8024
    %v8053 = vadd.f32 %v7977, %v8024
    %v8054 = vadd.f32 %v7978, %v8024
    %v8055 = vadd.f32 %v7979, %v8024
    %v8056 = vadd.f32 %v7980, %v8024
    %v8057 = vadd.f32 %v7981, %v8024
    %v8058 = vadd.f32 %v7982, %v8024
    %v8059 = vadd.f32 %v7983, %v8024
    %v8060 = vadd.f32 %v7984, %v8024
    %v8061 = vadd.f32 %v7985, %v8024
    %v8062 = vadd.f32 %v7986, %v8024
    %v8063 = vadd.f32 %v7987, %v8028
    %v8064 = vadd.f32 %v7988, %v8028
    %v8065 = vadd.f32 %v7989, %v8028
    %v8066 = vadd.f32 %v7990, %v8028
    %v8067 = vadd.f32 %v7991, %v8028
    %v8068 = vadd.f32 %v7992, %v8028
    %v8069 = vadd.f32 %v7993, %v8028
    %v8070 = vadd.f32 %v7994, %v8028
    %v8071 = vadd.f32 %v7995, %v8028
    %v8072 = vadd.f32 %v7996, %v8028
    %v8073 = vadd.f32 %v7997, %v8028
    %v8074 = vadd.f32 %v7998, %v8028
    %v8075 = vadd.f32 %v7999, %v8028
    %v8076 = vadd.f32 %v8000, %v8028
    %v8077 = vadd.f32 %v8001, %v8028
    %v8078 = vadd.f32 %v8002, %v8028
    %v8079 = vadd.f32 %v8003, %v8028
    %v8080 = vadd.f32 %v8004, %v8028
    %v8081 = vadd.f32 %v8005, %v8028
    %v8082 = vadd.f32 %v8006, %v8028
    %v8083 = vadd.f32 %v8007, %v8028
    %v8084 = vadd.f32 %v8008, %v8028
    %v8085 = vadd.f32 %v8009, %v8028
    %v8086 = vadd.f32 %v8010, %v8028
    %v8087 = vadd.f32 %v8011, %v8028
    %v8088 = vadd.f32 %v8012, %v8028
    %v8089 = vadd.f32 %v8013, %v8028
    %v8090 = vadd.f32 %v8014, %v8028
    %v8091 = vadd.f32 %v8015, %v8028
    %v8092 = vadd.f32 %v8016, %v8028
    %v8093 = vadd.f32 %v8017, %v8028
    %v8094 = vadd.f32 %v8018, %v8028
    %v8095 = vld [vmem:[%s0] sm:$0xff]
    %v8096 = vld [vmem:[%s0 + $0x8] sm:$0xff]
    %v8097 = vld [vmem:[%s0 + $0x10] sm:$0xff]
    %v8098 = vld [vmem:[%s0 + $0x18] sm:$0xff]
    %v8099 = vld [vmem:[%s0 + $0x20] sm:$0xff]
    %v8100 = vld [vmem:[%s0 + $0x28] sm:$0xff]
    %v8101 = vld [vmem:[%s0 + $0x30] sm:$0xff]
    %v8102 = vld [vmem:[%s0 + $0x38] sm:$0xff]
    %v8103 = vld [vmem:[%s0 + $0x40] sm:$0xff]
    %v8104 = vld [vmem:[%s0 + $0x48] sm:$0xff]
    %v8105 = vld [vmem:[%s0 + $0x50] sm:$0xff]
    %v8106 = vld [vmem:[%s0 + $0x58] sm:$0xff]
    %v8107 = vld [vmem:[%s0 + $0x60] sm:$0xff]
    %v8108 = vld [vmem:[%s0 + $0x68] sm:$0xff]
    %v8109 = vld [vmem:[%s0 + $0x70] sm:$0xff]
    %v8110 = vld [vmem:[%s0 + $0x78] sm:$0xff]
    %v8111 = vld [vmem:[%s0 + $0x80] sm:$0xff]
    %v8112 = vld [vmem:[%s0 + $0x88] sm:$0xff]
    %v8113 = vld [vmem:[%s0 + $0x90] sm:$0xff]
    %v8114 = vld [vmem:[%s0 + $0x98] sm:$0xff]
    %v8115 = vld [vmem:[%s0 + $0xa0] sm:$0xff]
    %v8116 = vld [vmem:[%s0 + $0xa8] sm:$0xff]
    %v8117 = vld [vmem:[%s0 + $0xb0] sm:$0xff]
    %v8118 = vld [vmem:[%s0 + $0xb8] sm:$0xff]
    %v8119 = vld [vmem:[%s0 + $0xc0] sm:$0xff]
    %v8120 = vld [vmem:[%s0 + $0xc8] sm:$0xff]
    %v8121 = vld [vmem:[%s0 + $0xd0] sm:$0xff]
    %v8122 = vld [vmem:[%s0 + $0xd8] sm:$0xff]
    %v8123 = vld [vmem:[%s0 + $0xe0] sm:$0xff]
    %v8124 = vld [vmem:[%s0 + $0xe8] sm:$0xff]
    %v8125 = vld [vmem:[%s0 + $0xf0] sm:$0xff]
    %v8126 = vld [vmem:[%s0 + $0xf8] sm:$0xff]
    %v8127 = vld [vmem:[%s0 + $0x100] sm:$0xff]
    %v8128 = vld [vmem:[%s0 + $0x108] sm:$0xff]
    %v8129 = vld [vmem:[%s0 + $0x110] sm:$0xff]
    %v8130 = vld [vmem:[%s0 + $0x118] sm:$0xff]
    %v8131 = vld [vmem:[%s0 + $0x120] sm:$0xff]
    %v8132 = vld [vmem:[%s0 + $0x128] sm:$0xff]
    %v8133 = vld [vmem:[%s0 + $0x130] sm:$0xff]
    %v8134 = vld [vmem:[%s0 + $0x138] sm:$0xff]
    %v8135 = vld [vmem:[%s0 + $0x140] sm:$0xff]
    %v8136 = vld [vmem:[%s0 + $0x148] sm:$0xff]
    %v8137 = vld [vmem:[%s0 + $0x150] sm:$0xff]
    %v8138 = vld [vmem:[%s0 + $0x158] sm:$0xff]
    %v8139 = vld [vmem:[%s0 + $0x160] sm:$0xff]
    %v8140 = vld [vmem:[%s0 + $0x168] sm:$0xff]
    %v8141 = vld [vmem:[%s0 + $0x170] sm:$0xff]
    %v8142 = vld [vmem:[%s0 + $0x178] sm:$0xff]
    %v8143 = vld [vmem:[%s0 + $0x180] sm:$0xff]
    %v8144 = vld [vmem:[%s0 + $0x188] sm:$0xff]
    %v8145 = vld [vmem:[%s0 + $0x190] sm:$0xff]
    %v8146 = vld [vmem:[%s0 + $0x198] sm:$0xff]
    %v8147 = vld [vmem:[%s0 + $0x1a0] sm:$0xff]
    %v8148 = vld [vmem:[%s0 + $0x1a8] sm:$0xff]
    %v8149 = vld [vmem:[%s0 + $0x1b0] sm:$0xff]
    %v8150 = vld [vmem:[%s0 + $0x1b8] sm:$0xff]
    %v8151 = vld [vmem:[%s0 + $0x1c0] sm:$0xff]
    %v8152 = vld [vmem:[%s0 + $0x1c8] sm:$0xff]
    %v8153 = vld [vmem:[%s0 + $0x1d0] sm:$0xff]
    %v8154 = vld [vmem:[%s0 + $0x1d8] sm:$0xff]
    %v8155 = vld [vmem:[%s0 + $0x1e0] sm:$0xff]
    %v8156 = vld [vmem:[%s0 + $0x1e8] sm:$0xff]
    %v8157 = vld [vmem:[%s0 + $0x1f0] sm:$0xff]
    %v8158 = vld [vmem:[%s0 + $0x1f8] sm:$0xff]
    %v8159 = vadd.f32 %v8095, %v8031
    %v8160 = vadd.f32 %v8096, %v8032
    %v8161 = vadd.f32 %v8097, %v8033
    %v8162 = vadd.f32 %v8098, %v8034
    %v8163 = vadd.f32 %v8099, %v8035
    %v8164 = vadd.f32 %v8100, %v8036
    %v8165 = vadd.f32 %v8101, %v8037
    %v8166 = vadd.f32 %v8102, %v8038
    %v8167 = vadd.f32 %v8103, %v8039
    %v8168 = vadd.f32 %v8104, %v8040
    %v8169 = vadd.f32 %v8105, %v8041
    %v8170 = vadd.f32 %v8106, %v8042
    %v8171 = vadd.f32 %v8107, %v8043
    %v8172 = vadd.f32 %v8108, %v8044
    %v8173 = vadd.f32 %v8109, %v8045
    %v8174 = vadd.f32 %v8110, %v8046
    %v8175 = vadd.f32 %v8111, %v8047
    %v8176 = vadd.f32 %v8112, %v8048
    %v8177 = vadd.f32 %v8113, %v8049
    %v8178 = vadd.f32 %v8114, %v8050
    %v8179 = vadd.f32 %v8115, %v8051
    %v8180 = vadd.f32 %v8116, %v8052
    %v8181 = vadd.f32 %v8117, %v8053
    %v8182 = vadd.f32 %v8118, %v8054
    %v8183 = vadd.f32 %v8119, %v8055
    %v8184 = vadd.f32 %v8120, %v8056
    %v8185 = vadd.f32 %v8121, %v8057
    %v8186 = vadd.f32 %v8122, %v8058
    %v8187 = vadd.f32 %v8123, %v8059
    %v8188 = vadd.f32 %v8124, %v8060
    %v8189 = vadd.f32 %v8125, %v8061
    %v8190 = vadd.f32 %v8126, %v8062
    %v8191 = vadd.f32 %v8127, %v8063
    %v8192 = vadd.f32 %v8128, %v8064
    %v8193 = vadd.f32 %v8129, %v8065
    %v8194 = vadd.f32 %v8130, %v8066
    %v8195 = vadd.f32 %v8131, %v8067
    %v8196 = vadd.f32 %v8132, %v8068
    %v8197 = vadd.f32 %v8133, %v8069
    %v8198 = vadd.f32 %v8134, %v8070
    %v8199 = vadd.f32 %v8135, %v8071
    %v8200 = vadd.f32 %v8136, %v8072
    %v8201 = vadd.f32 %v8137, %v8073
    %v8202 = vadd.f32 %v8138, %v8074
    %v8203 = vadd.f32 %v8139, %v8075
    %v8204 = vadd.f32 %v8140, %v8076
    %v8205 = vadd.f32 %v8141, %v8077
    %v8206 = vadd.f32 %v8142, %v8078
    %v8207 = vadd.f32 %v8143, %v8079
    %v8208 = vadd.f32 %v8144, %v8080
    %v8209 = vadd.f32 %v8145, %v8081
    %v8210 = vadd.f32 %v8146, %v8082
    %v8211 = vadd.f32 %v8147, %v8083
    %v8212 = vadd.f32 %v8148, %v8084
    %v8213 = vadd.f32 %v8149, %v8085
    %v8214 = vadd.f32 %v8150, %v8086
    %v8215 = vadd.f32 %v8151, %v8087
    %v8216 = vadd.f32 %v8152, %v8088
    %v8217 = vadd.f32 %v8153, %v8089
    %v8218 = vadd.f32 %v8154, %v8090
    %v8219 = vadd.f32 %v8155, %v8091
    %v8220 = vadd.f32 %v8156, %v8092
    %v8221 = vadd.f32 %v8157, %v8093
    %v8222 = vadd.f32 %v8158, %v8094
    %8223 = vst [vmem:[#allocation7] sm:$0xff] %v8159
    %8224 = vst [vmem:[#allocation7 + $0x8] sm:$0xff] %v8160
    %8225 = vst [vmem:[#allocation7 + $0x10] sm:$0xff] %v8161
    %8226 = vst [vmem:[#allocation7 + $0x18] sm:$0xff] %v8162
    %8227 = vst [vmem:[#allocation7 + $0x20] sm:$0xff] %v8163
    %8228 = vst [vmem:[#allocation7 + $0x28] sm:$0xff] %v8164
    %8229 = vst [vmem:[#allocation7 + $0x30] sm:$0xff] %v8165
    %8230 = vst [vmem:[#allocation7 + $0x38] sm:$0xff] %v8166
    %8231 = vst [vmem:[#allocation7 + $0x40] sm:$0xff] %v8167
    %8232 = vst [vmem:[#allocation7 + $0x48] sm:$0xff] %v8168
    %8233 = vst [vmem:[#allocation7 + $0x50] sm:$0xff] %v8169
    %8234 = vst [vmem:[#allocation7 + $0x58] sm:$0xff] %v8170
    %8235 = vst [vmem:[#allocation7 + $0x60] sm:$0xff] %v8171
    %8236 = vst [vmem:[#allocation7 + $0x68] sm:$0xff] %v8172
    %8237 = vst [vmem:[#allocation7 + $0x70] sm:$0xff] %v8173
    %8238 = vst [vmem:[#allocation7 + $0x78] sm:$0xff] %v8174
    %8239 = vst [vmem:[#allocation7 + $0x80] sm:$0xff] %v8175
    %8240 = vst [vmem:[#allocation7 + $0x88] sm:$0xff] %v8176
    %8241 = vst [vmem:[#allocation7 + $0x90] sm:$0xff] %v8177
    %8242 = vst [vmem:[#allocation7 + $0x98] sm:$0xff] %v8178
    %8243 = vst [vmem:[#allocation7 + $0xa0] sm:$0xff] %v8179
    %8244 = vst [vmem:[#allocation7 + $0xa8] sm:$0xff] %v8180
    %8245 = vst [vmem:[#allocation7 + $0xb0] sm:$0xff] %v8181
    %8246 = vst [vmem:[#allocation7 + $0xb8] sm:$0xff] %v8182
    %8247 = vst [vmem:[#allocation7 + $0xc0] sm:$0xff] %v8183
    %8248 = vst [vmem:[#allocation7 + $0xc8] sm:$0xff] %v8184
    %8249 = vst [vmem:[#allocation7 + $0xd0] sm:$0xff] %v8185
    %8250 = vst [vmem:[#allocation7 + $0xd8] sm:$0xff] %v8186
    %8251 = vst [vmem:[#allocation7 + $0xe0] sm:$0xff] %v8187
    %8252 = vst [vmem:[#allocation7 + $0xe8] sm:$0xff] %v8188
    %8253 = vst [vmem:[#allocation7 + $0xf0] sm:$0xff] %v8189
    %8254 = vst [vmem:[#allocation7 + $0xf8] sm:$0xff] %v8190
    %8255 = vst [vmem:[#allocation7 + $0x100] sm:$0xff] %v8191
    %8256 = vst [vmem:[#allocation7 + $0x108] sm:$0xff] %v8192
    %8257 = vst [vmem:[#allocation7 + $0x110] sm:$0xff] %v8193
    %8258 = vst [vmem:[#allocation7 + $0x118] sm:$0xff] %v8194
    %8259 = vst [vmem:[#allocation7 + $0x120] sm:$0xff] %v8195
    %8260 = vst [vmem:[#allocation7 + $0x128] sm:$0xff] %v8196
    %8261 = vst [vmem:[#allocation7 + $0x130] sm:$0xff] %v8197
    %8262 = vst [vmem:[#allocation7 + $0x138] sm:$0xff] %v8198
    %8263 = vst [vmem:[#allocation7 + $0x140] sm:$0xff] %v8199
    %8264 = vst [vmem:[#allocation7 + $0x148] sm:$0xff] %v8200
    %8265 = vst [vmem:[#allocation7 + $0x150] sm:$0xff] %v8201
    %8266 = vst [vmem:[#allocation7 + $0x158] sm:$0xff] %v8202
    %8267 = vst [vmem:[#allocation7 + $0x160] sm:$0xff] %v8203
    %8268 = vst [vmem:[#allocation7 + $0x168] sm:$0xff] %v8204
    %8269 = vst [vmem:[#allocation7 + $0x170] sm:$0xff] %v8205
    %8270 = vst [vmem:[#allocation7 + $0x178] sm:$0xff] %v8206
    %8271 = vst [vmem:[#allocation7 + $0x180] sm:$0xff] %v8207
    %8272 = vst [vmem:[#allocation7 + $0x188] sm:$0xff] %v8208
    %8273 = vst [vmem:[#allocation7 + $0x190] sm:$0xff] %v8209
    %8274 = vst [vmem:[#allocation7 + $0x198] sm:$0xff] %v8210
    %8275 = vst [vmem:[#allocation7 + $0x1a0] sm:$0xff] %v8211
    %8276 = vst [vmem:[#allocation7 + $0x1a8] sm:$0xff] %v8212
    %8277 = vst [vmem:[#allocation7 + $0x1b0] sm:$0xff] %v8213
    %8278 = vst [vmem:[#allocation7 + $0x1b8] sm:$0xff] %v8214
    %8279 = vst [vmem:[#allocation7 + $0x1c0] sm:$0xff] %v8215
    %8280 = vst [vmem:[#allocation7 + $0x1c8] sm:$0xff] %v8216
    %8281 = vst [vmem:[#allocation7 + $0x1d0] sm:$0xff] %v8217
    %8282 = vst [vmem:[#allocation7 + $0x1d8] sm:$0xff] %v8218
    %8283 = vst [vmem:[#allocation7 + $0x1e0] sm:$0xff] %v8219
    %8284 = vst [vmem:[#allocation7 + $0x1e8] sm:$0xff] %v8220
    %8285 = vst [vmem:[#allocation7 + $0x1f0] sm:$0xff] %v8221
    %8286 = vst [vmem:[#allocation7 + $0x1f8] sm:$0xff] %v8222
    // Predicated region
    $region46: #{residual_block_forward.1} parent=1 // pred_check
      _
    $region47: #{residual_block_forward.1} parent=1 // pred_check_branch
      %8288 = sbr.rel (0) target = $region49
    $region48: #{residual_block_forward.1} parent=1 // pred_region
      %s8290 = ssub.s32 8192, 8192
      %8291 = vsyncadd [#allocation5], %s8290
      %s8292 = sshll.u32 [#allocation7], 4
      %s8293 = int_to_ptr.vmem [resolvable:$true] %s8292
      %8298 = dma.vmem_to_hbm [thread:$0]  %s8293, 8192, %s10, [#allocation5], 128, 128, 8
    $region49: #{residual_block_forward.1} parent=1 // pred_fallthru
      _
    // Predicated region
    $region50: #{residual_block_forward.1} parent=1 // pred_check
      _
    $region51: #{residual_block_forward.1} parent=1 // pred_check_branch
      %8300 = sbr.rel (0) target = $region53
    $region52: #{residual_block_forward.1} parent=1 // pred_region
      %8301 = dma.done [#allocation5], 8192
    $region53: #{residual_block_forward.1} parent=1 // pred_fallthru
      _
    %8302 = vsyncpa [#allocation5], 1
    %8303 = vsyncpa [#allocation6], 1

</llo_original>
